<compile_context>
chip_gen: v5e
topology: v5e:2x2
jax: 0.10.0
libtpu: 0.0.40
codegen_flags: <defaults>
</compile_context>

<pallas_src>
import jax
import jax.numpy as jnp
import numpy as np
from jax import lax
from jax.experimental import pallas as pl
from jax.experimental.pallas import tpu as pltpu


# ---------------------------------------------------------------------------
# Fused Pallas kernel
# ---------------------------------------------------------------------------

def _generation_core_kernel(pad_ref, c_ref, u_ref, w_ref, b_ref, wu_ref,
                            c_out_ref, h_out_ref, u_out_ref):
    # pad_ref : (1, S+4, S+4, Cin) f32   spatially padded cat(r, z), NHWC
    # c_ref   : (1, S*S, H)        f32   previous cell state (rows = pixels)
    # u_ref   : (1, S*S, 16*H)     f32   canvas as space-to-depth slab
    # w_ref   : (25, Cin, 4*H)     bf16  gate conv weights, tap-major (kh, kw)
    # b_ref   : (1, 4*H)           f32   gate biases (f|i|o|g)
    # wu_ref  : (H, 16*H)          bf16  ConvTranspose2d weight as matmul
    S = pad_ref.shape[1] - 4          # LSTM spatial size (16)
    H = c_ref.shape[2]                # h_dim
    HW = c_ref.shape[1]               # S*S

    pad = pad_ref[0]                  # (S+4, S+4, Cin) resident in VMEM

    # 5x5 "same" convolution of all four gates as 25 accumulated MXU matmuls.
    # In-VMEM im2col: window (kh, kw) is a shifted (S, S, Cin) view reshaped
    # (major-dim collapse, minor dim unchanged) to (S*S, Cin).
    pre = jnp.zeros((HW, 4 * H), dtype=jnp.float32)
    tap = 0
    for kh in range(5):
        for kw in range(5):
            win = pad[kh:kh + S, kw:kw + S, :]                     # (S, S, Cin)
            win2d = win.reshape(HW, win.shape[-1]).astype(jnp.bfloat16)
            pre += jnp.dot(win2d, w_ref[tap],
                           preferred_element_type=jnp.float32)
            tap += 1
    pre = pre + b_ref[...]                                          # (HW, 4H)

    # LSTM gating in f32.
    f = jax.nn.sigmoid(pre[:, 0 * H:1 * H])
    i = jax.nn.sigmoid(pre[:, 1 * H:2 * H])
    o = jax.nn.sigmoid(pre[:, 2 * H:3 * H])
    g = jnp.tanh(pre[:, 3 * H:4 * H])

    c_new = f * c_ref[0] + i * g
    h_new = o * jnp.tanh(c_new)

    c_out_ref[0] = c_new
    h_out_ref[0] = h_new

    # ConvTranspose2d(h, h, k=4, s=4, p=0, bias=False) + u:
    # stride == kernel -> non-overlapping -> one lane-dense matmul + add.
    u_out_ref[0] = jnp.dot(h_new.astype(jnp.bfloat16), wu_ref[...],
                           preferred_element_type=jnp.float32) + u_ref[0]


def _fused_core(pad, c_slab, u_slab, w_taps, b_all, w_up):
    B, HW, H = c_slab.shape
    P = pad.shape[1]
    Cin = pad.shape[-1]
    return pl.pallas_call(
        _generation_core_kernel,
        out_shape=(
            jax.ShapeDtypeStruct((B, HW, H), jnp.float32),        # c'
            jax.ShapeDtypeStruct((B, HW, H), jnp.float32),        # h'
            jax.ShapeDtypeStruct((B, HW, 16 * H), jnp.float32),   # u'
        ),
        grid=(B,),
        in_specs=[
            pl.BlockSpec((1, P, P, Cin), lambda b: (b, 0, 0, 0)),
            pl.BlockSpec((1, HW, H), lambda b: (b, 0, 0)),
            pl.BlockSpec((1, HW, 16 * H), lambda b: (b, 0, 0)),
            # weights / bias: constant block index -> fetched once, VMEM resident
            pl.BlockSpec((25, Cin, 4 * H), lambda b: (0, 0, 0)),
            pl.BlockSpec((1, 4 * H), lambda b: (0, 0)),
            pl.BlockSpec((H, 16 * H), lambda b: (0, 0)),
        ],
        out_specs=(
            pl.BlockSpec((1, HW, H), lambda b: (b, 0, 0)),
            pl.BlockSpec((1, HW, H), lambda b: (b, 0, 0)),
            pl.BlockSpec((1, HW, 16 * H), lambda b: (b, 0, 0)),
        ),
        compiler_params=pltpu.CompilerParams(
            dimension_semantics=("parallel",)),
    )(pad, c_slab, u_slab, w_taps, b_all, w_up)


# ---------------------------------------------------------------------------
# Parameters (PyTorch layouts) + one-time packing for the kernel
# ---------------------------------------------------------------------------

def init_params(key, r_dim, z_dim, h_dim):
    in_dim = r_dim + z_dim
    ks = jax.random.split(key, 9)

    def uni(k, shape, fan_in):
        b = 1.0 / np.sqrt(fan_in)
        return jax.random.uniform(k, shape, jnp.float32, -b, b)

    return {
        "w_forget": uni(ks[0], (h_dim, in_dim, 5, 5), in_dim * 25),
        "b_forget": uni(ks[1], (h_dim,), in_dim * 25),
        "w_input":  uni(ks[2], (h_dim, in_dim, 5, 5), in_dim * 25),
        "b_input":  uni(ks[3], (h_dim,), in_dim * 25),
        "w_output": uni(ks[4], (h_dim, in_dim, 5, 5), in_dim * 25),
        "b_output": uni(ks[5], (h_dim,), in_dim * 25),
        "w_state":  uni(ks[6], (h_dim, in_dim, 5, 5), in_dim * 25),
        "b_state":  uni(ks[7], (h_dim,), in_dim * 25),
        # ConvTranspose2d weight layout: (in_channels, out_channels, kh, kw)
        "w_up":     uni(ks[8], (h_dim, h_dim, 4, 4), h_dim * 16),
    }


def pack_params(params):
    """One-time weight repacking (hoisted out of the per-step forward)."""
    h_dim, in_dim = params["w_forget"].shape[:2]

    def taps(w):  # OIHW (h, Cin, 5, 5) -> tap-major (25, Cin, h)
        return jnp.transpose(w, (2, 3, 1, 0)).reshape(25, in_dim, h_dim)

    w_taps = jnp.concatenate(
        [taps(params["w_forget"]), taps(params["w_input"]),
         taps(params["w_output"]), taps(params["w_state"])],
        axis=-1).astype(jnp.bfloat16)                                  # (25, Cin, 4h)
    b_all = jnp.concatenate(
        [params["b_forget"], params["b_input"],
         params["b_output"], params["b_state"]])[None, :].astype(jnp.float32)
    # (in=h, out=h, 4, 4) -> (h, 16h); column index = (dh*4 + dw)*h + o
    w_up = jnp.transpose(params["w_up"], (0, 2, 3, 1)).reshape(
        h_dim, 16 * h_dim).astype(jnp.bfloat16)
    return {"w_taps": w_taps, "b_all": b_all, "w_up": w_up}


# ---------------------------------------------------------------------------
# Forward (NCHW in / NCHW out, mirroring GenerationCore.forward(r,c_g,h_g,u,z))
# ---------------------------------------------------------------------------

def _nearest_resize_nhwc(x, out_h, out_w):
    # matches nn.Upsample(mode='nearest'): idx = floor(i * in / out)
    _, H, W, _ = x.shape
    rows = (jnp.arange(out_h) * H) // out_h
    cols = (jnp.arange(out_w) * W) // out_w
    return x[:, rows][:, :, cols]


def generation_core_forward(packed, r, c_g, h_g, u, z):
    B = r.shape[0]
    H = packed["w_up"].shape[0]          # h_dim
    S = h_g.shape[2]                     # LSTM spatial size (16)
    HW = S * S

    nhwc = lambda t: jnp.transpose(t, (0, 2, 3, 1)).astype(jnp.float32)

    # upsample r to LSTM resolution if needed (nearest), then cat(r, z)
    r_n = nhwc(r)
    if r.shape[2] != S:
        r_n = _nearest_resize_nhwc(r_n, S, S)
    cat = jnp.concatenate([r_n, nhwc(z)], axis=-1)                # (B,S,S,Cin)
    pad = jnp.pad(cat, ((0, 0), (2, 2), (2, 2), (0, 0)))          # (B,S+4,S+4,Cin)

    # cell state as a (pixels, channels) slab
    c_slab = nhwc(c_g).reshape(B, HW, H)

    # canvas u (B,H,4S,4S) -> space-to-depth slab (B, HW, 16*H)
    u_slab = u.astype(jnp.float32).reshape(B, H, S, 4, S, 4)
    u_slab = jnp.transpose(u_slab, (0, 2, 4, 3, 5, 1)).reshape(B, HW, 16 * H)

    c_out, h_out, u_out = _fused_core(pad, c_slab, u_slab,
                                      packed["w_taps"], packed["b_all"],
                                      packed["w_up"])

    c_new = jnp.transpose(c_out.reshape(B, S, S, H), (0, 3, 1, 2))
    h_new = jnp.transpose(h_out.reshape(B, S, S, H), (0, 3, 1, 2))
    u_new = u_out.reshape(B, S, S, 4, 4, H)
    u_new = jnp.transpose(u_new, (0, 5, 1, 3, 2, 4)).reshape(B, H, 4 * S, 4 * S)
    return c_new, h_new, u_new


# ---------------------------------------------------------------------------
# Pure-JAX reference (independent formulation, for the correctness check)
# ---------------------------------------------------------------------------

def _ref_forward(params, r, c_g, h_g, u, z):
    S = h_g.shape[2]
    if r.shape[2] != S:
        rows = (np.arange(S) * r.shape[2]) // S
        cols = (np.arange(S) * r.shape[3]) // S
        r = r[:, :, rows][:, :, :, cols]
    cat = jnp.concatenate([r, z], axis=1)

    def conv(inp, w, b):
        y = lax.conv_general_dilated(inp, w, (1, 1), [(2, 2), (2, 2)],
                                     dimension_numbers=("NCHW", "OIHW", "NCHW"))
        return y + b[None, :, None, None]

    f = jax.nn.sigmoid(conv(cat, params["w_forget"], params["b_forget"]))
    i = jax.nn.sigmoid(conv(cat, params["w_input"], params["b_input"]))
    o = jax.nn.sigmoid(conv(cat, params["w_output"], params["b_output"]))
    g = jnp.tanh(conv(cat, params["w_state"], params["b_state"]))
    c_new = f * c_g + i * g
    h_new = o * jnp.tanh(c_new)

    # ConvTranspose2d(k=4, s=4, p=0, bias=False) as a dilated convolution
    w_t = params["w_up"]                                  # (in, out, 4, 4)
    w_conv = jnp.transpose(w_t, (1, 0, 2, 3))[:, :, ::-1, ::-1]
    u_delta = lax.conv_general_dilated(h_new, w_conv, (1, 1), [(3, 3), (3, 3)],
                                       lhs_dilation=(4, 4),
                                       dimension_numbers=("NCHW", "OIHW", "NCHW"))
    return c_new, h_new, u_delta + u


# ---------------------------------------------------------------------------

if __name__ == "__main__":
    key = jax.random.PRNGKey(0)
    B, r_dim, z_dim, h_dim = 2, 32, 8, 32
    kp, k1, k2, k3, k4, k5 = jax.random.split(key, 6)

    params = init_params(kp, r_dim, z_dim, h_dim)
    packed = pack_params(params)        # weight repacking done once

    r = jax.random.normal(k1, (B, r_dim, 1, 1), jnp.float32)       # representation
    c_g = jax.random.normal(k2, (B, h_dim, 16, 16), jnp.float32)   # cell state
    h_g = jax.random.normal(k3, (B, h_dim, 16, 16), jnp.float32)   # hidden state
    u = jax.random.normal(k4, (B, h_dim, 64, 64), jnp.float32)     # canvas
    z = jax.random.normal(k5, (B, z_dim, 16, 16), jnp.float32)     # latent

    fwd = jax.jit(generation_core_forward)
    c_new, h_new, u_new = fwd(packed, r, c_g, h_g, u, z)
    jax.block_until_ready((c_new, h_new, u_new))

    c_r, h_r, u_r = _ref_forward(params, r, c_g, h_g, u, z)
    np.testing.assert_allclose(np.asarray(c_new), np.asarray(c_r), atol=5e-2, rtol=5e-2)
    np.testing.assert_allclose(np.asarray(h_new), np.asarray(h_r), atol=5e-2, rtol=5e-2)
    np.testing.assert_allclose(np.asarray(u_new), np.asarray(u_r), atol=5e-2, rtol=5e-2)
    assert c_new.shape == (B, h_dim, 16, 16)
    assert h_new.shape == (B, h_dim, 16, 16)
    assert u_new.shape == (B, h_dim, 64, 64)

    print("KERNEL_OK")
</pallas_src>

<mosaic_0001>
module attributes {stable_mosaic.version = 11 : i64} {
  func.func @_generation_core_kernel(%arg0: i32, %arg1: memref<1x20x20x40xf32, #tpu.memory_space<vmem>>, %arg2: memref<1x256x32xf32, #tpu.memory_space<vmem>>, %arg3: memref<1x256x512xf32, #tpu.memory_space<vmem>>, %arg4: memref<25x40x128xbf16, #tpu.memory_space<vmem>>, %arg5: memref<1x128xf32, #tpu.memory_space<vmem>>, %arg6: memref<32x512xbf16, #tpu.memory_space<vmem>>, %arg7: memref<1x256x32xf32, #tpu.memory_space<vmem>>, %arg8: memref<1x256x32xf32, #tpu.memory_space<vmem>>, %arg9: memref<1x256x512xf32, #tpu.memory_space<vmem>>) attributes {dimension_semantics = [#tpu.dimension_semantics<parallel>], iteration_bounds = array<i64: 2>, scalar_prefetch = 0 : i64, scratch_operands = 0 : i64, tpu.core_type = #tpu.core_type<tc>, window_params = [{transform_indices = @transform_0, window_bounds = array<i64: 1, 20, 20, 40>}, {transform_indices = @transform_1, window_bounds = array<i64: 1, 256, 32>}, {transform_indices = @transform_2, window_bounds = array<i64: 1, 256, 512>}, {pipeline_mode = #tpu.pipeline_mode<synchronous>, transform_indices = @transform_3, window_bounds = array<i64: 25, 40, 128>}, {pipeline_mode = #tpu.pipeline_mode<synchronous>, transform_indices = @transform_4, window_bounds = array<i64: 1, 128>}, {pipeline_mode = #tpu.pipeline_mode<synchronous>, transform_indices = @transform_5, window_bounds = array<i64: 32, 512>}, {transform_indices = @transform_6, window_bounds = array<i64: 1, 256, 32>}, {transform_indices = @transform_7, window_bounds = array<i64: 1, 256, 32>}, {transform_indices = @transform_8, window_bounds = array<i64: 1, 256, 512>}]} {
    %c0 = arith.constant 0 : index
    %c0_0 = arith.constant 0 : index
    %c0_1 = arith.constant 0 : index
    %c0_2 = arith.constant 0 : index
    %0 = vector.load %arg1[%c0, %c0_0, %c0_1, %c0_2] : memref<1x20x20x40xf32, #tpu.memory_space<vmem>>, vector<1x20x20x40xf32>
    %1 = vector.shape_cast %0 : vector<1x20x20x40xf32> to vector<20x20x40xf32>
    %cst = arith.constant 0.000000e+00 : f32
    %2 = vector.broadcast %cst : f32 to vector<256x128xf32>
    %3 = vector.extract_strided_slice %1 {offsets = [0, 0, 0], sizes = [16, 16, 40], strides = [1, 1, 1]} : vector<20x20x40xf32> to vector<16x16x40xf32>
    %4 = vector.shape_cast %3 : vector<16x16x40xf32> to vector<256x40xf32>
    %5 = arith.truncf %4 : vector<256x40xf32> to vector<256x40xbf16>
    %c0_3 = arith.constant 0 : index
    %c0_4 = arith.constant 0 : index
    %c0_5 = arith.constant 0 : index
    %6 = vector.load %arg4[%c0_3, %c0_4, %c0_5] : memref<25x40x128xbf16, #tpu.memory_space<vmem>>, vector<1x40x128xbf16>
    %7 = vector.shape_cast %6 : vector<1x40x128xbf16> to vector<40x128xbf16>
    %cst_6 = arith.constant dense<0.000000e+00> : vector<256x128xf32>
    %8 = tpu.matmul %5, %7, %cst_6 {dimension_numbers = #tpu.dot_dimension_numbers<[1], [0], [0], [1], [0, 0, 1, 1], [], []>} : vector<256x40xbf16>, vector<40x128xbf16>, vector<256x128xf32> -> vector<256x128xf32>
    %9 = arith.addf %2, %8 : vector<256x128xf32>
    %10 = vector.extract_strided_slice %1 {offsets = [0, 1, 0], sizes = [16, 16, 40], strides = [1, 1, 1]} : vector<20x20x40xf32> to vector<16x16x40xf32>
    %11 = vector.shape_cast %10 : vector<16x16x40xf32> to vector<256x40xf32>
    %12 = arith.truncf %11 : vector<256x40xf32> to vector<256x40xbf16>
    %c1 = arith.constant 1 : index
    %c0_7 = arith.constant 0 : index
    %c0_8 = arith.constant 0 : index
    %13 = vector.load %arg4[%c1, %c0_7, %c0_8] : memref<25x40x128xbf16, #tpu.memory_space<vmem>>, vector<1x40x128xbf16>
    %14 = vector.shape_cast %13 : vector<1x40x128xbf16> to vector<40x128xbf16>
    %cst_9 = arith.constant dense<0.000000e+00> : vector<256x128xf32>
    %15 = tpu.matmul %12, %14, %cst_9 {dimension_numbers = #tpu.dot_dimension_numbers<[1], [0], [0], [1], [0, 0, 1, 1], [], []>} : vector<256x40xbf16>, vector<40x128xbf16>, vector<256x128xf32> -> vector<256x128xf32>
    %16 = arith.addf %9, %15 : vector<256x128xf32>
    %17 = vector.extract_strided_slice %1 {offsets = [0, 2, 0], sizes = [16, 16, 40], strides = [1, 1, 1]} : vector<20x20x40xf32> to vector<16x16x40xf32>
    %18 = vector.shape_cast %17 : vector<16x16x40xf32> to vector<256x40xf32>
    %19 = arith.truncf %18 : vector<256x40xf32> to vector<256x40xbf16>
    %c2 = arith.constant 2 : index
    %c0_10 = arith.constant 0 : index
    %c0_11 = arith.constant 0 : index
    %20 = vector.load %arg4[%c2, %c0_10, %c0_11] : memref<25x40x128xbf16, #tpu.memory_space<vmem>>, vector<1x40x128xbf16>
    %21 = vector.shape_cast %20 : vector<1x40x128xbf16> to vector<40x128xbf16>
    %cst_12 = arith.constant dense<0.000000e+00> : vector<256x128xf32>
    %22 = tpu.matmul %19, %21, %cst_12 {dimension_numbers = #tpu.dot_dimension_numbers<[1], [0], [0], [1], [0, 0, 1, 1], [], []>} : vector<256x40xbf16>, vector<40x128xbf16>, vector<256x128xf32> -> vector<256x128xf32>
    %23 = arith.addf %16, %22 : vector<256x128xf32>
    %24 = vector.extract_strided_slice %1 {offsets = [0, 3, 0], sizes = [16, 16, 40], strides = [1, 1, 1]} : vector<20x20x40xf32> to vector<16x16x40xf32>
    %25 = vector.shape_cast %24 : vector<16x16x40xf32> to vector<256x40xf32>
    %26 = arith.truncf %25 : vector<256x40xf32> to vector<256x40xbf16>
    %c3 = arith.constant 3 : index
    %c0_13 = arith.constant 0 : index
    %c0_14 = arith.constant 0 : index
    %27 = vector.load %arg4[%c3, %c0_13, %c0_14] : memref<25x40x128xbf16, #tpu.memory_space<vmem>>, vector<1x40x128xbf16>
    %28 = vector.shape_cast %27 : vector<1x40x128xbf16> to vector<40x128xbf16>
    %cst_15 = arith.constant dense<0.000000e+00> : vector<256x128xf32>
    %29 = tpu.matmul %26, %28, %cst_15 {dimension_numbers = #tpu.dot_dimension_numbers<[1], [0], [0], [1], [0, 0, 1, 1], [], []>} : vector<256x40xbf16>, vector<40x128xbf16>, vector<256x128xf32> -> vector<256x128xf32>
    %30 = arith.addf %23, %29 : vector<256x128xf32>
    %31 = vector.extract_strided_slice %1 {offsets = [0, 4, 0], sizes = [16, 16, 40], strides = [1, 1, 1]} : vector<20x20x40xf32> to vector<16x16x40xf32>
    %32 = vector.shape_cast %31 : vector<16x16x40xf32> to vector<256x40xf32>
    %33 = arith.truncf %32 : vector<256x40xf32> to vector<256x40xbf16>
    %c4 = arith.constant 4 : index
    %c0_16 = arith.constant 0 : index
    %c0_17 = arith.constant 0 : index
    %34 = vector.load %arg4[%c4, %c0_16, %c0_17] : memref<25x40x128xbf16, #tpu.memory_space<vmem>>, vector<1x40x128xbf16>
    %35 = vector.shape_cast %34 : vector<1x40x128xbf16> to vector<40x128xbf16>
    %cst_18 = arith.constant dense<0.000000e+00> : vector<256x128xf32>
    %36 = tpu.matmul %33, %35, %cst_18 {dimension_numbers = #tpu.dot_dimension_numbers<[1], [0], [0], [1], [0, 0, 1, 1], [], []>} : vector<256x40xbf16>, vector<40x128xbf16>, vector<256x128xf32> -> vector<256x128xf32>
    %37 = arith.addf %30, %36 : vector<256x128xf32>
    %38 = vector.extract_strided_slice %1 {offsets = [1, 0, 0], sizes = [16, 16, 40], strides = [1, 1, 1]} : vector<20x20x40xf32> to vector<16x16x40xf32>
    %39 = vector.shape_cast %38 : vector<16x16x40xf32> to vector<256x40xf32>
    %40 = arith.truncf %39 : vector<256x40xf32> to vector<256x40xbf16>
    %c5 = arith.constant 5 : index
    %c0_19 = arith.constant 0 : index
    %c0_20 = arith.constant 0 : index
    %41 = vector.load %arg4[%c5, %c0_19, %c0_20] : memref<25x40x128xbf16, #tpu.memory_space<vmem>>, vector<1x40x128xbf16>
    %42 = vector.shape_cast %41 : vector<1x40x128xbf16> to vector<40x128xbf16>
    %cst_21 = arith.constant dense<0.000000e+00> : vector<256x128xf32>
    %43 = tpu.matmul %40, %42, %cst_21 {dimension_numbers = #tpu.dot_dimension_numbers<[1], [0], [0], [1], [0, 0, 1, 1], [], []>} : vector<256x40xbf16>, vector<40x128xbf16>, vector<256x128xf32> -> vector<256x128xf32>
    %44 = arith.addf %37, %43 : vector<256x128xf32>
    %45 = vector.extract_strided_slice %1 {offsets = [1, 1, 0], sizes = [16, 16, 40], strides = [1, 1, 1]} : vector<20x20x40xf32> to vector<16x16x40xf32>
    %46 = vector.shape_cast %45 : vector<16x16x40xf32> to vector<256x40xf32>
    %47 = arith.truncf %46 : vector<256x40xf32> to vector<256x40xbf16>
    %c6 = arith.constant 6 : index
    %c0_22 = arith.constant 0 : index
    %c0_23 = arith.constant 0 : index
    %48 = vector.load %arg4[%c6, %c0_22, %c0_23] : memref<25x40x128xbf16, #tpu.memory_space<vmem>>, vector<1x40x128xbf16>
    %49 = vector.shape_cast %48 : vector<1x40x128xbf16> to vector<40x128xbf16>
    %cst_24 = arith.constant dense<0.000000e+00> : vector<256x128xf32>
    %50 = tpu.matmul %47, %49, %cst_24 {dimension_numbers = #tpu.dot_dimension_numbers<[1], [0], [0], [1], [0, 0, 1, 1], [], []>} : vector<256x40xbf16>, vector<40x128xbf16>, vector<256x128xf32> -> vector<256x128xf32>
    %51 = arith.addf %44, %50 : vector<256x128xf32>
    %52 = vector.extract_strided_slice %1 {offsets = [1, 2, 0], sizes = [16, 16, 40], strides = [1, 1, 1]} : vector<20x20x40xf32> to vector<16x16x40xf32>
    %53 = vector.shape_cast %52 : vector<16x16x40xf32> to vector<256x40xf32>
    %54 = arith.truncf %53 : vector<256x40xf32> to vector<256x40xbf16>
    %c7 = arith.constant 7 : index
    %c0_25 = arith.constant 0 : index
    %c0_26 = arith.constant 0 : index
    %55 = vector.load %arg4[%c7, %c0_25, %c0_26] : memref<25x40x128xbf16, #tpu.memory_space<vmem>>, vector<1x40x128xbf16>
    %56 = vector.shape_cast %55 : vector<1x40x128xbf16> to vector<40x128xbf16>
    %cst_27 = arith.constant dense<0.000000e+00> : vector<256x128xf32>
    %57 = tpu.matmul %54, %56, %cst_27 {dimension_numbers = #tpu.dot_dimension_numbers<[1], [0], [0], [1], [0, 0, 1, 1], [], []>} : vector<256x40xbf16>, vector<40x128xbf16>, vector<256x128xf32> -> vector<256x128xf32>
    %58 = arith.addf %51, %57 : vector<256x128xf32>
    %59 = vector.extract_strided_slice %1 {offsets = [1, 3, 0], sizes = [16, 16, 40], strides = [1, 1, 1]} : vector<20x20x40xf32> to vector<16x16x40xf32>
    %60 = vector.shape_cast %59 : vector<16x16x40xf32> to vector<256x40xf32>
    %61 = arith.truncf %60 : vector<256x40xf32> to vector<256x40xbf16>
    %c8 = arith.constant 8 : index
    %c0_28 = arith.constant 0 : index
    %c0_29 = arith.constant 0 : index
    %62 = vector.load %arg4[%c8, %c0_28, %c0_29] : memref<25x40x128xbf16, #tpu.memory_space<vmem>>, vector<1x40x128xbf16>
    %63 = vector.shape_cast %62 : vector<1x40x128xbf16> to vector<40x128xbf16>
    %cst_30 = arith.constant dense<0.000000e+00> : vector<256x128xf32>
    %64 = tpu.matmul %61, %63, %cst_30 {dimension_numbers = #tpu.dot_dimension_numbers<[1], [0], [0], [1], [0, 0, 1, 1], [], []>} : vector<256x40xbf16>, vector<40x128xbf16>, vector<256x128xf32> -> vector<256x128xf32>
    %65 = arith.addf %58, %64 : vector<256x128xf32>
    %66 = vector.extract_strided_slice %1 {offsets = [1, 4, 0], sizes = [16, 16, 40], strides = [1, 1, 1]} : vector<20x20x40xf32> to vector<16x16x40xf32>
    %67 = vector.shape_cast %66 : vector<16x16x40xf32> to vector<256x40xf32>
    %68 = arith.truncf %67 : vector<256x40xf32> to vector<256x40xbf16>
    %c9 = arith.constant 9 : index
    %c0_31 = arith.constant 0 : index
    %c0_32 = arith.constant 0 : index
    %69 = vector.load %arg4[%c9, %c0_31, %c0_32] : memref<25x40x128xbf16, #tpu.memory_space<vmem>>, vector<1x40x128xbf16>
    %70 = vector.shape_cast %69 : vector<1x40x128xbf16> to vector<40x128xbf16>
    %cst_33 = arith.constant dense<0.000000e+00> : vector<256x128xf32>
    %71 = tpu.matmul %68, %70, %cst_33 {dimension_numbers = #tpu.dot_dimension_numbers<[1], [0], [0], [1], [0, 0, 1, 1], [], []>} : vector<256x40xbf16>, vector<40x128xbf16>, vector<256x128xf32> -> vector<256x128xf32>
    %72 = arith.addf %65, %71 : vector<256x128xf32>
    %73 = vector.extract_strided_slice %1 {offsets = [2, 0, 0], sizes = [16, 16, 40], strides = [1, 1, 1]} : vector<20x20x40xf32> to vector<16x16x40xf32>
    %74 = vector.shape_cast %73 : vector<16x16x40xf32> to vector<256x40xf32>
    %75 = arith.truncf %74 : vector<256x40xf32> to vector<256x40xbf16>
    %c10 = arith.constant 10 : index
    %c0_34 = arith.constant 0 : index
    %c0_35 = arith.constant 0 : index
    %76 = vector.load %arg4[%c10, %c0_34, %c0_35] : memref<25x40x128xbf16, #tpu.memory_space<vmem>>, vector<1x40x128xbf16>
    %77 = vector.shape_cast %76 : vector<1x40x128xbf16> to vector<40x128xbf16>
    %cst_36 = arith.constant dense<0.000000e+00> : vector<256x128xf32>
    %78 = tpu.matmul %75, %77, %cst_36 {dimension_numbers = #tpu.dot_dimension_numbers<[1], [0], [0], [1], [0, 0, 1, 1], [], []>} : vector<256x40xbf16>, vector<40x128xbf16>, vector<256x128xf32> -> vector<256x128xf32>
    %79 = arith.addf %72, %78 : vector<256x128xf32>
    %80 = vector.extract_strided_slice %1 {offsets = [2, 1, 0], sizes = [16, 16, 40], strides = [1, 1, 1]} : vector<20x20x40xf32> to vector<16x16x40xf32>
    %81 = vector.shape_cast %80 : vector<16x16x40xf32> to vector<256x40xf32>
    %82 = arith.truncf %81 : vector<256x40xf32> to vector<256x40xbf16>
    %c11 = arith.constant 11 : index
    %c0_37 = arith.constant 0 : index
    %c0_38 = arith.constant 0 : index
    %83 = vector.load %arg4[%c11, %c0_37, %c0_38] : memref<25x40x128xbf16, #tpu.memory_space<vmem>>, vector<1x40x128xbf16>
    %84 = vector.shape_cast %83 : vector<1x40x128xbf16> to vector<40x128xbf16>
    %cst_39 = arith.constant dense<0.000000e+00> : vector<256x128xf32>
    %85 = tpu.matmul %82, %84, %cst_39 {dimension_numbers = #tpu.dot_dimension_numbers<[1], [0], [0], [1], [0, 0, 1, 1], [], []>} : vector<256x40xbf16>, vector<40x128xbf16>, vector<256x128xf32> -> vector<256x128xf32>
    %86 = arith.addf %79, %85 : vector<256x128xf32>
    %87 = vector.extract_strided_slice %1 {offsets = [2, 2, 0], sizes = [16, 16, 40], strides = [1, 1, 1]} : vector<20x20x40xf32> to vector<16x16x40xf32>
    %88 = vector.shape_cast %87 : vector<16x16x40xf32> to vector<256x40xf32>
    %89 = arith.truncf %88 : vector<256x40xf32> to vector<256x40xbf16>
    %c12 = arith.constant 12 : index
    %c0_40 = arith.constant 0 : index
    %c0_41 = arith.constant 0 : index
    %90 = vector.load %arg4[%c12, %c0_40, %c0_41] : memref<25x40x128xbf16, #tpu.memory_space<vmem>>, vector<1x40x128xbf16>
    %91 = vector.shape_cast %90 : vector<1x40x128xbf16> to vector<40x128xbf16>
    %cst_42 = arith.constant dense<0.000000e+00> : vector<256x128xf32>
    %92 = tpu.matmul %89, %91, %cst_42 {dimension_numbers = #tpu.dot_dimension_numbers<[1], [0], [0], [1], [0, 0, 1, 1], [], []>} : vector<256x40xbf16>, vector<40x128xbf16>, vector<256x128xf32> -> vector<256x128xf32>
    %93 = arith.addf %86, %92 : vector<256x128xf32>
    %94 = vector.extract_strided_slice %1 {offsets = [2, 3, 0], sizes = [16, 16, 40], strides = [1, 1, 1]} : vector<20x20x40xf32> to vector<16x16x40xf32>
    %95 = vector.shape_cast %94 : vector<16x16x40xf32> to vector<256x40xf32>
    %96 = arith.truncf %95 : vector<256x40xf32> to vector<256x40xbf16>
    %c13 = arith.constant 13 : index
    %c0_43 = arith.constant 0 : index
    %c0_44 = arith.constant 0 : index
    %97 = vector.load %arg4[%c13, %c0_43, %c0_44] : memref<25x40x128xbf16, #tpu.memory_space<vmem>>, vector<1x40x128xbf16>
    %98 = vector.shape_cast %97 : vector<1x40x128xbf16> to vector<40x128xbf16>
    %cst_45 = arith.constant dense<0.000000e+00> : vector<256x128xf32>
    %99 = tpu.matmul %96, %98, %cst_45 {dimension_numbers = #tpu.dot_dimension_numbers<[1], [0], [0], [1], [0, 0, 1, 1], [], []>} : vector<256x40xbf16>, vector<40x128xbf16>, vector<256x128xf32> -> vector<256x128xf32>
    %100 = arith.addf %93, %99 : vector<256x128xf32>
    %101 = vector.extract_strided_slice %1 {offsets = [2, 4, 0], sizes = [16, 16, 40], strides = [1, 1, 1]} : vector<20x20x40xf32> to vector<16x16x40xf32>
    %102 = vector.shape_cast %101 : vector<16x16x40xf32> to vector<256x40xf32>
    %103 = arith.truncf %102 : vector<256x40xf32> to vector<256x40xbf16>
    %c14 = arith.constant 14 : index
    %c0_46 = arith.constant 0 : index
    %c0_47 = arith.constant 0 : index
    %104 = vector.load %arg4[%c14, %c0_46, %c0_47] : memref<25x40x128xbf16, #tpu.memory_space<vmem>>, vector<1x40x128xbf16>
    %105 = vector.shape_cast %104 : vector<1x40x128xbf16> to vector<40x128xbf16>
    %cst_48 = arith.constant dense<0.000000e+00> : vector<256x128xf32>
    %106 = tpu.matmul %103, %105, %cst_48 {dimension_numbers = #tpu.dot_dimension_numbers<[1], [0], [0], [1], [0, 0, 1, 1], [], []>} : vector<256x40xbf16>, vector<40x128xbf16>, vector<256x128xf32> -> vector<256x128xf32>
    %107 = arith.addf %100, %106 : vector<256x128xf32>
    %108 = vector.extract_strided_slice %1 {offsets = [3, 0, 0], sizes = [16, 16, 40], strides = [1, 1, 1]} : vector<20x20x40xf32> to vector<16x16x40xf32>
    %109 = vector.shape_cast %108 : vector<16x16x40xf32> to vector<256x40xf32>
    %110 = arith.truncf %109 : vector<256x40xf32> to vector<256x40xbf16>
    %c15 = arith.constant 15 : index
    %c0_49 = arith.constant 0 : index
    %c0_50 = arith.constant 0 : index
    %111 = vector.load %arg4[%c15, %c0_49, %c0_50] : memref<25x40x128xbf16, #tpu.memory_space<vmem>>, vector<1x40x128xbf16>
    %112 = vector.shape_cast %111 : vector<1x40x128xbf16> to vector<40x128xbf16>
    %cst_51 = arith.constant dense<0.000000e+00> : vector<256x128xf32>
    %113 = tpu.matmul %110, %112, %cst_51 {dimension_numbers = #tpu.dot_dimension_numbers<[1], [0], [0], [1], [0, 0, 1, 1], [], []>} : vector<256x40xbf16>, vector<40x128xbf16>, vector<256x128xf32> -> vector<256x128xf32>
    %114 = arith.addf %107, %113 : vector<256x128xf32>
    %115 = vector.extract_strided_slice %1 {offsets = [3, 1, 0], sizes = [16, 16, 40], strides = [1, 1, 1]} : vector<20x20x40xf32> to vector<16x16x40xf32>
    %116 = vector.shape_cast %115 : vector<16x16x40xf32> to vector<256x40xf32>
    %117 = arith.truncf %116 : vector<256x40xf32> to vector<256x40xbf16>
    %c16 = arith.constant 16 : index
    %c0_52 = arith.constant 0 : index
    %c0_53 = arith.constant 0 : index
    %118 = vector.load %arg4[%c16, %c0_52, %c0_53] : memref<25x40x128xbf16, #tpu.memory_space<vmem>>, vector<1x40x128xbf16>
    %119 = vector.shape_cast %118 : vector<1x40x128xbf16> to vector<40x128xbf16>
    %cst_54 = arith.constant dense<0.000000e+00> : vector<256x128xf32>
    %120 = tpu.matmul %117, %119, %cst_54 {dimension_numbers = #tpu.dot_dimension_numbers<[1], [0], [0], [1], [0, 0, 1, 1], [], []>} : vector<256x40xbf16>, vector<40x128xbf16>, vector<256x128xf32> -> vector<256x128xf32>
    %121 = arith.addf %114, %120 : vector<256x128xf32>
    %122 = vector.extract_strided_slice %1 {offsets = [3, 2, 0], sizes = [16, 16, 40], strides = [1, 1, 1]} : vector<20x20x40xf32> to vector<16x16x40xf32>
    %123 = vector.shape_cast %122 : vector<16x16x40xf32> to vector<256x40xf32>
    %124 = arith.truncf %123 : vector<256x40xf32> to vector<256x40xbf16>
    %c17 = arith.constant 17 : index
    %c0_55 = arith.constant 0 : index
    %c0_56 = arith.constant 0 : index
    %125 = vector.load %arg4[%c17, %c0_55, %c0_56] : memref<25x40x128xbf16, #tpu.memory_space<vmem>>, vector<1x40x128xbf16>
    %126 = vector.shape_cast %125 : vector<1x40x128xbf16> to vector<40x128xbf16>
    %cst_57 = arith.constant dense<0.000000e+00> : vector<256x128xf32>
    %127 = tpu.matmul %124, %126, %cst_57 {dimension_numbers = #tpu.dot_dimension_numbers<[1], [0], [0], [1], [0, 0, 1, 1], [], []>} : vector<256x40xbf16>, vector<40x128xbf16>, vector<256x128xf32> -> vector<256x128xf32>
    %128 = arith.addf %121, %127 : vector<256x128xf32>
    %129 = vector.extract_strided_slice %1 {offsets = [3, 3, 0], sizes = [16, 16, 40], strides = [1, 1, 1]} : vector<20x20x40xf32> to vector<16x16x40xf32>
    %130 = vector.shape_cast %129 : vector<16x16x40xf32> to vector<256x40xf32>
    %131 = arith.truncf %130 : vector<256x40xf32> to vector<256x40xbf16>
    %c18 = arith.constant 18 : index
    %c0_58 = arith.constant 0 : index
    %c0_59 = arith.constant 0 : index
    %132 = vector.load %arg4[%c18, %c0_58, %c0_59] : memref<25x40x128xbf16, #tpu.memory_space<vmem>>, vector<1x40x128xbf16>
    %133 = vector.shape_cast %132 : vector<1x40x128xbf16> to vector<40x128xbf16>
    %cst_60 = arith.constant dense<0.000000e+00> : vector<256x128xf32>
    %134 = tpu.matmul %131, %133, %cst_60 {dimension_numbers = #tpu.dot_dimension_numbers<[1], [0], [0], [1], [0, 0, 1, 1], [], []>} : vector<256x40xbf16>, vector<40x128xbf16>, vector<256x128xf32> -> vector<256x128xf32>
    %135 = arith.addf %128, %134 : vector<256x128xf32>
    %136 = vector.extract_strided_slice %1 {offsets = [3, 4, 0], sizes = [16, 16, 40], strides = [1, 1, 1]} : vector<20x20x40xf32> to vector<16x16x40xf32>
    %137 = vector.shape_cast %136 : vector<16x16x40xf32> to vector<256x40xf32>
    %138 = arith.truncf %137 : vector<256x40xf32> to vector<256x40xbf16>
    %c19 = arith.constant 19 : index
    %c0_61 = arith.constant 0 : index
    %c0_62 = arith.constant 0 : index
    %139 = vector.load %arg4[%c19, %c0_61, %c0_62] : memref<25x40x128xbf16, #tpu.memory_space<vmem>>, vector<1x40x128xbf16>
    %140 = vector.shape_cast %139 : vector<1x40x128xbf16> to vector<40x128xbf16>
    %cst_63 = arith.constant dense<0.000000e+00> : vector<256x128xf32>
    %141 = tpu.matmul %138, %140, %cst_63 {dimension_numbers = #tpu.dot_dimension_numbers<[1], [0], [0], [1], [0, 0, 1, 1], [], []>} : vector<256x40xbf16>, vector<40x128xbf16>, vector<256x128xf32> -> vector<256x128xf32>
    %142 = arith.addf %135, %141 : vector<256x128xf32>
    %143 = vector.extract_strided_slice %1 {offsets = [4, 0, 0], sizes = [16, 16, 40], strides = [1, 1, 1]} : vector<20x20x40xf32> to vector<16x16x40xf32>
    %144 = vector.shape_cast %143 : vector<16x16x40xf32> to vector<256x40xf32>
    %145 = arith.truncf %144 : vector<256x40xf32> to vector<256x40xbf16>
    %c20 = arith.constant 20 : index
    %c0_64 = arith.constant 0 : index
    %c0_65 = arith.constant 0 : index
    %146 = vector.load %arg4[%c20, %c0_64, %c0_65] : memref<25x40x128xbf16, #tpu.memory_space<vmem>>, vector<1x40x128xbf16>
    %147 = vector.shape_cast %146 : vector<1x40x128xbf16> to vector<40x128xbf16>
    %cst_66 = arith.constant dense<0.000000e+00> : vector<256x128xf32>
    %148 = tpu.matmul %145, %147, %cst_66 {dimension_numbers = #tpu.dot_dimension_numbers<[1], [0], [0], [1], [0, 0, 1, 1], [], []>} : vector<256x40xbf16>, vector<40x128xbf16>, vector<256x128xf32> -> vector<256x128xf32>
    %149 = arith.addf %142, %148 : vector<256x128xf32>
    %150 = vector.extract_strided_slice %1 {offsets = [4, 1, 0], sizes = [16, 16, 40], strides = [1, 1, 1]} : vector<20x20x40xf32> to vector<16x16x40xf32>
    %151 = vector.shape_cast %150 : vector<16x16x40xf32> to vector<256x40xf32>
    %152 = arith.truncf %151 : vector<256x40xf32> to vector<256x40xbf16>
    %c21 = arith.constant 21 : index
    %c0_67 = arith.constant 0 : index
    %c0_68 = arith.constant 0 : index
    %153 = vector.load %arg4[%c21, %c0_67, %c0_68] : memref<25x40x128xbf16, #tpu.memory_space<vmem>>, vector<1x40x128xbf16>
    %154 = vector.shape_cast %153 : vector<1x40x128xbf16> to vector<40x128xbf16>
    %cst_69 = arith.constant dense<0.000000e+00> : vector<256x128xf32>
    %155 = tpu.matmul %152, %154, %cst_69 {dimension_numbers = #tpu.dot_dimension_numbers<[1], [0], [0], [1], [0, 0, 1, 1], [], []>} : vector<256x40xbf16>, vector<40x128xbf16>, vector<256x128xf32> -> vector<256x128xf32>
    %156 = arith.addf %149, %155 : vector<256x128xf32>
    %157 = vector.extract_strided_slice %1 {offsets = [4, 2, 0], sizes = [16, 16, 40], strides = [1, 1, 1]} : vector<20x20x40xf32> to vector<16x16x40xf32>
    %158 = vector.shape_cast %157 : vector<16x16x40xf32> to vector<256x40xf32>
    %159 = arith.truncf %158 : vector<256x40xf32> to vector<256x40xbf16>
    %c22 = arith.constant 22 : index
    %c0_70 = arith.constant 0 : index
    %c0_71 = arith.constant 0 : index
    %160 = vector.load %arg4[%c22, %c0_70, %c0_71] : memref<25x40x128xbf16, #tpu.memory_space<vmem>>, vector<1x40x128xbf16>
    %161 = vector.shape_cast %160 : vector<1x40x128xbf16> to vector<40x128xbf16>
    %cst_72 = arith.constant dense<0.000000e+00> : vector<256x128xf32>
    %162 = tpu.matmul %159, %161, %cst_72 {dimension_numbers = #tpu.dot_dimension_numbers<[1], [0], [0], [1], [0, 0, 1, 1], [], []>} : vector<256x40xbf16>, vector<40x128xbf16>, vector<256x128xf32> -> vector<256x128xf32>
    %163 = arith.addf %156, %162 : vector<256x128xf32>
    %164 = vector.extract_strided_slice %1 {offsets = [4, 3, 0], sizes = [16, 16, 40], strides = [1, 1, 1]} : vector<20x20x40xf32> to vector<16x16x40xf32>
    %165 = vector.shape_cast %164 : vector<16x16x40xf32> to vector<256x40xf32>
    %166 = arith.truncf %165 : vector<256x40xf32> to vector<256x40xbf16>
    %c23 = arith.constant 23 : index
    %c0_73 = arith.constant 0 : index
    %c0_74 = arith.constant 0 : index
    %167 = vector.load %arg4[%c23, %c0_73, %c0_74] : memref<25x40x128xbf16, #tpu.memory_space<vmem>>, vector<1x40x128xbf16>
    %168 = vector.shape_cast %167 : vector<1x40x128xbf16> to vector<40x128xbf16>
    %cst_75 = arith.constant dense<0.000000e+00> : vector<256x128xf32>
    %169 = tpu.matmul %166, %168, %cst_75 {dimension_numbers = #tpu.dot_dimension_numbers<[1], [0], [0], [1], [0, 0, 1, 1], [], []>} : vector<256x40xbf16>, vector<40x128xbf16>, vector<256x128xf32> -> vector<256x128xf32>
    %170 = arith.addf %163, %169 : vector<256x128xf32>
    %171 = vector.extract_strided_slice %1 {offsets = [4, 4, 0], sizes = [16, 16, 40], strides = [1, 1, 1]} : vector<20x20x40xf32> to vector<16x16x40xf32>
    %172 = vector.shape_cast %171 : vector<16x16x40xf32> to vector<256x40xf32>
    %173 = arith.truncf %172 : vector<256x40xf32> to vector<256x40xbf16>
    %c24 = arith.constant 24 : index
    %c0_76 = arith.constant 0 : index
    %c0_77 = arith.constant 0 : index
    %174 = vector.load %arg4[%c24, %c0_76, %c0_77] : memref<25x40x128xbf16, #tpu.memory_space<vmem>>, vector<1x40x128xbf16>
    %175 = vector.shape_cast %174 : vector<1x40x128xbf16> to vector<40x128xbf16>
    %cst_78 = arith.constant dense<0.000000e+00> : vector<256x128xf32>
    %176 = tpu.matmul %173, %175, %cst_78 {dimension_numbers = #tpu.dot_dimension_numbers<[1], [0], [0], [1], [0, 0, 1, 1], [], []>} : vector<256x40xbf16>, vector<40x128xbf16>, vector<256x128xf32> -> vector<256x128xf32>
    %177 = arith.addf %170, %176 : vector<256x128xf32>
    %c0_79 = arith.constant 0 : index
    %c0_80 = arith.constant 0 : index
    %178 = vector.load %arg5[%c0_79, %c0_80] : memref<1x128xf32, #tpu.memory_space<vmem>>, vector<1x128xf32>
    %179 = vector.broadcast %178 : vector<1x128xf32> to vector<256x128xf32>
    %180 = arith.addf %177, %179 : vector<256x128xf32>
    %181 = vector.extract_strided_slice %180 {offsets = [0, 0], sizes = [256, 32], strides = [1, 1]} : vector<256x128xf32> to vector<256x32xf32>
    %182 = arith.negf %181 : vector<256x32xf32>
    %183 = math.exp %182 : vector<256x32xf32>
    %cst_81 = arith.constant 1.000000e+00 : f32
    %184 = vector.broadcast %cst_81 : f32 to vector<256x32xf32>
    %185 = arith.addf %184, %183 : vector<256x32xf32>
    %186 = arith.divf %184, %185 : vector<256x32xf32>
    %187 = vector.extract_strided_slice %180 {offsets = [0, 32], sizes = [256, 32], strides = [1, 1]} : vector<256x128xf32> to vector<256x32xf32>
    %188 = arith.negf %187 : vector<256x32xf32>
    %189 = math.exp %188 : vector<256x32xf32>
    %cst_82 = arith.constant 1.000000e+00 : f32
    %190 = vector.broadcast %cst_82 : f32 to vector<256x32xf32>
    %191 = arith.addf %190, %189 : vector<256x32xf32>
    %192 = arith.divf %190, %191 : vector<256x32xf32>
    %193 = vector.extract_strided_slice %180 {offsets = [0, 64], sizes = [256, 32], strides = [1, 1]} : vector<256x128xf32> to vector<256x32xf32>
    %194 = arith.negf %193 : vector<256x32xf32>
    %195 = math.exp %194 : vector<256x32xf32>
    %cst_83 = arith.constant 1.000000e+00 : f32
    %196 = vector.broadcast %cst_83 : f32 to vector<256x32xf32>
    %197 = arith.addf %196, %195 : vector<256x32xf32>
    %198 = arith.divf %196, %197 : vector<256x32xf32>
    %199 = vector.extract_strided_slice %180 {offsets = [0, 96], sizes = [256, 32], strides = [1, 1]} : vector<256x128xf32> to vector<256x32xf32>
    %200 = math.tanh %199 : vector<256x32xf32>
    %c0_84 = arith.constant 0 : index
    %c0_85 = arith.constant 0 : index
    %c0_86 = arith.constant 0 : index
    %201 = vector.load %arg2[%c0_84, %c0_85, %c0_86] : memref<1x256x32xf32, #tpu.memory_space<vmem>>, vector<1x256x32xf32>
    %202 = vector.shape_cast %201 : vector<1x256x32xf32> to vector<256x32xf32>
    %203 = arith.mulf %186, %202 : vector<256x32xf32>
    %204 = arith.mulf %192, %200 : vector<256x32xf32>
    %205 = arith.addf %203, %204 : vector<256x32xf32>
    %206 = math.tanh %205 : vector<256x32xf32>
    %207 = arith.mulf %198, %206 : vector<256x32xf32>
    %c0_87 = arith.constant 0 : index
    %c0_88 = arith.constant 0 : index
    %c0_89 = arith.constant 0 : index
    %208 = vector.load %arg7[%c0_87, %c0_88, %c0_89] : memref<1x256x32xf32, #tpu.memory_space<vmem>>, vector<1x256x32xf32>
    %209 = vector.shape_cast %208 : vector<1x256x32xf32> to vector<256x32xf32>
    %210 = vector.shape_cast %205 : vector<256x32xf32> to vector<1x256x32xf32>
    tpu.vector_store %arg7[%c0_87, %c0_88, %c0_89], %210 {strides = array<i32>} : memref<1x256x32xf32, #tpu.memory_space<vmem>>, vector<1x256x32xf32>,
    %c0_90 = arith.constant 0 : index
    %c0_91 = arith.constant 0 : index
    %c0_92 = arith.constant 0 : index
    %211 = vector.load %arg8[%c0_90, %c0_91, %c0_92] : memref<1x256x32xf32, #tpu.memory_space<vmem>>, vector<1x256x32xf32>
    %212 = vector.shape_cast %211 : vector<1x256x32xf32> to vector<256x32xf32>
    %213 = vector.shape_cast %207 : vector<256x32xf32> to vector<1x256x32xf32>
    tpu.vector_store %arg8[%c0_90, %c0_91, %c0_92], %213 {strides = array<i32>} : memref<1x256x32xf32, #tpu.memory_space<vmem>>, vector<1x256x32xf32>,
    %214 = arith.truncf %207 : vector<256x32xf32> to vector<256x32xbf16>
    %c0_93 = arith.constant 0 : index
    %c0_94 = arith.constant 0 : index
    %215 = vector.load %arg6[%c0_93, %c0_94] : memref<32x512xbf16, #tpu.memory_space<vmem>>, vector<32x512xbf16>
    %cst_95 = arith.constant dense<0.000000e+00> : vector<256x512xf32>
    %216 = tpu.matmul %214, %215, %cst_95 {dimension_numbers = #tpu.dot_dimension_numbers<[1], [0], [0], [1], [0, 0, 1, 1], [], []>} : vector<256x32xbf16>, vector<32x512xbf16>, vector<256x512xf32> -> vector<256x512xf32>
    %c0_96 = arith.constant 0 : index
    %c0_97 = arith.constant 0 : index
    %c0_98 = arith.constant 0 : index
    %217 = vector.load %arg3[%c0_96, %c0_97, %c0_98] : memref<1x256x512xf32, #tpu.memory_space<vmem>>, vector<1x256x512xf32>
    %218 = vector.shape_cast %217 : vector<1x256x512xf32> to vector<256x512xf32>
    %219 = arith.addf %216, %218 : vector<256x512xf32>
    %c0_99 = arith.constant 0 : index
    %c0_100 = arith.constant 0 : index
    %c0_101 = arith.constant 0 : index
    %220 = vector.load %arg9[%c0_99, %c0_100, %c0_101] : memref<1x256x512xf32, #tpu.memory_space<vmem>>, vector<1x256x512xf32>
    %221 = vector.shape_cast %220 : vector<1x256x512xf32> to vector<256x512xf32>
    %222 = vector.shape_cast %219 : vector<256x512xf32> to vector<1x256x512xf32>
    tpu.vector_store %arg9[%c0_99, %c0_100, %c0_101], %222 {strides = array<i32>} : memref<1x256x512xf32, #tpu.memory_space<vmem>>, vector<1x256x512xf32>,
    return
  }
  func.func @transform_0(%arg0: i32) -> (i32, i32, i32, i32) {
    %c0_i32 = arith.constant 0 : i32
    %c0_i32_0 = arith.constant 0 : i32
    %c0_i32_1 = arith.constant 0 : i32
    %c0_i32_2 = arith.constant 0 : i32
    return %arg0, %c0_i32, %c0_i32_0, %c0_i32_1 : i32, i32, i32, i32
  }
  func.func @transform_1(%arg0: i32) -> (i32, i32, i32) {
    %c0_i32 = arith.constant 0 : i32
    %c0_i32_0 = arith.constant 0 : i32
    %c0_i32_1 = arith.constant 0 : i32
    return %arg0, %c0_i32, %c0_i32_0 : i32, i32, i32
  }
  func.func @transform_2(%arg0: i32) -> (i32, i32, i32) {
    %c0_i32 = arith.constant 0 : i32
    %c0_i32_0 = arith.constant 0 : i32
    %c0_i32_1 = arith.constant 0 : i32
    return %arg0, %c0_i32, %c0_i32_0 : i32, i32, i32
  }
  func.func @transform_3(%arg0: i32) -> (i32, i32, i32) {
    %c0_i32 = arith.constant 0 : i32
    %c0_i32_0 = arith.constant 0 : i32
    %c0_i32_1 = arith.constant 0 : i32
    %c0_i32_2 = arith.constant 0 : i32
    return %c0_i32, %c0_i32_0, %c0_i32_1 : i32, i32, i32
  }
  func.func @transform_4(%arg0: i32) -> (i32, i32) {
    %c0_i32 = arith.constant 0 : i32
    %c0_i32_0 = arith.constant 0 : i32
    %c0_i32_1 = arith.constant 0 : i32
    return %c0_i32, %c0_i32_0 : i32, i32
  }
  func.func @transform_5(%arg0: i32) -> (i32, i32) {
    %c0_i32 = arith.constant 0 : i32
    %c0_i32_0 = arith.constant 0 : i32
    %c0_i32_1 = arith.constant 0 : i32
    return %c0_i32, %c0_i32_0 : i32, i32
  }
  func.func @transform_6(%arg0: i32) -> (i32, i32, i32) {
    %c0_i32 = arith.constant 0 : i32
    %c0_i32_0 = arith.constant 0 : i32
    %c0_i32_1 = arith.constant 0 : i32
    return %arg0, %c0_i32, %c0_i32_0 : i32, i32, i32
  }
  func.func @transform_7(%arg0: i32) -> (i32, i32, i32) {
    %c0_i32 = arith.constant 0 : i32
    %c0_i32_0 = arith.constant 0 : i32
    %c0_i32_1 = arith.constant 0 : i32
    return %arg0, %c0_i32, %c0_i32_0 : i32, i32, i32
  }
  func.func @transform_8(%arg0: i32) -> (i32, i32, i32) {
    %c0_i32 = arith.constant 0 : i32
    %c0_i32_0 = arith.constant 0 : i32
    %c0_i32_1 = arith.constant 0 : i32
    return %arg0, %c0_i32, %c0_i32_0 : i32, i32, i32
  }
}

</mosaic_0001>

<llo_original>
// kernel: generation_core_forward.1
$region0: #{generation_core_forward.1}
  #allocation0 [shape = 'u32[]', space=smem, size = 0x4, offset = 0x4, fixed_abs, tag = 'smem constant byte address 0x4 - core index']
  #allocation1 [shape = 'u32[72,128]{1,0:T(1,128)}', space=vmem, size = 0x9000, scoped, tag = 'internal scratch']
  %s0 = inlined_call_operand.vmem [shape: f32[2,20,20,40], index: 0, kind: input, shape index: {}]
  %s1 = inlined_call_operand.vmem [shape: f32[2,256,32], index: 1, kind: input, shape index: {}]
  %s2 = inlined_call_operand.vmem [shape: f32[2,256,512], index: 2, kind: input, shape index: {}]
  %s3 = inlined_call_operand.vmem [shape: bf16[25,40,128], index: 3, kind: input, shape index: {}]
  %s4 = inlined_call_operand.vmem [shape: f32[1,128], index: 4, kind: input, shape index: {}]
  %s5 = inlined_call_operand.vmem [shape: bf16[32,512], index: 5, kind: input, shape index: {}]
  %s6 = inlined_call_operand.hbm [shape: f32[2,256,32], index: 6, kind: output, shape index: {0}]
  %s7 = inlined_call_operand.hbm [shape: f32[2,256,32], index: 7, kind: output, shape index: {1}]
  %s8 = inlined_call_operand.vmem [shape: f32[2,256,512], index: 8, kind: output, shape index: {2}]
  %9 = xla_tuple %s6, %s7, %s8
  %s10 = sld [smem:[#allocation0]]
  $region73: #{generation_core_forward.1} parent=0
    _
  %s12 = ssub.s32 1, %s10
  %s13 = scalar_select 0, %s12, %s10
  $region1: #{generation_core_forward.1} parent=0
    #allocation2 [shape = 'u8[262144]{0}', space=vmem, size = 0x40000, scoped, tag = 'output window, operand 0']
    #allocation3 [shape = 's32[2]{0}', space=sflag, size = 0x8, scoped, tag = 'scoped memory for generation_core_forward.1']
    #allocation4 [shape = 'u8[262144]{0}', space=vmem, size = 0x40000, scoped, tag = 'output window, operand 1']
    #allocation5 [shape = 's32[2]{0}', space=sflag, size = 0x8, scoped, tag = 'scoped memory for generation_core_forward.1']
    %14 = vsyncpa [#allocation3], 0
    %s15 = scalar_lea.sflag [#allocation3], 1
    %16 = vsyncpa %s15, 0
    %17 = vsyncpa [#allocation5], 0
    %s18 = scalar_lea.sflag [#allocation5], 1
    %19 = vsyncpa %s18, 0
    loop: start=0, step=1, limit=4
    $region2: #{generation_core_forward.1} parent=1 // loop_pre_header
      _
    $region3: #{generation_core_forward.1} parent=1 // loop_header
      %s21 = sphi 0, %s25
      %p22 = scmp.ge.s32.totalorder %s21, 4
      %s31 = sphi 0, %s33
      %s34 = sphi 0, %s31
      %s35 = sphi 0, %s34
      %s51 = sphi 0, %s35
      %s57 = sphi 0, %s59
      %s60 = sphi 0, %s57
      %s61 = sphi 0, %s60
      %s77 = sphi 0, %s61
      %s83 = sphi 0, %s85
      %s86 = sphi 0, %s83
      %s87 = sphi 0, %s86
      %s103 = sphi 0, %s87
      %s107 = sphi 0, %s107
      %s109 = sphi 0, %s107
      %s110 = sphi 0, %s109
      %s124 = sphi 0, %s110
      %s128 = sphi 0, %s128
      %s130 = sphi 0, %s128
      %s131 = sphi 0, %s130
      %s145 = sphi 0, %s131
      %s149 = sphi 0, %s149
      %s151 = sphi 0, %s149
      %s152 = sphi 0, %s151
      %s166 = sphi 0, %s152
      %s172 = sphi 0, %s174
      %s175 = sphi 0, %s172
      %s176 = sphi 0, %s175
      %s192 = sphi 0, %s176
      %s198 = sphi 0, %s200
      %s201 = sphi 0, %s198
      %s202 = sphi 0, %s201
      %s218 = sphi 0, %s202
      %s224 = sphi 0, %s226
      %s227 = sphi 0, %s224
      %s228 = sphi 0, %s227
      %s244 = sphi 0, %s228
    $region4: #{generation_core_forward.1} parent=1 // loop_header_branch
      %24 = sbr.rel (%p22) target = $region8
    $region5: #{generation_core_forward.1} parent=1 // loop_body
      %s26 = ssub.s32 %s21, 1
      %s27 = ssub.s32 %s21, 2
      %s28 = sadd.s32 %s21, 1
      %s29 = ssub.s32 %s21, %s28
      %p30 = scmp.eq.s32.totalorder %s29, 0
      %s32 = sadd.s32 %s31, 1
      %s33 = scalar_select %p30, %s31, %s32
      %p36 = pneg %p30
      %p37 = scmp.eq.s32.totalorder %s21, 1
      %p38 = por %p36, %p37
      %p39 = scmp.ne.s32.totalorder %s31, %s34
      %p40 = scmp.eq.s32.totalorder %s21, 0
      %p41 = por %p39, %p40
      %p42 = scmp.ne.s32.totalorder %s31, %s34
      %p43 = scmp.eq.s32.totalorder %s26, 1
      %p44 = por %p42, %p43
      %p45 = scmp.ne.s32.totalorder %s34, %s35
      %p46 = scmp.eq.s32.totalorder %s26, 0
      %p47 = por %p45, %p46
      %p48 = scmp.ne.s32.totalorder %s34, %s35
      %p49 = scmp.eq.s32.totalorder %s27, 1
      %p50 = por %p48, %p49
      %p52 = scmp.ne.s32.totalorder %s35, %s51
      %p53 = scmp.eq.s32.totalorder %s27, 0
      %p54 = por %p52, %p53
      %s55 = ssub.s32 %s21, %s28
      %p56 = scmp.eq.s32.totalorder %s55, 0
      %s58 = sadd.s32 %s57, 1
      %s59 = scalar_select %p56, %s57, %s58
      %p62 = pneg %p56
      %p63 = scmp.eq.s32.totalorder %s21, 1
      %p64 = por %p62, %p63
      %p65 = scmp.ne.s32.totalorder %s57, %s60
      %p66 = scmp.eq.s32.totalorder %s21, 0
      %p67 = por %p65, %p66
      %p68 = scmp.ne.s32.totalorder %s57, %s60
      %p69 = scmp.eq.s32.totalorder %s26, 1
      %p70 = por %p68, %p69
      %p71 = scmp.ne.s32.totalorder %s60, %s61
      %p72 = scmp.eq.s32.totalorder %s26, 0
      %p73 = por %p71, %p72
      %p74 = scmp.ne.s32.totalorder %s60, %s61
      %p75 = scmp.eq.s32.totalorder %s27, 1
      %p76 = por %p74, %p75
      %p78 = scmp.ne.s32.totalorder %s61, %s77
      %p79 = scmp.eq.s32.totalorder %s27, 0
      %p80 = por %p78, %p79
      %s81 = ssub.s32 %s21, %s28
      %p82 = scmp.eq.s32.totalorder %s81, 0
      %s84 = sadd.s32 %s83, 1
      %s85 = scalar_select %p82, %s83, %s84
      %p88 = pneg %p82
      %p89 = scmp.eq.s32.totalorder %s21, 1
      %p90 = por %p88, %p89
      %p91 = scmp.ne.s32.totalorder %s83, %s86
      %p92 = scmp.eq.s32.totalorder %s21, 0
      %p93 = por %p91, %p92
      %p94 = scmp.ne.s32.totalorder %s83, %s86
      %p95 = scmp.eq.s32.totalorder %s26, 1
      %p96 = por %p94, %p95
      %p97 = scmp.ne.s32.totalorder %s86, %s87
      %p98 = scmp.eq.s32.totalorder %s26, 0
      %p99 = por %p97, %p98
      %p100 = scmp.ne.s32.totalorder %s86, %s87
      %p101 = scmp.eq.s32.totalorder %s27, 1
      %p102 = por %p100, %p101
      %p104 = scmp.ne.s32.totalorder %s87, %s103
      %p105 = scmp.eq.s32.totalorder %s27, 0
      %p106 = por %p104, %p105
      %s108 = sadd.s32 %s107, 1
      %p111 = scmp.eq.s32.totalorder %s21, 1
      %p112 = scmp.ne.s32.totalorder %s107, %s109
      %p113 = scmp.eq.s32.totalorder %s21, 0
      %p114 = por %p112, %p113
      %p115 = scmp.ne.s32.totalorder %s107, %s109
      %p116 = scmp.eq.s32.totalorder %s26, 1
      %p117 = por %p115, %p116
      %p118 = scmp.ne.s32.totalorder %s109, %s110
      %p119 = scmp.eq.s32.totalorder %s26, 0
      %p120 = por %p118, %p119
      %p121 = scmp.ne.s32.totalorder %s109, %s110
      %p122 = scmp.eq.s32.totalorder %s27, 1
      %p123 = por %p121, %p122
      %p125 = scmp.ne.s32.totalorder %s110, %s124
      %p126 = scmp.eq.s32.totalorder %s27, 0
      %p127 = por %p125, %p126
      %s129 = sadd.s32 %s128, 1
      %p132 = scmp.eq.s32.totalorder %s21, 1
      %p133 = scmp.ne.s32.totalorder %s128, %s130
      %p134 = scmp.eq.s32.totalorder %s21, 0
      %p135 = por %p133, %p134
      %p136 = scmp.ne.s32.totalorder %s128, %s130
      %p137 = scmp.eq.s32.totalorder %s26, 1
      %p138 = por %p136, %p137
      %p139 = scmp.ne.s32.totalorder %s130, %s131
      %p140 = scmp.eq.s32.totalorder %s26, 0
      %p141 = por %p139, %p140
      %p142 = scmp.ne.s32.totalorder %s130, %s131
      %p143 = scmp.eq.s32.totalorder %s27, 1
      %p144 = por %p142, %p143
      %p146 = scmp.ne.s32.totalorder %s131, %s145
      %p147 = scmp.eq.s32.totalorder %s27, 0
      %p148 = por %p146, %p147
      %s150 = sadd.s32 %s149, 1
      %p153 = scmp.eq.s32.totalorder %s21, 1
      %p154 = scmp.ne.s32.totalorder %s149, %s151
      %p155 = scmp.eq.s32.totalorder %s21, 0
      %p156 = por %p154, %p155
      %p157 = scmp.ne.s32.totalorder %s149, %s151
      %p158 = scmp.eq.s32.totalorder %s26, 1
      %p159 = por %p157, %p158
      %p160 = scmp.ne.s32.totalorder %s151, %s152
      %p161 = scmp.eq.s32.totalorder %s26, 0
      %p162 = por %p160, %p161
      %p163 = scmp.ne.s32.totalorder %s151, %s152
      %p164 = scmp.eq.s32.totalorder %s27, 1
      %p165 = por %p163, %p164
      %p167 = scmp.ne.s32.totalorder %s152, %s166
      %p168 = scmp.eq.s32.totalorder %s27, 0
      %p169 = por %p167, %p168
      %s170 = ssub.s32 %s21, %s28
      %p171 = scmp.eq.s32.totalorder %s170, 0
      %s173 = sadd.s32 %s172, 1
      %s174 = scalar_select %p171, %s172, %s173
      %p177 = pneg %p171
      %p178 = scmp.eq.s32.totalorder %s21, 1
      %p179 = por %p177, %p178
      %p180 = scmp.ne.s32.totalorder %s172, %s175
      %p181 = scmp.eq.s32.totalorder %s21, 0
      %p182 = por %p180, %p181
      %p183 = scmp.ne.s32.totalorder %s172, %s175
      %p184 = scmp.eq.s32.totalorder %s26, 1
      %p185 = por %p183, %p184
      %p186 = scmp.ne.s32.totalorder %s175, %s176
      %p187 = scmp.eq.s32.totalorder %s26, 0
      %p188 = por %p186, %p187
      %p189 = scmp.ne.s32.totalorder %s175, %s176
      %p190 = scmp.eq.s32.totalorder %s27, 1
      %p191 = por %p189, %p190
      %p193 = scmp.ne.s32.totalorder %s176, %s192
      %p194 = scmp.eq.s32.totalorder %s27, 0
      %p195 = por %p193, %p194
      %s196 = ssub.s32 %s21, %s28
      %p197 = scmp.eq.s32.totalorder %s196, 0
      %s199 = sadd.s32 %s198, 1
      %s200 = scalar_select %p197, %s198, %s199
      %p203 = pneg %p197
      %p204 = scmp.eq.s32.totalorder %s21, 1
      %p205 = por %p203, %p204
      %p206 = scmp.ne.s32.totalorder %s198, %s201
      %p207 = scmp.eq.s32.totalorder %s21, 0
      %p208 = por %p206, %p207
      %p209 = scmp.ne.s32.totalorder %s198, %s201
      %p210 = scmp.eq.s32.totalorder %s26, 1
      %p211 = por %p209, %p210
      %p212 = scmp.ne.s32.totalorder %s201, %s202
      %p213 = scmp.eq.s32.totalorder %s26, 0
      %p214 = por %p212, %p213
      %p215 = scmp.ne.s32.totalorder %s201, %s202
      %p216 = scmp.eq.s32.totalorder %s27, 1
      %p217 = por %p215, %p216
      %p219 = scmp.ne.s32.totalorder %s202, %s218
      %p220 = scmp.eq.s32.totalorder %s27, 0
      %p221 = por %p219, %p220
      %s222 = ssub.s32 %s21, %s28
      %p223 = scmp.eq.s32.totalorder %s222, 0
      %s225 = sadd.s32 %s224, 1
      %s226 = scalar_select %p223, %s224, %s225
      %p229 = pneg %p223
      %p230 = scmp.eq.s32.totalorder %s21, 1
      %p231 = por %p229, %p230
      %p232 = scmp.ne.s32.totalorder %s224, %s227
      %p233 = scmp.eq.s32.totalorder %s21, 0
      %p234 = por %p232, %p233
      %p235 = scmp.ne.s32.totalorder %s224, %s227
      %p236 = scmp.eq.s32.totalorder %s26, 1
      %p237 = por %p235, %p236
      %p238 = scmp.ne.s32.totalorder %s227, %s228
      %p239 = scmp.eq.s32.totalorder %s26, 0
      %p240 = por %p238, %p239
      %p241 = scmp.ne.s32.totalorder %s227, %s228
      %p242 = scmp.eq.s32.totalorder %s27, 1
      %p243 = por %p241, %p242
      %p245 = scmp.ne.s32.totalorder %s228, %s244
      %p246 = scmp.eq.s32.totalorder %s27, 0
      %p247 = por %p245, %p246
      %p248 = scmp.le.s32.totalorder 1, %s21
      %p249 = scmp.lt.s32.totalorder %s21, 3
      %p250 = pnand %p248, %p249
      %p251 = pneg %p250
      // Predicated region
      $region9: #{generation_core_forward.1} parent=5 // pred_check
        _
      $region10: #{generation_core_forward.1} parent=5 // pred_check_branch
        %253 = sbr.rel (%p250) target = $region12
      $region11: #{generation_core_forward.1} parent=5 // pred_region
        %s254 = ssub.s32 %s21, 1
        // Predicated region
        $region13: #{generation_core_forward.1} parent=11 // pred_check
          %p255 = pneg %p120
        $region14: #{generation_core_forward.1} parent=11 // pred_check_branch
          %257 = sbr.rel (%p255) target = $region16
        $region15: #{generation_core_forward.1} parent=11 // pred_region
          _
        $region16: #{generation_core_forward.1} parent=11 // pred_fallthru
          _
        // Predicated region
        $region17: #{generation_core_forward.1} parent=11 // pred_check
          %p258 = pneg %p141
        $region18: #{generation_core_forward.1} parent=11 // pred_check_branch
          %260 = sbr.rel (%p258) target = $region20
        $region19: #{generation_core_forward.1} parent=11 // pred_region
          _
        $region20: #{generation_core_forward.1} parent=11 // pred_fallthru
          _
        // Predicated region
        $region21: #{generation_core_forward.1} parent=11 // pred_check
          %p261 = pneg %p162
        $region22: #{generation_core_forward.1} parent=11 // pred_check_branch
          %263 = sbr.rel (%p261) target = $region24
        $region23: #{generation_core_forward.1} parent=11 // pred_region
          _
        $region24: #{generation_core_forward.1} parent=11 // pred_fallthru
          _
      $region12: #{generation_core_forward.1} parent=5 // pred_fallthru
        _
      %p264 = scmp.lt.s32.totalorder %s21, 2
      // Predicated region
      $region25: #{generation_core_forward.1} parent=5 // pred_check
        %p265 = pneg %p264
      $region26: #{generation_core_forward.1} parent=5 // pred_check_branch
        %267 = sbr.rel (%p265) target = $region28
      $region27: #{generation_core_forward.1} parent=5 // pred_region
        // Predicated region
        $region29: #{generation_core_forward.1} parent=27 // pred_check
          %p268 = pneg %p41
        $region30: #{generation_core_forward.1} parent=27 // pred_check_branch
          %270 = sbr.rel (%p268) target = $region32
        $region31: #{generation_core_forward.1} parent=27 // pred_region
          %p271 = scmp.lt.s32.totalorder %s21, 1
          %s272 = scalar_select %p271, %s21, 1
          %s273 = smul.addr %s272, 60
          %s274 = smul.addr %s273, 8
          %s275 = scalar_lea.vmem %s0, %s274
        $region32: #{generation_core_forward.1} parent=27 // pred_fallthru
          _
        // Predicated region
        $region33: #{generation_core_forward.1} parent=27 // pred_check
          %p276 = pneg %p67
        $region34: #{generation_core_forward.1} parent=27 // pred_check_branch
          %278 = sbr.rel (%p276) target = $region36
        $region35: #{generation_core_forward.1} parent=27 // pred_region
          %p279 = scmp.lt.s32.totalorder %s21, 1
          %s280 = scalar_select %p279, %s21, 1
          %s281 = smul.addr %s280, 32
          %s282 = smul.addr %s281, 8
          %s283 = scalar_lea.vmem %s1, %s282
        $region36: #{generation_core_forward.1} parent=27 // pred_fallthru
          _
        // Predicated region
        $region37: #{generation_core_forward.1} parent=27 // pred_check
          %p284 = pneg %p93
        $region38: #{generation_core_forward.1} parent=27 // pred_check_branch
          %286 = sbr.rel (%p284) target = $region40
        $region39: #{generation_core_forward.1} parent=27 // pred_region
          %p287 = scmp.lt.s32.totalorder %s21, 1
          %s288 = scalar_select %p287, %s21, 1
          %s289 = smul.addr %s288, 128
          %s290 = smul.addr %s289, 8
          %s291 = scalar_lea.vmem %s2, %s290
        $region40: #{generation_core_forward.1} parent=27 // pred_fallthru
          _
      $region28: #{generation_core_forward.1} parent=5 // pred_fallthru
        _
      %p292 = scmp.le.s32.totalorder 1, %s21
      %p293 = scmp.lt.s32.totalorder %s21, 3
      %p294 = pnand %p292, %p293
      %p295 = pneg %p294
      // Predicated region
      $region41: #{generation_core_forward.1} parent=5 // pred_check
        _
      $region42: #{generation_core_forward.1} parent=5 // pred_check_branch
        %297 = sbr.rel (%p294) target = $region44
      $region43: #{generation_core_forward.1} parent=5 // pred_region
        %s298 = ssub.s32 %s21, 1
        %p299 = scmp.lt.s32.totalorder %s26, 1
        %s300 = scalar_select %p299, %s26, 1
        %s301 = smul.addr %s300, 60
        %s302 = smul.addr %s301, 8
        %s303 = scalar_lea.vmem %s0, %s302
        %p304 = pneg %p47
        %p305 = pneg %p44
        %p306 = scmp.lt.s32.totalorder %s26, 1
        %s307 = scalar_select %p306, %s26, 1
        %s308 = smul.addr %s307, 32
        %s309 = smul.addr %s308, 8
        %s310 = scalar_lea.vmem %s1, %s309
        %p311 = pneg %p73
        %p312 = pneg %p70
        %p313 = scmp.lt.s32.totalorder %s26, 1
        %s314 = scalar_select %p313, %s26, 1
        %s315 = smul.addr %s314, 128
        %s316 = smul.addr %s315, 8
        %s317 = scalar_lea.vmem %s2, %s316
        %p318 = pneg %p99
        %p319 = pneg %p96
        %p320 = pneg %p120
        %p321 = pneg %p117
        %p322 = pneg %p141
        %p323 = pneg %p138
        %p324 = pneg %p162
        %p325 = pneg %p159
        %p326 = pneg %p188
        %p327 = pneg %p185
        %s328 = sand.u32 %s175, 1
        %s329 = scalar_lea.sflag [#allocation3], %s328
        %s330 = sand.u32 %s175, 1
        %s331 = smul.addr %s330, 256
        %s332 = scalar_lea.vmem [#allocation2], %s331
        %p333 = pneg %p214
        %p334 = pneg %p211
        %s335 = sand.u32 %s201, 1
        %s336 = scalar_lea.sflag [#allocation5], %s335
        %s337 = sand.u32 %s201, 1
        %s338 = smul.addr %s337, 256
        %s339 = scalar_lea.vmem [#allocation4], %s338
        %p340 = pneg %p240
        %p341 = pneg %p237
        %p342 = scmp.lt.s32.totalorder %s26, 1
        %s343 = scalar_select %p342, %s26, 1
        %s344 = smul.addr %s343, 128
        %s345 = smul.addr %s344, 8
        %s346 = scalar_lea.vmem %s8, %s345
        %p347 = scmp.lt.s32.totalorder %s26, 1
        %s348 = scalar_select %p347, %s26, 1
        %s349 = smul.addr %s348, 60
        %s350 = smul.addr %s349, 8
        %s351 = scalar_lea.vmem %s0, %s350
        %p352 = scmp.lt.s32.totalorder %s26, 1
        %s353 = scalar_select %p352, %s26, 1
        %s354 = smul.addr %s353, 32
        %s355 = smul.addr %s354, 8
        %s356 = scalar_lea.vmem %s1, %s355
        %p357 = scmp.lt.s32.totalorder %s26, 1
        %s358 = scalar_select %p357, %s26, 1
        %s359 = smul.addr %s358, 128
        %s360 = smul.addr %s359, 8
        %s361 = scalar_lea.vmem %s2, %s360
        %p362 = scmp.lt.s32.totalorder %s26, 1
        %s363 = scalar_select %p362, %s26, 1
        %s364 = smul.addr %s363, 128
        %s365 = smul.addr %s364, 8
        %s366 = scalar_lea.vmem %s8, %s365
        %v368 = vld [vmem:[%s351] sm:$0xff]
        %v369 = vld [vmem:[%s351 + $0x8] sm:$0xff]
        %v370 = vld [vmem:[%s351 + $0x10] sm:$0xf]
        %v371 = vld [vmem:[%s351 + $0x18] sm:$0xff]
        %v372 = vld [vmem:[%s351 + $0x20] sm:$0xff]
        %v373 = vld [vmem:[%s351 + $0x28] sm:$0xf]
        %v374 = vld [vmem:[%s351 + $0x30] sm:$0xff]
        %v375 = vld [vmem:[%s351 + $0x38] sm:$0xff]
        %v376 = vld [vmem:[%s351 + $0x40] sm:$0xf]
        %v377 = vld [vmem:[%s351 + $0x48] sm:$0xff]
        %v378 = vld [vmem:[%s351 + $0x50] sm:$0xff]
        %v379 = vld [vmem:[%s351 + $0x58] sm:$0xf]
        %v380 = vld [vmem:[%s351 + $0x60] sm:$0xff]
        %v381 = vld [vmem:[%s351 + $0x68] sm:$0xff]
        %v382 = vld [vmem:[%s351 + $0x70] sm:$0xf]
        %v383 = vld [vmem:[%s351 + $0x78] sm:$0xff]
        %v384 = vld [vmem:[%s351 + $0x80] sm:$0xff]
        %v385 = vld [vmem:[%s351 + $0x88] sm:$0xf]
        %v386 = vld [vmem:[%s351 + $0x90] sm:$0xff]
        %v387 = vld [vmem:[%s351 + $0x98] sm:$0xff]
        %v388 = vld [vmem:[%s351 + $0xa0] sm:$0xf]
        %v389 = vld [vmem:[%s351 + $0xa8] sm:$0xff]
        %v390 = vld [vmem:[%s351 + $0xb0] sm:$0xff]
        %v391 = vld [vmem:[%s351 + $0xb8] sm:$0xf]
        %v392 = vld [vmem:[%s351 + $0xc0] sm:$0xff]
        %v393 = vld [vmem:[%s351 + $0xc8] sm:$0xff]
        %v394 = vld [vmem:[%s351 + $0xd0] sm:$0xf]
        %v395 = vld [vmem:[%s351 + $0xd8] sm:$0xff]
        %v396 = vld [vmem:[%s351 + $0xe0] sm:$0xff]
        %v397 = vld [vmem:[%s351 + $0xe8] sm:$0xf]
        %v398 = vld [vmem:[%s351 + $0xf0] sm:$0xff]
        %v399 = vld [vmem:[%s351 + $0xf8] sm:$0xff]
        %v400 = vld [vmem:[%s351 + $0x100] sm:$0xf]
        %v401 = vld [vmem:[%s351 + $0x108] sm:$0xff]
        %v402 = vld [vmem:[%s351 + $0x110] sm:$0xff]
        %v403 = vld [vmem:[%s351 + $0x118] sm:$0xf]
        %v404 = vld [vmem:[%s351 + $0x120] sm:$0xff]
        %v405 = vld [vmem:[%s351 + $0x128] sm:$0xff]
        %v406 = vld [vmem:[%s351 + $0x130] sm:$0xf]
        %v407 = vld [vmem:[%s351 + $0x138] sm:$0xff]
        %v408 = vld [vmem:[%s351 + $0x140] sm:$0xff]
        %v409 = vld [vmem:[%s351 + $0x148] sm:$0xf]
        %v410 = vld [vmem:[%s351 + $0x150] sm:$0xff]
        %v411 = vld [vmem:[%s351 + $0x158] sm:$0xff]
        %v412 = vld [vmem:[%s351 + $0x160] sm:$0xf]
        %v413 = vld [vmem:[%s351 + $0x168] sm:$0xff]
        %v414 = vld [vmem:[%s351 + $0x170] sm:$0xff]
        %v415 = vld [vmem:[%s351 + $0x178] sm:$0xf]
        %v416 = vld [vmem:[%s351 + $0x180] sm:$0xff]
        %v417 = vld [vmem:[%s351 + $0x188] sm:$0xff]
        %v418 = vld [vmem:[%s351 + $0x190] sm:$0xf]
        %v419 = vld [vmem:[%s351 + $0x198] sm:$0xff]
        %v420 = vld [vmem:[%s351 + $0x1a0] sm:$0xff]
        %v421 = vld [vmem:[%s351 + $0x1a8] sm:$0xf]
        %v422 = vld [vmem:[%s351 + $0x1b0] sm:$0xff]
        %v423 = vld [vmem:[%s351 + $0x1b8] sm:$0xff]
        %v424 = vld [vmem:[%s351 + $0x1c0] sm:$0xf]
        %v425 = vld [vmem:[%s351 + $0x1c8] sm:$0xff]
        %v426 = vld [vmem:[%s351 + $0x1d0] sm:$0xff]
        %v427 = vld [vmem:[%s351 + $0x1d8] sm:$0xf]
        %v428 = vpack.c.bf16 %v369, %v368
        %v429 = vpack.c.bf16 %v372, %v371
        %v430 = vpack.c.bf16 %v375, %v374
        %v431 = vpack.c.bf16 %v378, %v377
        %v432 = vpack.c.bf16 %v381, %v380
        %v433 = vpack.c.bf16 %v384, %v383
        %v434 = vpack.c.bf16 %v387, %v386
        %v435 = vpack.c.bf16 %v390, %v389
        %v436 = vpack.c.bf16 %v393, %v392
        %v437 = vpack.c.bf16 %v396, %v395
        %v438 = vpack.c.bf16 %v399, %v398
        %v439 = vpack.c.bf16 %v402, %v401
        %v440 = vpack.c.bf16 %v405, %v404
        %v441 = vpack.c.bf16 %v408, %v407
        %v442 = vpack.c.bf16 %v411, %v410
        %v443 = vpack.c.bf16 %v414, %v413
        %v444 = vld [vmem:[%s3] sm:$0xf]
        %v445 = vld [vmem:[%s3 + $0x4] sm:$0xf]
        %v446 = vld [vmem:[%s3 + $0x8] sm:$0xf]
        %v447 = vld [vmem:[%s3 + $0xc] sm:$0xf]
        %v448 = vld [vmem:[%s3 + $0x10] sm:$0xf]
        %vm497 = vcmask 1046528
        %v498 = vrot.slane %v368, 1
        %v499 = vrot.slane %v369, 1
        %v500 = vsel %vm497, %v498, %v499
        %v501 = vrot.slane %v370, 1
        %v502 = vsel %vm497, %v499, %v501
        %v503 = vrot.slane %v371, 1
        %v504 = vrot.slane %v372, 1
        %v505 = vsel %vm497, %v503, %v504
        %v506 = vrot.slane %v373, 1
        %v507 = vsel %vm497, %v504, %v506
        %v508 = vrot.slane %v374, 1
        %v509 = vrot.slane %v375, 1
        %v510 = vsel %vm497, %v508, %v509
        %v511 = vrot.slane %v376, 1
        %v512 = vsel %vm497, %v509, %v511
        %v513 = vrot.slane %v377, 1
        %v514 = vrot.slane %v378, 1
        %v515 = vsel %vm497, %v513, %v514
        %v516 = vrot.slane %v379, 1
        %v517 = vsel %vm497, %v514, %v516
        %v518 = vrot.slane %v380, 1
        %v519 = vrot.slane %v381, 1
        %v520 = vsel %vm497, %v518, %v519
        %v521 = vrot.slane %v382, 1
        %v522 = vsel %vm497, %v519, %v521
        %v523 = vrot.slane %v383, 1
        %v524 = vrot.slane %v384, 1
        %v525 = vsel %vm497, %v523, %v524
        %v526 = vrot.slane %v385, 1
        %v527 = vsel %vm497, %v524, %v526
        %v528 = vrot.slane %v386, 1
        %v529 = vrot.slane %v387, 1
        %v530 = vsel %vm497, %v528, %v529
        %v531 = vrot.slane %v388, 1
        %v532 = vsel %vm497, %v529, %v531
        %v533 = vrot.slane %v389, 1
        %v534 = vrot.slane %v390, 1
        %v535 = vsel %vm497, %v533, %v534
        %v536 = vrot.slane %v391, 1
        %v537 = vsel %vm497, %v534, %v536
        %v538 = vrot.slane %v392, 1
        %v539 = vrot.slane %v393, 1
        %v540 = vsel %vm497, %v538, %v539
        %v541 = vrot.slane %v394, 1
        %v542 = vsel %vm497, %v539, %v541
        %v543 = vrot.slane %v395, 1
        %v544 = vrot.slane %v396, 1
        %v545 = vsel %vm497, %v543, %v544
        %v546 = vrot.slane %v397, 1
        %v547 = vsel %vm497, %v544, %v546
        %v548 = vrot.slane %v398, 1
        %v549 = vrot.slane %v399, 1
        %v550 = vsel %vm497, %v548, %v549
        %v551 = vrot.slane %v400, 1
        %v552 = vsel %vm497, %v549, %v551
        %v553 = vrot.slane %v401, 1
        %v554 = vrot.slane %v402, 1
        %v555 = vsel %vm497, %v553, %v554
        %v556 = vrot.slane %v403, 1
        %v557 = vsel %vm497, %v554, %v556
        %v558 = vrot.slane %v404, 1
        %v559 = vrot.slane %v405, 1
        %v560 = vsel %vm497, %v558, %v559
        %v561 = vrot.slane %v406, 1
        %v562 = vsel %vm497, %v559, %v561
        %v563 = vrot.slane %v407, 1
        %v564 = vrot.slane %v408, 1
        %v565 = vsel %vm497, %v563, %v564
        %v566 = vrot.slane %v409, 1
        %v567 = vsel %vm497, %v564, %v566
        %v568 = vrot.slane %v410, 1
        %v569 = vrot.slane %v411, 1
        %v570 = vsel %vm497, %v568, %v569
        %v571 = vrot.slane %v412, 1
        %v572 = vsel %vm497, %v569, %v571
        %v573 = vrot.slane %v413, 1
        %v574 = vrot.slane %v414, 1
        %v575 = vsel %vm497, %v573, %v574
        %v576 = vrot.slane %v415, 1
        %v577 = vsel %vm497, %v574, %v576
        %v610 = vpack.c.bf16 %v502, %v500
        %v611 = vpack.c.bf16 %v507, %v505
        %v612 = vpack.c.bf16 %v512, %v510
        %v613 = vpack.c.bf16 %v517, %v515
        %v614 = vpack.c.bf16 %v522, %v520
        %v615 = vpack.c.bf16 %v527, %v525
        %v616 = vpack.c.bf16 %v532, %v530
        %v617 = vpack.c.bf16 %v537, %v535
        %v618 = vpack.c.bf16 %v542, %v540
        %v619 = vpack.c.bf16 %v547, %v545
        %v620 = vpack.c.bf16 %v552, %v550
        %v621 = vpack.c.bf16 %v557, %v555
        %v622 = vpack.c.bf16 %v562, %v560
        %v623 = vpack.c.bf16 %v567, %v565
        %v624 = vpack.c.bf16 %v572, %v570
        %v625 = vpack.c.bf16 %v577, %v575
        %s626 = scalar_lea.vmem %s3, 20
        %v627 = vld [vmem:[%s626] sm:$0xf]
        %v628 = vld [vmem:[%s626 + $0x4] sm:$0xf]
        %v629 = vld [vmem:[%s626 + $0x8] sm:$0xf]
        %v630 = vld [vmem:[%s626 + $0xc] sm:$0xf]
        %v631 = vld [vmem:[%s626 + $0x10] sm:$0xf]
        %v637 = vunpack.c.l.b16 %v627
        %v638 = vunpack.c.l.b16 %v628
        %v639 = vunpack.c.l.b16 %v629
        %v640 = vunpack.c.l.b16 %v630
        %v641 = vunpack.c.l.b16 %v631
        %v642 = vpack.c.b16 %v638, %v637
        %v643 = vpack.c.b16 %v640, %v639
        %v644 = vpack.c.b16 %v641, %v641
        %vm647 = vcmask 326656
        %v649 = vsel %vm647, %v610, 0
        %v652 = vsel %vm647, %v611, 0
        %v655 = vsel %vm647, %v612, 0
        %v658 = vsel %vm647, %v613, 0
        %v661 = vsel %vm647, %v614, 0
        %v664 = vsel %vm647, %v615, 0
        %v667 = vsel %vm647, %v616, 0
        %v670 = vsel %vm647, %v617, 0
        %v673 = vsel %vm647, %v618, 0
        %v676 = vsel %vm647, %v619, 0
        %v679 = vsel %vm647, %v620, 0
        %v682 = vsel %vm647, %v621, 0
        %v685 = vsel %vm647, %v622, 0
        %v688 = vsel %vm647, %v623, 0
        %v691 = vsel %vm647, %v624, 0
        %v694 = vsel %vm647, %v625, 0
        %vm696 = vcmask 1043456
        %v698 = vsel %vm696, %v644, 0
        %700 = vmatpush.bf16.msra.mxu0 0
        %701 = vmatpush.bf16.msra.mxu0 0
        %702 = vmatpush.bf16.msra.mxu0 0
        %703 = vmatpush.bf16.msra.mxu0 0
        %704 = vmatpush.bf16.msra.mxu0 0
        %705 = vmatpush.bf16.msra.mxu0 %v698
        %706 = vmatpush.bf16.msra.mxu0 %v643
        %707 = vmatpush.bf16.msra.mxu0 %v642
        %708 = vmatmul.bf16.gmra.mxu0 %v649
        %v709 = vpop.f32.mrf.mxu0
        %v710 = vadd.f32 0.0, %v709
        %v711 = vpop.f32.mrf.mxu0
        %v712 = vadd.f32 0.0, %v711
        %713 = vmatmul.bf16.gmra.mxu0 %v652
        %v714 = vpop.f32.mrf.mxu0
        %v715 = vadd.f32 0.0, %v714
        %v716 = vpop.f32.mrf.mxu0
        %v717 = vadd.f32 0.0, %v716
        %718 = vmatmul.bf16.gmra.mxu0 %v655
        %v719 = vpop.f32.mrf.mxu0
        %v720 = vadd.f32 0.0, %v719
        %v721 = vpop.f32.mrf.mxu0
        %v722 = vadd.f32 0.0, %v721
        %723 = vmatmul.bf16.gmra.mxu0 %v658
        %v724 = vpop.f32.mrf.mxu0
        %v725 = vadd.f32 0.0, %v724
        %v726 = vpop.f32.mrf.mxu0
        %v727 = vadd.f32 0.0, %v726
        %728 = vmatmul.bf16.gmra.mxu0 %v661
        %v729 = vpop.f32.mrf.mxu0
        %v730 = vadd.f32 0.0, %v729
        %v731 = vpop.f32.mrf.mxu0
        %v732 = vadd.f32 0.0, %v731
        %733 = vmatmul.bf16.gmra.mxu0 %v664
        %v734 = vpop.f32.mrf.mxu0
        %v735 = vadd.f32 0.0, %v734
        %v736 = vpop.f32.mrf.mxu0
        %v737 = vadd.f32 0.0, %v736
        %738 = vmatmul.bf16.gmra.mxu0 %v667
        %v739 = vpop.f32.mrf.mxu0
        %v740 = vadd.f32 0.0, %v739
        %v741 = vpop.f32.mrf.mxu0
        %v742 = vadd.f32 0.0, %v741
        %743 = vmatmul.bf16.gmra.mxu0 %v670
        %v744 = vpop.f32.mrf.mxu0
        %v745 = vadd.f32 0.0, %v744
        %v746 = vpop.f32.mrf.mxu0
        %v747 = vadd.f32 0.0, %v746
        %748 = vmatmul.bf16.gmra.mxu0 %v673
        %v749 = vpop.f32.mrf.mxu0
        %v750 = vadd.f32 0.0, %v749
        %v751 = vpop.f32.mrf.mxu0
        %v752 = vadd.f32 0.0, %v751
        %753 = vmatmul.bf16.gmra.mxu0 %v676
        %v754 = vpop.f32.mrf.mxu0
        %v755 = vadd.f32 0.0, %v754
        %v756 = vpop.f32.mrf.mxu0
        %v757 = vadd.f32 0.0, %v756
        %758 = vmatmul.bf16.gmra.mxu0 %v679
        %v759 = vpop.f32.mrf.mxu0
        %v760 = vadd.f32 0.0, %v759
        %v761 = vpop.f32.mrf.mxu0
        %v762 = vadd.f32 0.0, %v761
        %763 = vmatmul.bf16.gmra.mxu0 %v682
        %v764 = vpop.f32.mrf.mxu0
        %v765 = vadd.f32 0.0, %v764
        %v766 = vpop.f32.mrf.mxu0
        %v767 = vadd.f32 0.0, %v766
        %768 = vmatmul.bf16.gmra.mxu0 %v685
        %v769 = vpop.f32.mrf.mxu0
        %v770 = vadd.f32 0.0, %v769
        %v771 = vpop.f32.mrf.mxu0
        %v772 = vadd.f32 0.0, %v771
        %773 = vmatmul.bf16.gmra.mxu0 %v688
        %v774 = vpop.f32.mrf.mxu0
        %v775 = vadd.f32 0.0, %v774
        %v776 = vpop.f32.mrf.mxu0
        %v777 = vadd.f32 0.0, %v776
        %778 = vmatmul.bf16.gmra.mxu0 %v691
        %v779 = vpop.f32.mrf.mxu0
        %v780 = vadd.f32 0.0, %v779
        %v781 = vpop.f32.mrf.mxu0
        %v782 = vadd.f32 0.0, %v781
        %783 = vmatmul.bf16.gmra.mxu0 %v694
        %v784 = vpop.f32.mrf.mxu0
        %v785 = vadd.f32 0.0, %v784
        %v786 = vpop.f32.mrf.mxu0
        %v787 = vadd.f32 0.0, %v786
        %788 = vdwg.mxu0
        %v794 = vunpack.c.l.b16 %v444
        %v795 = vunpack.c.l.b16 %v445
        %v796 = vunpack.c.l.b16 %v446
        %v797 = vunpack.c.l.b16 %v447
        %v798 = vunpack.c.l.b16 %v448
        %v799 = vpack.c.b16 %v795, %v794
        %v800 = vpack.c.b16 %v797, %v796
        %v801 = vpack.c.b16 %v798, %v798
        %v805 = vsel %vm647, %v428, 0
        %v808 = vsel %vm647, %v429, 0
        %v811 = vsel %vm647, %v430, 0
        %v814 = vsel %vm647, %v431, 0
        %v817 = vsel %vm647, %v432, 0
        %v820 = vsel %vm647, %v433, 0
        %v823 = vsel %vm647, %v434, 0
        %v826 = vsel %vm647, %v435, 0
        %v829 = vsel %vm647, %v436, 0
        %v832 = vsel %vm647, %v437, 0
        %v835 = vsel %vm647, %v438, 0
        %v838 = vsel %vm647, %v439, 0
        %v841 = vsel %vm647, %v440, 0
        %v844 = vsel %vm647, %v441, 0
        %v847 = vsel %vm647, %v442, 0
        %v850 = vsel %vm647, %v443, 0
        %v853 = vsel %vm696, %v801, 0
        %855 = vmatpush.bf16.msra.mxu0 0
        %856 = vmatpush.bf16.msra.mxu0 0
        %857 = vmatpush.bf16.msra.mxu0 0
        %858 = vmatpush.bf16.msra.mxu0 0
        %859 = vmatpush.bf16.msra.mxu0 0
        %860 = vmatpush.bf16.msra.mxu0 %v853
        %861 = vmatpush.bf16.msra.mxu0 %v800
        %862 = vmatpush.bf16.msra.mxu0 %v799
        %863 = vmatmul.bf16.gmra.mxu0 %v805
        %v864 = vpop.f32.mrf.mxu0
        %v865 = vadd.f32 %v710, %v864
        %v866 = vpop.f32.mrf.mxu0
        %v867 = vadd.f32 %v712, %v866
        %868 = vmatmul.bf16.gmra.mxu0 %v808
        %v869 = vpop.f32.mrf.mxu0
        %v870 = vadd.f32 %v715, %v869
        %v871 = vpop.f32.mrf.mxu0
        %v872 = vadd.f32 %v717, %v871
        %873 = vmatmul.bf16.gmra.mxu0 %v811
        %v874 = vpop.f32.mrf.mxu0
        %v875 = vadd.f32 %v720, %v874
        %v876 = vpop.f32.mrf.mxu0
        %v877 = vadd.f32 %v722, %v876
        %878 = vmatmul.bf16.gmra.mxu0 %v814
        %v879 = vpop.f32.mrf.mxu0
        %v880 = vadd.f32 %v725, %v879
        %v881 = vpop.f32.mrf.mxu0
        %v882 = vadd.f32 %v727, %v881
        %883 = vmatmul.bf16.gmra.mxu0 %v817
        %v884 = vpop.f32.mrf.mxu0
        %v885 = vadd.f32 %v730, %v884
        %v886 = vpop.f32.mrf.mxu0
        %v887 = vadd.f32 %v732, %v886
        %888 = vmatmul.bf16.gmra.mxu0 %v820
        %v889 = vpop.f32.mrf.mxu0
        %v890 = vadd.f32 %v735, %v889
        %v891 = vpop.f32.mrf.mxu0
        %v892 = vadd.f32 %v737, %v891
        %893 = vmatmul.bf16.gmra.mxu0 %v823
        %v894 = vpop.f32.mrf.mxu0
        %v895 = vadd.f32 %v740, %v894
        %v896 = vpop.f32.mrf.mxu0
        %v897 = vadd.f32 %v742, %v896
        %898 = vmatmul.bf16.gmra.mxu0 %v826
        %v899 = vpop.f32.mrf.mxu0
        %v900 = vadd.f32 %v745, %v899
        %v901 = vpop.f32.mrf.mxu0
        %v902 = vadd.f32 %v747, %v901
        %903 = vmatmul.bf16.gmra.mxu0 %v829
        %v904 = vpop.f32.mrf.mxu0
        %v905 = vadd.f32 %v750, %v904
        %v906 = vpop.f32.mrf.mxu0
        %v907 = vadd.f32 %v752, %v906
        %908 = vmatmul.bf16.gmra.mxu0 %v832
        %v909 = vpop.f32.mrf.mxu0
        %v910 = vadd.f32 %v755, %v909
        %v911 = vpop.f32.mrf.mxu0
        %v912 = vadd.f32 %v757, %v911
        %913 = vmatmul.bf16.gmra.mxu0 %v835
        %v914 = vpop.f32.mrf.mxu0
        %v915 = vadd.f32 %v760, %v914
        %v916 = vpop.f32.mrf.mxu0
        %v917 = vadd.f32 %v762, %v916
        %918 = vmatmul.bf16.gmra.mxu0 %v838
        %v919 = vpop.f32.mrf.mxu0
        %v920 = vadd.f32 %v765, %v919
        %v921 = vpop.f32.mrf.mxu0
        %v922 = vadd.f32 %v767, %v921
        %923 = vmatmul.bf16.gmra.mxu0 %v841
        %v924 = vpop.f32.mrf.mxu0
        %v925 = vadd.f32 %v770, %v924
        %v926 = vpop.f32.mrf.mxu0
        %v927 = vadd.f32 %v772, %v926
        %928 = vmatmul.bf16.gmra.mxu0 %v844
        %v929 = vpop.f32.mrf.mxu0
        %v930 = vadd.f32 %v775, %v929
        %v931 = vpop.f32.mrf.mxu0
        %v932 = vadd.f32 %v777, %v931
        %933 = vmatmul.bf16.gmra.mxu0 %v847
        %v934 = vpop.f32.mrf.mxu0
        %v935 = vadd.f32 %v780, %v934
        %v936 = vpop.f32.mrf.mxu0
        %v937 = vadd.f32 %v782, %v936
        %938 = vmatmul.bf16.gmra.mxu0 %v850
        %v939 = vpop.f32.mrf.mxu0
        %v940 = vadd.f32 %v785, %v939
        %v941 = vpop.f32.mrf.mxu0
        %v942 = vadd.f32 %v787, %v941
        %943 = vdwg.mxu0
        %vm944 = vcmask 1045504
        %v945 = vrot.slane %v368, 2
        %v946 = vrot.slane %v369, 2
        %v947 = vsel %vm944, %v945, %v946
        %v948 = vrot.slane %v370, 2
        %v949 = vsel %vm944, %v946, %v948
        %v950 = vrot.slane %v371, 2
        %v951 = vrot.slane %v372, 2
        %v952 = vsel %vm944, %v950, %v951
        %v953 = vrot.slane %v373, 2
        %v954 = vsel %vm944, %v951, %v953
        %v955 = vrot.slane %v374, 2
        %v956 = vrot.slane %v375, 2
        %v957 = vsel %vm944, %v955, %v956
        %v958 = vrot.slane %v376, 2
        %v959 = vsel %vm944, %v956, %v958
        %v960 = vrot.slane %v377, 2
        %v961 = vrot.slane %v378, 2
        %v962 = vsel %vm944, %v960, %v961
        %v963 = vrot.slane %v379, 2
        %v964 = vsel %vm944, %v961, %v963
        %v965 = vrot.slane %v380, 2
        %v966 = vrot.slane %v381, 2
        %v967 = vsel %vm944, %v965, %v966
        %v968 = vrot.slane %v382, 2
        %v969 = vsel %vm944, %v966, %v968
        %v970 = vrot.slane %v383, 2
        %v971 = vrot.slane %v384, 2
        %v972 = vsel %vm944, %v970, %v971
        %v973 = vrot.slane %v385, 2
        %v974 = vsel %vm944, %v971, %v973
        %v975 = vrot.slane %v386, 2
        %v976 = vrot.slane %v387, 2
        %v977 = vsel %vm944, %v975, %v976
        %v978 = vrot.slane %v388, 2
        %v979 = vsel %vm944, %v976, %v978
        %v980 = vrot.slane %v389, 2
        %v981 = vrot.slane %v390, 2
        %v982 = vsel %vm944, %v980, %v981
        %v983 = vrot.slane %v391, 2
        %v984 = vsel %vm944, %v981, %v983
        %v985 = vrot.slane %v392, 2
        %v986 = vrot.slane %v393, 2
        %v987 = vsel %vm944, %v985, %v986
        %v988 = vrot.slane %v394, 2
        %v989 = vsel %vm944, %v986, %v988
        %v990 = vrot.slane %v395, 2
        %v991 = vrot.slane %v396, 2
        %v992 = vsel %vm944, %v990, %v991
        %v993 = vrot.slane %v397, 2
        %v994 = vsel %vm944, %v991, %v993
        %v995 = vrot.slane %v398, 2
        %v996 = vrot.slane %v399, 2
        %v997 = vsel %vm944, %v995, %v996
        %v998 = vrot.slane %v400, 2
        %v999 = vsel %vm944, %v996, %v998
        %v1000 = vrot.slane %v401, 2
        %v1001 = vrot.slane %v402, 2
        %v1002 = vsel %vm944, %v1000, %v1001
        %v1003 = vrot.slane %v403, 2
        %v1004 = vsel %vm944, %v1001, %v1003
        %v1005 = vrot.slane %v404, 2
        %v1006 = vrot.slane %v405, 2
        %v1007 = vsel %vm944, %v1005, %v1006
        %v1008 = vrot.slane %v406, 2
        %v1009 = vsel %vm944, %v1006, %v1008
        %v1010 = vrot.slane %v407, 2
        %v1011 = vrot.slane %v408, 2
        %v1012 = vsel %vm944, %v1010, %v1011
        %v1013 = vrot.slane %v409, 2
        %v1014 = vsel %vm944, %v1011, %v1013
        %v1015 = vrot.slane %v410, 2
        %v1016 = vrot.slane %v411, 2
        %v1017 = vsel %vm944, %v1015, %v1016
        %v1018 = vrot.slane %v412, 2
        %v1019 = vsel %vm944, %v1016, %v1018
        %v1020 = vrot.slane %v413, 2
        %v1021 = vrot.slane %v414, 2
        %v1022 = vsel %vm944, %v1020, %v1021
        %v1023 = vrot.slane %v415, 2
        %v1024 = vsel %vm944, %v1021, %v1023
        %v1057 = vpack.c.bf16 %v949, %v947
        %v1058 = vpack.c.bf16 %v954, %v952
        %v1059 = vpack.c.bf16 %v959, %v957
        %v1060 = vpack.c.bf16 %v964, %v962
        %v1061 = vpack.c.bf16 %v969, %v967
        %v1062 = vpack.c.bf16 %v974, %v972
        %v1063 = vpack.c.bf16 %v979, %v977
        %v1064 = vpack.c.bf16 %v984, %v982
        %v1065 = vpack.c.bf16 %v989, %v987
        %v1066 = vpack.c.bf16 %v994, %v992
        %v1067 = vpack.c.bf16 %v999, %v997
        %v1068 = vpack.c.bf16 %v1004, %v1002
        %v1069 = vpack.c.bf16 %v1009, %v1007
        %v1070 = vpack.c.bf16 %v1014, %v1012
        %v1071 = vpack.c.bf16 %v1019, %v1017
        %v1072 = vpack.c.bf16 %v1024, %v1022
        %s1073 = scalar_lea.vmem %s3, 40
        %v1074 = vld [vmem:[%s1073] sm:$0xf]
        %v1075 = vld [vmem:[%s1073 + $0x4] sm:$0xf]
        %v1076 = vld [vmem:[%s1073 + $0x8] sm:$0xf]
        %v1077 = vld [vmem:[%s1073 + $0xc] sm:$0xf]
        %v1078 = vld [vmem:[%s1073 + $0x10] sm:$0xf]
        %v1084 = vunpack.c.l.b16 %v1074
        %v1085 = vunpack.c.l.b16 %v1075
        %v1086 = vunpack.c.l.b16 %v1076
        %v1087 = vunpack.c.l.b16 %v1077
        %v1088 = vunpack.c.l.b16 %v1078
        %v1089 = vpack.c.b16 %v1085, %v1084
        %v1090 = vpack.c.b16 %v1087, %v1086
        %v1091 = vpack.c.b16 %v1088, %v1088
        %v1095 = vsel %vm647, %v1057, 0
        %v1098 = vsel %vm647, %v1058, 0
        %v1101 = vsel %vm647, %v1059, 0
        %v1104 = vsel %vm647, %v1060, 0
        %v1107 = vsel %vm647, %v1061, 0
        %v1110 = vsel %vm647, %v1062, 0
        %v1113 = vsel %vm647, %v1063, 0
        %v1116 = vsel %vm647, %v1064, 0
        %v1119 = vsel %vm647, %v1065, 0
        %v1122 = vsel %vm647, %v1066, 0
        %v1125 = vsel %vm647, %v1067, 0
        %v1128 = vsel %vm647, %v1068, 0
        %v1131 = vsel %vm647, %v1069, 0
        %v1134 = vsel %vm647, %v1070, 0
        %v1137 = vsel %vm647, %v1071, 0
        %v1140 = vsel %vm647, %v1072, 0
        %v1143 = vsel %vm696, %v1091, 0
        %1145 = vmatpush.bf16.msra.mxu0 0
        %1146 = vmatpush.bf16.msra.mxu0 0
        %1147 = vmatpush.bf16.msra.mxu0 0
        %1148 = vmatpush.bf16.msra.mxu0 0
        %1149 = vmatpush.bf16.msra.mxu0 0
        %1150 = vmatpush.bf16.msra.mxu0 %v1143
        %1151 = vmatpush.bf16.msra.mxu0 %v1090
        %1152 = vmatpush.bf16.msra.mxu0 %v1089
        %1153 = vmatmul.bf16.gmra.mxu0 %v1095
        %v1154 = vpop.f32.mrf.mxu0
        %v1155 = vadd.f32 0.0, %v1154
        %v1156 = vpop.f32.mrf.mxu0
        %v1157 = vadd.f32 0.0, %v1156
        %1158 = vmatmul.bf16.gmra.mxu0 %v1098
        %v1159 = vpop.f32.mrf.mxu0
        %v1160 = vadd.f32 0.0, %v1159
        %v1161 = vpop.f32.mrf.mxu0
        %v1162 = vadd.f32 0.0, %v1161
        %1163 = vmatmul.bf16.gmra.mxu0 %v1101
        %v1164 = vpop.f32.mrf.mxu0
        %v1165 = vadd.f32 0.0, %v1164
        %v1166 = vpop.f32.mrf.mxu0
        %v1167 = vadd.f32 0.0, %v1166
        %1168 = vmatmul.bf16.gmra.mxu0 %v1104
        %v1169 = vpop.f32.mrf.mxu0
        %v1170 = vadd.f32 0.0, %v1169
        %v1171 = vpop.f32.mrf.mxu0
        %v1172 = vadd.f32 0.0, %v1171
        %1173 = vmatmul.bf16.gmra.mxu0 %v1107
        %v1174 = vpop.f32.mrf.mxu0
        %v1175 = vadd.f32 0.0, %v1174
        %v1176 = vpop.f32.mrf.mxu0
        %v1177 = vadd.f32 0.0, %v1176
        %1178 = vmatmul.bf16.gmra.mxu0 %v1110
        %v1179 = vpop.f32.mrf.mxu0
        %v1180 = vadd.f32 0.0, %v1179
        %v1181 = vpop.f32.mrf.mxu0
        %v1182 = vadd.f32 0.0, %v1181
        %1183 = vmatmul.bf16.gmra.mxu0 %v1113
        %v1184 = vpop.f32.mrf.mxu0
        %v1185 = vadd.f32 0.0, %v1184
        %v1186 = vpop.f32.mrf.mxu0
        %v1187 = vadd.f32 0.0, %v1186
        %1188 = vmatmul.bf16.gmra.mxu0 %v1116
        %v1189 = vpop.f32.mrf.mxu0
        %v1190 = vadd.f32 0.0, %v1189
        %v1191 = vpop.f32.mrf.mxu0
        %v1192 = vadd.f32 0.0, %v1191
        %1193 = vmatmul.bf16.gmra.mxu0 %v1119
        %v1194 = vpop.f32.mrf.mxu0
        %v1195 = vadd.f32 0.0, %v1194
        %v1196 = vpop.f32.mrf.mxu0
        %v1197 = vadd.f32 0.0, %v1196
        %1198 = vmatmul.bf16.gmra.mxu0 %v1122
        %v1199 = vpop.f32.mrf.mxu0
        %v1200 = vadd.f32 0.0, %v1199
        %v1201 = vpop.f32.mrf.mxu0
        %v1202 = vadd.f32 0.0, %v1201
        %1203 = vmatmul.bf16.gmra.mxu0 %v1125
        %v1204 = vpop.f32.mrf.mxu0
        %v1205 = vadd.f32 0.0, %v1204
        %v1206 = vpop.f32.mrf.mxu0
        %v1207 = vadd.f32 0.0, %v1206
        %1208 = vmatmul.bf16.gmra.mxu0 %v1128
        %v1209 = vpop.f32.mrf.mxu0
        %v1210 = vadd.f32 0.0, %v1209
        %v1211 = vpop.f32.mrf.mxu0
        %v1212 = vadd.f32 0.0, %v1211
        %1213 = vmatmul.bf16.gmra.mxu0 %v1131
        %v1214 = vpop.f32.mrf.mxu0
        %v1215 = vadd.f32 0.0, %v1214
        %v1216 = vpop.f32.mrf.mxu0
        %v1217 = vadd.f32 0.0, %v1216
        %1218 = vmatmul.bf16.gmra.mxu0 %v1134
        %v1219 = vpop.f32.mrf.mxu0
        %v1220 = vadd.f32 0.0, %v1219
        %v1221 = vpop.f32.mrf.mxu0
        %v1222 = vadd.f32 0.0, %v1221
        %1223 = vmatmul.bf16.gmra.mxu0 %v1137
        %v1224 = vpop.f32.mrf.mxu0
        %v1225 = vadd.f32 0.0, %v1224
        %v1226 = vpop.f32.mrf.mxu0
        %v1227 = vadd.f32 0.0, %v1226
        %1228 = vmatmul.bf16.gmra.mxu0 %v1140
        %v1229 = vpop.f32.mrf.mxu0
        %v1230 = vadd.f32 0.0, %v1229
        %v1231 = vpop.f32.mrf.mxu0
        %v1232 = vadd.f32 0.0, %v1231
        %1233 = vdwg.mxu0
        %v1234 = vadd.f32 %v865, %v1155
        %v1235 = vadd.f32 %v867, %v1157
        %v1236 = vadd.f32 %v870, %v1160
        %v1237 = vadd.f32 %v872, %v1162
        %v1238 = vadd.f32 %v875, %v1165
        %v1239 = vadd.f32 %v877, %v1167
        %v1240 = vadd.f32 %v880, %v1170
        %v1241 = vadd.f32 %v882, %v1172
        %v1242 = vadd.f32 %v885, %v1175
        %v1243 = vadd.f32 %v887, %v1177
        %v1244 = vadd.f32 %v890, %v1180
        %v1245 = vadd.f32 %v892, %v1182
        %v1246 = vadd.f32 %v895, %v1185
        %v1247 = vadd.f32 %v897, %v1187
        %v1248 = vadd.f32 %v900, %v1190
        %v1249 = vadd.f32 %v902, %v1192
        %v1250 = vadd.f32 %v905, %v1195
        %v1251 = vadd.f32 %v907, %v1197
        %v1252 = vadd.f32 %v910, %v1200
        %v1253 = vadd.f32 %v912, %v1202
        %v1254 = vadd.f32 %v915, %v1205
        %v1255 = vadd.f32 %v917, %v1207
        %v1256 = vadd.f32 %v920, %v1210
        %v1257 = vadd.f32 %v922, %v1212
        %v1258 = vadd.f32 %v925, %v1215
        %v1259 = vadd.f32 %v927, %v1217
        %v1260 = vadd.f32 %v930, %v1220
        %v1261 = vadd.f32 %v932, %v1222
        %v1262 = vadd.f32 %v935, %v1225
        %v1263 = vadd.f32 %v937, %v1227
        %v1264 = vadd.f32 %v940, %v1230
        %v1265 = vadd.f32 %v942, %v1232
        %vm1266 = vcmask 1044480
        %v1267 = vrot.slane %v368, 3
        %v1268 = vrot.slane %v369, 3
        %v1269 = vsel %vm1266, %v1267, %v1268
        %v1270 = vrot.slane %v370, 3
        %v1271 = vsel %vm1266, %v1268, %v1270
        %v1272 = vrot.slane %v371, 3
        %v1273 = vrot.slane %v372, 3
        %v1274 = vsel %vm1266, %v1272, %v1273
        %v1275 = vrot.slane %v373, 3
        %v1276 = vsel %vm1266, %v1273, %v1275
        %v1277 = vrot.slane %v374, 3
        %v1278 = vrot.slane %v375, 3
        %v1279 = vsel %vm1266, %v1277, %v1278
        %v1280 = vrot.slane %v376, 3
        %v1281 = vsel %vm1266, %v1278, %v1280
        %v1282 = vrot.slane %v377, 3
        %v1283 = vrot.slane %v378, 3
        %v1284 = vsel %vm1266, %v1282, %v1283
        %v1285 = vrot.slane %v379, 3
        %v1286 = vsel %vm1266, %v1283, %v1285
        %v1287 = vrot.slane %v380, 3
        %v1288 = vrot.slane %v381, 3
        %v1289 = vsel %vm1266, %v1287, %v1288
        %v1290 = vrot.slane %v382, 3
        %v1291 = vsel %vm1266, %v1288, %v1290
        %v1292 = vrot.slane %v383, 3
        %v1293 = vrot.slane %v384, 3
        %v1294 = vsel %vm1266, %v1292, %v1293
        %v1295 = vrot.slane %v385, 3
        %v1296 = vsel %vm1266, %v1293, %v1295
        %v1297 = vrot.slane %v386, 3
        %v1298 = vrot.slane %v387, 3
        %v1299 = vsel %vm1266, %v1297, %v1298
        %v1300 = vrot.slane %v388, 3
        %v1301 = vsel %vm1266, %v1298, %v1300
        %v1302 = vrot.slane %v389, 3
        %v1303 = vrot.slane %v390, 3
        %v1304 = vsel %vm1266, %v1302, %v1303
        %v1305 = vrot.slane %v391, 3
        %v1306 = vsel %vm1266, %v1303, %v1305
        %v1307 = vrot.slane %v392, 3
        %v1308 = vrot.slane %v393, 3
        %v1309 = vsel %vm1266, %v1307, %v1308
        %v1310 = vrot.slane %v394, 3
        %v1311 = vsel %vm1266, %v1308, %v1310
        %v1312 = vrot.slane %v395, 3
        %v1313 = vrot.slane %v396, 3
        %v1314 = vsel %vm1266, %v1312, %v1313
        %v1315 = vrot.slane %v397, 3
        %v1316 = vsel %vm1266, %v1313, %v1315
        %v1317 = vrot.slane %v398, 3
        %v1318 = vrot.slane %v399, 3
        %v1319 = vsel %vm1266, %v1317, %v1318
        %v1320 = vrot.slane %v400, 3
        %v1321 = vsel %vm1266, %v1318, %v1320
        %v1322 = vrot.slane %v401, 3
        %v1323 = vrot.slane %v402, 3
        %v1324 = vsel %vm1266, %v1322, %v1323
        %v1325 = vrot.slane %v403, 3
        %v1326 = vsel %vm1266, %v1323, %v1325
        %v1327 = vrot.slane %v404, 3
        %v1328 = vrot.slane %v405, 3
        %v1329 = vsel %vm1266, %v1327, %v1328
        %v1330 = vrot.slane %v406, 3
        %v1331 = vsel %vm1266, %v1328, %v1330
        %v1332 = vrot.slane %v407, 3
        %v1333 = vrot.slane %v408, 3
        %v1334 = vsel %vm1266, %v1332, %v1333
        %v1335 = vrot.slane %v409, 3
        %v1336 = vsel %vm1266, %v1333, %v1335
        %v1337 = vrot.slane %v410, 3
        %v1338 = vrot.slane %v411, 3
        %v1339 = vsel %vm1266, %v1337, %v1338
        %v1340 = vrot.slane %v412, 3
        %v1341 = vsel %vm1266, %v1338, %v1340
        %v1342 = vrot.slane %v413, 3
        %v1343 = vrot.slane %v414, 3
        %v1344 = vsel %vm1266, %v1342, %v1343
        %v1345 = vrot.slane %v415, 3
        %v1346 = vsel %vm1266, %v1343, %v1345
        %v1379 = vpack.c.bf16 %v1271, %v1269
        %v1380 = vpack.c.bf16 %v1276, %v1274
        %v1381 = vpack.c.bf16 %v1281, %v1279
        %v1382 = vpack.c.bf16 %v1286, %v1284
        %v1383 = vpack.c.bf16 %v1291, %v1289
        %v1384 = vpack.c.bf16 %v1296, %v1294
        %v1385 = vpack.c.bf16 %v1301, %v1299
        %v1386 = vpack.c.bf16 %v1306, %v1304
        %v1387 = vpack.c.bf16 %v1311, %v1309
        %v1388 = vpack.c.bf16 %v1316, %v1314
        %v1389 = vpack.c.bf16 %v1321, %v1319
        %v1390 = vpack.c.bf16 %v1326, %v1324
        %v1391 = vpack.c.bf16 %v1331, %v1329
        %v1392 = vpack.c.bf16 %v1336, %v1334
        %v1393 = vpack.c.bf16 %v1341, %v1339
        %v1394 = vpack.c.bf16 %v1346, %v1344
        %s1395 = scalar_lea.vmem %s3, 60
        %v1396 = vld [vmem:[%s1395] sm:$0xf]
        %v1397 = vld [vmem:[%s1395 + $0x4] sm:$0xf]
        %v1398 = vld [vmem:[%s1395 + $0x8] sm:$0xf]
        %v1399 = vld [vmem:[%s1395 + $0xc] sm:$0xf]
        %v1400 = vld [vmem:[%s1395 + $0x10] sm:$0xf]
        %v1406 = vunpack.c.l.b16 %v1396
        %v1407 = vunpack.c.l.b16 %v1397
        %v1408 = vunpack.c.l.b16 %v1398
        %v1409 = vunpack.c.l.b16 %v1399
        %v1410 = vunpack.c.l.b16 %v1400
        %v1411 = vpack.c.b16 %v1407, %v1406
        %v1412 = vpack.c.b16 %v1409, %v1408
        %v1413 = vpack.c.b16 %v1410, %v1410
        %v1417 = vsel %vm647, %v1379, 0
        %v1420 = vsel %vm647, %v1380, 0
        %v1423 = vsel %vm647, %v1381, 0
        %v1426 = vsel %vm647, %v1382, 0
        %v1429 = vsel %vm647, %v1383, 0
        %v1432 = vsel %vm647, %v1384, 0
        %v1435 = vsel %vm647, %v1385, 0
        %v1438 = vsel %vm647, %v1386, 0
        %v1441 = vsel %vm647, %v1387, 0
        %v1444 = vsel %vm647, %v1388, 0
        %v1447 = vsel %vm647, %v1389, 0
        %v1450 = vsel %vm647, %v1390, 0
        %v1453 = vsel %vm647, %v1391, 0
        %v1456 = vsel %vm647, %v1392, 0
        %v1459 = vsel %vm647, %v1393, 0
        %v1462 = vsel %vm647, %v1394, 0
        %v1465 = vsel %vm696, %v1413, 0
        %1467 = vmatpush.bf16.msra.mxu0 0
        %1468 = vmatpush.bf16.msra.mxu0 0
        %1469 = vmatpush.bf16.msra.mxu0 0
        %1470 = vmatpush.bf16.msra.mxu0 0
        %1471 = vmatpush.bf16.msra.mxu0 0
        %1472 = vmatpush.bf16.msra.mxu0 %v1465
        %1473 = vmatpush.bf16.msra.mxu0 %v1412
        %1474 = vmatpush.bf16.msra.mxu0 %v1411
        %1475 = vmatmul.bf16.gmra.mxu0 %v1417
        %v1476 = vpop.f32.mrf.mxu0
        %v1477 = vadd.f32 0.0, %v1476
        %v1478 = vpop.f32.mrf.mxu0
        %v1479 = vadd.f32 0.0, %v1478
        %1480 = vmatmul.bf16.gmra.mxu0 %v1420
        %v1481 = vpop.f32.mrf.mxu0
        %v1482 = vadd.f32 0.0, %v1481
        %v1483 = vpop.f32.mrf.mxu0
        %v1484 = vadd.f32 0.0, %v1483
        %1485 = vmatmul.bf16.gmra.mxu0 %v1423
        %v1486 = vpop.f32.mrf.mxu0
        %v1487 = vadd.f32 0.0, %v1486
        %v1488 = vpop.f32.mrf.mxu0
        %v1489 = vadd.f32 0.0, %v1488
        %1490 = vmatmul.bf16.gmra.mxu0 %v1426
        %v1491 = vpop.f32.mrf.mxu0
        %v1492 = vadd.f32 0.0, %v1491
        %v1493 = vpop.f32.mrf.mxu0
        %v1494 = vadd.f32 0.0, %v1493
        %1495 = vmatmul.bf16.gmra.mxu0 %v1429
        %v1496 = vpop.f32.mrf.mxu0
        %v1497 = vadd.f32 0.0, %v1496
        %v1498 = vpop.f32.mrf.mxu0
        %v1499 = vadd.f32 0.0, %v1498
        %1500 = vmatmul.bf16.gmra.mxu0 %v1432
        %v1501 = vpop.f32.mrf.mxu0
        %v1502 = vadd.f32 0.0, %v1501
        %v1503 = vpop.f32.mrf.mxu0
        %v1504 = vadd.f32 0.0, %v1503
        %1505 = vmatmul.bf16.gmra.mxu0 %v1435
        %v1506 = vpop.f32.mrf.mxu0
        %v1507 = vadd.f32 0.0, %v1506
        %v1508 = vpop.f32.mrf.mxu0
        %v1509 = vadd.f32 0.0, %v1508
        %1510 = vmatmul.bf16.gmra.mxu0 %v1438
        %v1511 = vpop.f32.mrf.mxu0
        %v1512 = vadd.f32 0.0, %v1511
        %v1513 = vpop.f32.mrf.mxu0
        %v1514 = vadd.f32 0.0, %v1513
        %1515 = vmatmul.bf16.gmra.mxu0 %v1441
        %v1516 = vpop.f32.mrf.mxu0
        %v1517 = vadd.f32 0.0, %v1516
        %v1518 = vpop.f32.mrf.mxu0
        %v1519 = vadd.f32 0.0, %v1518
        %1520 = vmatmul.bf16.gmra.mxu0 %v1444
        %v1521 = vpop.f32.mrf.mxu0
        %v1522 = vadd.f32 0.0, %v1521
        %v1523 = vpop.f32.mrf.mxu0
        %v1524 = vadd.f32 0.0, %v1523
        %1525 = vmatmul.bf16.gmra.mxu0 %v1447
        %v1526 = vpop.f32.mrf.mxu0
        %v1527 = vadd.f32 0.0, %v1526
        %v1528 = vpop.f32.mrf.mxu0
        %v1529 = vadd.f32 0.0, %v1528
        %1530 = vmatmul.bf16.gmra.mxu0 %v1450
        %v1531 = vpop.f32.mrf.mxu0
        %v1532 = vadd.f32 0.0, %v1531
        %v1533 = vpop.f32.mrf.mxu0
        %v1534 = vadd.f32 0.0, %v1533
        %1535 = vmatmul.bf16.gmra.mxu0 %v1453
        %v1536 = vpop.f32.mrf.mxu0
        %v1537 = vadd.f32 0.0, %v1536
        %v1538 = vpop.f32.mrf.mxu0
        %v1539 = vadd.f32 0.0, %v1538
        %1540 = vmatmul.bf16.gmra.mxu0 %v1456
        %v1541 = vpop.f32.mrf.mxu0
        %v1542 = vadd.f32 0.0, %v1541
        %v1543 = vpop.f32.mrf.mxu0
        %v1544 = vadd.f32 0.0, %v1543
        %1545 = vmatmul.bf16.gmra.mxu0 %v1459
        %v1546 = vpop.f32.mrf.mxu0
        %v1547 = vadd.f32 0.0, %v1546
        %v1548 = vpop.f32.mrf.mxu0
        %v1549 = vadd.f32 0.0, %v1548
        %1550 = vmatmul.bf16.gmra.mxu0 %v1462
        %v1551 = vpop.f32.mrf.mxu0
        %v1552 = vadd.f32 0.0, %v1551
        %v1553 = vpop.f32.mrf.mxu0
        %v1554 = vadd.f32 0.0, %v1553
        %1555 = vdwg.mxu0
        %v1556 = vadd.f32 %v1234, %v1477
        %v1557 = vadd.f32 %v1235, %v1479
        %v1558 = vadd.f32 %v1236, %v1482
        %v1559 = vadd.f32 %v1237, %v1484
        %v1560 = vadd.f32 %v1238, %v1487
        %v1561 = vadd.f32 %v1239, %v1489
        %v1562 = vadd.f32 %v1240, %v1492
        %v1563 = vadd.f32 %v1241, %v1494
        %v1564 = vadd.f32 %v1242, %v1497
        %v1565 = vadd.f32 %v1243, %v1499
        %v1566 = vadd.f32 %v1244, %v1502
        %v1567 = vadd.f32 %v1245, %v1504
        %v1568 = vadd.f32 %v1246, %v1507
        %v1569 = vadd.f32 %v1247, %v1509
        %v1570 = vadd.f32 %v1248, %v1512
        %v1571 = vadd.f32 %v1249, %v1514
        %v1572 = vadd.f32 %v1250, %v1517
        %v1573 = vadd.f32 %v1251, %v1519
        %v1574 = vadd.f32 %v1252, %v1522
        %v1575 = vadd.f32 %v1253, %v1524
        %v1576 = vadd.f32 %v1254, %v1527
        %v1577 = vadd.f32 %v1255, %v1529
        %v1578 = vadd.f32 %v1256, %v1532
        %v1579 = vadd.f32 %v1257, %v1534
        %v1580 = vadd.f32 %v1258, %v1537
        %v1581 = vadd.f32 %v1259, %v1539
        %v1582 = vadd.f32 %v1260, %v1542
        %v1583 = vadd.f32 %v1261, %v1544
        %v1584 = vadd.f32 %v1262, %v1547
        %v1585 = vadd.f32 %v1263, %v1549
        %v1586 = vadd.f32 %v1264, %v1552
        %v1587 = vadd.f32 %v1265, %v1554
        %v1588 = vrot.slane %v368, 4
        %v1589 = vrot.slane %v369, 4
        %v1590 = vsel %vm696, %v1588, %v1589
        %v1591 = vrot.slane %v370, 4
        %v1592 = vsel %vm696, %v1589, %v1591
        %v1593 = vrot.slane %v371, 4
        %v1594 = vrot.slane %v372, 4
        %v1595 = vsel %vm696, %v1593, %v1594
        %v1596 = vrot.slane %v373, 4
        %v1597 = vsel %vm696, %v1594, %v1596
        %v1598 = vrot.slane %v374, 4
        %v1599 = vrot.slane %v375, 4
        %v1600 = vsel %vm696, %v1598, %v1599
        %v1601 = vrot.slane %v376, 4
        %v1602 = vsel %vm696, %v1599, %v1601
        %v1603 = vrot.slane %v377, 4
        %v1604 = vrot.slane %v378, 4
        %v1605 = vsel %vm696, %v1603, %v1604
        %v1606 = vrot.slane %v379, 4
        %v1607 = vsel %vm696, %v1604, %v1606
        %v1608 = vrot.slane %v380, 4
        %v1609 = vrot.slane %v381, 4
        %v1610 = vsel %vm696, %v1608, %v1609
        %v1611 = vrot.slane %v382, 4
        %v1612 = vsel %vm696, %v1609, %v1611
        %v1613 = vrot.slane %v383, 4
        %v1614 = vrot.slane %v384, 4
        %v1615 = vsel %vm696, %v1613, %v1614
        %v1616 = vrot.slane %v385, 4
        %v1617 = vsel %vm696, %v1614, %v1616
        %v1618 = vrot.slane %v386, 4
        %v1619 = vrot.slane %v387, 4
        %v1620 = vsel %vm696, %v1618, %v1619
        %v1621 = vrot.slane %v388, 4
        %v1622 = vsel %vm696, %v1619, %v1621
        %v1623 = vrot.slane %v389, 4
        %v1624 = vrot.slane %v390, 4
        %v1625 = vsel %vm696, %v1623, %v1624
        %v1626 = vrot.slane %v391, 4
        %v1627 = vsel %vm696, %v1624, %v1626
        %v1628 = vrot.slane %v392, 4
        %v1629 = vrot.slane %v393, 4
        %v1630 = vsel %vm696, %v1628, %v1629
        %v1631 = vrot.slane %v394, 4
        %v1632 = vsel %vm696, %v1629, %v1631
        %v1633 = vrot.slane %v395, 4
        %v1634 = vrot.slane %v396, 4
        %v1635 = vsel %vm696, %v1633, %v1634
        %v1636 = vrot.slane %v397, 4
        %v1637 = vsel %vm696, %v1634, %v1636
        %v1638 = vrot.slane %v398, 4
        %v1639 = vrot.slane %v399, 4
        %v1640 = vsel %vm696, %v1638, %v1639
        %v1641 = vrot.slane %v400, 4
        %v1642 = vsel %vm696, %v1639, %v1641
        %v1643 = vrot.slane %v401, 4
        %v1644 = vrot.slane %v402, 4
        %v1645 = vsel %vm696, %v1643, %v1644
        %v1646 = vrot.slane %v403, 4
        %v1647 = vsel %vm696, %v1644, %v1646
        %v1648 = vrot.slane %v404, 4
        %v1649 = vrot.slane %v405, 4
        %v1650 = vsel %vm696, %v1648, %v1649
        %v1651 = vrot.slane %v406, 4
        %v1652 = vsel %vm696, %v1649, %v1651
        %v1653 = vrot.slane %v407, 4
        %v1654 = vrot.slane %v408, 4
        %v1655 = vsel %vm696, %v1653, %v1654
        %v1656 = vrot.slane %v409, 4
        %v1657 = vsel %vm696, %v1654, %v1656
        %v1658 = vrot.slane %v410, 4
        %v1659 = vrot.slane %v411, 4
        %v1660 = vsel %vm696, %v1658, %v1659
        %v1661 = vrot.slane %v412, 4
        %v1662 = vsel %vm696, %v1659, %v1661
        %v1663 = vrot.slane %v413, 4
        %v1664 = vrot.slane %v414, 4
        %v1665 = vsel %vm696, %v1663, %v1664
        %v1666 = vrot.slane %v415, 4
        %v1667 = vsel %vm696, %v1664, %v1666
        %v1700 = vpack.c.bf16 %v1592, %v1590
        %v1701 = vpack.c.bf16 %v1597, %v1595
        %v1702 = vpack.c.bf16 %v1602, %v1600
        %v1703 = vpack.c.bf16 %v1607, %v1605
        %v1704 = vpack.c.bf16 %v1612, %v1610
        %v1705 = vpack.c.bf16 %v1617, %v1615
        %v1706 = vpack.c.bf16 %v1622, %v1620
        %v1707 = vpack.c.bf16 %v1627, %v1625
        %v1708 = vpack.c.bf16 %v1632, %v1630
        %v1709 = vpack.c.bf16 %v1637, %v1635
        %v1710 = vpack.c.bf16 %v1642, %v1640
        %v1711 = vpack.c.bf16 %v1647, %v1645
        %v1712 = vpack.c.bf16 %v1652, %v1650
        %v1713 = vpack.c.bf16 %v1657, %v1655
        %v1714 = vpack.c.bf16 %v1662, %v1660
        %v1715 = vpack.c.bf16 %v1667, %v1665
        %s1716 = scalar_lea.vmem %s3, 80
        %v1717 = vld [vmem:[%s1716] sm:$0xf]
        %v1718 = vld [vmem:[%s1716 + $0x4] sm:$0xf]
        %v1719 = vld [vmem:[%s1716 + $0x8] sm:$0xf]
        %v1720 = vld [vmem:[%s1716 + $0xc] sm:$0xf]
        %v1721 = vld [vmem:[%s1716 + $0x10] sm:$0xf]
        %v1727 = vunpack.c.l.b16 %v1717
        %v1728 = vunpack.c.l.b16 %v1718
        %v1729 = vunpack.c.l.b16 %v1719
        %v1730 = vunpack.c.l.b16 %v1720
        %v1731 = vunpack.c.l.b16 %v1721
        %v1732 = vpack.c.b16 %v1728, %v1727
        %v1733 = vpack.c.b16 %v1730, %v1729
        %v1734 = vpack.c.b16 %v1731, %v1731
        %v1738 = vsel %vm647, %v1700, 0
        %v1741 = vsel %vm647, %v1701, 0
        %v1744 = vsel %vm647, %v1702, 0
        %v1747 = vsel %vm647, %v1703, 0
        %v1750 = vsel %vm647, %v1704, 0
        %v1753 = vsel %vm647, %v1705, 0
        %v1756 = vsel %vm647, %v1706, 0
        %v1759 = vsel %vm647, %v1707, 0
        %v1762 = vsel %vm647, %v1708, 0
        %v1765 = vsel %vm647, %v1709, 0
        %v1768 = vsel %vm647, %v1710, 0
        %v1771 = vsel %vm647, %v1711, 0
        %v1774 = vsel %vm647, %v1712, 0
        %v1777 = vsel %vm647, %v1713, 0
        %v1780 = vsel %vm647, %v1714, 0
        %v1783 = vsel %vm647, %v1715, 0
        %v1786 = vsel %vm696, %v1734, 0
        %1788 = vmatpush.bf16.msra.mxu0 0
        %1789 = vmatpush.bf16.msra.mxu0 0
        %1790 = vmatpush.bf16.msra.mxu0 0
        %1791 = vmatpush.bf16.msra.mxu0 0
        %1792 = vmatpush.bf16.msra.mxu0 0
        %1793 = vmatpush.bf16.msra.mxu0 %v1786
        %1794 = vmatpush.bf16.msra.mxu0 %v1733
        %1795 = vmatpush.bf16.msra.mxu0 %v1732
        %1796 = vmatmul.bf16.gmra.mxu0 %v1738
        %v1797 = vpop.f32.mrf.mxu0
        %v1798 = vadd.f32 0.0, %v1797
        %v1799 = vpop.f32.mrf.mxu0
        %v1800 = vadd.f32 0.0, %v1799
        %1801 = vmatmul.bf16.gmra.mxu0 %v1741
        %v1802 = vpop.f32.mrf.mxu0
        %v1803 = vadd.f32 0.0, %v1802
        %v1804 = vpop.f32.mrf.mxu0
        %v1805 = vadd.f32 0.0, %v1804
        %1806 = vmatmul.bf16.gmra.mxu0 %v1744
        %v1807 = vpop.f32.mrf.mxu0
        %v1808 = vadd.f32 0.0, %v1807
        %v1809 = vpop.f32.mrf.mxu0
        %v1810 = vadd.f32 0.0, %v1809
        %1811 = vmatmul.bf16.gmra.mxu0 %v1747
        %v1812 = vpop.f32.mrf.mxu0
        %v1813 = vadd.f32 0.0, %v1812
        %v1814 = vpop.f32.mrf.mxu0
        %v1815 = vadd.f32 0.0, %v1814
        %1816 = vmatmul.bf16.gmra.mxu0 %v1750
        %v1817 = vpop.f32.mrf.mxu0
        %v1818 = vadd.f32 0.0, %v1817
        %v1819 = vpop.f32.mrf.mxu0
        %v1820 = vadd.f32 0.0, %v1819
        %1821 = vmatmul.bf16.gmra.mxu0 %v1753
        %v1822 = vpop.f32.mrf.mxu0
        %v1823 = vadd.f32 0.0, %v1822
        %v1824 = vpop.f32.mrf.mxu0
        %v1825 = vadd.f32 0.0, %v1824
        %1826 = vmatmul.bf16.gmra.mxu0 %v1756
        %v1827 = vpop.f32.mrf.mxu0
        %v1828 = vadd.f32 0.0, %v1827
        %v1829 = vpop.f32.mrf.mxu0
        %v1830 = vadd.f32 0.0, %v1829
        %1831 = vmatmul.bf16.gmra.mxu0 %v1759
        %v1832 = vpop.f32.mrf.mxu0
        %v1833 = vadd.f32 0.0, %v1832
        %v1834 = vpop.f32.mrf.mxu0
        %v1835 = vadd.f32 0.0, %v1834
        %1836 = vmatmul.bf16.gmra.mxu0 %v1762
        %v1837 = vpop.f32.mrf.mxu0
        %v1838 = vadd.f32 0.0, %v1837
        %v1839 = vpop.f32.mrf.mxu0
        %v1840 = vadd.f32 0.0, %v1839
        %1841 = vmatmul.bf16.gmra.mxu0 %v1765
        %v1842 = vpop.f32.mrf.mxu0
        %v1843 = vadd.f32 0.0, %v1842
        %v1844 = vpop.f32.mrf.mxu0
        %v1845 = vadd.f32 0.0, %v1844
        %1846 = vmatmul.bf16.gmra.mxu0 %v1768
        %v1847 = vpop.f32.mrf.mxu0
        %v1848 = vadd.f32 0.0, %v1847
        %v1849 = vpop.f32.mrf.mxu0
        %v1850 = vadd.f32 0.0, %v1849
        %1851 = vmatmul.bf16.gmra.mxu0 %v1771
        %v1852 = vpop.f32.mrf.mxu0
        %v1853 = vadd.f32 0.0, %v1852
        %v1854 = vpop.f32.mrf.mxu0
        %v1855 = vadd.f32 0.0, %v1854
        %1856 = vmatmul.bf16.gmra.mxu0 %v1774
        %v1857 = vpop.f32.mrf.mxu0
        %v1858 = vadd.f32 0.0, %v1857
        %v1859 = vpop.f32.mrf.mxu0
        %v1860 = vadd.f32 0.0, %v1859
        %1861 = vmatmul.bf16.gmra.mxu0 %v1777
        %v1862 = vpop.f32.mrf.mxu0
        %v1863 = vadd.f32 0.0, %v1862
        %v1864 = vpop.f32.mrf.mxu0
        %v1865 = vadd.f32 0.0, %v1864
        %1866 = vmatmul.bf16.gmra.mxu0 %v1780
        %v1867 = vpop.f32.mrf.mxu0
        %v1868 = vadd.f32 0.0, %v1867
        %v1869 = vpop.f32.mrf.mxu0
        %v1870 = vadd.f32 0.0, %v1869
        %1871 = vmatmul.bf16.gmra.mxu0 %v1783
        %v1872 = vpop.f32.mrf.mxu0
        %v1873 = vadd.f32 0.0, %v1872
        %v1874 = vpop.f32.mrf.mxu0
        %v1875 = vadd.f32 0.0, %v1874
        %1876 = vdwg.mxu0
        %v1877 = vadd.f32 %v1556, %v1798
        %v1878 = vadd.f32 %v1557, %v1800
        %v1879 = vadd.f32 %v1558, %v1803
        %v1880 = vadd.f32 %v1559, %v1805
        %v1881 = vadd.f32 %v1560, %v1808
        %v1882 = vadd.f32 %v1561, %v1810
        %v1883 = vadd.f32 %v1562, %v1813
        %v1884 = vadd.f32 %v1563, %v1815
        %v1885 = vadd.f32 %v1564, %v1818
        %v1886 = vadd.f32 %v1565, %v1820
        %v1887 = vadd.f32 %v1566, %v1823
        %v1888 = vadd.f32 %v1567, %v1825
        %v1889 = vadd.f32 %v1568, %v1828
        %v1890 = vadd.f32 %v1569, %v1830
        %v1891 = vadd.f32 %v1570, %v1833
        %v1892 = vadd.f32 %v1571, %v1835
        %v1893 = vadd.f32 %v1572, %v1838
        %v1894 = vadd.f32 %v1573, %v1840
        %v1895 = vadd.f32 %v1574, %v1843
        %v1896 = vadd.f32 %v1575, %v1845
        %v1897 = vadd.f32 %v1576, %v1848
        %v1898 = vadd.f32 %v1577, %v1850
        %v1899 = vadd.f32 %v1578, %v1853
        %v1900 = vadd.f32 %v1579, %v1855
        %v1901 = vadd.f32 %v1580, %v1858
        %v1902 = vadd.f32 %v1581, %v1860
        %v1903 = vadd.f32 %v1582, %v1863
        %v1904 = vadd.f32 %v1583, %v1865
        %v1905 = vadd.f32 %v1584, %v1868
        %v1906 = vadd.f32 %v1585, %v1870
        %v1907 = vadd.f32 %v1586, %v1873
        %v1908 = vadd.f32 %v1587, %v1875
        %v1909 = vpack.c.bf16 %v417, %v416
        %s1910 = scalar_lea.vmem %s3, 100
        %v1911 = vld [vmem:[%s1910] sm:$0xf]
        %v1912 = vld [vmem:[%s1910 + $0x4] sm:$0xf]
        %v1913 = vld [vmem:[%s1910 + $0x8] sm:$0xf]
        %v1914 = vld [vmem:[%s1910 + $0xc] sm:$0xf]
        %v1915 = vld [vmem:[%s1910 + $0x10] sm:$0xf]
        %v1921 = vunpack.c.l.b16 %v1911
        %v1922 = vunpack.c.l.b16 %v1912
        %v1923 = vunpack.c.l.b16 %v1913
        %v1924 = vunpack.c.l.b16 %v1914
        %v1925 = vunpack.c.l.b16 %v1915
        %v1926 = vpack.c.b16 %v1922, %v1921
        %v1927 = vpack.c.b16 %v1924, %v1923
        %v1928 = vpack.c.b16 %v1925, %v1925
        %v1932 = vsel %vm647, %v1909, 0
        %v1935 = vsel %vm696, %v1928, 0
        %1937 = vmatpush.bf16.msra.mxu0 0
        %1938 = vmatpush.bf16.msra.mxu0 0
        %1939 = vmatpush.bf16.msra.mxu0 0
        %1940 = vmatpush.bf16.msra.mxu0 0
        %1941 = vmatpush.bf16.msra.mxu0 0
        %1942 = vmatpush.bf16.msra.mxu0 %v1935
        %1943 = vmatpush.bf16.msra.mxu0 %v1927
        %1944 = vmatpush.bf16.msra.mxu0 %v1926
        %1945 = vmatmul.bf16.gmra.mxu0 %v808
        %v1946 = vpop.f32.mrf.mxu0
        %v1947 = vadd.f32 0.0, %v1946
        %v1948 = vpop.f32.mrf.mxu0
        %v1949 = vadd.f32 0.0, %v1948
        %1950 = vmatmul.bf16.gmra.mxu0 %v811
        %v1951 = vpop.f32.mrf.mxu0
        %v1952 = vadd.f32 0.0, %v1951
        %v1953 = vpop.f32.mrf.mxu0
        %v1954 = vadd.f32 0.0, %v1953
        %1955 = vmatmul.bf16.gmra.mxu0 %v814
        %v1956 = vpop.f32.mrf.mxu0
        %v1957 = vadd.f32 0.0, %v1956
        %v1958 = vpop.f32.mrf.mxu0
        %v1959 = vadd.f32 0.0, %v1958
        %1960 = vmatmul.bf16.gmra.mxu0 %v817
        %v1961 = vpop.f32.mrf.mxu0
        %v1962 = vadd.f32 0.0, %v1961
        %v1963 = vpop.f32.mrf.mxu0
        %v1964 = vadd.f32 0.0, %v1963
        %1965 = vmatmul.bf16.gmra.mxu0 %v820
        %v1966 = vpop.f32.mrf.mxu0
        %v1967 = vadd.f32 0.0, %v1966
        %v1968 = vpop.f32.mrf.mxu0
        %v1969 = vadd.f32 0.0, %v1968
        %1970 = vmatmul.bf16.gmra.mxu0 %v823
        %v1971 = vpop.f32.mrf.mxu0
        %v1972 = vadd.f32 0.0, %v1971
        %v1973 = vpop.f32.mrf.mxu0
        %v1974 = vadd.f32 0.0, %v1973
        %1975 = vmatmul.bf16.gmra.mxu0 %v826
        %v1976 = vpop.f32.mrf.mxu0
        %v1977 = vadd.f32 0.0, %v1976
        %v1978 = vpop.f32.mrf.mxu0
        %v1979 = vadd.f32 0.0, %v1978
        %1980 = vmatmul.bf16.gmra.mxu0 %v829
        %v1981 = vpop.f32.mrf.mxu0
        %v1982 = vadd.f32 0.0, %v1981
        %v1983 = vpop.f32.mrf.mxu0
        %v1984 = vadd.f32 0.0, %v1983
        %1985 = vmatmul.bf16.gmra.mxu0 %v832
        %v1986 = vpop.f32.mrf.mxu0
        %v1987 = vadd.f32 0.0, %v1986
        %v1988 = vpop.f32.mrf.mxu0
        %v1989 = vadd.f32 0.0, %v1988
        %1990 = vmatmul.bf16.gmra.mxu0 %v835
        %v1991 = vpop.f32.mrf.mxu0
        %v1992 = vadd.f32 0.0, %v1991
        %v1993 = vpop.f32.mrf.mxu0
        %v1994 = vadd.f32 0.0, %v1993
        %1995 = vmatmul.bf16.gmra.mxu0 %v838
        %v1996 = vpop.f32.mrf.mxu0
        %v1997 = vadd.f32 0.0, %v1996
        %v1998 = vpop.f32.mrf.mxu0
        %v1999 = vadd.f32 0.0, %v1998
        %2000 = vmatmul.bf16.gmra.mxu0 %v841
        %v2001 = vpop.f32.mrf.mxu0
        %v2002 = vadd.f32 0.0, %v2001
        %v2003 = vpop.f32.mrf.mxu0
        %v2004 = vadd.f32 0.0, %v2003
        %2005 = vmatmul.bf16.gmra.mxu0 %v844
        %v2006 = vpop.f32.mrf.mxu0
        %v2007 = vadd.f32 0.0, %v2006
        %v2008 = vpop.f32.mrf.mxu0
        %v2009 = vadd.f32 0.0, %v2008
        %2010 = vmatmul.bf16.gmra.mxu0 %v847
        %v2011 = vpop.f32.mrf.mxu0
        %v2012 = vadd.f32 0.0, %v2011
        %v2013 = vpop.f32.mrf.mxu0
        %v2014 = vadd.f32 0.0, %v2013
        %2015 = vmatmul.bf16.gmra.mxu0 %v850
        %v2016 = vpop.f32.mrf.mxu0
        %v2017 = vadd.f32 0.0, %v2016
        %v2018 = vpop.f32.mrf.mxu0
        %v2019 = vadd.f32 0.0, %v2018
        %2020 = vmatmul.bf16.gmra.mxu0 %v1932
        %v2021 = vpop.f32.mrf.mxu0
        %v2022 = vadd.f32 0.0, %v2021
        %v2023 = vpop.f32.mrf.mxu0
        %v2024 = vadd.f32 0.0, %v2023
        %2025 = vdwg.mxu0
        %v2026 = vadd.f32 %v1877, %v1947
        %v2027 = vadd.f32 %v1878, %v1949
        %v2028 = vadd.f32 %v1879, %v1952
        %v2029 = vadd.f32 %v1880, %v1954
        %v2030 = vadd.f32 %v1881, %v1957
        %v2031 = vadd.f32 %v1882, %v1959
        %v2032 = vadd.f32 %v1883, %v1962
        %v2033 = vadd.f32 %v1884, %v1964
        %v2034 = vadd.f32 %v1885, %v1967
        %v2035 = vadd.f32 %v1886, %v1969
        %v2036 = vadd.f32 %v1887, %v1972
        %v2037 = vadd.f32 %v1888, %v1974
        %v2038 = vadd.f32 %v1889, %v1977
        %v2039 = vadd.f32 %v1890, %v1979
        %v2040 = vadd.f32 %v1891, %v1982
        %v2041 = vadd.f32 %v1892, %v1984
        %v2042 = vadd.f32 %v1893, %v1987
        %v2043 = vadd.f32 %v1894, %v1989
        %v2044 = vadd.f32 %v1895, %v1992
        %v2045 = vadd.f32 %v1896, %v1994
        %v2046 = vadd.f32 %v1897, %v1997
        %v2047 = vadd.f32 %v1898, %v1999
        %v2048 = vadd.f32 %v1899, %v2002
        %v2049 = vadd.f32 %v1900, %v2004
        %v2050 = vadd.f32 %v1901, %v2007
        %v2051 = vadd.f32 %v1902, %v2009
        %v2052 = vadd.f32 %v1903, %v2012
        %v2053 = vadd.f32 %v1904, %v2014
        %v2054 = vadd.f32 %v1905, %v2017
        %v2055 = vadd.f32 %v1906, %v2019
        %v2056 = vadd.f32 %v1907, %v2022
        %v2057 = vadd.f32 %v1908, %v2024
        %v2061 = vrot.slane %v416, 1
        %v2062 = vrot.slane %v417, 1
        %v2063 = vsel %vm497, %v2061, %v2062
        %v2064 = vrot.slane %v418, 1
        %v2065 = vsel %vm497, %v2062, %v2064
        %v2068 = vpack.c.bf16 %v2065, %v2063
        %s2069 = scalar_lea.vmem %s3, 120
        %v2070 = vld [vmem:[%s2069] sm:$0xf]
        %v2071 = vld [vmem:[%s2069 + $0x4] sm:$0xf]
        %v2072 = vld [vmem:[%s2069 + $0x8] sm:$0xf]
        %v2073 = vld [vmem:[%s2069 + $0xc] sm:$0xf]
        %v2074 = vld [vmem:[%s2069 + $0x10] sm:$0xf]
        %v2080 = vunpack.c.l.b16 %v2070
        %v2081 = vunpack.c.l.b16 %v2071
        %v2082 = vunpack.c.l.b16 %v2072
        %v2083 = vunpack.c.l.b16 %v2073
        %v2084 = vunpack.c.l.b16 %v2074
        %v2085 = vpack.c.b16 %v2081, %v2080
        %v2086 = vpack.c.b16 %v2083, %v2082
        %v2087 = vpack.c.b16 %v2084, %v2084
        %v2091 = vsel %vm647, %v2068, 0
        %v2094 = vsel %vm696, %v2087, 0
        %2096 = vmatpush.bf16.msra.mxu0 0
        %2097 = vmatpush.bf16.msra.mxu0 0
        %2098 = vmatpush.bf16.msra.mxu0 0
        %2099 = vmatpush.bf16.msra.mxu0 0
        %2100 = vmatpush.bf16.msra.mxu0 0
        %2101 = vmatpush.bf16.msra.mxu0 %v2094
        %2102 = vmatpush.bf16.msra.mxu0 %v2086
        %2103 = vmatpush.bf16.msra.mxu0 %v2085
        %2104 = vmatmul.bf16.gmra.mxu0 %v652
        %v2105 = vpop.f32.mrf.mxu0
        %v2106 = vadd.f32 0.0, %v2105
        %v2107 = vpop.f32.mrf.mxu0
        %v2108 = vadd.f32 0.0, %v2107
        %2109 = vmatmul.bf16.gmra.mxu0 %v655
        %v2110 = vpop.f32.mrf.mxu0
        %v2111 = vadd.f32 0.0, %v2110
        %v2112 = vpop.f32.mrf.mxu0
        %v2113 = vadd.f32 0.0, %v2112
        %2114 = vmatmul.bf16.gmra.mxu0 %v658
        %v2115 = vpop.f32.mrf.mxu0
        %v2116 = vadd.f32 0.0, %v2115
        %v2117 = vpop.f32.mrf.mxu0
        %v2118 = vadd.f32 0.0, %v2117
        %2119 = vmatmul.bf16.gmra.mxu0 %v661
        %v2120 = vpop.f32.mrf.mxu0
        %v2121 = vadd.f32 0.0, %v2120
        %v2122 = vpop.f32.mrf.mxu0
        %v2123 = vadd.f32 0.0, %v2122
        %2124 = vmatmul.bf16.gmra.mxu0 %v664
        %v2125 = vpop.f32.mrf.mxu0
        %v2126 = vadd.f32 0.0, %v2125
        %v2127 = vpop.f32.mrf.mxu0
        %v2128 = vadd.f32 0.0, %v2127
        %2129 = vmatmul.bf16.gmra.mxu0 %v667
        %v2130 = vpop.f32.mrf.mxu0
        %v2131 = vadd.f32 0.0, %v2130
        %v2132 = vpop.f32.mrf.mxu0
        %v2133 = vadd.f32 0.0, %v2132
        %2134 = vmatmul.bf16.gmra.mxu0 %v670
        %v2135 = vpop.f32.mrf.mxu0
        %v2136 = vadd.f32 0.0, %v2135
        %v2137 = vpop.f32.mrf.mxu0
        %v2138 = vadd.f32 0.0, %v2137
        %2139 = vmatmul.bf16.gmra.mxu0 %v673
        %v2140 = vpop.f32.mrf.mxu0
        %v2141 = vadd.f32 0.0, %v2140
        %v2142 = vpop.f32.mrf.mxu0
        %v2143 = vadd.f32 0.0, %v2142
        %2144 = vmatmul.bf16.gmra.mxu0 %v676
        %v2145 = vpop.f32.mrf.mxu0
        %v2146 = vadd.f32 0.0, %v2145
        %v2147 = vpop.f32.mrf.mxu0
        %v2148 = vadd.f32 0.0, %v2147
        %2149 = vmatmul.bf16.gmra.mxu0 %v679
        %v2150 = vpop.f32.mrf.mxu0
        %v2151 = vadd.f32 0.0, %v2150
        %v2152 = vpop.f32.mrf.mxu0
        %v2153 = vadd.f32 0.0, %v2152
        %2154 = vmatmul.bf16.gmra.mxu0 %v682
        %v2155 = vpop.f32.mrf.mxu0
        %v2156 = vadd.f32 0.0, %v2155
        %v2157 = vpop.f32.mrf.mxu0
        %v2158 = vadd.f32 0.0, %v2157
        %2159 = vmatmul.bf16.gmra.mxu0 %v685
        %v2160 = vpop.f32.mrf.mxu0
        %v2161 = vadd.f32 0.0, %v2160
        %v2162 = vpop.f32.mrf.mxu0
        %v2163 = vadd.f32 0.0, %v2162
        %2164 = vmatmul.bf16.gmra.mxu0 %v688
        %v2165 = vpop.f32.mrf.mxu0
        %v2166 = vadd.f32 0.0, %v2165
        %v2167 = vpop.f32.mrf.mxu0
        %v2168 = vadd.f32 0.0, %v2167
        %2169 = vmatmul.bf16.gmra.mxu0 %v691
        %v2170 = vpop.f32.mrf.mxu0
        %v2171 = vadd.f32 0.0, %v2170
        %v2172 = vpop.f32.mrf.mxu0
        %v2173 = vadd.f32 0.0, %v2172
        %2174 = vmatmul.bf16.gmra.mxu0 %v694
        %v2175 = vpop.f32.mrf.mxu0
        %v2176 = vadd.f32 0.0, %v2175
        %v2177 = vpop.f32.mrf.mxu0
        %v2178 = vadd.f32 0.0, %v2177
        %2179 = vmatmul.bf16.gmra.mxu0 %v2091
        %v2180 = vpop.f32.mrf.mxu0
        %v2181 = vadd.f32 0.0, %v2180
        %v2182 = vpop.f32.mrf.mxu0
        %v2183 = vadd.f32 0.0, %v2182
        %2184 = vdwg.mxu0
        %v2185 = vadd.f32 %v2026, %v2106
        %v2186 = vadd.f32 %v2027, %v2108
        %v2187 = vadd.f32 %v2028, %v2111
        %v2188 = vadd.f32 %v2029, %v2113
        %v2189 = vadd.f32 %v2030, %v2116
        %v2190 = vadd.f32 %v2031, %v2118
        %v2191 = vadd.f32 %v2032, %v2121
        %v2192 = vadd.f32 %v2033, %v2123
        %v2193 = vadd.f32 %v2034, %v2126
        %v2194 = vadd.f32 %v2035, %v2128
        %v2195 = vadd.f32 %v2036, %v2131
        %v2196 = vadd.f32 %v2037, %v2133
        %v2197 = vadd.f32 %v2038, %v2136
        %v2198 = vadd.f32 %v2039, %v2138
        %v2199 = vadd.f32 %v2040, %v2141
        %v2200 = vadd.f32 %v2041, %v2143
        %v2201 = vadd.f32 %v2042, %v2146
        %v2202 = vadd.f32 %v2043, %v2148
        %v2203 = vadd.f32 %v2044, %v2151
        %v2204 = vadd.f32 %v2045, %v2153
        %v2205 = vadd.f32 %v2046, %v2156
        %v2206 = vadd.f32 %v2047, %v2158
        %v2207 = vadd.f32 %v2048, %v2161
        %v2208 = vadd.f32 %v2049, %v2163
        %v2209 = vadd.f32 %v2050, %v2166
        %v2210 = vadd.f32 %v2051, %v2168
        %v2211 = vadd.f32 %v2052, %v2171
        %v2212 = vadd.f32 %v2053, %v2173
        %v2213 = vadd.f32 %v2054, %v2176
        %v2214 = vadd.f32 %v2055, %v2178
        %v2215 = vadd.f32 %v2056, %v2181
        %v2216 = vadd.f32 %v2057, %v2183
        %v2217 = vrot.slane %v416, 2
        %v2218 = vrot.slane %v417, 2
        %v2219 = vsel %vm944, %v2217, %v2218
        %v2220 = vrot.slane %v418, 2
        %v2221 = vsel %vm944, %v2218, %v2220
        %v2224 = vpack.c.bf16 %v2221, %v2219
        %s2225 = scalar_lea.vmem %s3, 140
        %v2226 = vld [vmem:[%s2225] sm:$0xf]
        %v2227 = vld [vmem:[%s2225 + $0x4] sm:$0xf]
        %v2228 = vld [vmem:[%s2225 + $0x8] sm:$0xf]
        %v2229 = vld [vmem:[%s2225 + $0xc] sm:$0xf]
        %v2230 = vld [vmem:[%s2225 + $0x10] sm:$0xf]
        %v2236 = vunpack.c.l.b16 %v2226
        %v2237 = vunpack.c.l.b16 %v2227
        %v2238 = vunpack.c.l.b16 %v2228
        %v2239 = vunpack.c.l.b16 %v2229
        %v2240 = vunpack.c.l.b16 %v2230
        %v2241 = vpack.c.b16 %v2237, %v2236
        %v2242 = vpack.c.b16 %v2239, %v2238
        %v2243 = vpack.c.b16 %v2240, %v2240
        %v2247 = vsel %vm647, %v2224, 0
        %v2250 = vsel %vm696, %v2243, 0
        %2252 = vmatpush.bf16.msra.mxu0 0
        %2253 = vmatpush.bf16.msra.mxu0 0
        %2254 = vmatpush.bf16.msra.mxu0 0
        %2255 = vmatpush.bf16.msra.mxu0 0
        %2256 = vmatpush.bf16.msra.mxu0 0
        %2257 = vmatpush.bf16.msra.mxu0 %v2250
        %2258 = vmatpush.bf16.msra.mxu0 %v2242
        %2259 = vmatpush.bf16.msra.mxu0 %v2241
        %2260 = vmatmul.bf16.gmra.mxu0 %v1098
        %v2261 = vpop.f32.mrf.mxu0
        %v2262 = vadd.f32 0.0, %v2261
        %v2263 = vpop.f32.mrf.mxu0
        %v2264 = vadd.f32 0.0, %v2263
        %2265 = vmatmul.bf16.gmra.mxu0 %v1101
        %v2266 = vpop.f32.mrf.mxu0
        %v2267 = vadd.f32 0.0, %v2266
        %v2268 = vpop.f32.mrf.mxu0
        %v2269 = vadd.f32 0.0, %v2268
        %2270 = vmatmul.bf16.gmra.mxu0 %v1104
        %v2271 = vpop.f32.mrf.mxu0
        %v2272 = vadd.f32 0.0, %v2271
        %v2273 = vpop.f32.mrf.mxu0
        %v2274 = vadd.f32 0.0, %v2273
        %2275 = vmatmul.bf16.gmra.mxu0 %v1107
        %v2276 = vpop.f32.mrf.mxu0
        %v2277 = vadd.f32 0.0, %v2276
        %v2278 = vpop.f32.mrf.mxu0
        %v2279 = vadd.f32 0.0, %v2278
        %2280 = vmatmul.bf16.gmra.mxu0 %v1110
        %v2281 = vpop.f32.mrf.mxu0
        %v2282 = vadd.f32 0.0, %v2281
        %v2283 = vpop.f32.mrf.mxu0
        %v2284 = vadd.f32 0.0, %v2283
        %2285 = vmatmul.bf16.gmra.mxu0 %v1113
        %v2286 = vpop.f32.mrf.mxu0
        %v2287 = vadd.f32 0.0, %v2286
        %v2288 = vpop.f32.mrf.mxu0
        %v2289 = vadd.f32 0.0, %v2288
        %2290 = vmatmul.bf16.gmra.mxu0 %v1116
        %v2291 = vpop.f32.mrf.mxu0
        %v2292 = vadd.f32 0.0, %v2291
        %v2293 = vpop.f32.mrf.mxu0
        %v2294 = vadd.f32 0.0, %v2293
        %2295 = vmatmul.bf16.gmra.mxu0 %v1119
        %v2296 = vpop.f32.mrf.mxu0
        %v2297 = vadd.f32 0.0, %v2296
        %v2298 = vpop.f32.mrf.mxu0
        %v2299 = vadd.f32 0.0, %v2298
        %2300 = vmatmul.bf16.gmra.mxu0 %v1122
        %v2301 = vpop.f32.mrf.mxu0
        %v2302 = vadd.f32 0.0, %v2301
        %v2303 = vpop.f32.mrf.mxu0
        %v2304 = vadd.f32 0.0, %v2303
        %2305 = vmatmul.bf16.gmra.mxu0 %v1125
        %v2306 = vpop.f32.mrf.mxu0
        %v2307 = vadd.f32 0.0, %v2306
        %v2308 = vpop.f32.mrf.mxu0
        %v2309 = vadd.f32 0.0, %v2308
        %2310 = vmatmul.bf16.gmra.mxu0 %v1128
        %v2311 = vpop.f32.mrf.mxu0
        %v2312 = vadd.f32 0.0, %v2311
        %v2313 = vpop.f32.mrf.mxu0
        %v2314 = vadd.f32 0.0, %v2313
        %2315 = vmatmul.bf16.gmra.mxu0 %v1131
        %v2316 = vpop.f32.mrf.mxu0
        %v2317 = vadd.f32 0.0, %v2316
        %v2318 = vpop.f32.mrf.mxu0
        %v2319 = vadd.f32 0.0, %v2318
        %2320 = vmatmul.bf16.gmra.mxu0 %v1134
        %v2321 = vpop.f32.mrf.mxu0
        %v2322 = vadd.f32 0.0, %v2321
        %v2323 = vpop.f32.mrf.mxu0
        %v2324 = vadd.f32 0.0, %v2323
        %2325 = vmatmul.bf16.gmra.mxu0 %v1137
        %v2326 = vpop.f32.mrf.mxu0
        %v2327 = vadd.f32 0.0, %v2326
        %v2328 = vpop.f32.mrf.mxu0
        %v2329 = vadd.f32 0.0, %v2328
        %2330 = vmatmul.bf16.gmra.mxu0 %v1140
        %v2331 = vpop.f32.mrf.mxu0
        %v2332 = vadd.f32 0.0, %v2331
        %v2333 = vpop.f32.mrf.mxu0
        %v2334 = vadd.f32 0.0, %v2333
        %2335 = vmatmul.bf16.gmra.mxu0 %v2247
        %v2336 = vpop.f32.mrf.mxu0
        %v2337 = vadd.f32 0.0, %v2336
        %v2338 = vpop.f32.mrf.mxu0
        %v2339 = vadd.f32 0.0, %v2338
        %2340 = vdwg.mxu0
        %v2341 = vadd.f32 %v2185, %v2262
        %v2342 = vadd.f32 %v2186, %v2264
        %v2343 = vadd.f32 %v2187, %v2267
        %v2344 = vadd.f32 %v2188, %v2269
        %v2345 = vadd.f32 %v2189, %v2272
        %v2346 = vadd.f32 %v2190, %v2274
        %v2347 = vadd.f32 %v2191, %v2277
        %v2348 = vadd.f32 %v2192, %v2279
        %v2349 = vadd.f32 %v2193, %v2282
        %v2350 = vadd.f32 %v2194, %v2284
        %v2351 = vadd.f32 %v2195, %v2287
        %v2352 = vadd.f32 %v2196, %v2289
        %v2353 = vadd.f32 %v2197, %v2292
        %v2354 = vadd.f32 %v2198, %v2294
        %v2355 = vadd.f32 %v2199, %v2297
        %v2356 = vadd.f32 %v2200, %v2299
        %v2357 = vadd.f32 %v2201, %v2302
        %v2358 = vadd.f32 %v2202, %v2304
        %v2359 = vadd.f32 %v2203, %v2307
        %v2360 = vadd.f32 %v2204, %v2309
        %v2361 = vadd.f32 %v2205, %v2312
        %v2362 = vadd.f32 %v2206, %v2314
        %v2363 = vadd.f32 %v2207, %v2317
        %v2364 = vadd.f32 %v2208, %v2319
        %v2365 = vadd.f32 %v2209, %v2322
        %v2366 = vadd.f32 %v2210, %v2324
        %v2367 = vadd.f32 %v2211, %v2327
        %v2368 = vadd.f32 %v2212, %v2329
        %v2369 = vadd.f32 %v2213, %v2332
        %v2370 = vadd.f32 %v2214, %v2334
        %v2371 = vadd.f32 %v2215, %v2337
        %v2372 = vadd.f32 %v2216, %v2339
        %v2373 = vrot.slane %v416, 3
        %v2374 = vrot.slane %v417, 3
        %v2375 = vsel %vm1266, %v2373, %v2374
        %v2376 = vrot.slane %v418, 3
        %v2377 = vsel %vm1266, %v2374, %v2376
        %v2380 = vpack.c.bf16 %v2377, %v2375
        %s2381 = scalar_lea.vmem %s3, 160
        %v2382 = vld [vmem:[%s2381] sm:$0xf]
        %v2383 = vld [vmem:[%s2381 + $0x4] sm:$0xf]
        %v2384 = vld [vmem:[%s2381 + $0x8] sm:$0xf]
        %v2385 = vld [vmem:[%s2381 + $0xc] sm:$0xf]
        %v2386 = vld [vmem:[%s2381 + $0x10] sm:$0xf]
        %v2392 = vunpack.c.l.b16 %v2382
        %v2393 = vunpack.c.l.b16 %v2383
        %v2394 = vunpack.c.l.b16 %v2384
        %v2395 = vunpack.c.l.b16 %v2385
        %v2396 = vunpack.c.l.b16 %v2386
        %v2397 = vpack.c.b16 %v2393, %v2392
        %v2398 = vpack.c.b16 %v2395, %v2394
        %v2399 = vpack.c.b16 %v2396, %v2396
        %v2403 = vsel %vm647, %v2380, 0
        %v2406 = vsel %vm696, %v2399, 0
        %2408 = vmatpush.bf16.msra.mxu0 0
        %2409 = vmatpush.bf16.msra.mxu0 0
        %2410 = vmatpush.bf16.msra.mxu0 0
        %2411 = vmatpush.bf16.msra.mxu0 0
        %2412 = vmatpush.bf16.msra.mxu0 0
        %2413 = vmatpush.bf16.msra.mxu0 %v2406
        %2414 = vmatpush.bf16.msra.mxu0 %v2398
        %2415 = vmatpush.bf16.msra.mxu0 %v2397
        %2416 = vmatmul.bf16.gmra.mxu0 %v1420
        %v2417 = vpop.f32.mrf.mxu0
        %v2418 = vadd.f32 0.0, %v2417
        %v2419 = vpop.f32.mrf.mxu0
        %v2420 = vadd.f32 0.0, %v2419
        %2421 = vmatmul.bf16.gmra.mxu0 %v1423
        %v2422 = vpop.f32.mrf.mxu0
        %v2423 = vadd.f32 0.0, %v2422
        %v2424 = vpop.f32.mrf.mxu0
        %v2425 = vadd.f32 0.0, %v2424
        %2426 = vmatmul.bf16.gmra.mxu0 %v1426
        %v2427 = vpop.f32.mrf.mxu0
        %v2428 = vadd.f32 0.0, %v2427
        %v2429 = vpop.f32.mrf.mxu0
        %v2430 = vadd.f32 0.0, %v2429
        %2431 = vmatmul.bf16.gmra.mxu0 %v1429
        %v2432 = vpop.f32.mrf.mxu0
        %v2433 = vadd.f32 0.0, %v2432
        %v2434 = vpop.f32.mrf.mxu0
        %v2435 = vadd.f32 0.0, %v2434
        %2436 = vmatmul.bf16.gmra.mxu0 %v1432
        %v2437 = vpop.f32.mrf.mxu0
        %v2438 = vadd.f32 0.0, %v2437
        %v2439 = vpop.f32.mrf.mxu0
        %v2440 = vadd.f32 0.0, %v2439
        %2441 = vmatmul.bf16.gmra.mxu0 %v1435
        %v2442 = vpop.f32.mrf.mxu0
        %v2443 = vadd.f32 0.0, %v2442
        %v2444 = vpop.f32.mrf.mxu0
        %v2445 = vadd.f32 0.0, %v2444
        %2446 = vmatmul.bf16.gmra.mxu0 %v1438
        %v2447 = vpop.f32.mrf.mxu0
        %v2448 = vadd.f32 0.0, %v2447
        %v2449 = vpop.f32.mrf.mxu0
        %v2450 = vadd.f32 0.0, %v2449
        %2451 = vmatmul.bf16.gmra.mxu0 %v1441
        %v2452 = vpop.f32.mrf.mxu0
        %v2453 = vadd.f32 0.0, %v2452
        %v2454 = vpop.f32.mrf.mxu0
        %v2455 = vadd.f32 0.0, %v2454
        %2456 = vmatmul.bf16.gmra.mxu0 %v1444
        %v2457 = vpop.f32.mrf.mxu0
        %v2458 = vadd.f32 0.0, %v2457
        %v2459 = vpop.f32.mrf.mxu0
        %v2460 = vadd.f32 0.0, %v2459
        %2461 = vmatmul.bf16.gmra.mxu0 %v1447
        %v2462 = vpop.f32.mrf.mxu0
        %v2463 = vadd.f32 0.0, %v2462
        %v2464 = vpop.f32.mrf.mxu0
        %v2465 = vadd.f32 0.0, %v2464
        %2466 = vmatmul.bf16.gmra.mxu0 %v1450
        %v2467 = vpop.f32.mrf.mxu0
        %v2468 = vadd.f32 0.0, %v2467
        %v2469 = vpop.f32.mrf.mxu0
        %v2470 = vadd.f32 0.0, %v2469
        %2471 = vmatmul.bf16.gmra.mxu0 %v1453
        %v2472 = vpop.f32.mrf.mxu0
        %v2473 = vadd.f32 0.0, %v2472
        %v2474 = vpop.f32.mrf.mxu0
        %v2475 = vadd.f32 0.0, %v2474
        %2476 = vmatmul.bf16.gmra.mxu0 %v1456
        %v2477 = vpop.f32.mrf.mxu0
        %v2478 = vadd.f32 0.0, %v2477
        %v2479 = vpop.f32.mrf.mxu0
        %v2480 = vadd.f32 0.0, %v2479
        %2481 = vmatmul.bf16.gmra.mxu0 %v1459
        %v2482 = vpop.f32.mrf.mxu0
        %v2483 = vadd.f32 0.0, %v2482
        %v2484 = vpop.f32.mrf.mxu0
        %v2485 = vadd.f32 0.0, %v2484
        %2486 = vmatmul.bf16.gmra.mxu0 %v1462
        %v2487 = vpop.f32.mrf.mxu0
        %v2488 = vadd.f32 0.0, %v2487
        %v2489 = vpop.f32.mrf.mxu0
        %v2490 = vadd.f32 0.0, %v2489
        %2491 = vmatmul.bf16.gmra.mxu0 %v2403
        %v2492 = vpop.f32.mrf.mxu0
        %v2493 = vadd.f32 0.0, %v2492
        %v2494 = vpop.f32.mrf.mxu0
        %v2495 = vadd.f32 0.0, %v2494
        %2496 = vdwg.mxu0
        %v2497 = vadd.f32 %v2341, %v2418
        %v2498 = vadd.f32 %v2342, %v2420
        %v2499 = vadd.f32 %v2343, %v2423
        %v2500 = vadd.f32 %v2344, %v2425
        %v2501 = vadd.f32 %v2345, %v2428
        %v2502 = vadd.f32 %v2346, %v2430
        %v2503 = vadd.f32 %v2347, %v2433
        %v2504 = vadd.f32 %v2348, %v2435
        %v2505 = vadd.f32 %v2349, %v2438
        %v2506 = vadd.f32 %v2350, %v2440
        %v2507 = vadd.f32 %v2351, %v2443
        %v2508 = vadd.f32 %v2352, %v2445
        %v2509 = vadd.f32 %v2353, %v2448
        %v2510 = vadd.f32 %v2354, %v2450
        %v2511 = vadd.f32 %v2355, %v2453
        %v2512 = vadd.f32 %v2356, %v2455
        %v2513 = vadd.f32 %v2357, %v2458
        %v2514 = vadd.f32 %v2358, %v2460
        %v2515 = vadd.f32 %v2359, %v2463
        %v2516 = vadd.f32 %v2360, %v2465
        %v2517 = vadd.f32 %v2361, %v2468
        %v2518 = vadd.f32 %v2362, %v2470
        %v2519 = vadd.f32 %v2363, %v2473
        %v2520 = vadd.f32 %v2364, %v2475
        %v2521 = vadd.f32 %v2365, %v2478
        %v2522 = vadd.f32 %v2366, %v2480
        %v2523 = vadd.f32 %v2367, %v2483
        %v2524 = vadd.f32 %v2368, %v2485
        %v2525 = vadd.f32 %v2369, %v2488
        %v2526 = vadd.f32 %v2370, %v2490
        %v2527 = vadd.f32 %v2371, %v2493
        %v2528 = vadd.f32 %v2372, %v2495
        %v2529 = vrot.slane %v416, 4
        %v2530 = vrot.slane %v417, 4
        %v2531 = vsel %vm696, %v2529, %v2530
        %v2532 = vrot.slane %v418, 4
        %v2533 = vsel %vm696, %v2530, %v2532
        %v2536 = vpack.c.bf16 %v2533, %v2531
        %s2537 = scalar_lea.vmem %s3, 180
        %v2538 = vld [vmem:[%s2537] sm:$0xf]
        %v2539 = vld [vmem:[%s2537 + $0x4] sm:$0xf]
        %v2540 = vld [vmem:[%s2537 + $0x8] sm:$0xf]
        %v2541 = vld [vmem:[%s2537 + $0xc] sm:$0xf]
        %v2542 = vld [vmem:[%s2537 + $0x10] sm:$0xf]
        %v2548 = vunpack.c.l.b16 %v2538
        %v2549 = vunpack.c.l.b16 %v2539
        %v2550 = vunpack.c.l.b16 %v2540
        %v2551 = vunpack.c.l.b16 %v2541
        %v2552 = vunpack.c.l.b16 %v2542
        %v2553 = vpack.c.b16 %v2549, %v2548
        %v2554 = vpack.c.b16 %v2551, %v2550
        %v2555 = vpack.c.b16 %v2552, %v2552
        %v2559 = vsel %vm647, %v2536, 0
        %v2562 = vsel %vm696, %v2555, 0
        %2564 = vmatpush.bf16.msra.mxu0 0
        %2565 = vmatpush.bf16.msra.mxu0 0
        %2566 = vmatpush.bf16.msra.mxu0 0
        %2567 = vmatpush.bf16.msra.mxu0 0
        %2568 = vmatpush.bf16.msra.mxu0 0
        %2569 = vmatpush.bf16.msra.mxu0 %v2562
        %2570 = vmatpush.bf16.msra.mxu0 %v2554
        %2571 = vmatpush.bf16.msra.mxu0 %v2553
        %2572 = vmatmul.bf16.gmra.mxu0 %v1741
        %v2573 = vpop.f32.mrf.mxu0
        %v2574 = vadd.f32 0.0, %v2573
        %v2575 = vpop.f32.mrf.mxu0
        %v2576 = vadd.f32 0.0, %v2575
        %2577 = vmatmul.bf16.gmra.mxu0 %v1744
        %v2578 = vpop.f32.mrf.mxu0
        %v2579 = vadd.f32 0.0, %v2578
        %v2580 = vpop.f32.mrf.mxu0
        %v2581 = vadd.f32 0.0, %v2580
        %2582 = vmatmul.bf16.gmra.mxu0 %v1747
        %v2583 = vpop.f32.mrf.mxu0
        %v2584 = vadd.f32 0.0, %v2583
        %v2585 = vpop.f32.mrf.mxu0
        %v2586 = vadd.f32 0.0, %v2585
        %2587 = vmatmul.bf16.gmra.mxu0 %v1750
        %v2588 = vpop.f32.mrf.mxu0
        %v2589 = vadd.f32 0.0, %v2588
        %v2590 = vpop.f32.mrf.mxu0
        %v2591 = vadd.f32 0.0, %v2590
        %2592 = vmatmul.bf16.gmra.mxu0 %v1753
        %v2593 = vpop.f32.mrf.mxu0
        %v2594 = vadd.f32 0.0, %v2593
        %v2595 = vpop.f32.mrf.mxu0
        %v2596 = vadd.f32 0.0, %v2595
        %2597 = vmatmul.bf16.gmra.mxu0 %v1756
        %v2598 = vpop.f32.mrf.mxu0
        %v2599 = vadd.f32 0.0, %v2598
        %v2600 = vpop.f32.mrf.mxu0
        %v2601 = vadd.f32 0.0, %v2600
        %2602 = vmatmul.bf16.gmra.mxu0 %v1759
        %v2603 = vpop.f32.mrf.mxu0
        %v2604 = vadd.f32 0.0, %v2603
        %v2605 = vpop.f32.mrf.mxu0
        %v2606 = vadd.f32 0.0, %v2605
        %2607 = vmatmul.bf16.gmra.mxu0 %v1762
        %v2608 = vpop.f32.mrf.mxu0
        %v2609 = vadd.f32 0.0, %v2608
        %v2610 = vpop.f32.mrf.mxu0
        %v2611 = vadd.f32 0.0, %v2610
        %2612 = vmatmul.bf16.gmra.mxu0 %v1765
        %v2613 = vpop.f32.mrf.mxu0
        %v2614 = vadd.f32 0.0, %v2613
        %v2615 = vpop.f32.mrf.mxu0
        %v2616 = vadd.f32 0.0, %v2615
        %2617 = vmatmul.bf16.gmra.mxu0 %v1768
        %v2618 = vpop.f32.mrf.mxu0
        %v2619 = vadd.f32 0.0, %v2618
        %v2620 = vpop.f32.mrf.mxu0
        %v2621 = vadd.f32 0.0, %v2620
        %2622 = vmatmul.bf16.gmra.mxu0 %v1771
        %v2623 = vpop.f32.mrf.mxu0
        %v2624 = vadd.f32 0.0, %v2623
        %v2625 = vpop.f32.mrf.mxu0
        %v2626 = vadd.f32 0.0, %v2625
        %2627 = vmatmul.bf16.gmra.mxu0 %v1774
        %v2628 = vpop.f32.mrf.mxu0
        %v2629 = vadd.f32 0.0, %v2628
        %v2630 = vpop.f32.mrf.mxu0
        %v2631 = vadd.f32 0.0, %v2630
        %2632 = vmatmul.bf16.gmra.mxu0 %v1777
        %v2633 = vpop.f32.mrf.mxu0
        %v2634 = vadd.f32 0.0, %v2633
        %v2635 = vpop.f32.mrf.mxu0
        %v2636 = vadd.f32 0.0, %v2635
        %2637 = vmatmul.bf16.gmra.mxu0 %v1780
        %v2638 = vpop.f32.mrf.mxu0
        %v2639 = vadd.f32 0.0, %v2638
        %v2640 = vpop.f32.mrf.mxu0
        %v2641 = vadd.f32 0.0, %v2640
        %2642 = vmatmul.bf16.gmra.mxu0 %v1783
        %v2643 = vpop.f32.mrf.mxu0
        %v2644 = vadd.f32 0.0, %v2643
        %v2645 = vpop.f32.mrf.mxu0
        %v2646 = vadd.f32 0.0, %v2645
        %2647 = vmatmul.bf16.gmra.mxu0 %v2559
        %v2648 = vpop.f32.mrf.mxu0
        %v2649 = vadd.f32 0.0, %v2648
        %v2650 = vpop.f32.mrf.mxu0
        %v2651 = vadd.f32 0.0, %v2650
        %2652 = vdwg.mxu0
        %v2653 = vadd.f32 %v2497, %v2574
        %v2654 = vadd.f32 %v2498, %v2576
        %v2655 = vadd.f32 %v2499, %v2579
        %v2656 = vadd.f32 %v2500, %v2581
        %v2657 = vadd.f32 %v2501, %v2584
        %v2658 = vadd.f32 %v2502, %v2586
        %v2659 = vadd.f32 %v2503, %v2589
        %v2660 = vadd.f32 %v2504, %v2591
        %v2661 = vadd.f32 %v2505, %v2594
        %v2662 = vadd.f32 %v2506, %v2596
        %v2663 = vadd.f32 %v2507, %v2599
        %v2664 = vadd.f32 %v2508, %v2601
        %v2665 = vadd.f32 %v2509, %v2604
        %v2666 = vadd.f32 %v2510, %v2606
        %v2667 = vadd.f32 %v2511, %v2609
        %v2668 = vadd.f32 %v2512, %v2611
        %v2669 = vadd.f32 %v2513, %v2614
        %v2670 = vadd.f32 %v2514, %v2616
        %v2671 = vadd.f32 %v2515, %v2619
        %v2672 = vadd.f32 %v2516, %v2621
        %v2673 = vadd.f32 %v2517, %v2624
        %v2674 = vadd.f32 %v2518, %v2626
        %v2675 = vadd.f32 %v2519, %v2629
        %v2676 = vadd.f32 %v2520, %v2631
        %v2677 = vadd.f32 %v2521, %v2634
        %v2678 = vadd.f32 %v2522, %v2636
        %v2679 = vadd.f32 %v2523, %v2639
        %v2680 = vadd.f32 %v2524, %v2641
        %v2681 = vadd.f32 %v2525, %v2644
        %v2682 = vadd.f32 %v2526, %v2646
        %v2683 = vadd.f32 %v2527, %v2649
        %v2684 = vadd.f32 %v2528, %v2651
        %v2685 = vpack.c.bf16 %v420, %v419
        %s2686 = scalar_lea.vmem %s3, 200
        %v2687 = vld [vmem:[%s2686] sm:$0xf]
        %v2688 = vld [vmem:[%s2686 + $0x4] sm:$0xf]
        %v2689 = vld [vmem:[%s2686 + $0x8] sm:$0xf]
        %v2690 = vld [vmem:[%s2686 + $0xc] sm:$0xf]
        %v2691 = vld [vmem:[%s2686 + $0x10] sm:$0xf]
        %v2697 = vunpack.c.l.b16 %v2687
        %v2698 = vunpack.c.l.b16 %v2688
        %v2699 = vunpack.c.l.b16 %v2689
        %v2700 = vunpack.c.l.b16 %v2690
        %v2701 = vunpack.c.l.b16 %v2691
        %v2702 = vpack.c.b16 %v2698, %v2697
        %v2703 = vpack.c.b16 %v2700, %v2699
        %v2704 = vpack.c.b16 %v2701, %v2701
        %v2708 = vsel %vm647, %v2685, 0
        %v2711 = vsel %vm696, %v2704, 0
        %2713 = vmatpush.bf16.msra.mxu0 0
        %2714 = vmatpush.bf16.msra.mxu0 0
        %2715 = vmatpush.bf16.msra.mxu0 0
        %2716 = vmatpush.bf16.msra.mxu0 0
        %2717 = vmatpush.bf16.msra.mxu0 0
        %2718 = vmatpush.bf16.msra.mxu0 %v2711
        %2719 = vmatpush.bf16.msra.mxu0 %v2703
        %2720 = vmatpush.bf16.msra.mxu0 %v2702
        %2721 = vmatmul.bf16.gmra.mxu0 %v811
        %v2722 = vpop.f32.mrf.mxu0
        %v2723 = vadd.f32 0.0, %v2722
        %v2724 = vpop.f32.mrf.mxu0
        %v2725 = vadd.f32 0.0, %v2724
        %2726 = vmatmul.bf16.gmra.mxu0 %v814
        %v2727 = vpop.f32.mrf.mxu0
        %v2728 = vadd.f32 0.0, %v2727
        %v2729 = vpop.f32.mrf.mxu0
        %v2730 = vadd.f32 0.0, %v2729
        %2731 = vmatmul.bf16.gmra.mxu0 %v817
        %v2732 = vpop.f32.mrf.mxu0
        %v2733 = vadd.f32 0.0, %v2732
        %v2734 = vpop.f32.mrf.mxu0
        %v2735 = vadd.f32 0.0, %v2734
        %2736 = vmatmul.bf16.gmra.mxu0 %v820
        %v2737 = vpop.f32.mrf.mxu0
        %v2738 = vadd.f32 0.0, %v2737
        %v2739 = vpop.f32.mrf.mxu0
        %v2740 = vadd.f32 0.0, %v2739
        %2741 = vmatmul.bf16.gmra.mxu0 %v823
        %v2742 = vpop.f32.mrf.mxu0
        %v2743 = vadd.f32 0.0, %v2742
        %v2744 = vpop.f32.mrf.mxu0
        %v2745 = vadd.f32 0.0, %v2744
        %2746 = vmatmul.bf16.gmra.mxu0 %v826
        %v2747 = vpop.f32.mrf.mxu0
        %v2748 = vadd.f32 0.0, %v2747
        %v2749 = vpop.f32.mrf.mxu0
        %v2750 = vadd.f32 0.0, %v2749
        %2751 = vmatmul.bf16.gmra.mxu0 %v829
        %v2752 = vpop.f32.mrf.mxu0
        %v2753 = vadd.f32 0.0, %v2752
        %v2754 = vpop.f32.mrf.mxu0
        %v2755 = vadd.f32 0.0, %v2754
        %2756 = vmatmul.bf16.gmra.mxu0 %v832
        %v2757 = vpop.f32.mrf.mxu0
        %v2758 = vadd.f32 0.0, %v2757
        %v2759 = vpop.f32.mrf.mxu0
        %v2760 = vadd.f32 0.0, %v2759
        %2761 = vmatmul.bf16.gmra.mxu0 %v835
        %v2762 = vpop.f32.mrf.mxu0
        %v2763 = vadd.f32 0.0, %v2762
        %v2764 = vpop.f32.mrf.mxu0
        %v2765 = vadd.f32 0.0, %v2764
        %2766 = vmatmul.bf16.gmra.mxu0 %v838
        %v2767 = vpop.f32.mrf.mxu0
        %v2768 = vadd.f32 0.0, %v2767
        %v2769 = vpop.f32.mrf.mxu0
        %v2770 = vadd.f32 0.0, %v2769
        %2771 = vmatmul.bf16.gmra.mxu0 %v841
        %v2772 = vpop.f32.mrf.mxu0
        %v2773 = vadd.f32 0.0, %v2772
        %v2774 = vpop.f32.mrf.mxu0
        %v2775 = vadd.f32 0.0, %v2774
        %2776 = vmatmul.bf16.gmra.mxu0 %v844
        %v2777 = vpop.f32.mrf.mxu0
        %v2778 = vadd.f32 0.0, %v2777
        %v2779 = vpop.f32.mrf.mxu0
        %v2780 = vadd.f32 0.0, %v2779
        %2781 = vmatmul.bf16.gmra.mxu0 %v847
        %v2782 = vpop.f32.mrf.mxu0
        %v2783 = vadd.f32 0.0, %v2782
        %v2784 = vpop.f32.mrf.mxu0
        %v2785 = vadd.f32 0.0, %v2784
        %2786 = vmatmul.bf16.gmra.mxu0 %v850
        %v2787 = vpop.f32.mrf.mxu0
        %v2788 = vadd.f32 0.0, %v2787
        %v2789 = vpop.f32.mrf.mxu0
        %v2790 = vadd.f32 0.0, %v2789
        %2791 = vmatmul.bf16.gmra.mxu0 %v1932
        %v2792 = vpop.f32.mrf.mxu0
        %v2793 = vadd.f32 0.0, %v2792
        %v2794 = vpop.f32.mrf.mxu0
        %v2795 = vadd.f32 0.0, %v2794
        %2796 = vmatmul.bf16.gmra.mxu0 %v2708
        %v2797 = vpop.f32.mrf.mxu0
        %v2798 = vadd.f32 0.0, %v2797
        %v2799 = vpop.f32.mrf.mxu0
        %v2800 = vadd.f32 0.0, %v2799
        %2801 = vdwg.mxu0
        %v2802 = vadd.f32 %v2653, %v2723
        %v2803 = vadd.f32 %v2654, %v2725
        %v2804 = vadd.f32 %v2655, %v2728
        %v2805 = vadd.f32 %v2656, %v2730
        %v2806 = vadd.f32 %v2657, %v2733
        %v2807 = vadd.f32 %v2658, %v2735
        %v2808 = vadd.f32 %v2659, %v2738
        %v2809 = vadd.f32 %v2660, %v2740
        %v2810 = vadd.f32 %v2661, %v2743
        %v2811 = vadd.f32 %v2662, %v2745
        %v2812 = vadd.f32 %v2663, %v2748
        %v2813 = vadd.f32 %v2664, %v2750
        %v2814 = vadd.f32 %v2665, %v2753
        %v2815 = vadd.f32 %v2666, %v2755
        %v2816 = vadd.f32 %v2667, %v2758
        %v2817 = vadd.f32 %v2668, %v2760
        %v2818 = vadd.f32 %v2669, %v2763
        %v2819 = vadd.f32 %v2670, %v2765
        %v2820 = vadd.f32 %v2671, %v2768
        %v2821 = vadd.f32 %v2672, %v2770
        %v2822 = vadd.f32 %v2673, %v2773
        %v2823 = vadd.f32 %v2674, %v2775
        %v2824 = vadd.f32 %v2675, %v2778
        %v2825 = vadd.f32 %v2676, %v2780
        %v2826 = vadd.f32 %v2677, %v2783
        %v2827 = vadd.f32 %v2678, %v2785
        %v2828 = vadd.f32 %v2679, %v2788
        %v2829 = vadd.f32 %v2680, %v2790
        %v2830 = vadd.f32 %v2681, %v2793
        %v2831 = vadd.f32 %v2682, %v2795
        %v2832 = vadd.f32 %v2683, %v2798
        %v2833 = vadd.f32 %v2684, %v2800
        %v2837 = vrot.slane %v419, 1
        %v2838 = vrot.slane %v420, 1
        %v2839 = vsel %vm497, %v2837, %v2838
        %v2840 = vrot.slane %v421, 1
        %v2841 = vsel %vm497, %v2838, %v2840
        %v2844 = vpack.c.bf16 %v2841, %v2839
        %s2845 = scalar_lea.vmem %s3, 220
        %v2846 = vld [vmem:[%s2845] sm:$0xf]
        %v2847 = vld [vmem:[%s2845 + $0x4] sm:$0xf]
        %v2848 = vld [vmem:[%s2845 + $0x8] sm:$0xf]
        %v2849 = vld [vmem:[%s2845 + $0xc] sm:$0xf]
        %v2850 = vld [vmem:[%s2845 + $0x10] sm:$0xf]
        %v2856 = vunpack.c.l.b16 %v2846
        %v2857 = vunpack.c.l.b16 %v2847
        %v2858 = vunpack.c.l.b16 %v2848
        %v2859 = vunpack.c.l.b16 %v2849
        %v2860 = vunpack.c.l.b16 %v2850
        %v2861 = vpack.c.b16 %v2857, %v2856
        %v2862 = vpack.c.b16 %v2859, %v2858
        %v2863 = vpack.c.b16 %v2860, %v2860
        %v2867 = vsel %vm647, %v2844, 0
        %v2870 = vsel %vm696, %v2863, 0
        %2872 = vmatpush.bf16.msra.mxu0 0
        %2873 = vmatpush.bf16.msra.mxu0 0
        %2874 = vmatpush.bf16.msra.mxu0 0
        %2875 = vmatpush.bf16.msra.mxu0 0
        %2876 = vmatpush.bf16.msra.mxu0 0
        %2877 = vmatpush.bf16.msra.mxu0 %v2870
        %2878 = vmatpush.bf16.msra.mxu0 %v2862
        %2879 = vmatpush.bf16.msra.mxu0 %v2861
        %2880 = vmatmul.bf16.gmra.mxu0 %v655
        %v2881 = vpop.f32.mrf.mxu0
        %v2882 = vadd.f32 0.0, %v2881
        %v2883 = vpop.f32.mrf.mxu0
        %v2884 = vadd.f32 0.0, %v2883
        %2885 = vmatmul.bf16.gmra.mxu0 %v658
        %v2886 = vpop.f32.mrf.mxu0
        %v2887 = vadd.f32 0.0, %v2886
        %v2888 = vpop.f32.mrf.mxu0
        %v2889 = vadd.f32 0.0, %v2888
        %2890 = vmatmul.bf16.gmra.mxu0 %v661
        %v2891 = vpop.f32.mrf.mxu0
        %v2892 = vadd.f32 0.0, %v2891
        %v2893 = vpop.f32.mrf.mxu0
        %v2894 = vadd.f32 0.0, %v2893
        %2895 = vmatmul.bf16.gmra.mxu0 %v664
        %v2896 = vpop.f32.mrf.mxu0
        %v2897 = vadd.f32 0.0, %v2896
        %v2898 = vpop.f32.mrf.mxu0
        %v2899 = vadd.f32 0.0, %v2898
        %2900 = vmatmul.bf16.gmra.mxu0 %v667
        %v2901 = vpop.f32.mrf.mxu0
        %v2902 = vadd.f32 0.0, %v2901
        %v2903 = vpop.f32.mrf.mxu0
        %v2904 = vadd.f32 0.0, %v2903
        %2905 = vmatmul.bf16.gmra.mxu0 %v670
        %v2906 = vpop.f32.mrf.mxu0
        %v2907 = vadd.f32 0.0, %v2906
        %v2908 = vpop.f32.mrf.mxu0
        %v2909 = vadd.f32 0.0, %v2908
        %2910 = vmatmul.bf16.gmra.mxu0 %v673
        %v2911 = vpop.f32.mrf.mxu0
        %v2912 = vadd.f32 0.0, %v2911
        %v2913 = vpop.f32.mrf.mxu0
        %v2914 = vadd.f32 0.0, %v2913
        %2915 = vmatmul.bf16.gmra.mxu0 %v676
        %v2916 = vpop.f32.mrf.mxu0
        %v2917 = vadd.f32 0.0, %v2916
        %v2918 = vpop.f32.mrf.mxu0
        %v2919 = vadd.f32 0.0, %v2918
        %2920 = vmatmul.bf16.gmra.mxu0 %v679
        %v2921 = vpop.f32.mrf.mxu0
        %v2922 = vadd.f32 0.0, %v2921
        %v2923 = vpop.f32.mrf.mxu0
        %v2924 = vadd.f32 0.0, %v2923
        %2925 = vmatmul.bf16.gmra.mxu0 %v682
        %v2926 = vpop.f32.mrf.mxu0
        %v2927 = vadd.f32 0.0, %v2926
        %v2928 = vpop.f32.mrf.mxu0
        %v2929 = vadd.f32 0.0, %v2928
        %2930 = vmatmul.bf16.gmra.mxu0 %v685
        %v2931 = vpop.f32.mrf.mxu0
        %v2932 = vadd.f32 0.0, %v2931
        %v2933 = vpop.f32.mrf.mxu0
        %v2934 = vadd.f32 0.0, %v2933
        %2935 = vmatmul.bf16.gmra.mxu0 %v688
        %v2936 = vpop.f32.mrf.mxu0
        %v2937 = vadd.f32 0.0, %v2936
        %v2938 = vpop.f32.mrf.mxu0
        %v2939 = vadd.f32 0.0, %v2938
        %2940 = vmatmul.bf16.gmra.mxu0 %v691
        %v2941 = vpop.f32.mrf.mxu0
        %v2942 = vadd.f32 0.0, %v2941
        %v2943 = vpop.f32.mrf.mxu0
        %v2944 = vadd.f32 0.0, %v2943
        %2945 = vmatmul.bf16.gmra.mxu0 %v694
        %v2946 = vpop.f32.mrf.mxu0
        %v2947 = vadd.f32 0.0, %v2946
        %v2948 = vpop.f32.mrf.mxu0
        %v2949 = vadd.f32 0.0, %v2948
        %2950 = vmatmul.bf16.gmra.mxu0 %v2091
        %v2951 = vpop.f32.mrf.mxu0
        %v2952 = vadd.f32 0.0, %v2951
        %v2953 = vpop.f32.mrf.mxu0
        %v2954 = vadd.f32 0.0, %v2953
        %2955 = vmatmul.bf16.gmra.mxu0 %v2867
        %v2956 = vpop.f32.mrf.mxu0
        %v2957 = vadd.f32 0.0, %v2956
        %v2958 = vpop.f32.mrf.mxu0
        %v2959 = vadd.f32 0.0, %v2958
        %2960 = vdwg.mxu0
        %v2961 = vadd.f32 %v2802, %v2882
        %v2962 = vadd.f32 %v2803, %v2884
        %v2963 = vadd.f32 %v2804, %v2887
        %v2964 = vadd.f32 %v2805, %v2889
        %v2965 = vadd.f32 %v2806, %v2892
        %v2966 = vadd.f32 %v2807, %v2894
        %v2967 = vadd.f32 %v2808, %v2897
        %v2968 = vadd.f32 %v2809, %v2899
        %v2969 = vadd.f32 %v2810, %v2902
        %v2970 = vadd.f32 %v2811, %v2904
        %v2971 = vadd.f32 %v2812, %v2907
        %v2972 = vadd.f32 %v2813, %v2909
        %v2973 = vadd.f32 %v2814, %v2912
        %v2974 = vadd.f32 %v2815, %v2914
        %v2975 = vadd.f32 %v2816, %v2917
        %v2976 = vadd.f32 %v2817, %v2919
        %v2977 = vadd.f32 %v2818, %v2922
        %v2978 = vadd.f32 %v2819, %v2924
        %v2979 = vadd.f32 %v2820, %v2927
        %v2980 = vadd.f32 %v2821, %v2929
        %v2981 = vadd.f32 %v2822, %v2932
        %v2982 = vadd.f32 %v2823, %v2934
        %v2983 = vadd.f32 %v2824, %v2937
        %v2984 = vadd.f32 %v2825, %v2939
        %v2985 = vadd.f32 %v2826, %v2942
        %v2986 = vadd.f32 %v2827, %v2944
        %v2987 = vadd.f32 %v2828, %v2947
        %v2988 = vadd.f32 %v2829, %v2949
        %v2989 = vadd.f32 %v2830, %v2952
        %v2990 = vadd.f32 %v2831, %v2954
        %v2991 = vadd.f32 %v2832, %v2957
        %v2992 = vadd.f32 %v2833, %v2959
        %v2993 = vrot.slane %v419, 2
        %v2994 = vrot.slane %v420, 2
        %v2995 = vsel %vm944, %v2993, %v2994
        %v2996 = vrot.slane %v421, 2
        %v2997 = vsel %vm944, %v2994, %v2996
        %v3000 = vpack.c.bf16 %v2997, %v2995
        %s3001 = scalar_lea.vmem %s3, 240
        %v3002 = vld [vmem:[%s3001] sm:$0xf]
        %v3003 = vld [vmem:[%s3001 + $0x4] sm:$0xf]
        %v3004 = vld [vmem:[%s3001 + $0x8] sm:$0xf]
        %v3005 = vld [vmem:[%s3001 + $0xc] sm:$0xf]
        %v3006 = vld [vmem:[%s3001 + $0x10] sm:$0xf]
        %v3012 = vunpack.c.l.b16 %v3002
        %v3013 = vunpack.c.l.b16 %v3003
        %v3014 = vunpack.c.l.b16 %v3004
        %v3015 = vunpack.c.l.b16 %v3005
        %v3016 = vunpack.c.l.b16 %v3006
        %v3017 = vpack.c.b16 %v3013, %v3012
        %v3018 = vpack.c.b16 %v3015, %v3014
        %v3019 = vpack.c.b16 %v3016, %v3016
        %v3023 = vsel %vm647, %v3000, 0
        %v3026 = vsel %vm696, %v3019, 0
        %3028 = vmatpush.bf16.msra.mxu0 0
        %3029 = vmatpush.bf16.msra.mxu0 0
        %3030 = vmatpush.bf16.msra.mxu0 0
        %3031 = vmatpush.bf16.msra.mxu0 0
        %3032 = vmatpush.bf16.msra.mxu0 0
        %3033 = vmatpush.bf16.msra.mxu0 %v3026
        %3034 = vmatpush.bf16.msra.mxu0 %v3018
        %3035 = vmatpush.bf16.msra.mxu0 %v3017
        %3036 = vmatmul.bf16.gmra.mxu0 %v1101
        %v3037 = vpop.f32.mrf.mxu0
        %v3038 = vadd.f32 0.0, %v3037
        %v3039 = vpop.f32.mrf.mxu0
        %v3040 = vadd.f32 0.0, %v3039
        %3041 = vmatmul.bf16.gmra.mxu0 %v1104
        %v3042 = vpop.f32.mrf.mxu0
        %v3043 = vadd.f32 0.0, %v3042
        %v3044 = vpop.f32.mrf.mxu0
        %v3045 = vadd.f32 0.0, %v3044
        %3046 = vmatmul.bf16.gmra.mxu0 %v1107
        %v3047 = vpop.f32.mrf.mxu0
        %v3048 = vadd.f32 0.0, %v3047
        %v3049 = vpop.f32.mrf.mxu0
        %v3050 = vadd.f32 0.0, %v3049
        %3051 = vmatmul.bf16.gmra.mxu0 %v1110
        %v3052 = vpop.f32.mrf.mxu0
        %v3053 = vadd.f32 0.0, %v3052
        %v3054 = vpop.f32.mrf.mxu0
        %v3055 = vadd.f32 0.0, %v3054
        %3056 = vmatmul.bf16.gmra.mxu0 %v1113
        %v3057 = vpop.f32.mrf.mxu0
        %v3058 = vadd.f32 0.0, %v3057
        %v3059 = vpop.f32.mrf.mxu0
        %v3060 = vadd.f32 0.0, %v3059
        %3061 = vmatmul.bf16.gmra.mxu0 %v1116
        %v3062 = vpop.f32.mrf.mxu0
        %v3063 = vadd.f32 0.0, %v3062
        %v3064 = vpop.f32.mrf.mxu0
        %v3065 = vadd.f32 0.0, %v3064
        %3066 = vmatmul.bf16.gmra.mxu0 %v1119
        %v3067 = vpop.f32.mrf.mxu0
        %v3068 = vadd.f32 0.0, %v3067
        %v3069 = vpop.f32.mrf.mxu0
        %v3070 = vadd.f32 0.0, %v3069
        %3071 = vmatmul.bf16.gmra.mxu0 %v1122
        %v3072 = vpop.f32.mrf.mxu0
        %v3073 = vadd.f32 0.0, %v3072
        %v3074 = vpop.f32.mrf.mxu0
        %v3075 = vadd.f32 0.0, %v3074
        %3076 = vmatmul.bf16.gmra.mxu0 %v1125
        %v3077 = vpop.f32.mrf.mxu0
        %v3078 = vadd.f32 0.0, %v3077
        %v3079 = vpop.f32.mrf.mxu0
        %v3080 = vadd.f32 0.0, %v3079
        %3081 = vmatmul.bf16.gmra.mxu0 %v1128
        %v3082 = vpop.f32.mrf.mxu0
        %v3083 = vadd.f32 0.0, %v3082
        %v3084 = vpop.f32.mrf.mxu0
        %v3085 = vadd.f32 0.0, %v3084
        %3086 = vmatmul.bf16.gmra.mxu0 %v1131
        %v3087 = vpop.f32.mrf.mxu0
        %v3088 = vadd.f32 0.0, %v3087
        %v3089 = vpop.f32.mrf.mxu0
        %v3090 = vadd.f32 0.0, %v3089
        %3091 = vmatmul.bf16.gmra.mxu0 %v1134
        %v3092 = vpop.f32.mrf.mxu0
        %v3093 = vadd.f32 0.0, %v3092
        %v3094 = vpop.f32.mrf.mxu0
        %v3095 = vadd.f32 0.0, %v3094
        %3096 = vmatmul.bf16.gmra.mxu0 %v1137
        %v3097 = vpop.f32.mrf.mxu0
        %v3098 = vadd.f32 0.0, %v3097
        %v3099 = vpop.f32.mrf.mxu0
        %v3100 = vadd.f32 0.0, %v3099
        %3101 = vmatmul.bf16.gmra.mxu0 %v1140
        %v3102 = vpop.f32.mrf.mxu0
        %v3103 = vadd.f32 0.0, %v3102
        %v3104 = vpop.f32.mrf.mxu0
        %v3105 = vadd.f32 0.0, %v3104
        %3106 = vmatmul.bf16.gmra.mxu0 %v2247
        %v3107 = vpop.f32.mrf.mxu0
        %v3108 = vadd.f32 0.0, %v3107
        %v3109 = vpop.f32.mrf.mxu0
        %v3110 = vadd.f32 0.0, %v3109
        %3111 = vmatmul.bf16.gmra.mxu0 %v3023
        %v3112 = vpop.f32.mrf.mxu0
        %v3113 = vadd.f32 0.0, %v3112
        %v3114 = vpop.f32.mrf.mxu0
        %v3115 = vadd.f32 0.0, %v3114
        %3116 = vdwg.mxu0
        %v3117 = vadd.f32 %v2961, %v3038
        %v3118 = vadd.f32 %v2962, %v3040
        %v3119 = vadd.f32 %v2963, %v3043
        %v3120 = vadd.f32 %v2964, %v3045
        %v3121 = vadd.f32 %v2965, %v3048
        %v3122 = vadd.f32 %v2966, %v3050
        %v3123 = vadd.f32 %v2967, %v3053
        %v3124 = vadd.f32 %v2968, %v3055
        %v3125 = vadd.f32 %v2969, %v3058
        %v3126 = vadd.f32 %v2970, %v3060
        %v3127 = vadd.f32 %v2971, %v3063
        %v3128 = vadd.f32 %v2972, %v3065
        %v3129 = vadd.f32 %v2973, %v3068
        %v3130 = vadd.f32 %v2974, %v3070
        %v3131 = vadd.f32 %v2975, %v3073
        %v3132 = vadd.f32 %v2976, %v3075
        %v3133 = vadd.f32 %v2977, %v3078
        %v3134 = vadd.f32 %v2978, %v3080
        %v3135 = vadd.f32 %v2979, %v3083
        %v3136 = vadd.f32 %v2980, %v3085
        %v3137 = vadd.f32 %v2981, %v3088
        %v3138 = vadd.f32 %v2982, %v3090
        %v3139 = vadd.f32 %v2983, %v3093
        %v3140 = vadd.f32 %v2984, %v3095
        %v3141 = vadd.f32 %v2985, %v3098
        %v3142 = vadd.f32 %v2986, %v3100
        %v3143 = vadd.f32 %v2987, %v3103
        %v3144 = vadd.f32 %v2988, %v3105
        %v3145 = vadd.f32 %v2989, %v3108
        %v3146 = vadd.f32 %v2990, %v3110
        %v3147 = vadd.f32 %v2991, %v3113
        %v3148 = vadd.f32 %v2992, %v3115
        %v3149 = vrot.slane %v419, 3
        %v3150 = vrot.slane %v420, 3
        %v3151 = vsel %vm1266, %v3149, %v3150
        %v3152 = vrot.slane %v421, 3
        %v3153 = vsel %vm1266, %v3150, %v3152
        %v3156 = vpack.c.bf16 %v3153, %v3151
        %s3157 = scalar_lea.vmem %s3, 260
        %v3158 = vld [vmem:[%s3157] sm:$0xf]
        %v3159 = vld [vmem:[%s3157 + $0x4] sm:$0xf]
        %v3160 = vld [vmem:[%s3157 + $0x8] sm:$0xf]
        %v3161 = vld [vmem:[%s3157 + $0xc] sm:$0xf]
        %v3162 = vld [vmem:[%s3157 + $0x10] sm:$0xf]
        %v3168 = vunpack.c.l.b16 %v3158
        %v3169 = vunpack.c.l.b16 %v3159
        %v3170 = vunpack.c.l.b16 %v3160
        %v3171 = vunpack.c.l.b16 %v3161
        %v3172 = vunpack.c.l.b16 %v3162
        %v3173 = vpack.c.b16 %v3169, %v3168
        %v3174 = vpack.c.b16 %v3171, %v3170
        %v3175 = vpack.c.b16 %v3172, %v3172
        %v3179 = vsel %vm647, %v3156, 0
        %v3182 = vsel %vm696, %v3175, 0
        %3184 = vmatpush.bf16.msra.mxu0 0
        %3185 = vmatpush.bf16.msra.mxu0 0
        %3186 = vmatpush.bf16.msra.mxu0 0
        %3187 = vmatpush.bf16.msra.mxu0 0
        %3188 = vmatpush.bf16.msra.mxu0 0
        %3189 = vmatpush.bf16.msra.mxu0 %v3182
        %3190 = vmatpush.bf16.msra.mxu0 %v3174
        %3191 = vmatpush.bf16.msra.mxu0 %v3173
        %3192 = vmatmul.bf16.gmra.mxu0 %v1423
        %v3193 = vpop.f32.mrf.mxu0
        %v3194 = vadd.f32 0.0, %v3193
        %v3195 = vpop.f32.mrf.mxu0
        %v3196 = vadd.f32 0.0, %v3195
        %3197 = vmatmul.bf16.gmra.mxu0 %v1426
        %v3198 = vpop.f32.mrf.mxu0
        %v3199 = vadd.f32 0.0, %v3198
        %v3200 = vpop.f32.mrf.mxu0
        %v3201 = vadd.f32 0.0, %v3200
        %3202 = vmatmul.bf16.gmra.mxu0 %v1429
        %v3203 = vpop.f32.mrf.mxu0
        %v3204 = vadd.f32 0.0, %v3203
        %v3205 = vpop.f32.mrf.mxu0
        %v3206 = vadd.f32 0.0, %v3205
        %3207 = vmatmul.bf16.gmra.mxu0 %v1432
        %v3208 = vpop.f32.mrf.mxu0
        %v3209 = vadd.f32 0.0, %v3208
        %v3210 = vpop.f32.mrf.mxu0
        %v3211 = vadd.f32 0.0, %v3210
        %3212 = vmatmul.bf16.gmra.mxu0 %v1435
        %v3213 = vpop.f32.mrf.mxu0
        %v3214 = vadd.f32 0.0, %v3213
        %v3215 = vpop.f32.mrf.mxu0
        %v3216 = vadd.f32 0.0, %v3215
        %3217 = vmatmul.bf16.gmra.mxu0 %v1438
        %v3218 = vpop.f32.mrf.mxu0
        %v3219 = vadd.f32 0.0, %v3218
        %v3220 = vpop.f32.mrf.mxu0
        %v3221 = vadd.f32 0.0, %v3220
        %3222 = vmatmul.bf16.gmra.mxu0 %v1441
        %v3223 = vpop.f32.mrf.mxu0
        %v3224 = vadd.f32 0.0, %v3223
        %v3225 = vpop.f32.mrf.mxu0
        %v3226 = vadd.f32 0.0, %v3225
        %3227 = vmatmul.bf16.gmra.mxu0 %v1444
        %v3228 = vpop.f32.mrf.mxu0
        %v3229 = vadd.f32 0.0, %v3228
        %v3230 = vpop.f32.mrf.mxu0
        %v3231 = vadd.f32 0.0, %v3230
        %3232 = vmatmul.bf16.gmra.mxu0 %v1447
        %v3233 = vpop.f32.mrf.mxu0
        %v3234 = vadd.f32 0.0, %v3233
        %v3235 = vpop.f32.mrf.mxu0
        %v3236 = vadd.f32 0.0, %v3235
        %3237 = vmatmul.bf16.gmra.mxu0 %v1450
        %v3238 = vpop.f32.mrf.mxu0
        %v3239 = vadd.f32 0.0, %v3238
        %v3240 = vpop.f32.mrf.mxu0
        %v3241 = vadd.f32 0.0, %v3240
        %3242 = vmatmul.bf16.gmra.mxu0 %v1453
        %v3243 = vpop.f32.mrf.mxu0
        %v3244 = vadd.f32 0.0, %v3243
        %v3245 = vpop.f32.mrf.mxu0
        %v3246 = vadd.f32 0.0, %v3245
        %3247 = vmatmul.bf16.gmra.mxu0 %v1456
        %v3248 = vpop.f32.mrf.mxu0
        %v3249 = vadd.f32 0.0, %v3248
        %v3250 = vpop.f32.mrf.mxu0
        %v3251 = vadd.f32 0.0, %v3250
        %3252 = vmatmul.bf16.gmra.mxu0 %v1459
        %v3253 = vpop.f32.mrf.mxu0
        %v3254 = vadd.f32 0.0, %v3253
        %v3255 = vpop.f32.mrf.mxu0
        %v3256 = vadd.f32 0.0, %v3255
        %3257 = vmatmul.bf16.gmra.mxu0 %v1462
        %v3258 = vpop.f32.mrf.mxu0
        %v3259 = vadd.f32 0.0, %v3258
        %v3260 = vpop.f32.mrf.mxu0
        %v3261 = vadd.f32 0.0, %v3260
        %3262 = vmatmul.bf16.gmra.mxu0 %v2403
        %v3263 = vpop.f32.mrf.mxu0
        %v3264 = vadd.f32 0.0, %v3263
        %v3265 = vpop.f32.mrf.mxu0
        %v3266 = vadd.f32 0.0, %v3265
        %3267 = vmatmul.bf16.gmra.mxu0 %v3179
        %v3268 = vpop.f32.mrf.mxu0
        %v3269 = vadd.f32 0.0, %v3268
        %v3270 = vpop.f32.mrf.mxu0
        %v3271 = vadd.f32 0.0, %v3270
        %3272 = vdwg.mxu0
        %v3273 = vadd.f32 %v3117, %v3194
        %v3274 = vadd.f32 %v3118, %v3196
        %v3275 = vadd.f32 %v3119, %v3199
        %v3276 = vadd.f32 %v3120, %v3201
        %v3277 = vadd.f32 %v3121, %v3204
        %v3278 = vadd.f32 %v3122, %v3206
        %v3279 = vadd.f32 %v3123, %v3209
        %v3280 = vadd.f32 %v3124, %v3211
        %v3281 = vadd.f32 %v3125, %v3214
        %v3282 = vadd.f32 %v3126, %v3216
        %v3283 = vadd.f32 %v3127, %v3219
        %v3284 = vadd.f32 %v3128, %v3221
        %v3285 = vadd.f32 %v3129, %v3224
        %v3286 = vadd.f32 %v3130, %v3226
        %v3287 = vadd.f32 %v3131, %v3229
        %v3288 = vadd.f32 %v3132, %v3231
        %v3289 = vadd.f32 %v3133, %v3234
        %v3290 = vadd.f32 %v3134, %v3236
        %v3291 = vadd.f32 %v3135, %v3239
        %v3292 = vadd.f32 %v3136, %v3241
        %v3293 = vadd.f32 %v3137, %v3244
        %v3294 = vadd.f32 %v3138, %v3246
        %v3295 = vadd.f32 %v3139, %v3249
        %v3296 = vadd.f32 %v3140, %v3251
        %v3297 = vadd.f32 %v3141, %v3254
        %v3298 = vadd.f32 %v3142, %v3256
        %v3299 = vadd.f32 %v3143, %v3259
        %v3300 = vadd.f32 %v3144, %v3261
        %v3301 = vadd.f32 %v3145, %v3264
        %v3302 = vadd.f32 %v3146, %v3266
        %v3303 = vadd.f32 %v3147, %v3269
        %v3304 = vadd.f32 %v3148, %v3271
        %v3305 = vrot.slane %v419, 4
        %v3306 = vrot.slane %v420, 4
        %v3307 = vsel %vm696, %v3305, %v3306
        %v3308 = vrot.slane %v421, 4
        %v3309 = vsel %vm696, %v3306, %v3308
        %v3312 = vpack.c.bf16 %v3309, %v3307
        %s3313 = scalar_lea.vmem %s3, 280
        %v3314 = vld [vmem:[%s3313] sm:$0xf]
        %v3315 = vld [vmem:[%s3313 + $0x4] sm:$0xf]
        %v3316 = vld [vmem:[%s3313 + $0x8] sm:$0xf]
        %v3317 = vld [vmem:[%s3313 + $0xc] sm:$0xf]
        %v3318 = vld [vmem:[%s3313 + $0x10] sm:$0xf]
        %v3324 = vunpack.c.l.b16 %v3314
        %v3325 = vunpack.c.l.b16 %v3315
        %v3326 = vunpack.c.l.b16 %v3316
        %v3327 = vunpack.c.l.b16 %v3317
        %v3328 = vunpack.c.l.b16 %v3318
        %v3329 = vpack.c.b16 %v3325, %v3324
        %v3330 = vpack.c.b16 %v3327, %v3326
        %v3331 = vpack.c.b16 %v3328, %v3328
        %v3335 = vsel %vm647, %v3312, 0
        %v3338 = vsel %vm696, %v3331, 0
        %3340 = vmatpush.bf16.msra.mxu0 0
        %3341 = vmatpush.bf16.msra.mxu0 0
        %3342 = vmatpush.bf16.msra.mxu0 0
        %3343 = vmatpush.bf16.msra.mxu0 0
        %3344 = vmatpush.bf16.msra.mxu0 0
        %3345 = vmatpush.bf16.msra.mxu0 %v3338
        %3346 = vmatpush.bf16.msra.mxu0 %v3330
        %3347 = vmatpush.bf16.msra.mxu0 %v3329
        %3348 = vmatmul.bf16.gmra.mxu0 %v1744
        %v3349 = vpop.f32.mrf.mxu0
        %v3350 = vadd.f32 0.0, %v3349
        %v3351 = vpop.f32.mrf.mxu0
        %v3352 = vadd.f32 0.0, %v3351
        %3353 = vmatmul.bf16.gmra.mxu0 %v1747
        %v3354 = vpop.f32.mrf.mxu0
        %v3355 = vadd.f32 0.0, %v3354
        %v3356 = vpop.f32.mrf.mxu0
        %v3357 = vadd.f32 0.0, %v3356
        %3358 = vmatmul.bf16.gmra.mxu0 %v1750
        %v3359 = vpop.f32.mrf.mxu0
        %v3360 = vadd.f32 0.0, %v3359
        %v3361 = vpop.f32.mrf.mxu0
        %v3362 = vadd.f32 0.0, %v3361
        %3363 = vmatmul.bf16.gmra.mxu0 %v1753
        %v3364 = vpop.f32.mrf.mxu0
        %v3365 = vadd.f32 0.0, %v3364
        %v3366 = vpop.f32.mrf.mxu0
        %v3367 = vadd.f32 0.0, %v3366
        %3368 = vmatmul.bf16.gmra.mxu0 %v1756
        %v3369 = vpop.f32.mrf.mxu0
        %v3370 = vadd.f32 0.0, %v3369
        %v3371 = vpop.f32.mrf.mxu0
        %v3372 = vadd.f32 0.0, %v3371
        %3373 = vmatmul.bf16.gmra.mxu0 %v1759
        %v3374 = vpop.f32.mrf.mxu0
        %v3375 = vadd.f32 0.0, %v3374
        %v3376 = vpop.f32.mrf.mxu0
        %v3377 = vadd.f32 0.0, %v3376
        %3378 = vmatmul.bf16.gmra.mxu0 %v1762
        %v3379 = vpop.f32.mrf.mxu0
        %v3380 = vadd.f32 0.0, %v3379
        %v3381 = vpop.f32.mrf.mxu0
        %v3382 = vadd.f32 0.0, %v3381
        %3383 = vmatmul.bf16.gmra.mxu0 %v1765
        %v3384 = vpop.f32.mrf.mxu0
        %v3385 = vadd.f32 0.0, %v3384
        %v3386 = vpop.f32.mrf.mxu0
        %v3387 = vadd.f32 0.0, %v3386
        %3388 = vmatmul.bf16.gmra.mxu0 %v1768
        %v3389 = vpop.f32.mrf.mxu0
        %v3390 = vadd.f32 0.0, %v3389
        %v3391 = vpop.f32.mrf.mxu0
        %v3392 = vadd.f32 0.0, %v3391
        %3393 = vmatmul.bf16.gmra.mxu0 %v1771
        %v3394 = vpop.f32.mrf.mxu0
        %v3395 = vadd.f32 0.0, %v3394
        %v3396 = vpop.f32.mrf.mxu0
        %v3397 = vadd.f32 0.0, %v3396
        %3398 = vmatmul.bf16.gmra.mxu0 %v1774
        %v3399 = vpop.f32.mrf.mxu0
        %v3400 = vadd.f32 0.0, %v3399
        %v3401 = vpop.f32.mrf.mxu0
        %v3402 = vadd.f32 0.0, %v3401
        %3403 = vmatmul.bf16.gmra.mxu0 %v1777
        %v3404 = vpop.f32.mrf.mxu0
        %v3405 = vadd.f32 0.0, %v3404
        %v3406 = vpop.f32.mrf.mxu0
        %v3407 = vadd.f32 0.0, %v3406
        %3408 = vmatmul.bf16.gmra.mxu0 %v1780
        %v3409 = vpop.f32.mrf.mxu0
        %v3410 = vadd.f32 0.0, %v3409
        %v3411 = vpop.f32.mrf.mxu0
        %v3412 = vadd.f32 0.0, %v3411
        %3413 = vmatmul.bf16.gmra.mxu0 %v1783
        %v3414 = vpop.f32.mrf.mxu0
        %v3415 = vadd.f32 0.0, %v3414
        %v3416 = vpop.f32.mrf.mxu0
        %v3417 = vadd.f32 0.0, %v3416
        %3418 = vmatmul.bf16.gmra.mxu0 %v2559
        %v3419 = vpop.f32.mrf.mxu0
        %v3420 = vadd.f32 0.0, %v3419
        %v3421 = vpop.f32.mrf.mxu0
        %v3422 = vadd.f32 0.0, %v3421
        %3423 = vmatmul.bf16.gmra.mxu0 %v3335
        %v3424 = vpop.f32.mrf.mxu0
        %v3425 = vadd.f32 0.0, %v3424
        %v3426 = vpop.f32.mrf.mxu0
        %v3427 = vadd.f32 0.0, %v3426
        %3428 = vdwg.mxu0
        %v3429 = vadd.f32 %v3273, %v3350
        %v3430 = vadd.f32 %v3274, %v3352
        %v3431 = vadd.f32 %v3275, %v3355
        %v3432 = vadd.f32 %v3276, %v3357
        %v3433 = vadd.f32 %v3277, %v3360
        %v3434 = vadd.f32 %v3278, %v3362
        %v3435 = vadd.f32 %v3279, %v3365
        %v3436 = vadd.f32 %v3280, %v3367
        %v3437 = vadd.f32 %v3281, %v3370
        %v3438 = vadd.f32 %v3282, %v3372
        %v3439 = vadd.f32 %v3283, %v3375
        %v3440 = vadd.f32 %v3284, %v3377
        %v3441 = vadd.f32 %v3285, %v3380
        %v3442 = vadd.f32 %v3286, %v3382
        %v3443 = vadd.f32 %v3287, %v3385
        %v3444 = vadd.f32 %v3288, %v3387
        %v3445 = vadd.f32 %v3289, %v3390
        %v3446 = vadd.f32 %v3290, %v3392
        %v3447 = vadd.f32 %v3291, %v3395
        %v3448 = vadd.f32 %v3292, %v3397
        %v3449 = vadd.f32 %v3293, %v3400
        %v3450 = vadd.f32 %v3294, %v3402
        %v3451 = vadd.f32 %v3295, %v3405
        %v3452 = vadd.f32 %v3296, %v3407
        %v3453 = vadd.f32 %v3297, %v3410
        %v3454 = vadd.f32 %v3298, %v3412
        %v3455 = vadd.f32 %v3299, %v3415
        %v3456 = vadd.f32 %v3300, %v3417
        %v3457 = vadd.f32 %v3301, %v3420
        %v3458 = vadd.f32 %v3302, %v3422
        %v3459 = vadd.f32 %v3303, %v3425
        %v3460 = vadd.f32 %v3304, %v3427
        %v3461 = vpack.c.bf16 %v423, %v422
        %s3462 = scalar_lea.vmem %s3, 300
        %v3463 = vld [vmem:[%s3462] sm:$0xf]
        %v3464 = vld [vmem:[%s3462 + $0x4] sm:$0xf]
        %v3465 = vld [vmem:[%s3462 + $0x8] sm:$0xf]
        %v3466 = vld [vmem:[%s3462 + $0xc] sm:$0xf]
        %v3467 = vld [vmem:[%s3462 + $0x10] sm:$0xf]
        %v3473 = vunpack.c.l.b16 %v3463
        %v3474 = vunpack.c.l.b16 %v3464
        %v3475 = vunpack.c.l.b16 %v3465
        %v3476 = vunpack.c.l.b16 %v3466
        %v3477 = vunpack.c.l.b16 %v3467
        %v3478 = vpack.c.b16 %v3474, %v3473
        %v3479 = vpack.c.b16 %v3476, %v3475
        %v3480 = vpack.c.b16 %v3477, %v3477
        %v3484 = vsel %vm647, %v3461, 0
        %v3487 = vsel %vm696, %v3480, 0
        %3489 = vmatpush.bf16.msra.mxu0 0
        %3490 = vmatpush.bf16.msra.mxu0 0
        %3491 = vmatpush.bf16.msra.mxu0 0
        %3492 = vmatpush.bf16.msra.mxu0 0
        %3493 = vmatpush.bf16.msra.mxu0 0
        %3494 = vmatpush.bf16.msra.mxu0 %v3487
        %3495 = vmatpush.bf16.msra.mxu0 %v3479
        %3496 = vmatpush.bf16.msra.mxu0 %v3478
        %3497 = vmatmul.bf16.gmra.mxu0 %v814
        %v3498 = vpop.f32.mrf.mxu0
        %v3499 = vadd.f32 0.0, %v3498
        %v3500 = vpop.f32.mrf.mxu0
        %v3501 = vadd.f32 0.0, %v3500
        %3502 = vmatmul.bf16.gmra.mxu0 %v817
        %v3503 = vpop.f32.mrf.mxu0
        %v3504 = vadd.f32 0.0, %v3503
        %v3505 = vpop.f32.mrf.mxu0
        %v3506 = vadd.f32 0.0, %v3505
        %3507 = vmatmul.bf16.gmra.mxu0 %v820
        %v3508 = vpop.f32.mrf.mxu0
        %v3509 = vadd.f32 0.0, %v3508
        %v3510 = vpop.f32.mrf.mxu0
        %v3511 = vadd.f32 0.0, %v3510
        %3512 = vmatmul.bf16.gmra.mxu0 %v823
        %v3513 = vpop.f32.mrf.mxu0
        %v3514 = vadd.f32 0.0, %v3513
        %v3515 = vpop.f32.mrf.mxu0
        %v3516 = vadd.f32 0.0, %v3515
        %3517 = vmatmul.bf16.gmra.mxu0 %v826
        %v3518 = vpop.f32.mrf.mxu0
        %v3519 = vadd.f32 0.0, %v3518
        %v3520 = vpop.f32.mrf.mxu0
        %v3521 = vadd.f32 0.0, %v3520
        %3522 = vmatmul.bf16.gmra.mxu0 %v829
        %v3523 = vpop.f32.mrf.mxu0
        %v3524 = vadd.f32 0.0, %v3523
        %v3525 = vpop.f32.mrf.mxu0
        %v3526 = vadd.f32 0.0, %v3525
        %3527 = vmatmul.bf16.gmra.mxu0 %v832
        %v3528 = vpop.f32.mrf.mxu0
        %v3529 = vadd.f32 0.0, %v3528
        %v3530 = vpop.f32.mrf.mxu0
        %v3531 = vadd.f32 0.0, %v3530
        %3532 = vmatmul.bf16.gmra.mxu0 %v835
        %v3533 = vpop.f32.mrf.mxu0
        %v3534 = vadd.f32 0.0, %v3533
        %v3535 = vpop.f32.mrf.mxu0
        %v3536 = vadd.f32 0.0, %v3535
        %3537 = vmatmul.bf16.gmra.mxu0 %v838
        %v3538 = vpop.f32.mrf.mxu0
        %v3539 = vadd.f32 0.0, %v3538
        %v3540 = vpop.f32.mrf.mxu0
        %v3541 = vadd.f32 0.0, %v3540
        %3542 = vmatmul.bf16.gmra.mxu0 %v841
        %v3543 = vpop.f32.mrf.mxu0
        %v3544 = vadd.f32 0.0, %v3543
        %v3545 = vpop.f32.mrf.mxu0
        %v3546 = vadd.f32 0.0, %v3545
        %3547 = vmatmul.bf16.gmra.mxu0 %v844
        %v3548 = vpop.f32.mrf.mxu0
        %v3549 = vadd.f32 0.0, %v3548
        %v3550 = vpop.f32.mrf.mxu0
        %v3551 = vadd.f32 0.0, %v3550
        %3552 = vmatmul.bf16.gmra.mxu0 %v847
        %v3553 = vpop.f32.mrf.mxu0
        %v3554 = vadd.f32 0.0, %v3553
        %v3555 = vpop.f32.mrf.mxu0
        %v3556 = vadd.f32 0.0, %v3555
        %3557 = vmatmul.bf16.gmra.mxu0 %v850
        %v3558 = vpop.f32.mrf.mxu0
        %v3559 = vadd.f32 0.0, %v3558
        %v3560 = vpop.f32.mrf.mxu0
        %v3561 = vadd.f32 0.0, %v3560
        %3562 = vmatmul.bf16.gmra.mxu0 %v1932
        %v3563 = vpop.f32.mrf.mxu0
        %v3564 = vadd.f32 0.0, %v3563
        %v3565 = vpop.f32.mrf.mxu0
        %v3566 = vadd.f32 0.0, %v3565
        %3567 = vmatmul.bf16.gmra.mxu0 %v2708
        %v3568 = vpop.f32.mrf.mxu0
        %v3569 = vadd.f32 0.0, %v3568
        %v3570 = vpop.f32.mrf.mxu0
        %v3571 = vadd.f32 0.0, %v3570
        %3572 = vmatmul.bf16.gmra.mxu0 %v3484
        %v3573 = vpop.f32.mrf.mxu0
        %v3574 = vadd.f32 0.0, %v3573
        %v3575 = vpop.f32.mrf.mxu0
        %v3576 = vadd.f32 0.0, %v3575
        %3577 = vdwg.mxu0
        %v3578 = vadd.f32 %v3429, %v3499
        %v3579 = vadd.f32 %v3430, %v3501
        %v3580 = vadd.f32 %v3431, %v3504
        %v3581 = vadd.f32 %v3432, %v3506
        %v3582 = vadd.f32 %v3433, %v3509
        %v3583 = vadd.f32 %v3434, %v3511
        %v3584 = vadd.f32 %v3435, %v3514
        %v3585 = vadd.f32 %v3436, %v3516
        %v3586 = vadd.f32 %v3437, %v3519
        %v3587 = vadd.f32 %v3438, %v3521
        %v3588 = vadd.f32 %v3439, %v3524
        %v3589 = vadd.f32 %v3440, %v3526
        %v3590 = vadd.f32 %v3441, %v3529
        %v3591 = vadd.f32 %v3442, %v3531
        %v3592 = vadd.f32 %v3443, %v3534
        %v3593 = vadd.f32 %v3444, %v3536
        %v3594 = vadd.f32 %v3445, %v3539
        %v3595 = vadd.f32 %v3446, %v3541
        %v3596 = vadd.f32 %v3447, %v3544
        %v3597 = vadd.f32 %v3448, %v3546
        %v3598 = vadd.f32 %v3449, %v3549
        %v3599 = vadd.f32 %v3450, %v3551
        %v3600 = vadd.f32 %v3451, %v3554
        %v3601 = vadd.f32 %v3452, %v3556
        %v3602 = vadd.f32 %v3453, %v3559
        %v3603 = vadd.f32 %v3454, %v3561
        %v3604 = vadd.f32 %v3455, %v3564
        %v3605 = vadd.f32 %v3456, %v3566
        %v3606 = vadd.f32 %v3457, %v3569
        %v3607 = vadd.f32 %v3458, %v3571
        %v3608 = vadd.f32 %v3459, %v3574
        %v3609 = vadd.f32 %v3460, %v3576
        %v3613 = vrot.slane %v422, 1
        %v3614 = vrot.slane %v423, 1
        %v3615 = vsel %vm497, %v3613, %v3614
        %v3616 = vrot.slane %v424, 1
        %v3617 = vsel %vm497, %v3614, %v3616
        %v3620 = vpack.c.bf16 %v3617, %v3615
        %s3621 = scalar_lea.vmem %s3, 320
        %v3622 = vld [vmem:[%s3621] sm:$0xf]
        %v3623 = vld [vmem:[%s3621 + $0x4] sm:$0xf]
        %v3624 = vld [vmem:[%s3621 + $0x8] sm:$0xf]
        %v3625 = vld [vmem:[%s3621 + $0xc] sm:$0xf]
        %v3626 = vld [vmem:[%s3621 + $0x10] sm:$0xf]
        %v3632 = vunpack.c.l.b16 %v3622
        %v3633 = vunpack.c.l.b16 %v3623
        %v3634 = vunpack.c.l.b16 %v3624
        %v3635 = vunpack.c.l.b16 %v3625
        %v3636 = vunpack.c.l.b16 %v3626
        %v3637 = vpack.c.b16 %v3633, %v3632
        %v3638 = vpack.c.b16 %v3635, %v3634
        %v3639 = vpack.c.b16 %v3636, %v3636
        %v3643 = vsel %vm647, %v3620, 0
        %v3646 = vsel %vm696, %v3639, 0
        %3648 = vmatpush.bf16.msra.mxu0 0
        %3649 = vmatpush.bf16.msra.mxu0 0
        %3650 = vmatpush.bf16.msra.mxu0 0
        %3651 = vmatpush.bf16.msra.mxu0 0
        %3652 = vmatpush.bf16.msra.mxu0 0
        %3653 = vmatpush.bf16.msra.mxu0 %v3646
        %3654 = vmatpush.bf16.msra.mxu0 %v3638
        %3655 = vmatpush.bf16.msra.mxu0 %v3637
        %3656 = vmatmul.bf16.gmra.mxu0 %v658
        %v3657 = vpop.f32.mrf.mxu0
        %v3658 = vadd.f32 0.0, %v3657
        %v3659 = vpop.f32.mrf.mxu0
        %v3660 = vadd.f32 0.0, %v3659
        %3661 = vmatmul.bf16.gmra.mxu0 %v661
        %v3662 = vpop.f32.mrf.mxu0
        %v3663 = vadd.f32 0.0, %v3662
        %v3664 = vpop.f32.mrf.mxu0
        %v3665 = vadd.f32 0.0, %v3664
        %3666 = vmatmul.bf16.gmra.mxu0 %v664
        %v3667 = vpop.f32.mrf.mxu0
        %v3668 = vadd.f32 0.0, %v3667
        %v3669 = vpop.f32.mrf.mxu0
        %v3670 = vadd.f32 0.0, %v3669
        %3671 = vmatmul.bf16.gmra.mxu0 %v667
        %v3672 = vpop.f32.mrf.mxu0
        %v3673 = vadd.f32 0.0, %v3672
        %v3674 = vpop.f32.mrf.mxu0
        %v3675 = vadd.f32 0.0, %v3674
        %3676 = vmatmul.bf16.gmra.mxu0 %v670
        %v3677 = vpop.f32.mrf.mxu0
        %v3678 = vadd.f32 0.0, %v3677
        %v3679 = vpop.f32.mrf.mxu0
        %v3680 = vadd.f32 0.0, %v3679
        %3681 = vmatmul.bf16.gmra.mxu0 %v673
        %v3682 = vpop.f32.mrf.mxu0
        %v3683 = vadd.f32 0.0, %v3682
        %v3684 = vpop.f32.mrf.mxu0
        %v3685 = vadd.f32 0.0, %v3684
        %3686 = vmatmul.bf16.gmra.mxu0 %v676
        %v3687 = vpop.f32.mrf.mxu0
        %v3688 = vadd.f32 0.0, %v3687
        %v3689 = vpop.f32.mrf.mxu0
        %v3690 = vadd.f32 0.0, %v3689
        %3691 = vmatmul.bf16.gmra.mxu0 %v679
        %v3692 = vpop.f32.mrf.mxu0
        %v3693 = vadd.f32 0.0, %v3692
        %v3694 = vpop.f32.mrf.mxu0
        %v3695 = vadd.f32 0.0, %v3694
        %3696 = vmatmul.bf16.gmra.mxu0 %v682
        %v3697 = vpop.f32.mrf.mxu0
        %v3698 = vadd.f32 0.0, %v3697
        %v3699 = vpop.f32.mrf.mxu0
        %v3700 = vadd.f32 0.0, %v3699
        %3701 = vmatmul.bf16.gmra.mxu0 %v685
        %v3702 = vpop.f32.mrf.mxu0
        %v3703 = vadd.f32 0.0, %v3702
        %v3704 = vpop.f32.mrf.mxu0
        %v3705 = vadd.f32 0.0, %v3704
        %3706 = vmatmul.bf16.gmra.mxu0 %v688
        %v3707 = vpop.f32.mrf.mxu0
        %v3708 = vadd.f32 0.0, %v3707
        %v3709 = vpop.f32.mrf.mxu0
        %v3710 = vadd.f32 0.0, %v3709
        %3711 = vmatmul.bf16.gmra.mxu0 %v691
        %v3712 = vpop.f32.mrf.mxu0
        %v3713 = vadd.f32 0.0, %v3712
        %v3714 = vpop.f32.mrf.mxu0
        %v3715 = vadd.f32 0.0, %v3714
        %3716 = vmatmul.bf16.gmra.mxu0 %v694
        %v3717 = vpop.f32.mrf.mxu0
        %v3718 = vadd.f32 0.0, %v3717
        %v3719 = vpop.f32.mrf.mxu0
        %v3720 = vadd.f32 0.0, %v3719
        %3721 = vmatmul.bf16.gmra.mxu0 %v2091
        %v3722 = vpop.f32.mrf.mxu0
        %v3723 = vadd.f32 0.0, %v3722
        %v3724 = vpop.f32.mrf.mxu0
        %v3725 = vadd.f32 0.0, %v3724
        %3726 = vmatmul.bf16.gmra.mxu0 %v2867
        %v3727 = vpop.f32.mrf.mxu0
        %v3728 = vadd.f32 0.0, %v3727
        %v3729 = vpop.f32.mrf.mxu0
        %v3730 = vadd.f32 0.0, %v3729
        %3731 = vmatmul.bf16.gmra.mxu0 %v3643
        %v3732 = vpop.f32.mrf.mxu0
        %v3733 = vadd.f32 0.0, %v3732
        %v3734 = vpop.f32.mrf.mxu0
        %v3735 = vadd.f32 0.0, %v3734
        %3736 = vdwg.mxu0
        %v3737 = vadd.f32 %v3578, %v3658
        %v3738 = vadd.f32 %v3579, %v3660
        %v3739 = vadd.f32 %v3580, %v3663
        %v3740 = vadd.f32 %v3581, %v3665
        %v3741 = vadd.f32 %v3582, %v3668
        %v3742 = vadd.f32 %v3583, %v3670
        %v3743 = vadd.f32 %v3584, %v3673
        %v3744 = vadd.f32 %v3585, %v3675
        %v3745 = vadd.f32 %v3586, %v3678
        %v3746 = vadd.f32 %v3587, %v3680
        %v3747 = vadd.f32 %v3588, %v3683
        %v3748 = vadd.f32 %v3589, %v3685
        %v3749 = vadd.f32 %v3590, %v3688
        %v3750 = vadd.f32 %v3591, %v3690
        %v3751 = vadd.f32 %v3592, %v3693
        %v3752 = vadd.f32 %v3593, %v3695
        %v3753 = vadd.f32 %v3594, %v3698
        %v3754 = vadd.f32 %v3595, %v3700
        %v3755 = vadd.f32 %v3596, %v3703
        %v3756 = vadd.f32 %v3597, %v3705
        %v3757 = vadd.f32 %v3598, %v3708
        %v3758 = vadd.f32 %v3599, %v3710
        %v3759 = vadd.f32 %v3600, %v3713
        %v3760 = vadd.f32 %v3601, %v3715
        %v3761 = vadd.f32 %v3602, %v3718
        %v3762 = vadd.f32 %v3603, %v3720
        %v3763 = vadd.f32 %v3604, %v3723
        %v3764 = vadd.f32 %v3605, %v3725
        %v3765 = vadd.f32 %v3606, %v3728
        %v3766 = vadd.f32 %v3607, %v3730
        %v3767 = vadd.f32 %v3608, %v3733
        %v3768 = vadd.f32 %v3609, %v3735
        %v3769 = vrot.slane %v422, 2
        %v3770 = vrot.slane %v423, 2
        %v3771 = vsel %vm944, %v3769, %v3770
        %v3772 = vrot.slane %v424, 2
        %v3773 = vsel %vm944, %v3770, %v3772
        %v3776 = vpack.c.bf16 %v3773, %v3771
        %s3777 = scalar_lea.vmem %s3, 340
        %v3778 = vld [vmem:[%s3777] sm:$0xf]
        %v3779 = vld [vmem:[%s3777 + $0x4] sm:$0xf]
        %v3780 = vld [vmem:[%s3777 + $0x8] sm:$0xf]
        %v3781 = vld [vmem:[%s3777 + $0xc] sm:$0xf]
        %v3782 = vld [vmem:[%s3777 + $0x10] sm:$0xf]
        %v3788 = vunpack.c.l.b16 %v3778
        %v3789 = vunpack.c.l.b16 %v3779
        %v3790 = vunpack.c.l.b16 %v3780
        %v3791 = vunpack.c.l.b16 %v3781
        %v3792 = vunpack.c.l.b16 %v3782
        %v3793 = vpack.c.b16 %v3789, %v3788
        %v3794 = vpack.c.b16 %v3791, %v3790
        %v3795 = vpack.c.b16 %v3792, %v3792
        %v3799 = vsel %vm647, %v3776, 0
        %v3802 = vsel %vm696, %v3795, 0
        %3804 = vmatpush.bf16.msra.mxu0 0
        %3805 = vmatpush.bf16.msra.mxu0 0
        %3806 = vmatpush.bf16.msra.mxu0 0
        %3807 = vmatpush.bf16.msra.mxu0 0
        %3808 = vmatpush.bf16.msra.mxu0 0
        %3809 = vmatpush.bf16.msra.mxu0 %v3802
        %3810 = vmatpush.bf16.msra.mxu0 %v3794
        %3811 = vmatpush.bf16.msra.mxu0 %v3793
        %3812 = vmatmul.bf16.gmra.mxu0 %v1104
        %v3813 = vpop.f32.mrf.mxu0
        %v3814 = vadd.f32 0.0, %v3813
        %v3815 = vpop.f32.mrf.mxu0
        %v3816 = vadd.f32 0.0, %v3815
        %3817 = vmatmul.bf16.gmra.mxu0 %v1107
        %v3818 = vpop.f32.mrf.mxu0
        %v3819 = vadd.f32 0.0, %v3818
        %v3820 = vpop.f32.mrf.mxu0
        %v3821 = vadd.f32 0.0, %v3820
        %3822 = vmatmul.bf16.gmra.mxu0 %v1110
        %v3823 = vpop.f32.mrf.mxu0
        %v3824 = vadd.f32 0.0, %v3823
        %v3825 = vpop.f32.mrf.mxu0
        %v3826 = vadd.f32 0.0, %v3825
        %3827 = vmatmul.bf16.gmra.mxu0 %v1113
        %v3828 = vpop.f32.mrf.mxu0
        %v3829 = vadd.f32 0.0, %v3828
        %v3830 = vpop.f32.mrf.mxu0
        %v3831 = vadd.f32 0.0, %v3830
        %3832 = vmatmul.bf16.gmra.mxu0 %v1116
        %v3833 = vpop.f32.mrf.mxu0
        %v3834 = vadd.f32 0.0, %v3833
        %v3835 = vpop.f32.mrf.mxu0
        %v3836 = vadd.f32 0.0, %v3835
        %3837 = vmatmul.bf16.gmra.mxu0 %v1119
        %v3838 = vpop.f32.mrf.mxu0
        %v3839 = vadd.f32 0.0, %v3838
        %v3840 = vpop.f32.mrf.mxu0
        %v3841 = vadd.f32 0.0, %v3840
        %3842 = vmatmul.bf16.gmra.mxu0 %v1122
        %v3843 = vpop.f32.mrf.mxu0
        %v3844 = vadd.f32 0.0, %v3843
        %v3845 = vpop.f32.mrf.mxu0
        %v3846 = vadd.f32 0.0, %v3845
        %3847 = vmatmul.bf16.gmra.mxu0 %v1125
        %v3848 = vpop.f32.mrf.mxu0
        %v3849 = vadd.f32 0.0, %v3848
        %v3850 = vpop.f32.mrf.mxu0
        %v3851 = vadd.f32 0.0, %v3850
        %3852 = vmatmul.bf16.gmra.mxu0 %v1128
        %v3853 = vpop.f32.mrf.mxu0
        %v3854 = vadd.f32 0.0, %v3853
        %v3855 = vpop.f32.mrf.mxu0
        %v3856 = vadd.f32 0.0, %v3855
        %3857 = vmatmul.bf16.gmra.mxu0 %v1131
        %v3858 = vpop.f32.mrf.mxu0
        %v3859 = vadd.f32 0.0, %v3858
        %v3860 = vpop.f32.mrf.mxu0
        %v3861 = vadd.f32 0.0, %v3860
        %3862 = vmatmul.bf16.gmra.mxu0 %v1134
        %v3863 = vpop.f32.mrf.mxu0
        %v3864 = vadd.f32 0.0, %v3863
        %v3865 = vpop.f32.mrf.mxu0
        %v3866 = vadd.f32 0.0, %v3865
        %3867 = vmatmul.bf16.gmra.mxu0 %v1137
        %v3868 = vpop.f32.mrf.mxu0
        %v3869 = vadd.f32 0.0, %v3868
        %v3870 = vpop.f32.mrf.mxu0
        %v3871 = vadd.f32 0.0, %v3870
        %3872 = vmatmul.bf16.gmra.mxu0 %v1140
        %v3873 = vpop.f32.mrf.mxu0
        %v3874 = vadd.f32 0.0, %v3873
        %v3875 = vpop.f32.mrf.mxu0
        %v3876 = vadd.f32 0.0, %v3875
        %3877 = vmatmul.bf16.gmra.mxu0 %v2247
        %v3878 = vpop.f32.mrf.mxu0
        %v3879 = vadd.f32 0.0, %v3878
        %v3880 = vpop.f32.mrf.mxu0
        %v3881 = vadd.f32 0.0, %v3880
        %3882 = vmatmul.bf16.gmra.mxu0 %v3023
        %v3883 = vpop.f32.mrf.mxu0
        %v3884 = vadd.f32 0.0, %v3883
        %v3885 = vpop.f32.mrf.mxu0
        %v3886 = vadd.f32 0.0, %v3885
        %3887 = vmatmul.bf16.gmra.mxu0 %v3799
        %v3888 = vpop.f32.mrf.mxu0
        %v3889 = vadd.f32 0.0, %v3888
        %v3890 = vpop.f32.mrf.mxu0
        %v3891 = vadd.f32 0.0, %v3890
        %3892 = vdwg.mxu0
        %v3893 = vadd.f32 %v3737, %v3814
        %v3894 = vadd.f32 %v3738, %v3816
        %v3895 = vadd.f32 %v3739, %v3819
        %v3896 = vadd.f32 %v3740, %v3821
        %v3897 = vadd.f32 %v3741, %v3824
        %v3898 = vadd.f32 %v3742, %v3826
        %v3899 = vadd.f32 %v3743, %v3829
        %v3900 = vadd.f32 %v3744, %v3831
        %v3901 = vadd.f32 %v3745, %v3834
        %v3902 = vadd.f32 %v3746, %v3836
        %v3903 = vadd.f32 %v3747, %v3839
        %v3904 = vadd.f32 %v3748, %v3841
        %v3905 = vadd.f32 %v3749, %v3844
        %v3906 = vadd.f32 %v3750, %v3846
        %v3907 = vadd.f32 %v3751, %v3849
        %v3908 = vadd.f32 %v3752, %v3851
        %v3909 = vadd.f32 %v3753, %v3854
        %v3910 = vadd.f32 %v3754, %v3856
        %v3911 = vadd.f32 %v3755, %v3859
        %v3912 = vadd.f32 %v3756, %v3861
        %v3913 = vadd.f32 %v3757, %v3864
        %v3914 = vadd.f32 %v3758, %v3866
        %v3915 = vadd.f32 %v3759, %v3869
        %v3916 = vadd.f32 %v3760, %v3871
        %v3917 = vadd.f32 %v3761, %v3874
        %v3918 = vadd.f32 %v3762, %v3876
        %v3919 = vadd.f32 %v3763, %v3879
        %v3920 = vadd.f32 %v3764, %v3881
        %v3921 = vadd.f32 %v3765, %v3884
        %v3922 = vadd.f32 %v3766, %v3886
        %v3923 = vadd.f32 %v3767, %v3889
        %v3924 = vadd.f32 %v3768, %v3891
        %v3925 = vrot.slane %v422, 3
        %v3926 = vrot.slane %v423, 3
        %v3927 = vsel %vm1266, %v3925, %v3926
        %v3928 = vrot.slane %v424, 3
        %v3929 = vsel %vm1266, %v3926, %v3928
        %v3932 = vpack.c.bf16 %v3929, %v3927
        %s3933 = scalar_lea.vmem %s3, 360
        %v3934 = vld [vmem:[%s3933] sm:$0xf]
        %v3935 = vld [vmem:[%s3933 + $0x4] sm:$0xf]
        %v3936 = vld [vmem:[%s3933 + $0x8] sm:$0xf]
        %v3937 = vld [vmem:[%s3933 + $0xc] sm:$0xf]
        %v3938 = vld [vmem:[%s3933 + $0x10] sm:$0xf]
        %v3944 = vunpack.c.l.b16 %v3934
        %v3945 = vunpack.c.l.b16 %v3935
        %v3946 = vunpack.c.l.b16 %v3936
        %v3947 = vunpack.c.l.b16 %v3937
        %v3948 = vunpack.c.l.b16 %v3938
        %v3949 = vpack.c.b16 %v3945, %v3944
        %v3950 = vpack.c.b16 %v3947, %v3946
        %v3951 = vpack.c.b16 %v3948, %v3948
        %v3955 = vsel %vm647, %v3932, 0
        %v3958 = vsel %vm696, %v3951, 0
        %3960 = vmatpush.bf16.msra.mxu0 0
        %3961 = vmatpush.bf16.msra.mxu0 0
        %3962 = vmatpush.bf16.msra.mxu0 0
        %3963 = vmatpush.bf16.msra.mxu0 0
        %3964 = vmatpush.bf16.msra.mxu0 0
        %3965 = vmatpush.bf16.msra.mxu0 %v3958
        %3966 = vmatpush.bf16.msra.mxu0 %v3950
        %3967 = vmatpush.bf16.msra.mxu0 %v3949
        %3968 = vmatmul.bf16.gmra.mxu0 %v1426
        %v3969 = vpop.f32.mrf.mxu0
        %v3970 = vadd.f32 0.0, %v3969
        %v3971 = vpop.f32.mrf.mxu0
        %v3972 = vadd.f32 0.0, %v3971
        %3973 = vmatmul.bf16.gmra.mxu0 %v1429
        %v3974 = vpop.f32.mrf.mxu0
        %v3975 = vadd.f32 0.0, %v3974
        %v3976 = vpop.f32.mrf.mxu0
        %v3977 = vadd.f32 0.0, %v3976
        %3978 = vmatmul.bf16.gmra.mxu0 %v1432
        %v3979 = vpop.f32.mrf.mxu0
        %v3980 = vadd.f32 0.0, %v3979
        %v3981 = vpop.f32.mrf.mxu0
        %v3982 = vadd.f32 0.0, %v3981
        %3983 = vmatmul.bf16.gmra.mxu0 %v1435
        %v3984 = vpop.f32.mrf.mxu0
        %v3985 = vadd.f32 0.0, %v3984
        %v3986 = vpop.f32.mrf.mxu0
        %v3987 = vadd.f32 0.0, %v3986
        %3988 = vmatmul.bf16.gmra.mxu0 %v1438
        %v3989 = vpop.f32.mrf.mxu0
        %v3990 = vadd.f32 0.0, %v3989
        %v3991 = vpop.f32.mrf.mxu0
        %v3992 = vadd.f32 0.0, %v3991
        %3993 = vmatmul.bf16.gmra.mxu0 %v1441
        %v3994 = vpop.f32.mrf.mxu0
        %v3995 = vadd.f32 0.0, %v3994
        %v3996 = vpop.f32.mrf.mxu0
        %v3997 = vadd.f32 0.0, %v3996
        %3998 = vmatmul.bf16.gmra.mxu0 %v1444
        %v3999 = vpop.f32.mrf.mxu0
        %v4000 = vadd.f32 0.0, %v3999
        %v4001 = vpop.f32.mrf.mxu0
        %v4002 = vadd.f32 0.0, %v4001
        %4003 = vmatmul.bf16.gmra.mxu0 %v1447
        %v4004 = vpop.f32.mrf.mxu0
        %v4005 = vadd.f32 0.0, %v4004
        %v4006 = vpop.f32.mrf.mxu0
        %v4007 = vadd.f32 0.0, %v4006
        %4008 = vmatmul.bf16.gmra.mxu0 %v1450
        %v4009 = vpop.f32.mrf.mxu0
        %v4010 = vadd.f32 0.0, %v4009
        %v4011 = vpop.f32.mrf.mxu0
        %v4012 = vadd.f32 0.0, %v4011
        %4013 = vmatmul.bf16.gmra.mxu0 %v1453
        %v4014 = vpop.f32.mrf.mxu0
        %v4015 = vadd.f32 0.0, %v4014
        %v4016 = vpop.f32.mrf.mxu0
        %v4017 = vadd.f32 0.0, %v4016
        %4018 = vmatmul.bf16.gmra.mxu0 %v1456
        %v4019 = vpop.f32.mrf.mxu0
        %v4020 = vadd.f32 0.0, %v4019
        %v4021 = vpop.f32.mrf.mxu0
        %v4022 = vadd.f32 0.0, %v4021
        %4023 = vmatmul.bf16.gmra.mxu0 %v1459
        %v4024 = vpop.f32.mrf.mxu0
        %v4025 = vadd.f32 0.0, %v4024
        %v4026 = vpop.f32.mrf.mxu0
        %v4027 = vadd.f32 0.0, %v4026
        %4028 = vmatmul.bf16.gmra.mxu0 %v1462
        %v4029 = vpop.f32.mrf.mxu0
        %v4030 = vadd.f32 0.0, %v4029
        %v4031 = vpop.f32.mrf.mxu0
        %v4032 = vadd.f32 0.0, %v4031
        %4033 = vmatmul.bf16.gmra.mxu0 %v2403
        %v4034 = vpop.f32.mrf.mxu0
        %v4035 = vadd.f32 0.0, %v4034
        %v4036 = vpop.f32.mrf.mxu0
        %v4037 = vadd.f32 0.0, %v4036
        %4038 = vmatmul.bf16.gmra.mxu0 %v3179
        %v4039 = vpop.f32.mrf.mxu0
        %v4040 = vadd.f32 0.0, %v4039
        %v4041 = vpop.f32.mrf.mxu0
        %v4042 = vadd.f32 0.0, %v4041
        %4043 = vmatmul.bf16.gmra.mxu0 %v3955
        %v4044 = vpop.f32.mrf.mxu0
        %v4045 = vadd.f32 0.0, %v4044
        %v4046 = vpop.f32.mrf.mxu0
        %v4047 = vadd.f32 0.0, %v4046
        %4048 = vdwg.mxu0
        %v4049 = vadd.f32 %v3893, %v3970
        %v4050 = vadd.f32 %v3894, %v3972
        %v4051 = vadd.f32 %v3895, %v3975
        %v4052 = vadd.f32 %v3896, %v3977
        %v4053 = vadd.f32 %v3897, %v3980
        %v4054 = vadd.f32 %v3898, %v3982
        %v4055 = vadd.f32 %v3899, %v3985
        %v4056 = vadd.f32 %v3900, %v3987
        %v4057 = vadd.f32 %v3901, %v3990
        %v4058 = vadd.f32 %v3902, %v3992
        %v4059 = vadd.f32 %v3903, %v3995
        %v4060 = vadd.f32 %v3904, %v3997
        %v4061 = vadd.f32 %v3905, %v4000
        %v4062 = vadd.f32 %v3906, %v4002
        %v4063 = vadd.f32 %v3907, %v4005
        %v4064 = vadd.f32 %v3908, %v4007
        %v4065 = vadd.f32 %v3909, %v4010
        %v4066 = vadd.f32 %v3910, %v4012
        %v4067 = vadd.f32 %v3911, %v4015
        %v4068 = vadd.f32 %v3912, %v4017
        %v4069 = vadd.f32 %v3913, %v4020
        %v4070 = vadd.f32 %v3914, %v4022
        %v4071 = vadd.f32 %v3915, %v4025
        %v4072 = vadd.f32 %v3916, %v4027
        %v4073 = vadd.f32 %v3917, %v4030
        %v4074 = vadd.f32 %v3918, %v4032
        %v4075 = vadd.f32 %v3919, %v4035
        %v4076 = vadd.f32 %v3920, %v4037
        %v4077 = vadd.f32 %v3921, %v4040
        %v4078 = vadd.f32 %v3922, %v4042
        %v4079 = vadd.f32 %v3923, %v4045
        %v4080 = vadd.f32 %v3924, %v4047
        %v4081 = vrot.slane %v422, 4
        %v4082 = vrot.slane %v423, 4
        %v4083 = vsel %vm696, %v4081, %v4082
        %v4084 = vrot.slane %v424, 4
        %v4085 = vsel %vm696, %v4082, %v4084
        %v4088 = vpack.c.bf16 %v4085, %v4083
        %s4089 = scalar_lea.vmem %s3, 380
        %v4090 = vld [vmem:[%s4089] sm:$0xf]
        %v4091 = vld [vmem:[%s4089 + $0x4] sm:$0xf]
        %v4092 = vld [vmem:[%s4089 + $0x8] sm:$0xf]
        %v4093 = vld [vmem:[%s4089 + $0xc] sm:$0xf]
        %v4094 = vld [vmem:[%s4089 + $0x10] sm:$0xf]
        %v4100 = vunpack.c.l.b16 %v4090
        %v4101 = vunpack.c.l.b16 %v4091
        %v4102 = vunpack.c.l.b16 %v4092
        %v4103 = vunpack.c.l.b16 %v4093
        %v4104 = vunpack.c.l.b16 %v4094
        %v4105 = vpack.c.b16 %v4101, %v4100
        %v4106 = vpack.c.b16 %v4103, %v4102
        %v4107 = vpack.c.b16 %v4104, %v4104
        %v4111 = vsel %vm647, %v4088, 0
        %v4114 = vsel %vm696, %v4107, 0
        %4116 = vmatpush.bf16.msra.mxu0 0
        %4117 = vmatpush.bf16.msra.mxu0 0
        %4118 = vmatpush.bf16.msra.mxu0 0
        %4119 = vmatpush.bf16.msra.mxu0 0
        %4120 = vmatpush.bf16.msra.mxu0 0
        %4121 = vmatpush.bf16.msra.mxu0 %v4114
        %4122 = vmatpush.bf16.msra.mxu0 %v4106
        %4123 = vmatpush.bf16.msra.mxu0 %v4105
        %4124 = vmatmul.bf16.gmra.mxu0 %v1747
        %v4125 = vpop.f32.mrf.mxu0
        %v4126 = vadd.f32 0.0, %v4125
        %v4127 = vpop.f32.mrf.mxu0
        %v4128 = vadd.f32 0.0, %v4127
        %4129 = vmatmul.bf16.gmra.mxu0 %v1750
        %v4130 = vpop.f32.mrf.mxu0
        %v4131 = vadd.f32 0.0, %v4130
        %v4132 = vpop.f32.mrf.mxu0
        %v4133 = vadd.f32 0.0, %v4132
        %4134 = vmatmul.bf16.gmra.mxu0 %v1753
        %v4135 = vpop.f32.mrf.mxu0
        %v4136 = vadd.f32 0.0, %v4135
        %v4137 = vpop.f32.mrf.mxu0
        %v4138 = vadd.f32 0.0, %v4137
        %4139 = vmatmul.bf16.gmra.mxu0 %v1756
        %v4140 = vpop.f32.mrf.mxu0
        %v4141 = vadd.f32 0.0, %v4140
        %v4142 = vpop.f32.mrf.mxu0
        %v4143 = vadd.f32 0.0, %v4142
        %4144 = vmatmul.bf16.gmra.mxu0 %v1759
        %v4145 = vpop.f32.mrf.mxu0
        %v4146 = vadd.f32 0.0, %v4145
        %v4147 = vpop.f32.mrf.mxu0
        %v4148 = vadd.f32 0.0, %v4147
        %4149 = vmatmul.bf16.gmra.mxu0 %v1762
        %v4150 = vpop.f32.mrf.mxu0
        %v4151 = vadd.f32 0.0, %v4150
        %v4152 = vpop.f32.mrf.mxu0
        %v4153 = vadd.f32 0.0, %v4152
        %4154 = vmatmul.bf16.gmra.mxu0 %v1765
        %v4155 = vpop.f32.mrf.mxu0
        %v4156 = vadd.f32 0.0, %v4155
        %v4157 = vpop.f32.mrf.mxu0
        %v4158 = vadd.f32 0.0, %v4157
        %4159 = vmatmul.bf16.gmra.mxu0 %v1768
        %v4160 = vpop.f32.mrf.mxu0
        %v4161 = vadd.f32 0.0, %v4160
        %v4162 = vpop.f32.mrf.mxu0
        %v4163 = vadd.f32 0.0, %v4162
        %4164 = vmatmul.bf16.gmra.mxu0 %v1771
        %v4165 = vpop.f32.mrf.mxu0
        %v4166 = vadd.f32 0.0, %v4165
        %v4167 = vpop.f32.mrf.mxu0
        %v4168 = vadd.f32 0.0, %v4167
        %4169 = vmatmul.bf16.gmra.mxu0 %v1774
        %v4170 = vpop.f32.mrf.mxu0
        %v4171 = vadd.f32 0.0, %v4170
        %v4172 = vpop.f32.mrf.mxu0
        %v4173 = vadd.f32 0.0, %v4172
        %4174 = vmatmul.bf16.gmra.mxu0 %v1777
        %v4175 = vpop.f32.mrf.mxu0
        %v4176 = vadd.f32 0.0, %v4175
        %v4177 = vpop.f32.mrf.mxu0
        %v4178 = vadd.f32 0.0, %v4177
        %4179 = vmatmul.bf16.gmra.mxu0 %v1780
        %v4180 = vpop.f32.mrf.mxu0
        %v4181 = vadd.f32 0.0, %v4180
        %v4182 = vpop.f32.mrf.mxu0
        %v4183 = vadd.f32 0.0, %v4182
        %4184 = vmatmul.bf16.gmra.mxu0 %v1783
        %v4185 = vpop.f32.mrf.mxu0
        %v4186 = vadd.f32 0.0, %v4185
        %v4187 = vpop.f32.mrf.mxu0
        %v4188 = vadd.f32 0.0, %v4187
        %4189 = vmatmul.bf16.gmra.mxu0 %v2559
        %v4190 = vpop.f32.mrf.mxu0
        %v4191 = vadd.f32 0.0, %v4190
        %v4192 = vpop.f32.mrf.mxu0
        %v4193 = vadd.f32 0.0, %v4192
        %4194 = vmatmul.bf16.gmra.mxu0 %v3335
        %v4195 = vpop.f32.mrf.mxu0
        %v4196 = vadd.f32 0.0, %v4195
        %v4197 = vpop.f32.mrf.mxu0
        %v4198 = vadd.f32 0.0, %v4197
        %4199 = vmatmul.bf16.gmra.mxu0 %v4111
        %v4200 = vpop.f32.mrf.mxu0
        %v4201 = vadd.f32 0.0, %v4200
        %v4202 = vpop.f32.mrf.mxu0
        %v4203 = vadd.f32 0.0, %v4202
        %4204 = vdwg.mxu0
        %v4205 = vadd.f32 %v4049, %v4126
        %v4206 = vadd.f32 %v4050, %v4128
        %v4207 = vadd.f32 %v4051, %v4131
        %v4208 = vadd.f32 %v4052, %v4133
        %v4209 = vadd.f32 %v4053, %v4136
        %v4210 = vadd.f32 %v4054, %v4138
        %v4211 = vadd.f32 %v4055, %v4141
        %v4212 = vadd.f32 %v4056, %v4143
        %v4213 = vadd.f32 %v4057, %v4146
        %v4214 = vadd.f32 %v4058, %v4148
        %v4215 = vadd.f32 %v4059, %v4151
        %v4216 = vadd.f32 %v4060, %v4153
        %v4217 = vadd.f32 %v4061, %v4156
        %v4218 = vadd.f32 %v4062, %v4158
        %v4219 = vadd.f32 %v4063, %v4161
        %v4220 = vadd.f32 %v4064, %v4163
        %v4221 = vadd.f32 %v4065, %v4166
        %v4222 = vadd.f32 %v4066, %v4168
        %v4223 = vadd.f32 %v4067, %v4171
        %v4224 = vadd.f32 %v4068, %v4173
        %v4225 = vadd.f32 %v4069, %v4176
        %v4226 = vadd.f32 %v4070, %v4178
        %v4227 = vadd.f32 %v4071, %v4181
        %v4228 = vadd.f32 %v4072, %v4183
        %v4229 = vadd.f32 %v4073, %v4186
        %v4230 = vadd.f32 %v4074, %v4188
        %v4231 = vadd.f32 %v4075, %v4191
        %v4232 = vadd.f32 %v4076, %v4193
        %v4233 = vadd.f32 %v4077, %v4196
        %v4234 = vadd.f32 %v4078, %v4198
        %v4235 = vadd.f32 %v4079, %v4201
        %v4236 = vadd.f32 %v4080, %v4203
        %v4237 = vpack.c.bf16 %v426, %v425
        %s4238 = scalar_lea.vmem %s3, 400
        %v4239 = vld [vmem:[%s4238] sm:$0xf]
        %v4240 = vld [vmem:[%s4238 + $0x4] sm:$0xf]
        %v4241 = vld [vmem:[%s4238 + $0x8] sm:$0xf]
        %v4242 = vld [vmem:[%s4238 + $0xc] sm:$0xf]
        %v4243 = vld [vmem:[%s4238 + $0x10] sm:$0xf]
        %v4249 = vunpack.c.l.b16 %v4239
        %v4250 = vunpack.c.l.b16 %v4240
        %v4251 = vunpack.c.l.b16 %v4241
        %v4252 = vunpack.c.l.b16 %v4242
        %v4253 = vunpack.c.l.b16 %v4243
        %v4254 = vpack.c.b16 %v4250, %v4249
        %v4255 = vpack.c.b16 %v4252, %v4251
        %v4256 = vpack.c.b16 %v4253, %v4253
        %v4260 = vsel %vm647, %v4237, 0
        %v4263 = vsel %vm696, %v4256, 0
        %4265 = vmatpush.bf16.msra.mxu0 0
        %4266 = vmatpush.bf16.msra.mxu0 0
        %4267 = vmatpush.bf16.msra.mxu0 0
        %4268 = vmatpush.bf16.msra.mxu0 0
        %4269 = vmatpush.bf16.msra.mxu0 0
        %4270 = vmatpush.bf16.msra.mxu0 %v4263
        %4271 = vmatpush.bf16.msra.mxu0 %v4255
        %4272 = vmatpush.bf16.msra.mxu0 %v4254
        %4273 = vmatmul.bf16.gmra.mxu0 %v817
        %v4274 = vpop.f32.mrf.mxu0
        %v4275 = vadd.f32 0.0, %v4274
        %v4276 = vpop.f32.mrf.mxu0
        %v4277 = vadd.f32 0.0, %v4276
        %4278 = vmatmul.bf16.gmra.mxu0 %v820
        %v4279 = vpop.f32.mrf.mxu0
        %v4280 = vadd.f32 0.0, %v4279
        %v4281 = vpop.f32.mrf.mxu0
        %v4282 = vadd.f32 0.0, %v4281
        %4283 = vmatmul.bf16.gmra.mxu0 %v823
        %v4284 = vpop.f32.mrf.mxu0
        %v4285 = vadd.f32 0.0, %v4284
        %v4286 = vpop.f32.mrf.mxu0
        %v4287 = vadd.f32 0.0, %v4286
        %4288 = vmatmul.bf16.gmra.mxu0 %v826
        %v4289 = vpop.f32.mrf.mxu0
        %v4290 = vadd.f32 0.0, %v4289
        %v4291 = vpop.f32.mrf.mxu0
        %v4292 = vadd.f32 0.0, %v4291
        %4293 = vmatmul.bf16.gmra.mxu0 %v829
        %v4294 = vpop.f32.mrf.mxu0
        %v4295 = vadd.f32 0.0, %v4294
        %v4296 = vpop.f32.mrf.mxu0
        %v4297 = vadd.f32 0.0, %v4296
        %4298 = vmatmul.bf16.gmra.mxu0 %v832
        %v4299 = vpop.f32.mrf.mxu0
        %v4300 = vadd.f32 0.0, %v4299
        %v4301 = vpop.f32.mrf.mxu0
        %v4302 = vadd.f32 0.0, %v4301
        %4303 = vmatmul.bf16.gmra.mxu0 %v835
        %v4304 = vpop.f32.mrf.mxu0
        %v4305 = vadd.f32 0.0, %v4304
        %v4306 = vpop.f32.mrf.mxu0
        %v4307 = vadd.f32 0.0, %v4306
        %4308 = vmatmul.bf16.gmra.mxu0 %v838
        %v4309 = vpop.f32.mrf.mxu0
        %v4310 = vadd.f32 0.0, %v4309
        %v4311 = vpop.f32.mrf.mxu0
        %v4312 = vadd.f32 0.0, %v4311
        %4313 = vmatmul.bf16.gmra.mxu0 %v841
        %v4314 = vpop.f32.mrf.mxu0
        %v4315 = vadd.f32 0.0, %v4314
        %v4316 = vpop.f32.mrf.mxu0
        %v4317 = vadd.f32 0.0, %v4316
        %4318 = vmatmul.bf16.gmra.mxu0 %v844
        %v4319 = vpop.f32.mrf.mxu0
        %v4320 = vadd.f32 0.0, %v4319
        %v4321 = vpop.f32.mrf.mxu0
        %v4322 = vadd.f32 0.0, %v4321
        %4323 = vmatmul.bf16.gmra.mxu0 %v847
        %v4324 = vpop.f32.mrf.mxu0
        %v4325 = vadd.f32 0.0, %v4324
        %v4326 = vpop.f32.mrf.mxu0
        %v4327 = vadd.f32 0.0, %v4326
        %4328 = vmatmul.bf16.gmra.mxu0 %v850
        %v4329 = vpop.f32.mrf.mxu0
        %v4330 = vadd.f32 0.0, %v4329
        %v4331 = vpop.f32.mrf.mxu0
        %v4332 = vadd.f32 0.0, %v4331
        %4333 = vmatmul.bf16.gmra.mxu0 %v1932
        %v4334 = vpop.f32.mrf.mxu0
        %v4335 = vadd.f32 0.0, %v4334
        %v4336 = vpop.f32.mrf.mxu0
        %v4337 = vadd.f32 0.0, %v4336
        %4338 = vmatmul.bf16.gmra.mxu0 %v2708
        %v4339 = vpop.f32.mrf.mxu0
        %v4340 = vadd.f32 0.0, %v4339
        %v4341 = vpop.f32.mrf.mxu0
        %v4342 = vadd.f32 0.0, %v4341
        %4343 = vmatmul.bf16.gmra.mxu0 %v3484
        %v4344 = vpop.f32.mrf.mxu0
        %v4345 = vadd.f32 0.0, %v4344
        %v4346 = vpop.f32.mrf.mxu0
        %v4347 = vadd.f32 0.0, %v4346
        %4348 = vmatmul.bf16.gmra.mxu0 %v4260
        %v4349 = vpop.f32.mrf.mxu0
        %v4350 = vadd.f32 0.0, %v4349
        %v4351 = vpop.f32.mrf.mxu0
        %v4352 = vadd.f32 0.0, %v4351
        %4353 = vdwg.mxu0
        %v4354 = vadd.f32 %v4205, %v4275
        %v4355 = vadd.f32 %v4206, %v4277
        %v4356 = vadd.f32 %v4207, %v4280
        %v4357 = vadd.f32 %v4208, %v4282
        %v4358 = vadd.f32 %v4209, %v4285
        %v4359 = vadd.f32 %v4210, %v4287
        %v4360 = vadd.f32 %v4211, %v4290
        %v4361 = vadd.f32 %v4212, %v4292
        %v4362 = vadd.f32 %v4213, %v4295
        %v4363 = vadd.f32 %v4214, %v4297
        %v4364 = vadd.f32 %v4215, %v4300
        %v4365 = vadd.f32 %v4216, %v4302
        %v4366 = vadd.f32 %v4217, %v4305
        %v4367 = vadd.f32 %v4218, %v4307
        %v4368 = vadd.f32 %v4219, %v4310
        %v4369 = vadd.f32 %v4220, %v4312
        %v4370 = vadd.f32 %v4221, %v4315
        %v4371 = vadd.f32 %v4222, %v4317
        %v4372 = vadd.f32 %v4223, %v4320
        %v4373 = vadd.f32 %v4224, %v4322
        %v4374 = vadd.f32 %v4225, %v4325
        %v4375 = vadd.f32 %v4226, %v4327
        %v4376 = vadd.f32 %v4227, %v4330
        %v4377 = vadd.f32 %v4228, %v4332
        %v4378 = vadd.f32 %v4229, %v4335
        %v4379 = vadd.f32 %v4230, %v4337
        %v4380 = vadd.f32 %v4231, %v4340
        %v4381 = vadd.f32 %v4232, %v4342
        %v4382 = vadd.f32 %v4233, %v4345
        %v4383 = vadd.f32 %v4234, %v4347
        %v4384 = vadd.f32 %v4235, %v4350
        %v4385 = vadd.f32 %v4236, %v4352
        %v4389 = vrot.slane %v425, 1
        %v4390 = vrot.slane %v426, 1
        %v4391 = vsel %vm497, %v4389, %v4390
        %v4392 = vrot.slane %v427, 1
        %v4393 = vsel %vm497, %v4390, %v4392
        %v4396 = vpack.c.bf16 %v4393, %v4391
        %s4397 = scalar_lea.vmem %s3, 420
        %v4398 = vld [vmem:[%s4397] sm:$0xf]
        %v4399 = vld [vmem:[%s4397 + $0x4] sm:$0xf]
        %v4400 = vld [vmem:[%s4397 + $0x8] sm:$0xf]
        %v4401 = vld [vmem:[%s4397 + $0xc] sm:$0xf]
        %v4402 = vld [vmem:[%s4397 + $0x10] sm:$0xf]
        %v4408 = vunpack.c.l.b16 %v4398
        %v4409 = vunpack.c.l.b16 %v4399
        %v4410 = vunpack.c.l.b16 %v4400
        %v4411 = vunpack.c.l.b16 %v4401
        %v4412 = vunpack.c.l.b16 %v4402
        %v4413 = vpack.c.b16 %v4409, %v4408
        %v4414 = vpack.c.b16 %v4411, %v4410
        %v4415 = vpack.c.b16 %v4412, %v4412
        %v4419 = vsel %vm647, %v4396, 0
        %v4422 = vsel %vm696, %v4415, 0
        %4424 = vmatpush.bf16.msra.mxu0 0
        %4425 = vmatpush.bf16.msra.mxu0 0
        %4426 = vmatpush.bf16.msra.mxu0 0
        %4427 = vmatpush.bf16.msra.mxu0 0
        %4428 = vmatpush.bf16.msra.mxu0 0
        %4429 = vmatpush.bf16.msra.mxu0 %v4422
        %4430 = vmatpush.bf16.msra.mxu0 %v4414
        %4431 = vmatpush.bf16.msra.mxu0 %v4413
        %4432 = vmatmul.bf16.gmra.mxu0 %v661
        %v4433 = vpop.f32.mrf.mxu0
        %v4434 = vadd.f32 0.0, %v4433
        %v4435 = vpop.f32.mrf.mxu0
        %v4436 = vadd.f32 0.0, %v4435
        %4437 = vmatmul.bf16.gmra.mxu0 %v664
        %v4438 = vpop.f32.mrf.mxu0
        %v4439 = vadd.f32 0.0, %v4438
        %v4440 = vpop.f32.mrf.mxu0
        %v4441 = vadd.f32 0.0, %v4440
        %4442 = vmatmul.bf16.gmra.mxu0 %v667
        %v4443 = vpop.f32.mrf.mxu0
        %v4444 = vadd.f32 0.0, %v4443
        %v4445 = vpop.f32.mrf.mxu0
        %v4446 = vadd.f32 0.0, %v4445
        %4447 = vmatmul.bf16.gmra.mxu0 %v670
        %v4448 = vpop.f32.mrf.mxu0
        %v4449 = vadd.f32 0.0, %v4448
        %v4450 = vpop.f32.mrf.mxu0
        %v4451 = vadd.f32 0.0, %v4450
        %4452 = vmatmul.bf16.gmra.mxu0 %v673
        %v4453 = vpop.f32.mrf.mxu0
        %v4454 = vadd.f32 0.0, %v4453
        %v4455 = vpop.f32.mrf.mxu0
        %v4456 = vadd.f32 0.0, %v4455
        %4457 = vmatmul.bf16.gmra.mxu0 %v676
        %v4458 = vpop.f32.mrf.mxu0
        %v4459 = vadd.f32 0.0, %v4458
        %v4460 = vpop.f32.mrf.mxu0
        %v4461 = vadd.f32 0.0, %v4460
        %4462 = vmatmul.bf16.gmra.mxu0 %v679
        %v4463 = vpop.f32.mrf.mxu0
        %v4464 = vadd.f32 0.0, %v4463
        %v4465 = vpop.f32.mrf.mxu0
        %v4466 = vadd.f32 0.0, %v4465
        %4467 = vmatmul.bf16.gmra.mxu0 %v682
        %v4468 = vpop.f32.mrf.mxu0
        %v4469 = vadd.f32 0.0, %v4468
        %v4470 = vpop.f32.mrf.mxu0
        %v4471 = vadd.f32 0.0, %v4470
        %4472 = vmatmul.bf16.gmra.mxu0 %v685
        %v4473 = vpop.f32.mrf.mxu0
        %v4474 = vadd.f32 0.0, %v4473
        %v4475 = vpop.f32.mrf.mxu0
        %v4476 = vadd.f32 0.0, %v4475
        %4477 = vmatmul.bf16.gmra.mxu0 %v688
        %v4478 = vpop.f32.mrf.mxu0
        %v4479 = vadd.f32 0.0, %v4478
        %v4480 = vpop.f32.mrf.mxu0
        %v4481 = vadd.f32 0.0, %v4480
        %4482 = vmatmul.bf16.gmra.mxu0 %v691
        %v4483 = vpop.f32.mrf.mxu0
        %v4484 = vadd.f32 0.0, %v4483
        %v4485 = vpop.f32.mrf.mxu0
        %v4486 = vadd.f32 0.0, %v4485
        %4487 = vmatmul.bf16.gmra.mxu0 %v694
        %v4488 = vpop.f32.mrf.mxu0
        %v4489 = vadd.f32 0.0, %v4488
        %v4490 = vpop.f32.mrf.mxu0
        %v4491 = vadd.f32 0.0, %v4490
        %4492 = vmatmul.bf16.gmra.mxu0 %v2091
        %v4493 = vpop.f32.mrf.mxu0
        %v4494 = vadd.f32 0.0, %v4493
        %v4495 = vpop.f32.mrf.mxu0
        %v4496 = vadd.f32 0.0, %v4495
        %4497 = vmatmul.bf16.gmra.mxu0 %v2867
        %v4498 = vpop.f32.mrf.mxu0
        %v4499 = vadd.f32 0.0, %v4498
        %v4500 = vpop.f32.mrf.mxu0
        %v4501 = vadd.f32 0.0, %v4500
        %4502 = vmatmul.bf16.gmra.mxu0 %v3643
        %v4503 = vpop.f32.mrf.mxu0
        %v4504 = vadd.f32 0.0, %v4503
        %v4505 = vpop.f32.mrf.mxu0
        %v4506 = vadd.f32 0.0, %v4505
        %4507 = vmatmul.bf16.gmra.mxu0 %v4419
        %v4508 = vpop.f32.mrf.mxu0
        %v4509 = vadd.f32 0.0, %v4508
        %v4510 = vpop.f32.mrf.mxu0
        %v4511 = vadd.f32 0.0, %v4510
        %4512 = vdwg.mxu0
        %v4513 = vadd.f32 %v4354, %v4434
        %v4514 = vadd.f32 %v4355, %v4436
        %v4515 = vadd.f32 %v4356, %v4439
        %v4516 = vadd.f32 %v4357, %v4441
        %v4517 = vadd.f32 %v4358, %v4444
        %v4518 = vadd.f32 %v4359, %v4446
        %v4519 = vadd.f32 %v4360, %v4449
        %v4520 = vadd.f32 %v4361, %v4451
        %v4521 = vadd.f32 %v4362, %v4454
        %v4522 = vadd.f32 %v4363, %v4456
        %v4523 = vadd.f32 %v4364, %v4459
        %v4524 = vadd.f32 %v4365, %v4461
        %v4525 = vadd.f32 %v4366, %v4464
        %v4526 = vadd.f32 %v4367, %v4466
        %v4527 = vadd.f32 %v4368, %v4469
        %v4528 = vadd.f32 %v4369, %v4471
        %v4529 = vadd.f32 %v4370, %v4474
        %v4530 = vadd.f32 %v4371, %v4476
        %v4531 = vadd.f32 %v4372, %v4479
        %v4532 = vadd.f32 %v4373, %v4481
        %v4533 = vadd.f32 %v4374, %v4484
        %v4534 = vadd.f32 %v4375, %v4486
        %v4535 = vadd.f32 %v4376, %v4489
        %v4536 = vadd.f32 %v4377, %v4491
        %v4537 = vadd.f32 %v4378, %v4494
        %v4538 = vadd.f32 %v4379, %v4496
        %v4539 = vadd.f32 %v4380, %v4499
        %v4540 = vadd.f32 %v4381, %v4501
        %v4541 = vadd.f32 %v4382, %v4504
        %v4542 = vadd.f32 %v4383, %v4506
        %v4543 = vadd.f32 %v4384, %v4509
        %v4544 = vadd.f32 %v4385, %v4511
        %v4545 = vrot.slane %v425, 2
        %v4546 = vrot.slane %v426, 2
        %v4547 = vsel %vm944, %v4545, %v4546
        %v4548 = vrot.slane %v427, 2
        %v4549 = vsel %vm944, %v4546, %v4548
        %v4552 = vpack.c.bf16 %v4549, %v4547
        %s4553 = scalar_lea.vmem %s3, 440
        %v4554 = vld [vmem:[%s4553] sm:$0xf]
        %v4555 = vld [vmem:[%s4553 + $0x4] sm:$0xf]
        %v4556 = vld [vmem:[%s4553 + $0x8] sm:$0xf]
        %v4557 = vld [vmem:[%s4553 + $0xc] sm:$0xf]
        %v4558 = vld [vmem:[%s4553 + $0x10] sm:$0xf]
        %v4564 = vunpack.c.l.b16 %v4554
        %v4565 = vunpack.c.l.b16 %v4555
        %v4566 = vunpack.c.l.b16 %v4556
        %v4567 = vunpack.c.l.b16 %v4557
        %v4568 = vunpack.c.l.b16 %v4558
        %v4569 = vpack.c.b16 %v4565, %v4564
        %v4570 = vpack.c.b16 %v4567, %v4566
        %v4571 = vpack.c.b16 %v4568, %v4568
        %v4575 = vsel %vm647, %v4552, 0
        %v4578 = vsel %vm696, %v4571, 0
        %4580 = vmatpush.bf16.msra.mxu0 0
        %4581 = vmatpush.bf16.msra.mxu0 0
        %4582 = vmatpush.bf16.msra.mxu0 0
        %4583 = vmatpush.bf16.msra.mxu0 0
        %4584 = vmatpush.bf16.msra.mxu0 0
        %4585 = vmatpush.bf16.msra.mxu0 %v4578
        %4586 = vmatpush.bf16.msra.mxu0 %v4570
        %4587 = vmatpush.bf16.msra.mxu0 %v4569
        %4588 = vmatmul.bf16.gmra.mxu0 %v1107
        %v4589 = vpop.f32.mrf.mxu0
        %v4590 = vadd.f32 0.0, %v4589
        %v4591 = vpop.f32.mrf.mxu0
        %v4592 = vadd.f32 0.0, %v4591
        %4593 = vmatmul.bf16.gmra.mxu0 %v1110
        %v4594 = vpop.f32.mrf.mxu0
        %v4595 = vadd.f32 0.0, %v4594
        %v4596 = vpop.f32.mrf.mxu0
        %v4597 = vadd.f32 0.0, %v4596
        %4598 = vmatmul.bf16.gmra.mxu0 %v1113
        %v4599 = vpop.f32.mrf.mxu0
        %v4600 = vadd.f32 0.0, %v4599
        %v4601 = vpop.f32.mrf.mxu0
        %v4602 = vadd.f32 0.0, %v4601
        %4603 = vmatmul.bf16.gmra.mxu0 %v1116
        %v4604 = vpop.f32.mrf.mxu0
        %v4605 = vadd.f32 0.0, %v4604
        %v4606 = vpop.f32.mrf.mxu0
        %v4607 = vadd.f32 0.0, %v4606
        %4608 = vmatmul.bf16.gmra.mxu0 %v1119
        %v4609 = vpop.f32.mrf.mxu0
        %v4610 = vadd.f32 0.0, %v4609
        %v4611 = vpop.f32.mrf.mxu0
        %v4612 = vadd.f32 0.0, %v4611
        %4613 = vmatmul.bf16.gmra.mxu0 %v1122
        %v4614 = vpop.f32.mrf.mxu0
        %v4615 = vadd.f32 0.0, %v4614
        %v4616 = vpop.f32.mrf.mxu0
        %v4617 = vadd.f32 0.0, %v4616
        %4618 = vmatmul.bf16.gmra.mxu0 %v1125
        %v4619 = vpop.f32.mrf.mxu0
        %v4620 = vadd.f32 0.0, %v4619
        %v4621 = vpop.f32.mrf.mxu0
        %v4622 = vadd.f32 0.0, %v4621
        %4623 = vmatmul.bf16.gmra.mxu0 %v1128
        %v4624 = vpop.f32.mrf.mxu0
        %v4625 = vadd.f32 0.0, %v4624
        %v4626 = vpop.f32.mrf.mxu0
        %v4627 = vadd.f32 0.0, %v4626
        %4628 = vmatmul.bf16.gmra.mxu0 %v1131
        %v4629 = vpop.f32.mrf.mxu0
        %v4630 = vadd.f32 0.0, %v4629
        %v4631 = vpop.f32.mrf.mxu0
        %v4632 = vadd.f32 0.0, %v4631
        %4633 = vmatmul.bf16.gmra.mxu0 %v1134
        %v4634 = vpop.f32.mrf.mxu0
        %v4635 = vadd.f32 0.0, %v4634
        %v4636 = vpop.f32.mrf.mxu0
        %v4637 = vadd.f32 0.0, %v4636
        %4638 = vmatmul.bf16.gmra.mxu0 %v1137
        %v4639 = vpop.f32.mrf.mxu0
        %v4640 = vadd.f32 0.0, %v4639
        %v4641 = vpop.f32.mrf.mxu0
        %v4642 = vadd.f32 0.0, %v4641
        %4643 = vmatmul.bf16.gmra.mxu0 %v1140
        %v4644 = vpop.f32.mrf.mxu0
        %v4645 = vadd.f32 0.0, %v4644
        %v4646 = vpop.f32.mrf.mxu0
        %v4647 = vadd.f32 0.0, %v4646
        %4648 = vmatmul.bf16.gmra.mxu0 %v2247
        %v4649 = vpop.f32.mrf.mxu0
        %v4650 = vadd.f32 0.0, %v4649
        %v4651 = vpop.f32.mrf.mxu0
        %v4652 = vadd.f32 0.0, %v4651
        %4653 = vmatmul.bf16.gmra.mxu0 %v3023
        %v4654 = vpop.f32.mrf.mxu0
        %v4655 = vadd.f32 0.0, %v4654
        %v4656 = vpop.f32.mrf.mxu0
        %v4657 = vadd.f32 0.0, %v4656
        %4658 = vmatmul.bf16.gmra.mxu0 %v3799
        %v4659 = vpop.f32.mrf.mxu0
        %v4660 = vadd.f32 0.0, %v4659
        %v4661 = vpop.f32.mrf.mxu0
        %v4662 = vadd.f32 0.0, %v4661
        %4663 = vmatmul.bf16.gmra.mxu0 %v4575
        %v4664 = vpop.f32.mrf.mxu0
        %v4665 = vadd.f32 0.0, %v4664
        %v4666 = vpop.f32.mrf.mxu0
        %v4667 = vadd.f32 0.0, %v4666
        %4668 = vdwg.mxu0
        %v4669 = vadd.f32 %v4513, %v4590
        %v4670 = vadd.f32 %v4514, %v4592
        %v4671 = vadd.f32 %v4515, %v4595
        %v4672 = vadd.f32 %v4516, %v4597
        %v4673 = vadd.f32 %v4517, %v4600
        %v4674 = vadd.f32 %v4518, %v4602
        %v4675 = vadd.f32 %v4519, %v4605
        %v4676 = vadd.f32 %v4520, %v4607
        %v4677 = vadd.f32 %v4521, %v4610
        %v4678 = vadd.f32 %v4522, %v4612
        %v4679 = vadd.f32 %v4523, %v4615
        %v4680 = vadd.f32 %v4524, %v4617
        %v4681 = vadd.f32 %v4525, %v4620
        %v4682 = vadd.f32 %v4526, %v4622
        %v4683 = vadd.f32 %v4527, %v4625
        %v4684 = vadd.f32 %v4528, %v4627
        %v4685 = vadd.f32 %v4529, %v4630
        %v4686 = vadd.f32 %v4530, %v4632
        %v4687 = vadd.f32 %v4531, %v4635
        %v4688 = vadd.f32 %v4532, %v4637
        %v4689 = vadd.f32 %v4533, %v4640
        %v4690 = vadd.f32 %v4534, %v4642
        %v4691 = vadd.f32 %v4535, %v4645
        %v4692 = vadd.f32 %v4536, %v4647
        %v4693 = vadd.f32 %v4537, %v4650
        %v4694 = vadd.f32 %v4538, %v4652
        %v4695 = vadd.f32 %v4539, %v4655
        %v4696 = vadd.f32 %v4540, %v4657
        %v4697 = vadd.f32 %v4541, %v4660
        %v4698 = vadd.f32 %v4542, %v4662
        %v4699 = vadd.f32 %v4543, %v4665
        %v4700 = vadd.f32 %v4544, %v4667
        %v4701 = vrot.slane %v425, 3
        %v4702 = vrot.slane %v426, 3
        %v4703 = vsel %vm1266, %v4701, %v4702
        %v4704 = vrot.slane %v427, 3
        %v4705 = vsel %vm1266, %v4702, %v4704
        %v4708 = vpack.c.bf16 %v4705, %v4703
        %s4709 = scalar_lea.vmem %s3, 460
        %v4710 = vld [vmem:[%s4709] sm:$0xf]
        %v4711 = vld [vmem:[%s4709 + $0x4] sm:$0xf]
        %v4712 = vld [vmem:[%s4709 + $0x8] sm:$0xf]
        %v4713 = vld [vmem:[%s4709 + $0xc] sm:$0xf]
        %v4714 = vld [vmem:[%s4709 + $0x10] sm:$0xf]
        %v4720 = vunpack.c.l.b16 %v4710
        %v4721 = vunpack.c.l.b16 %v4711
        %v4722 = vunpack.c.l.b16 %v4712
        %v4723 = vunpack.c.l.b16 %v4713
        %v4724 = vunpack.c.l.b16 %v4714
        %v4725 = vpack.c.b16 %v4721, %v4720
        %v4726 = vpack.c.b16 %v4723, %v4722
        %v4727 = vpack.c.b16 %v4724, %v4724
        %v4731 = vsel %vm647, %v4708, 0
        %v4734 = vsel %vm696, %v4727, 0
        %4736 = vmatpush.bf16.msra.mxu0 0
        %4737 = vmatpush.bf16.msra.mxu0 0
        %4738 = vmatpush.bf16.msra.mxu0 0
        %4739 = vmatpush.bf16.msra.mxu0 0
        %4740 = vmatpush.bf16.msra.mxu0 0
        %4741 = vmatpush.bf16.msra.mxu0 %v4734
        %4742 = vmatpush.bf16.msra.mxu0 %v4726
        %4743 = vmatpush.bf16.msra.mxu0 %v4725
        %4744 = vmatmul.bf16.gmra.mxu0 %v1429
        %v4745 = vpop.f32.mrf.mxu0
        %v4746 = vadd.f32 0.0, %v4745
        %v4747 = vpop.f32.mrf.mxu0
        %v4748 = vadd.f32 0.0, %v4747
        %4749 = vmatmul.bf16.gmra.mxu0 %v1432
        %v4750 = vpop.f32.mrf.mxu0
        %v4751 = vadd.f32 0.0, %v4750
        %v4752 = vpop.f32.mrf.mxu0
        %v4753 = vadd.f32 0.0, %v4752
        %4754 = vmatmul.bf16.gmra.mxu0 %v1435
        %v4755 = vpop.f32.mrf.mxu0
        %v4756 = vadd.f32 0.0, %v4755
        %v4757 = vpop.f32.mrf.mxu0
        %v4758 = vadd.f32 0.0, %v4757
        %4759 = vmatmul.bf16.gmra.mxu0 %v1438
        %v4760 = vpop.f32.mrf.mxu0
        %v4761 = vadd.f32 0.0, %v4760
        %v4762 = vpop.f32.mrf.mxu0
        %v4763 = vadd.f32 0.0, %v4762
        %4764 = vmatmul.bf16.gmra.mxu0 %v1441
        %v4765 = vpop.f32.mrf.mxu0
        %v4766 = vadd.f32 0.0, %v4765
        %v4767 = vpop.f32.mrf.mxu0
        %v4768 = vadd.f32 0.0, %v4767
        %4769 = vmatmul.bf16.gmra.mxu0 %v1444
        %v4770 = vpop.f32.mrf.mxu0
        %v4771 = vadd.f32 0.0, %v4770
        %v4772 = vpop.f32.mrf.mxu0
        %v4773 = vadd.f32 0.0, %v4772
        %4774 = vmatmul.bf16.gmra.mxu0 %v1447
        %v4775 = vpop.f32.mrf.mxu0
        %v4776 = vadd.f32 0.0, %v4775
        %v4777 = vpop.f32.mrf.mxu0
        %v4778 = vadd.f32 0.0, %v4777
        %4779 = vmatmul.bf16.gmra.mxu0 %v1450
        %v4780 = vpop.f32.mrf.mxu0
        %v4781 = vadd.f32 0.0, %v4780
        %v4782 = vpop.f32.mrf.mxu0
        %v4783 = vadd.f32 0.0, %v4782
        %4784 = vmatmul.bf16.gmra.mxu0 %v1453
        %v4785 = vpop.f32.mrf.mxu0
        %v4786 = vadd.f32 0.0, %v4785
        %v4787 = vpop.f32.mrf.mxu0
        %v4788 = vadd.f32 0.0, %v4787
        %4789 = vmatmul.bf16.gmra.mxu0 %v1456
        %v4790 = vpop.f32.mrf.mxu0
        %v4791 = vadd.f32 0.0, %v4790
        %v4792 = vpop.f32.mrf.mxu0
        %v4793 = vadd.f32 0.0, %v4792
        %4794 = vmatmul.bf16.gmra.mxu0 %v1459
        %v4795 = vpop.f32.mrf.mxu0
        %v4796 = vadd.f32 0.0, %v4795
        %v4797 = vpop.f32.mrf.mxu0
        %v4798 = vadd.f32 0.0, %v4797
        %4799 = vmatmul.bf16.gmra.mxu0 %v1462
        %v4800 = vpop.f32.mrf.mxu0
        %v4801 = vadd.f32 0.0, %v4800
        %v4802 = vpop.f32.mrf.mxu0
        %v4803 = vadd.f32 0.0, %v4802
        %4804 = vmatmul.bf16.gmra.mxu0 %v2403
        %v4805 = vpop.f32.mrf.mxu0
        %v4806 = vadd.f32 0.0, %v4805
        %v4807 = vpop.f32.mrf.mxu0
        %v4808 = vadd.f32 0.0, %v4807
        %4809 = vmatmul.bf16.gmra.mxu0 %v3179
        %v4810 = vpop.f32.mrf.mxu0
        %v4811 = vadd.f32 0.0, %v4810
        %v4812 = vpop.f32.mrf.mxu0
        %v4813 = vadd.f32 0.0, %v4812
        %4814 = vmatmul.bf16.gmra.mxu0 %v3955
        %v4815 = vpop.f32.mrf.mxu0
        %v4816 = vadd.f32 0.0, %v4815
        %v4817 = vpop.f32.mrf.mxu0
        %v4818 = vadd.f32 0.0, %v4817
        %4819 = vmatmul.bf16.gmra.mxu0 %v4731
        %v4820 = vpop.f32.mrf.mxu0
        %v4821 = vadd.f32 0.0, %v4820
        %v4822 = vpop.f32.mrf.mxu0
        %v4823 = vadd.f32 0.0, %v4822
        %4824 = vdwg.mxu0
        %v4825 = vadd.f32 %v4669, %v4746
        %v4826 = vadd.f32 %v4670, %v4748
        %v4827 = vadd.f32 %v4671, %v4751
        %v4828 = vadd.f32 %v4672, %v4753
        %v4829 = vadd.f32 %v4673, %v4756
        %v4830 = vadd.f32 %v4674, %v4758
        %v4831 = vadd.f32 %v4675, %v4761
        %v4832 = vadd.f32 %v4676, %v4763
        %v4833 = vadd.f32 %v4677, %v4766
        %v4834 = vadd.f32 %v4678, %v4768
        %v4835 = vadd.f32 %v4679, %v4771
        %v4836 = vadd.f32 %v4680, %v4773
        %v4837 = vadd.f32 %v4681, %v4776
        %v4838 = vadd.f32 %v4682, %v4778
        %v4839 = vadd.f32 %v4683, %v4781
        %v4840 = vadd.f32 %v4684, %v4783
        %v4841 = vadd.f32 %v4685, %v4786
        %v4842 = vadd.f32 %v4686, %v4788
        %v4843 = vadd.f32 %v4687, %v4791
        %v4844 = vadd.f32 %v4688, %v4793
        %v4845 = vadd.f32 %v4689, %v4796
        %v4846 = vadd.f32 %v4690, %v4798
        %v4847 = vadd.f32 %v4691, %v4801
        %v4848 = vadd.f32 %v4692, %v4803
        %v4849 = vadd.f32 %v4693, %v4806
        %v4850 = vadd.f32 %v4694, %v4808
        %v4851 = vadd.f32 %v4695, %v4811
        %v4852 = vadd.f32 %v4696, %v4813
        %v4853 = vadd.f32 %v4697, %v4816
        %v4854 = vadd.f32 %v4698, %v4818
        %v4855 = vadd.f32 %v4699, %v4821
        %v4856 = vadd.f32 %v4700, %v4823
        %v4857 = vrot.slane %v425, 4
        %v4858 = vrot.slane %v426, 4
        %v4859 = vsel %vm696, %v4857, %v4858
        %v4860 = vrot.slane %v427, 4
        %v4861 = vsel %vm696, %v4858, %v4860
        %v4864 = vpack.c.bf16 %v4861, %v4859
        %s4865 = scalar_lea.vmem %s3, 480
        %v4866 = vld [vmem:[%s4865] sm:$0xf]
        %v4867 = vld [vmem:[%s4865 + $0x4] sm:$0xf]
        %v4868 = vld [vmem:[%s4865 + $0x8] sm:$0xf]
        %v4869 = vld [vmem:[%s4865 + $0xc] sm:$0xf]
        %v4870 = vld [vmem:[%s4865 + $0x10] sm:$0xf]
        %v4876 = vunpack.c.l.b16 %v4866
        %v4877 = vunpack.c.l.b16 %v4867
        %v4878 = vunpack.c.l.b16 %v4868
        %v4879 = vunpack.c.l.b16 %v4869
        %v4880 = vunpack.c.l.b16 %v4870
        %v4881 = vpack.c.b16 %v4877, %v4876
        %v4882 = vpack.c.b16 %v4879, %v4878
        %v4883 = vpack.c.b16 %v4880, %v4880
        %v4887 = vsel %vm647, %v4864, 0
        %v4890 = vsel %vm696, %v4883, 0
        %4892 = vmatpush.bf16.msra.mxu0 0
        %4893 = vmatpush.bf16.msra.mxu0 0
        %4894 = vmatpush.bf16.msra.mxu0 0
        %4895 = vmatpush.bf16.msra.mxu0 0
        %4896 = vmatpush.bf16.msra.mxu0 0
        %4897 = vmatpush.bf16.msra.mxu0 %v4890
        %4898 = vmatpush.bf16.msra.mxu0 %v4882
        %4899 = vmatpush.bf16.msra.mxu0 %v4881
        %4900 = vmatmul.bf16.gmra.mxu0 %v1750
        %v4901 = vpop.f32.mrf.mxu0
        %v4902 = vadd.f32 0.0, %v4901
        %v4903 = vpop.f32.mrf.mxu0
        %v4904 = vadd.f32 0.0, %v4903
        %4905 = vmatmul.bf16.gmra.mxu0 %v1753
        %v4906 = vpop.f32.mrf.mxu0
        %v4907 = vadd.f32 0.0, %v4906
        %v4908 = vpop.f32.mrf.mxu0
        %v4909 = vadd.f32 0.0, %v4908
        %4910 = vmatmul.bf16.gmra.mxu0 %v1756
        %v4911 = vpop.f32.mrf.mxu0
        %v4912 = vadd.f32 0.0, %v4911
        %v4913 = vpop.f32.mrf.mxu0
        %v4914 = vadd.f32 0.0, %v4913
        %4915 = vmatmul.bf16.gmra.mxu0 %v1759
        %v4916 = vpop.f32.mrf.mxu0
        %v4917 = vadd.f32 0.0, %v4916
        %v4918 = vpop.f32.mrf.mxu0
        %v4919 = vadd.f32 0.0, %v4918
        %4920 = vmatmul.bf16.gmra.mxu0 %v1762
        %v4921 = vpop.f32.mrf.mxu0
        %v4922 = vadd.f32 0.0, %v4921
        %v4923 = vpop.f32.mrf.mxu0
        %v4924 = vadd.f32 0.0, %v4923
        %4925 = vmatmul.bf16.gmra.mxu0 %v1765
        %v4926 = vpop.f32.mrf.mxu0
        %v4927 = vadd.f32 0.0, %v4926
        %v4928 = vpop.f32.mrf.mxu0
        %v4929 = vadd.f32 0.0, %v4928
        %4930 = vmatmul.bf16.gmra.mxu0 %v1768
        %v4931 = vpop.f32.mrf.mxu0
        %v4932 = vadd.f32 0.0, %v4931
        %v4933 = vpop.f32.mrf.mxu0
        %v4934 = vadd.f32 0.0, %v4933
        %4935 = vmatmul.bf16.gmra.mxu0 %v1771
        %v4936 = vpop.f32.mrf.mxu0
        %v4937 = vadd.f32 0.0, %v4936
        %v4938 = vpop.f32.mrf.mxu0
        %v4939 = vadd.f32 0.0, %v4938
        %4940 = vmatmul.bf16.gmra.mxu0 %v1774
        %v4941 = vpop.f32.mrf.mxu0
        %v4942 = vadd.f32 0.0, %v4941
        %v4943 = vpop.f32.mrf.mxu0
        %v4944 = vadd.f32 0.0, %v4943
        %4945 = vmatmul.bf16.gmra.mxu0 %v1777
        %v4946 = vpop.f32.mrf.mxu0
        %v4947 = vadd.f32 0.0, %v4946
        %v4948 = vpop.f32.mrf.mxu0
        %v4949 = vadd.f32 0.0, %v4948
        %4950 = vmatmul.bf16.gmra.mxu0 %v1780
        %v4951 = vpop.f32.mrf.mxu0
        %v4952 = vadd.f32 0.0, %v4951
        %v4953 = vpop.f32.mrf.mxu0
        %v4954 = vadd.f32 0.0, %v4953
        %4955 = vmatmul.bf16.gmra.mxu0 %v1783
        %v4956 = vpop.f32.mrf.mxu0
        %v4957 = vadd.f32 0.0, %v4956
        %v4958 = vpop.f32.mrf.mxu0
        %v4959 = vadd.f32 0.0, %v4958
        %4960 = vmatmul.bf16.gmra.mxu0 %v2559
        %v4961 = vpop.f32.mrf.mxu0
        %v4962 = vadd.f32 0.0, %v4961
        %v4963 = vpop.f32.mrf.mxu0
        %v4964 = vadd.f32 0.0, %v4963
        %4965 = vmatmul.bf16.gmra.mxu0 %v3335
        %v4966 = vpop.f32.mrf.mxu0
        %v4967 = vadd.f32 0.0, %v4966
        %v4968 = vpop.f32.mrf.mxu0
        %v4969 = vadd.f32 0.0, %v4968
        %4970 = vmatmul.bf16.gmra.mxu0 %v4111
        %v4971 = vpop.f32.mrf.mxu0
        %v4972 = vadd.f32 0.0, %v4971
        %v4973 = vpop.f32.mrf.mxu0
        %v4974 = vadd.f32 0.0, %v4973
        %4975 = vmatmul.bf16.gmra.mxu0 %v4887
        %v4976 = vpop.f32.mrf.mxu0
        %v4977 = vadd.f32 0.0, %v4976
        %v4978 = vpop.f32.mrf.mxu0
        %v4979 = vadd.f32 0.0, %v4978
        %4980 = vdwg.mxu0
        %v4981 = vadd.f32 %v4825, %v4902
        %v4982 = vadd.f32 %v4826, %v4904
        %v4983 = vadd.f32 %v4827, %v4907
        %v4984 = vadd.f32 %v4828, %v4909
        %v4985 = vadd.f32 %v4829, %v4912
        %v4986 = vadd.f32 %v4830, %v4914
        %v4987 = vadd.f32 %v4831, %v4917
        %v4988 = vadd.f32 %v4832, %v4919
        %v4989 = vadd.f32 %v4833, %v4922
        %v4990 = vadd.f32 %v4834, %v4924
        %v4991 = vadd.f32 %v4835, %v4927
        %v4992 = vadd.f32 %v4836, %v4929
        %v4993 = vadd.f32 %v4837, %v4932
        %v4994 = vadd.f32 %v4838, %v4934
        %v4995 = vadd.f32 %v4839, %v4937
        %v4996 = vadd.f32 %v4840, %v4939
        %v4997 = vadd.f32 %v4841, %v4942
        %v4998 = vadd.f32 %v4842, %v4944
        %v4999 = vadd.f32 %v4843, %v4947
        %v5000 = vadd.f32 %v4844, %v4949
        %v5001 = vadd.f32 %v4845, %v4952
        %v5002 = vadd.f32 %v4846, %v4954
        %v5003 = vadd.f32 %v4847, %v4957
        %v5004 = vadd.f32 %v4848, %v4959
        %v5005 = vadd.f32 %v4849, %v4962
        %v5006 = vadd.f32 %v4850, %v4964
        %v5007 = vadd.f32 %v4851, %v4967
        %v5008 = vadd.f32 %v4852, %v4969
        %v5009 = vadd.f32 %v4853, %v4972
        %v5010 = vadd.f32 %v4854, %v4974
        %v5011 = vadd.f32 %v4855, %v4977
        %v5012 = vadd.f32 %v4856, %v4979
        %v5013 = vld [vmem:[%s4] sm:$0x1]
        %v5015 = vperm.slane %v5013, 0
        %v5017 = vadd.f32 %v4981, %v5015
        %v5018 = vadd.f32 %v4982, %v5015
        %v5019 = vadd.f32 %v4983, %v5015
        %v5020 = vadd.f32 %v4984, %v5015
        %v5021 = vadd.f32 %v4985, %v5015
        %v5022 = vadd.f32 %v4986, %v5015
        %v5023 = vadd.f32 %v4987, %v5015
        %v5024 = vadd.f32 %v4988, %v5015
        %v5025 = vadd.f32 %v4989, %v5015
        %v5026 = vadd.f32 %v4990, %v5015
        %v5027 = vadd.f32 %v4991, %v5015
        %v5028 = vadd.f32 %v4992, %v5015
        %v5029 = vadd.f32 %v4993, %v5015
        %v5030 = vadd.f32 %v4994, %v5015
        %v5031 = vadd.f32 %v4995, %v5015
        %v5032 = vadd.f32 %v4996, %v5015
        %v5033 = vadd.f32 %v4997, %v5015
        %v5034 = vadd.f32 %v4998, %v5015
        %v5035 = vadd.f32 %v4999, %v5015
        %v5036 = vadd.f32 %v5000, %v5015
        %v5037 = vadd.f32 %v5001, %v5015
        %v5038 = vadd.f32 %v5002, %v5015
        %v5039 = vadd.f32 %v5003, %v5015
        %v5040 = vadd.f32 %v5004, %v5015
        %v5041 = vadd.f32 %v5005, %v5015
        %v5042 = vadd.f32 %v5006, %v5015
        %v5043 = vadd.f32 %v5007, %v5015
        %v5044 = vadd.f32 %v5008, %v5015
        %v5045 = vadd.f32 %v5009, %v5015
        %v5046 = vadd.f32 %v5010, %v5015
        %v5047 = vadd.f32 %v5011, %v5015
        %v5048 = vadd.f32 %v5012, %v5015
        %v5049 = vxor.u32 %v5017, 2147483648
        %v5050 = vxor.u32 %v5018, 2147483648
        %v5051 = vxor.u32 %v5019, 2147483648
        %v5052 = vxor.u32 %v5020, 2147483648
        %v5053 = vxor.u32 %v5021, 2147483648
        %v5054 = vxor.u32 %v5022, 2147483648
        %v5055 = vxor.u32 %v5023, 2147483648
        %v5056 = vxor.u32 %v5024, 2147483648
        %v5057 = vxor.u32 %v5025, 2147483648
        %v5058 = vxor.u32 %v5026, 2147483648
        %v5059 = vxor.u32 %v5027, 2147483648
        %v5060 = vxor.u32 %v5028, 2147483648
        %v5061 = vxor.u32 %v5029, 2147483648
        %v5062 = vxor.u32 %v5030, 2147483648
        %v5063 = vxor.u32 %v5031, 2147483648
        %v5064 = vxor.u32 %v5032, 2147483648
        %v5065 = vxor.u32 %v5033, 2147483648
        %v5066 = vxor.u32 %v5034, 2147483648
        %v5067 = vxor.u32 %v5035, 2147483648
        %v5068 = vxor.u32 %v5036, 2147483648
        %v5069 = vxor.u32 %v5037, 2147483648
        %v5070 = vxor.u32 %v5038, 2147483648
        %v5071 = vxor.u32 %v5039, 2147483648
        %v5072 = vxor.u32 %v5040, 2147483648
        %v5073 = vxor.u32 %v5041, 2147483648
        %v5074 = vxor.u32 %v5042, 2147483648
        %v5075 = vxor.u32 %v5043, 2147483648
        %v5076 = vxor.u32 %v5044, 2147483648
        %v5077 = vxor.u32 %v5045, 2147483648
        %v5078 = vxor.u32 %v5046, 2147483648
        %v5079 = vxor.u32 %v5047, 2147483648
        %v5080 = vxor.u32 %v5048, 2147483648
        %v5081 = vmul.f32 %v5049, 1.442695
        %v5082 = vpow.pop %v5081
        %v5083 = vmul.f32 %v5050, 1.442695
        %v5084 = vpow.pop %v5083
        %v5085 = vmul.f32 %v5051, 1.442695
        %v5086 = vpow.pop %v5085
        %v5087 = vmul.f32 %v5052, 1.442695
        %v5088 = vpow.pop %v5087
        %v5089 = vmul.f32 %v5053, 1.442695
        %v5090 = vpow.pop %v5089
        %v5091 = vmul.f32 %v5054, 1.442695
        %v5092 = vpow.pop %v5091
        %v5093 = vmul.f32 %v5055, 1.442695
        %v5094 = vpow.pop %v5093
        %v5095 = vmul.f32 %v5056, 1.442695
        %v5096 = vpow.pop %v5095
        %v5097 = vmul.f32 %v5057, 1.442695
        %v5098 = vpow.pop %v5097
        %v5099 = vmul.f32 %v5058, 1.442695
        %v5100 = vpow.pop %v5099
        %v5101 = vmul.f32 %v5059, 1.442695
        %v5102 = vpow.pop %v5101
        %v5103 = vmul.f32 %v5060, 1.442695
        %v5104 = vpow.pop %v5103
        %v5105 = vmul.f32 %v5061, 1.442695
        %v5106 = vpow.pop %v5105
        %v5107 = vmul.f32 %v5062, 1.442695
        %v5108 = vpow.pop %v5107
        %v5109 = vmul.f32 %v5063, 1.442695
        %v5110 = vpow.pop %v5109
        %v5111 = vmul.f32 %v5064, 1.442695
        %v5112 = vpow.pop %v5111
        %v5113 = vmul.f32 %v5065, 1.442695
        %v5114 = vpow.pop %v5113
        %v5115 = vmul.f32 %v5066, 1.442695
        %v5116 = vpow.pop %v5115
        %v5117 = vmul.f32 %v5067, 1.442695
        %v5118 = vpow.pop %v5117
        %v5119 = vmul.f32 %v5068, 1.442695
        %v5120 = vpow.pop %v5119
        %v5121 = vmul.f32 %v5069, 1.442695
        %v5122 = vpow.pop %v5121
        %v5123 = vmul.f32 %v5070, 1.442695
        %v5124 = vpow.pop %v5123
        %v5125 = vmul.f32 %v5071, 1.442695
        %v5126 = vpow.pop %v5125
        %v5127 = vmul.f32 %v5072, 1.442695
        %v5128 = vpow.pop %v5127
        %v5129 = vmul.f32 %v5073, 1.442695
        %v5130 = vpow.pop %v5129
        %v5131 = vmul.f32 %v5074, 1.442695
        %v5132 = vpow.pop %v5131
        %v5133 = vmul.f32 %v5075, 1.442695
        %v5134 = vpow.pop %v5133
        %v5135 = vmul.f32 %v5076, 1.442695
        %v5136 = vpow.pop %v5135
        %v5137 = vmul.f32 %v5077, 1.442695
        %v5138 = vpow.pop %v5137
        %v5139 = vmul.f32 %v5078, 1.442695
        %v5140 = vpow.pop %v5139
        %v5141 = vmul.f32 %v5079, 1.442695
        %v5142 = vpow.pop %v5141
        %v5143 = vmul.f32 %v5080, 1.442695
        %v5144 = vpow.pop %v5143
        %v5145 = vadd.f32 %v5082, 1.0
        %v5146 = vadd.f32 %v5084, 1.0
        %v5147 = vadd.f32 %v5086, 1.0
        %v5148 = vadd.f32 %v5088, 1.0
        %v5149 = vadd.f32 %v5090, 1.0
        %v5150 = vadd.f32 %v5092, 1.0
        %v5151 = vadd.f32 %v5094, 1.0
        %v5152 = vadd.f32 %v5096, 1.0
        %v5153 = vadd.f32 %v5098, 1.0
        %v5154 = vadd.f32 %v5100, 1.0
        %v5155 = vadd.f32 %v5102, 1.0
        %v5156 = vadd.f32 %v5104, 1.0
        %v5157 = vadd.f32 %v5106, 1.0
        %v5158 = vadd.f32 %v5108, 1.0
        %v5159 = vadd.f32 %v5110, 1.0
        %v5160 = vadd.f32 %v5112, 1.0
        %v5161 = vadd.f32 %v5114, 1.0
        %v5162 = vadd.f32 %v5116, 1.0
        %v5163 = vadd.f32 %v5118, 1.0
        %v5164 = vadd.f32 %v5120, 1.0
        %v5165 = vadd.f32 %v5122, 1.0
        %v5166 = vadd.f32 %v5124, 1.0
        %v5167 = vadd.f32 %v5126, 1.0
        %v5168 = vadd.f32 %v5128, 1.0
        %v5169 = vadd.f32 %v5130, 1.0
        %v5170 = vadd.f32 %v5132, 1.0
        %v5171 = vadd.f32 %v5134, 1.0
        %v5172 = vadd.f32 %v5136, 1.0
        %v5173 = vadd.f32 %v5138, 1.0
        %v5174 = vadd.f32 %v5140, 1.0
        %v5175 = vadd.f32 %v5142, 1.0
        %v5176 = vadd.f32 %v5144, 1.0
        %v5177 = vrcp.pop %v5145
        %v5178 = vmul.f32 %v5145, %v5177
        %v5179 = vsub.f32 1.0, %v5178
        %v5180 = vmul.f32 %v5177, %v5179
        %v5181 = vadd.f32 %v5177, %v5180
        %vm5182 = vweird.f32 %v5145
        %vm5183 = vweird.f32 %v5177
        %vm5184 = vmor %vm5182, %vm5183
        %v5185 = vsel %vm5184, %v5177, %v5181
        %v5186 = vand.u32 2147483647, %v5145
        %vm5187 = vcmp.eq.f32.partialorder %v5186, 8.507059e+37
        %v5188 = vand.u32 %v5145, 2147483648
        %v5189 = vor.u32 1.1754944e-38, %v5188
        %v5190 = vsel %vm5187, %v5189, %v5185
        %v5191 = vmul.f32 1.0, %v5190
        %v5192 = vrcp.pop %v5146
        %v5193 = vmul.f32 %v5146, %v5192
        %v5194 = vsub.f32 1.0, %v5193
        %v5195 = vmul.f32 %v5192, %v5194
        %v5196 = vadd.f32 %v5192, %v5195
        %vm5197 = vweird.f32 %v5146
        %vm5198 = vweird.f32 %v5192
        %vm5199 = vmor %vm5197, %vm5198
        %v5200 = vsel %vm5199, %v5192, %v5196
        %v5201 = vand.u32 2147483647, %v5146
        %vm5202 = vcmp.eq.f32.partialorder %v5201, 8.507059e+37
        %v5203 = vand.u32 %v5146, 2147483648
        %v5204 = vor.u32 1.1754944e-38, %v5203
        %v5205 = vsel %vm5202, %v5204, %v5200
        %v5206 = vmul.f32 1.0, %v5205
        %v5207 = vrcp.pop %v5147
        %v5208 = vmul.f32 %v5147, %v5207
        %v5209 = vsub.f32 1.0, %v5208
        %v5210 = vmul.f32 %v5207, %v5209
        %v5211 = vadd.f32 %v5207, %v5210
        %vm5212 = vweird.f32 %v5147
        %vm5213 = vweird.f32 %v5207
        %vm5214 = vmor %vm5212, %vm5213
        %v5215 = vsel %vm5214, %v5207, %v5211
        %v5216 = vand.u32 2147483647, %v5147
        %vm5217 = vcmp.eq.f32.partialorder %v5216, 8.507059e+37
        %v5218 = vand.u32 %v5147, 2147483648
        %v5219 = vor.u32 1.1754944e-38, %v5218
        %v5220 = vsel %vm5217, %v5219, %v5215
        %v5221 = vmul.f32 1.0, %v5220
        %v5222 = vrcp.pop %v5148
        %v5223 = vmul.f32 %v5148, %v5222
        %v5224 = vsub.f32 1.0, %v5223
        %v5225 = vmul.f32 %v5222, %v5224
        %v5226 = vadd.f32 %v5222, %v5225
        %vm5227 = vweird.f32 %v5148
        %vm5228 = vweird.f32 %v5222
        %vm5229 = vmor %vm5227, %vm5228
        %v5230 = vsel %vm5229, %v5222, %v5226
        %v5231 = vand.u32 2147483647, %v5148
        %vm5232 = vcmp.eq.f32.partialorder %v5231, 8.507059e+37
        %v5233 = vand.u32 %v5148, 2147483648
        %v5234 = vor.u32 1.1754944e-38, %v5233
        %v5235 = vsel %vm5232, %v5234, %v5230
        %v5236 = vmul.f32 1.0, %v5235
        %v5237 = vrcp.pop %v5149
        %v5238 = vmul.f32 %v5149, %v5237
        %v5239 = vsub.f32 1.0, %v5238
        %v5240 = vmul.f32 %v5237, %v5239
        %v5241 = vadd.f32 %v5237, %v5240
        %vm5242 = vweird.f32 %v5149
        %vm5243 = vweird.f32 %v5237
        %vm5244 = vmor %vm5242, %vm5243
        %v5245 = vsel %vm5244, %v5237, %v5241
        %v5246 = vand.u32 2147483647, %v5149
        %vm5247 = vcmp.eq.f32.partialorder %v5246, 8.507059e+37
        %v5248 = vand.u32 %v5149, 2147483648
        %v5249 = vor.u32 1.1754944e-38, %v5248
        %v5250 = vsel %vm5247, %v5249, %v5245
        %v5251 = vmul.f32 1.0, %v5250
        %v5252 = vrcp.pop %v5150
        %v5253 = vmul.f32 %v5150, %v5252
        %v5254 = vsub.f32 1.0, %v5253
        %v5255 = vmul.f32 %v5252, %v5254
        %v5256 = vadd.f32 %v5252, %v5255
        %vm5257 = vweird.f32 %v5150
        %vm5258 = vweird.f32 %v5252
        %vm5259 = vmor %vm5257, %vm5258
        %v5260 = vsel %vm5259, %v5252, %v5256
        %v5261 = vand.u32 2147483647, %v5150
        %vm5262 = vcmp.eq.f32.partialorder %v5261, 8.507059e+37
        %v5263 = vand.u32 %v5150, 2147483648
        %v5264 = vor.u32 1.1754944e-38, %v5263
        %v5265 = vsel %vm5262, %v5264, %v5260
        %v5266 = vmul.f32 1.0, %v5265
        %v5267 = vrcp.pop %v5151
        %v5268 = vmul.f32 %v5151, %v5267
        %v5269 = vsub.f32 1.0, %v5268
        %v5270 = vmul.f32 %v5267, %v5269
        %v5271 = vadd.f32 %v5267, %v5270
        %vm5272 = vweird.f32 %v5151
        %vm5273 = vweird.f32 %v5267
        %vm5274 = vmor %vm5272, %vm5273
        %v5275 = vsel %vm5274, %v5267, %v5271
        %v5276 = vand.u32 2147483647, %v5151
        %vm5277 = vcmp.eq.f32.partialorder %v5276, 8.507059e+37
        %v5278 = vand.u32 %v5151, 2147483648
        %v5279 = vor.u32 1.1754944e-38, %v5278
        %v5280 = vsel %vm5277, %v5279, %v5275
        %v5281 = vmul.f32 1.0, %v5280
        %v5282 = vrcp.pop %v5152
        %v5283 = vmul.f32 %v5152, %v5282
        %v5284 = vsub.f32 1.0, %v5283
        %v5285 = vmul.f32 %v5282, %v5284
        %v5286 = vadd.f32 %v5282, %v5285
        %vm5287 = vweird.f32 %v5152
        %vm5288 = vweird.f32 %v5282
        %vm5289 = vmor %vm5287, %vm5288
        %v5290 = vsel %vm5289, %v5282, %v5286
        %v5291 = vand.u32 2147483647, %v5152
        %vm5292 = vcmp.eq.f32.partialorder %v5291, 8.507059e+37
        %v5293 = vand.u32 %v5152, 2147483648
        %v5294 = vor.u32 1.1754944e-38, %v5293
        %v5295 = vsel %vm5292, %v5294, %v5290
        %v5296 = vmul.f32 1.0, %v5295
        %v5297 = vrcp.pop %v5153
        %v5298 = vmul.f32 %v5153, %v5297
        %v5299 = vsub.f32 1.0, %v5298
        %v5300 = vmul.f32 %v5297, %v5299
        %v5301 = vadd.f32 %v5297, %v5300
        %vm5302 = vweird.f32 %v5153
        %vm5303 = vweird.f32 %v5297
        %vm5304 = vmor %vm5302, %vm5303
        %v5305 = vsel %vm5304, %v5297, %v5301
        %v5306 = vand.u32 2147483647, %v5153
        %vm5307 = vcmp.eq.f32.partialorder %v5306, 8.507059e+37
        %v5308 = vand.u32 %v5153, 2147483648
        %v5309 = vor.u32 1.1754944e-38, %v5308
        %v5310 = vsel %vm5307, %v5309, %v5305
        %v5311 = vmul.f32 1.0, %v5310
        %v5312 = vrcp.pop %v5154
        %v5313 = vmul.f32 %v5154, %v5312
        %v5314 = vsub.f32 1.0, %v5313
        %v5315 = vmul.f32 %v5312, %v5314
        %v5316 = vadd.f32 %v5312, %v5315
        %vm5317 = vweird.f32 %v5154
        %vm5318 = vweird.f32 %v5312
        %vm5319 = vmor %vm5317, %vm5318
        %v5320 = vsel %vm5319, %v5312, %v5316
        %v5321 = vand.u32 2147483647, %v5154
        %vm5322 = vcmp.eq.f32.partialorder %v5321, 8.507059e+37
        %v5323 = vand.u32 %v5154, 2147483648
        %v5324 = vor.u32 1.1754944e-38, %v5323
        %v5325 = vsel %vm5322, %v5324, %v5320
        %v5326 = vmul.f32 1.0, %v5325
        %v5327 = vrcp.pop %v5155
        %v5328 = vmul.f32 %v5155, %v5327
        %v5329 = vsub.f32 1.0, %v5328
        %v5330 = vmul.f32 %v5327, %v5329
        %v5331 = vadd.f32 %v5327, %v5330
        %vm5332 = vweird.f32 %v5155
        %vm5333 = vweird.f32 %v5327
        %vm5334 = vmor %vm5332, %vm5333
        %v5335 = vsel %vm5334, %v5327, %v5331
        %v5336 = vand.u32 2147483647, %v5155
        %vm5337 = vcmp.eq.f32.partialorder %v5336, 8.507059e+37
        %v5338 = vand.u32 %v5155, 2147483648
        %v5339 = vor.u32 1.1754944e-38, %v5338
        %v5340 = vsel %vm5337, %v5339, %v5335
        %v5341 = vmul.f32 1.0, %v5340
        %v5342 = vrcp.pop %v5156
        %v5343 = vmul.f32 %v5156, %v5342
        %v5344 = vsub.f32 1.0, %v5343
        %v5345 = vmul.f32 %v5342, %v5344
        %v5346 = vadd.f32 %v5342, %v5345
        %vm5347 = vweird.f32 %v5156
        %vm5348 = vweird.f32 %v5342
        %vm5349 = vmor %vm5347, %vm5348
        %v5350 = vsel %vm5349, %v5342, %v5346
        %v5351 = vand.u32 2147483647, %v5156
        %vm5352 = vcmp.eq.f32.partialorder %v5351, 8.507059e+37
        %v5353 = vand.u32 %v5156, 2147483648
        %v5354 = vor.u32 1.1754944e-38, %v5353
        %v5355 = vsel %vm5352, %v5354, %v5350
        %v5356 = vmul.f32 1.0, %v5355
        %v5357 = vrcp.pop %v5157
        %v5358 = vmul.f32 %v5157, %v5357
        %v5359 = vsub.f32 1.0, %v5358
        %v5360 = vmul.f32 %v5357, %v5359
        %v5361 = vadd.f32 %v5357, %v5360
        %vm5362 = vweird.f32 %v5157
        %vm5363 = vweird.f32 %v5357
        %vm5364 = vmor %vm5362, %vm5363
        %v5365 = vsel %vm5364, %v5357, %v5361
        %v5366 = vand.u32 2147483647, %v5157
        %vm5367 = vcmp.eq.f32.partialorder %v5366, 8.507059e+37
        %v5368 = vand.u32 %v5157, 2147483648
        %v5369 = vor.u32 1.1754944e-38, %v5368
        %v5370 = vsel %vm5367, %v5369, %v5365
        %v5371 = vmul.f32 1.0, %v5370
        %v5372 = vrcp.pop %v5158
        %v5373 = vmul.f32 %v5158, %v5372
        %v5374 = vsub.f32 1.0, %v5373
        %v5375 = vmul.f32 %v5372, %v5374
        %v5376 = vadd.f32 %v5372, %v5375
        %vm5377 = vweird.f32 %v5158
        %vm5378 = vweird.f32 %v5372
        %vm5379 = vmor %vm5377, %vm5378
        %v5380 = vsel %vm5379, %v5372, %v5376
        %v5381 = vand.u32 2147483647, %v5158
        %vm5382 = vcmp.eq.f32.partialorder %v5381, 8.507059e+37
        %v5383 = vand.u32 %v5158, 2147483648
        %v5384 = vor.u32 1.1754944e-38, %v5383
        %v5385 = vsel %vm5382, %v5384, %v5380
        %v5386 = vmul.f32 1.0, %v5385
        %v5387 = vrcp.pop %v5159
        %v5388 = vmul.f32 %v5159, %v5387
        %v5389 = vsub.f32 1.0, %v5388
        %v5390 = vmul.f32 %v5387, %v5389
        %v5391 = vadd.f32 %v5387, %v5390
        %vm5392 = vweird.f32 %v5159
        %vm5393 = vweird.f32 %v5387
        %vm5394 = vmor %vm5392, %vm5393
        %v5395 = vsel %vm5394, %v5387, %v5391
        %v5396 = vand.u32 2147483647, %v5159
        %vm5397 = vcmp.eq.f32.partialorder %v5396, 8.507059e+37
        %v5398 = vand.u32 %v5159, 2147483648
        %v5399 = vor.u32 1.1754944e-38, %v5398
        %v5400 = vsel %vm5397, %v5399, %v5395
        %v5401 = vmul.f32 1.0, %v5400
        %v5402 = vrcp.pop %v5160
        %v5403 = vmul.f32 %v5160, %v5402
        %v5404 = vsub.f32 1.0, %v5403
        %v5405 = vmul.f32 %v5402, %v5404
        %v5406 = vadd.f32 %v5402, %v5405
        %vm5407 = vweird.f32 %v5160
        %vm5408 = vweird.f32 %v5402
        %vm5409 = vmor %vm5407, %vm5408
        %v5410 = vsel %vm5409, %v5402, %v5406
        %v5411 = vand.u32 2147483647, %v5160
        %vm5412 = vcmp.eq.f32.partialorder %v5411, 8.507059e+37
        %v5413 = vand.u32 %v5160, 2147483648
        %v5414 = vor.u32 1.1754944e-38, %v5413
        %v5415 = vsel %vm5412, %v5414, %v5410
        %v5416 = vmul.f32 1.0, %v5415
        %v5417 = vrcp.pop %v5161
        %v5418 = vmul.f32 %v5161, %v5417
        %v5419 = vsub.f32 1.0, %v5418
        %v5420 = vmul.f32 %v5417, %v5419
        %v5421 = vadd.f32 %v5417, %v5420
        %vm5422 = vweird.f32 %v5161
        %vm5423 = vweird.f32 %v5417
        %vm5424 = vmor %vm5422, %vm5423
        %v5425 = vsel %vm5424, %v5417, %v5421
        %v5426 = vand.u32 2147483647, %v5161
        %vm5427 = vcmp.eq.f32.partialorder %v5426, 8.507059e+37
        %v5428 = vand.u32 %v5161, 2147483648
        %v5429 = vor.u32 1.1754944e-38, %v5428
        %v5430 = vsel %vm5427, %v5429, %v5425
        %v5431 = vmul.f32 1.0, %v5430
        %v5432 = vrcp.pop %v5162
        %v5433 = vmul.f32 %v5162, %v5432
        %v5434 = vsub.f32 1.0, %v5433
        %v5435 = vmul.f32 %v5432, %v5434
        %v5436 = vadd.f32 %v5432, %v5435
        %vm5437 = vweird.f32 %v5162
        %vm5438 = vweird.f32 %v5432
        %vm5439 = vmor %vm5437, %vm5438
        %v5440 = vsel %vm5439, %v5432, %v5436
        %v5441 = vand.u32 2147483647, %v5162
        %vm5442 = vcmp.eq.f32.partialorder %v5441, 8.507059e+37
        %v5443 = vand.u32 %v5162, 2147483648
        %v5444 = vor.u32 1.1754944e-38, %v5443
        %v5445 = vsel %vm5442, %v5444, %v5440
        %v5446 = vmul.f32 1.0, %v5445
        %v5447 = vrcp.pop %v5163
        %v5448 = vmul.f32 %v5163, %v5447
        %v5449 = vsub.f32 1.0, %v5448
        %v5450 = vmul.f32 %v5447, %v5449
        %v5451 = vadd.f32 %v5447, %v5450
        %vm5452 = vweird.f32 %v5163
        %vm5453 = vweird.f32 %v5447
        %vm5454 = vmor %vm5452, %vm5453
        %v5455 = vsel %vm5454, %v5447, %v5451
        %v5456 = vand.u32 2147483647, %v5163
        %vm5457 = vcmp.eq.f32.partialorder %v5456, 8.507059e+37
        %v5458 = vand.u32 %v5163, 2147483648
        %v5459 = vor.u32 1.1754944e-38, %v5458
        %v5460 = vsel %vm5457, %v5459, %v5455
        %v5461 = vmul.f32 1.0, %v5460
        %v5462 = vrcp.pop %v5164
        %v5463 = vmul.f32 %v5164, %v5462
        %v5464 = vsub.f32 1.0, %v5463
        %v5465 = vmul.f32 %v5462, %v5464
        %v5466 = vadd.f32 %v5462, %v5465
        %vm5467 = vweird.f32 %v5164
        %vm5468 = vweird.f32 %v5462
        %vm5469 = vmor %vm5467, %vm5468
        %v5470 = vsel %vm5469, %v5462, %v5466
        %v5471 = vand.u32 2147483647, %v5164
        %vm5472 = vcmp.eq.f32.partialorder %v5471, 8.507059e+37
        %v5473 = vand.u32 %v5164, 2147483648
        %v5474 = vor.u32 1.1754944e-38, %v5473
        %v5475 = vsel %vm5472, %v5474, %v5470
        %v5476 = vmul.f32 1.0, %v5475
        %v5477 = vrcp.pop %v5165
        %v5478 = vmul.f32 %v5165, %v5477
        %v5479 = vsub.f32 1.0, %v5478
        %v5480 = vmul.f32 %v5477, %v5479
        %v5481 = vadd.f32 %v5477, %v5480
        %vm5482 = vweird.f32 %v5165
        %vm5483 = vweird.f32 %v5477
        %vm5484 = vmor %vm5482, %vm5483
        %v5485 = vsel %vm5484, %v5477, %v5481
        %v5486 = vand.u32 2147483647, %v5165
        %vm5487 = vcmp.eq.f32.partialorder %v5486, 8.507059e+37
        %v5488 = vand.u32 %v5165, 2147483648
        %v5489 = vor.u32 1.1754944e-38, %v5488
        %v5490 = vsel %vm5487, %v5489, %v5485
        %v5491 = vmul.f32 1.0, %v5490
        %v5492 = vrcp.pop %v5166
        %v5493 = vmul.f32 %v5166, %v5492
        %v5494 = vsub.f32 1.0, %v5493
        %v5495 = vmul.f32 %v5492, %v5494
        %v5496 = vadd.f32 %v5492, %v5495
        %vm5497 = vweird.f32 %v5166
        %vm5498 = vweird.f32 %v5492
        %vm5499 = vmor %vm5497, %vm5498
        %v5500 = vsel %vm5499, %v5492, %v5496
        %v5501 = vand.u32 2147483647, %v5166
        %vm5502 = vcmp.eq.f32.partialorder %v5501, 8.507059e+37
        %v5503 = vand.u32 %v5166, 2147483648
        %v5504 = vor.u32 1.1754944e-38, %v5503
        %v5505 = vsel %vm5502, %v5504, %v5500
        %v5506 = vmul.f32 1.0, %v5505
        %v5507 = vrcp.pop %v5167
        %v5508 = vmul.f32 %v5167, %v5507
        %v5509 = vsub.f32 1.0, %v5508
        %v5510 = vmul.f32 %v5507, %v5509
        %v5511 = vadd.f32 %v5507, %v5510
        %vm5512 = vweird.f32 %v5167
        %vm5513 = vweird.f32 %v5507
        %vm5514 = vmor %vm5512, %vm5513
        %v5515 = vsel %vm5514, %v5507, %v5511
        %v5516 = vand.u32 2147483647, %v5167
        %vm5517 = vcmp.eq.f32.partialorder %v5516, 8.507059e+37
        %v5518 = vand.u32 %v5167, 2147483648
        %v5519 = vor.u32 1.1754944e-38, %v5518
        %v5520 = vsel %vm5517, %v5519, %v5515
        %v5521 = vmul.f32 1.0, %v5520
        %v5522 = vrcp.pop %v5168
        %v5523 = vmul.f32 %v5168, %v5522
        %v5524 = vsub.f32 1.0, %v5523
        %v5525 = vmul.f32 %v5522, %v5524
        %v5526 = vadd.f32 %v5522, %v5525
        %vm5527 = vweird.f32 %v5168
        %vm5528 = vweird.f32 %v5522
        %vm5529 = vmor %vm5527, %vm5528
        %v5530 = vsel %vm5529, %v5522, %v5526
        %v5531 = vand.u32 2147483647, %v5168
        %vm5532 = vcmp.eq.f32.partialorder %v5531, 8.507059e+37
        %v5533 = vand.u32 %v5168, 2147483648
        %v5534 = vor.u32 1.1754944e-38, %v5533
        %v5535 = vsel %vm5532, %v5534, %v5530
        %v5536 = vmul.f32 1.0, %v5535
        %v5537 = vrcp.pop %v5169
        %v5538 = vmul.f32 %v5169, %v5537
        %v5539 = vsub.f32 1.0, %v5538
        %v5540 = vmul.f32 %v5537, %v5539
        %v5541 = vadd.f32 %v5537, %v5540
        %vm5542 = vweird.f32 %v5169
        %vm5543 = vweird.f32 %v5537
        %vm5544 = vmor %vm5542, %vm5543
        %v5545 = vsel %vm5544, %v5537, %v5541
        %v5546 = vand.u32 2147483647, %v5169
        %vm5547 = vcmp.eq.f32.partialorder %v5546, 8.507059e+37
        %v5548 = vand.u32 %v5169, 2147483648
        %v5549 = vor.u32 1.1754944e-38, %v5548
        %v5550 = vsel %vm5547, %v5549, %v5545
        %v5551 = vmul.f32 1.0, %v5550
        %v5552 = vrcp.pop %v5170
        %v5553 = vmul.f32 %v5170, %v5552
        %v5554 = vsub.f32 1.0, %v5553
        %v5555 = vmul.f32 %v5552, %v5554
        %v5556 = vadd.f32 %v5552, %v5555
        %vm5557 = vweird.f32 %v5170
        %vm5558 = vweird.f32 %v5552
        %vm5559 = vmor %vm5557, %vm5558
        %v5560 = vsel %vm5559, %v5552, %v5556
        %v5561 = vand.u32 2147483647, %v5170
        %vm5562 = vcmp.eq.f32.partialorder %v5561, 8.507059e+37
        %v5563 = vand.u32 %v5170, 2147483648
        %v5564 = vor.u32 1.1754944e-38, %v5563
        %v5565 = vsel %vm5562, %v5564, %v5560
        %v5566 = vmul.f32 1.0, %v5565
        %v5567 = vrcp.pop %v5171
        %v5568 = vmul.f32 %v5171, %v5567
        %v5569 = vsub.f32 1.0, %v5568
        %v5570 = vmul.f32 %v5567, %v5569
        %v5571 = vadd.f32 %v5567, %v5570
        %vm5572 = vweird.f32 %v5171
        %vm5573 = vweird.f32 %v5567
        %vm5574 = vmor %vm5572, %vm5573
        %v5575 = vsel %vm5574, %v5567, %v5571
        %v5576 = vand.u32 2147483647, %v5171
        %vm5577 = vcmp.eq.f32.partialorder %v5576, 8.507059e+37
        %v5578 = vand.u32 %v5171, 2147483648
        %v5579 = vor.u32 1.1754944e-38, %v5578
        %v5580 = vsel %vm5577, %v5579, %v5575
        %v5581 = vmul.f32 1.0, %v5580
        %v5582 = vrcp.pop %v5172
        %v5583 = vmul.f32 %v5172, %v5582
        %v5584 = vsub.f32 1.0, %v5583
        %v5585 = vmul.f32 %v5582, %v5584
        %v5586 = vadd.f32 %v5582, %v5585
        %vm5587 = vweird.f32 %v5172
        %vm5588 = vweird.f32 %v5582
        %vm5589 = vmor %vm5587, %vm5588
        %v5590 = vsel %vm5589, %v5582, %v5586
        %v5591 = vand.u32 2147483647, %v5172
        %vm5592 = vcmp.eq.f32.partialorder %v5591, 8.507059e+37
        %v5593 = vand.u32 %v5172, 2147483648
        %v5594 = vor.u32 1.1754944e-38, %v5593
        %v5595 = vsel %vm5592, %v5594, %v5590
        %v5596 = vmul.f32 1.0, %v5595
        %v5597 = vrcp.pop %v5173
        %v5598 = vmul.f32 %v5173, %v5597
        %v5599 = vsub.f32 1.0, %v5598
        %v5600 = vmul.f32 %v5597, %v5599
        %v5601 = vadd.f32 %v5597, %v5600
        %vm5602 = vweird.f32 %v5173
        %vm5603 = vweird.f32 %v5597
        %vm5604 = vmor %vm5602, %vm5603
        %v5605 = vsel %vm5604, %v5597, %v5601
        %v5606 = vand.u32 2147483647, %v5173
        %vm5607 = vcmp.eq.f32.partialorder %v5606, 8.507059e+37
        %v5608 = vand.u32 %v5173, 2147483648
        %v5609 = vor.u32 1.1754944e-38, %v5608
        %v5610 = vsel %vm5607, %v5609, %v5605
        %v5611 = vmul.f32 1.0, %v5610
        %v5612 = vrcp.pop %v5174
        %v5613 = vmul.f32 %v5174, %v5612
        %v5614 = vsub.f32 1.0, %v5613
        %v5615 = vmul.f32 %v5612, %v5614
        %v5616 = vadd.f32 %v5612, %v5615
        %vm5617 = vweird.f32 %v5174
        %vm5618 = vweird.f32 %v5612
        %vm5619 = vmor %vm5617, %vm5618
        %v5620 = vsel %vm5619, %v5612, %v5616
        %v5621 = vand.u32 2147483647, %v5174
        %vm5622 = vcmp.eq.f32.partialorder %v5621, 8.507059e+37
        %v5623 = vand.u32 %v5174, 2147483648
        %v5624 = vor.u32 1.1754944e-38, %v5623
        %v5625 = vsel %vm5622, %v5624, %v5620
        %v5626 = vmul.f32 1.0, %v5625
        %v5627 = vrcp.pop %v5175
        %v5628 = vmul.f32 %v5175, %v5627
        %v5629 = vsub.f32 1.0, %v5628
        %v5630 = vmul.f32 %v5627, %v5629
        %v5631 = vadd.f32 %v5627, %v5630
        %vm5632 = vweird.f32 %v5175
        %vm5633 = vweird.f32 %v5627
        %vm5634 = vmor %vm5632, %vm5633
        %v5635 = vsel %vm5634, %v5627, %v5631
        %v5636 = vand.u32 2147483647, %v5175
        %vm5637 = vcmp.eq.f32.partialorder %v5636, 8.507059e+37
        %v5638 = vand.u32 %v5175, 2147483648
        %v5639 = vor.u32 1.1754944e-38, %v5638
        %v5640 = vsel %vm5637, %v5639, %v5635
        %v5641 = vmul.f32 1.0, %v5640
        %v5642 = vrcp.pop %v5176
        %v5643 = vmul.f32 %v5176, %v5642
        %v5644 = vsub.f32 1.0, %v5643
        %v5645 = vmul.f32 %v5642, %v5644
        %v5646 = vadd.f32 %v5642, %v5645
        %vm5647 = vweird.f32 %v5176
        %vm5648 = vweird.f32 %v5642
        %vm5649 = vmor %vm5647, %vm5648
        %v5650 = vsel %vm5649, %v5642, %v5646
        %v5651 = vand.u32 2147483647, %v5176
        %vm5652 = vcmp.eq.f32.partialorder %v5651, 8.507059e+37
        %v5653 = vand.u32 %v5176, 2147483648
        %v5654 = vor.u32 1.1754944e-38, %v5653
        %v5655 = vsel %vm5652, %v5654, %v5650
        %v5656 = vmul.f32 1.0, %v5655
        %v5657 = vtanh.pop %v5017
        %v5658 = vtanh.pop %v5018
        %v5659 = vtanh.pop %v5019
        %v5660 = vtanh.pop %v5020
        %v5661 = vtanh.pop %v5021
        %v5662 = vtanh.pop %v5022
        %v5663 = vtanh.pop %v5023
        %v5664 = vtanh.pop %v5024
        %v5665 = vtanh.pop %v5025
        %v5666 = vtanh.pop %v5026
        %v5667 = vtanh.pop %v5027
        %v5668 = vtanh.pop %v5028
        %v5669 = vtanh.pop %v5029
        %v5670 = vtanh.pop %v5030
        %v5671 = vtanh.pop %v5031
        %v5672 = vtanh.pop %v5032
        %v5673 = vtanh.pop %v5033
        %v5674 = vtanh.pop %v5034
        %v5675 = vtanh.pop %v5035
        %v5676 = vtanh.pop %v5036
        %v5677 = vtanh.pop %v5037
        %v5678 = vtanh.pop %v5038
        %v5679 = vtanh.pop %v5039
        %v5680 = vtanh.pop %v5040
        %v5681 = vtanh.pop %v5041
        %v5682 = vtanh.pop %v5042
        %v5683 = vtanh.pop %v5043
        %v5684 = vtanh.pop %v5044
        %v5685 = vtanh.pop %v5045
        %v5686 = vtanh.pop %v5046
        %v5687 = vtanh.pop %v5047
        %v5688 = vtanh.pop %v5048
        %v5689 = vld [vmem:[%s356] sm:$0xff]
        %v5690 = vld [vmem:[%s356 + $0x8] sm:$0xff]
        %v5691 = vld [vmem:[%s356 + $0x10] sm:$0xff]
        %v5692 = vld [vmem:[%s356 + $0x18] sm:$0xff]
        %v5693 = vld [vmem:[%s356 + $0x20] sm:$0xff]
        %v5694 = vld [vmem:[%s356 + $0x28] sm:$0xff]
        %v5695 = vld [vmem:[%s356 + $0x30] sm:$0xff]
        %v5696 = vld [vmem:[%s356 + $0x38] sm:$0xff]
        %v5697 = vld [vmem:[%s356 + $0x40] sm:$0xff]
        %v5698 = vld [vmem:[%s356 + $0x48] sm:$0xff]
        %v5699 = vld [vmem:[%s356 + $0x50] sm:$0xff]
        %v5700 = vld [vmem:[%s356 + $0x58] sm:$0xff]
        %v5701 = vld [vmem:[%s356 + $0x60] sm:$0xff]
        %v5702 = vld [vmem:[%s356 + $0x68] sm:$0xff]
        %v5703 = vld [vmem:[%s356 + $0x70] sm:$0xff]
        %v5704 = vld [vmem:[%s356 + $0x78] sm:$0xff]
        %v5705 = vld [vmem:[%s356 + $0x80] sm:$0xff]
        %v5706 = vld [vmem:[%s356 + $0x88] sm:$0xff]
        %v5707 = vld [vmem:[%s356 + $0x90] sm:$0xff]
        %v5708 = vld [vmem:[%s356 + $0x98] sm:$0xff]
        %v5709 = vld [vmem:[%s356 + $0xa0] sm:$0xff]
        %v5710 = vld [vmem:[%s356 + $0xa8] sm:$0xff]
        %v5711 = vld [vmem:[%s356 + $0xb0] sm:$0xff]
        %v5712 = vld [vmem:[%s356 + $0xb8] sm:$0xff]
        %v5713 = vld [vmem:[%s356 + $0xc0] sm:$0xff]
        %v5714 = vld [vmem:[%s356 + $0xc8] sm:$0xff]
        %v5715 = vld [vmem:[%s356 + $0xd0] sm:$0xff]
        %v5716 = vld [vmem:[%s356 + $0xd8] sm:$0xff]
        %v5717 = vld [vmem:[%s356 + $0xe0] sm:$0xff]
        %v5718 = vld [vmem:[%s356 + $0xe8] sm:$0xff]
        %v5719 = vld [vmem:[%s356 + $0xf0] sm:$0xff]
        %v5720 = vld [vmem:[%s356 + $0xf8] sm:$0xff]
        %v5721 = vmul.f32 %v5191, %v5689
        %v5722 = vmul.f32 %v5206, %v5690
        %v5723 = vmul.f32 %v5221, %v5691
        %v5724 = vmul.f32 %v5236, %v5692
        %v5725 = vmul.f32 %v5251, %v5693
        %v5726 = vmul.f32 %v5266, %v5694
        %v5727 = vmul.f32 %v5281, %v5695
        %v5728 = vmul.f32 %v5296, %v5696
        %v5729 = vmul.f32 %v5311, %v5697
        %v5730 = vmul.f32 %v5326, %v5698
        %v5731 = vmul.f32 %v5341, %v5699
        %v5732 = vmul.f32 %v5356, %v5700
        %v5733 = vmul.f32 %v5371, %v5701
        %v5734 = vmul.f32 %v5386, %v5702
        %v5735 = vmul.f32 %v5401, %v5703
        %v5736 = vmul.f32 %v5416, %v5704
        %v5737 = vmul.f32 %v5431, %v5705
        %v5738 = vmul.f32 %v5446, %v5706
        %v5739 = vmul.f32 %v5461, %v5707
        %v5740 = vmul.f32 %v5476, %v5708
        %v5741 = vmul.f32 %v5491, %v5709
        %v5742 = vmul.f32 %v5506, %v5710
        %v5743 = vmul.f32 %v5521, %v5711
        %v5744 = vmul.f32 %v5536, %v5712
        %v5745 = vmul.f32 %v5551, %v5713
        %v5746 = vmul.f32 %v5566, %v5714
        %v5747 = vmul.f32 %v5581, %v5715
        %v5748 = vmul.f32 %v5596, %v5716
        %v5749 = vmul.f32 %v5611, %v5717
        %v5750 = vmul.f32 %v5626, %v5718
        %v5751 = vmul.f32 %v5641, %v5719
        %v5752 = vmul.f32 %v5656, %v5720
        %5785 = vrot.lane.b32.xlu0 %v5657, 64
        %v5786 = vpop.permute.xlu0 %5785
        %5787 = vrot.lane.b32.xlu0 %v5658, 64
        %v5788 = vpop.permute.xlu0 %5787
        %5789 = vrot.lane.b32.xlu0 %v5659, 64
        %v5790 = vpop.permute.xlu0 %5789
        %5791 = vrot.lane.b32.xlu0 %v5660, 64
        %v5792 = vpop.permute.xlu0 %5791
        %5793 = vrot.lane.b32.xlu0 %v5661, 64
        %v5794 = vpop.permute.xlu0 %5793
        %5795 = vrot.lane.b32.xlu0 %v5662, 64
        %v5796 = vpop.permute.xlu0 %5795
        %5797 = vrot.lane.b32.xlu0 %v5663, 64
        %v5798 = vpop.permute.xlu0 %5797
        %5799 = vrot.lane.b32.xlu0 %v5664, 64
        %v5800 = vpop.permute.xlu0 %5799
        %5801 = vrot.lane.b32.xlu0 %v5665, 64
        %v5802 = vpop.permute.xlu0 %5801
        %5803 = vrot.lane.b32.xlu0 %v5666, 64
        %v5804 = vpop.permute.xlu0 %5803
        %5805 = vrot.lane.b32.xlu0 %v5667, 64
        %v5806 = vpop.permute.xlu0 %5805
        %5807 = vrot.lane.b32.xlu0 %v5668, 64
        %v5808 = vpop.permute.xlu0 %5807
        %5809 = vrot.lane.b32.xlu0 %v5669, 64
        %v5810 = vpop.permute.xlu0 %5809
        %5811 = vrot.lane.b32.xlu0 %v5670, 64
        %v5812 = vpop.permute.xlu0 %5811
        %5813 = vrot.lane.b32.xlu0 %v5671, 64
        %v5814 = vpop.permute.xlu0 %5813
        %5815 = vrot.lane.b32.xlu0 %v5672, 64
        %v5816 = vpop.permute.xlu0 %5815
        %5817 = vrot.lane.b32.xlu0 %v5673, 64
        %v5818 = vpop.permute.xlu0 %5817
        %5819 = vrot.lane.b32.xlu0 %v5674, 64
        %v5820 = vpop.permute.xlu0 %5819
        %5821 = vrot.lane.b32.xlu0 %v5675, 64
        %v5822 = vpop.permute.xlu0 %5821
        %5823 = vrot.lane.b32.xlu0 %v5676, 64
        %v5824 = vpop.permute.xlu0 %5823
        %5825 = vrot.lane.b32.xlu0 %v5677, 64
        %v5826 = vpop.permute.xlu0 %5825
        %5827 = vrot.lane.b32.xlu0 %v5678, 64
        %v5828 = vpop.permute.xlu0 %5827
        %5829 = vrot.lane.b32.xlu0 %v5679, 64
        %v5830 = vpop.permute.xlu0 %5829
        %5831 = vrot.lane.b32.xlu0 %v5680, 64
        %v5832 = vpop.permute.xlu0 %5831
        %5833 = vrot.lane.b32.xlu0 %v5681, 64
        %v5834 = vpop.permute.xlu0 %5833
        %5835 = vrot.lane.b32.xlu0 %v5682, 64
        %v5836 = vpop.permute.xlu0 %5835
        %5837 = vrot.lane.b32.xlu0 %v5683, 64
        %v5838 = vpop.permute.xlu0 %5837
        %5839 = vrot.lane.b32.xlu0 %v5684, 64
        %v5840 = vpop.permute.xlu0 %5839
        %5841 = vrot.lane.b32.xlu0 %v5685, 64
        %v5842 = vpop.permute.xlu0 %5841
        %5843 = vrot.lane.b32.xlu0 %v5686, 64
        %v5844 = vpop.permute.xlu0 %5843
        %5845 = vrot.lane.b32.xlu0 %v5687, 64
        %v5846 = vpop.permute.xlu0 %5845
        %5847 = vrot.lane.b32.xlu0 %v5688, 64
        %v5848 = vpop.permute.xlu0 %5847
        %v5881 = vmul.f32 %v5191, %v5786
        %v5882 = vmul.f32 %v5206, %v5788
        %v5883 = vmul.f32 %v5221, %v5790
        %v5884 = vmul.f32 %v5236, %v5792
        %v5885 = vmul.f32 %v5251, %v5794
        %v5886 = vmul.f32 %v5266, %v5796
        %v5887 = vmul.f32 %v5281, %v5798
        %v5888 = vmul.f32 %v5296, %v5800
        %v5889 = vmul.f32 %v5311, %v5802
        %v5890 = vmul.f32 %v5326, %v5804
        %v5891 = vmul.f32 %v5341, %v5806
        %v5892 = vmul.f32 %v5356, %v5808
        %v5893 = vmul.f32 %v5371, %v5810
        %v5894 = vmul.f32 %v5386, %v5812
        %v5895 = vmul.f32 %v5401, %v5814
        %v5896 = vmul.f32 %v5416, %v5816
        %v5897 = vmul.f32 %v5431, %v5818
        %v5898 = vmul.f32 %v5446, %v5820
        %v5899 = vmul.f32 %v5461, %v5822
        %v5900 = vmul.f32 %v5476, %v5824
        %v5901 = vmul.f32 %v5491, %v5826
        %v5902 = vmul.f32 %v5506, %v5828
        %v5903 = vmul.f32 %v5521, %v5830
        %v5904 = vmul.f32 %v5536, %v5832
        %v5905 = vmul.f32 %v5551, %v5834
        %v5906 = vmul.f32 %v5566, %v5836
        %v5907 = vmul.f32 %v5581, %v5838
        %v5908 = vmul.f32 %v5596, %v5840
        %v5909 = vmul.f32 %v5611, %v5842
        %v5910 = vmul.f32 %v5626, %v5844
        %v5911 = vmul.f32 %v5641, %v5846
        %v5912 = vmul.f32 %v5656, %v5848
        %5945 = vrot.lane.b32.xlu0 %v5881, 96
        %v5946 = vpop.permute.xlu0 %5945
        %5947 = vrot.lane.b32.xlu0 %v5882, 96
        %v5948 = vpop.permute.xlu0 %5947
        %5949 = vrot.lane.b32.xlu0 %v5883, 96
        %v5950 = vpop.permute.xlu0 %5949
        %5951 = vrot.lane.b32.xlu0 %v5884, 96
        %v5952 = vpop.permute.xlu0 %5951
        %5953 = vrot.lane.b32.xlu0 %v5885, 96
        %v5954 = vpop.permute.xlu0 %5953
        %5955 = vrot.lane.b32.xlu0 %v5886, 96
        %v5956 = vpop.permute.xlu0 %5955
        %5957 = vrot.lane.b32.xlu0 %v5887, 96
        %v5958 = vpop.permute.xlu0 %5957
        %5959 = vrot.lane.b32.xlu0 %v5888, 96
        %v5960 = vpop.permute.xlu0 %5959
        %5961 = vrot.lane.b32.xlu0 %v5889, 96
        %v5962 = vpop.permute.xlu0 %5961
        %5963 = vrot.lane.b32.xlu0 %v5890, 96
        %v5964 = vpop.permute.xlu0 %5963
        %5965 = vrot.lane.b32.xlu0 %v5891, 96
        %v5966 = vpop.permute.xlu0 %5965
        %5967 = vrot.lane.b32.xlu0 %v5892, 96
        %v5968 = vpop.permute.xlu0 %5967
        %5969 = vrot.lane.b32.xlu0 %v5893, 96
        %v5970 = vpop.permute.xlu0 %5969
        %5971 = vrot.lane.b32.xlu0 %v5894, 96
        %v5972 = vpop.permute.xlu0 %5971
        %5973 = vrot.lane.b32.xlu0 %v5895, 96
        %v5974 = vpop.permute.xlu0 %5973
        %5975 = vrot.lane.b32.xlu0 %v5896, 96
        %v5976 = vpop.permute.xlu0 %5975
        %5977 = vrot.lane.b32.xlu0 %v5897, 96
        %v5978 = vpop.permute.xlu0 %5977
        %5979 = vrot.lane.b32.xlu0 %v5898, 96
        %v5980 = vpop.permute.xlu0 %5979
        %5981 = vrot.lane.b32.xlu0 %v5899, 96
        %v5982 = vpop.permute.xlu0 %5981
        %5983 = vrot.lane.b32.xlu0 %v5900, 96
        %v5984 = vpop.permute.xlu0 %5983
        %5985 = vrot.lane.b32.xlu0 %v5901, 96
        %v5986 = vpop.permute.xlu0 %5985
        %5987 = vrot.lane.b32.xlu0 %v5902, 96
        %v5988 = vpop.permute.xlu0 %5987
        %5989 = vrot.lane.b32.xlu0 %v5903, 96
        %v5990 = vpop.permute.xlu0 %5989
        %5991 = vrot.lane.b32.xlu0 %v5904, 96
        %v5992 = vpop.permute.xlu0 %5991
        %5993 = vrot.lane.b32.xlu0 %v5905, 96
        %v5994 = vpop.permute.xlu0 %5993
        %5995 = vrot.lane.b32.xlu0 %v5906, 96
        %v5996 = vpop.permute.xlu0 %5995
        %5997 = vrot.lane.b32.xlu0 %v5907, 96
        %v5998 = vpop.permute.xlu0 %5997
        %5999 = vrot.lane.b32.xlu0 %v5908, 96
        %v6000 = vpop.permute.xlu0 %5999
        %6001 = vrot.lane.b32.xlu0 %v5909, 96
        %v6002 = vpop.permute.xlu0 %6001
        %6003 = vrot.lane.b32.xlu0 %v5910, 96
        %v6004 = vpop.permute.xlu0 %6003
        %6005 = vrot.lane.b32.xlu0 %v5911, 96
        %v6006 = vpop.permute.xlu0 %6005
        %6007 = vrot.lane.b32.xlu0 %v5912, 96
        %v6008 = vpop.permute.xlu0 %6007
        %v6041 = vadd.f32 %v5721, %v5946
        %v6042 = vadd.f32 %v5722, %v5948
        %v6043 = vadd.f32 %v5723, %v5950
        %v6044 = vadd.f32 %v5724, %v5952
        %v6045 = vadd.f32 %v5725, %v5954
        %v6046 = vadd.f32 %v5726, %v5956
        %v6047 = vadd.f32 %v5727, %v5958
        %v6048 = vadd.f32 %v5728, %v5960
        %v6049 = vadd.f32 %v5729, %v5962
        %v6050 = vadd.f32 %v5730, %v5964
        %v6051 = vadd.f32 %v5731, %v5966
        %v6052 = vadd.f32 %v5732, %v5968
        %v6053 = vadd.f32 %v5733, %v5970
        %v6054 = vadd.f32 %v5734, %v5972
        %v6055 = vadd.f32 %v5735, %v5974
        %v6056 = vadd.f32 %v5736, %v5976
        %v6057 = vadd.f32 %v5737, %v5978
        %v6058 = vadd.f32 %v5738, %v5980
        %v6059 = vadd.f32 %v5739, %v5982
        %v6060 = vadd.f32 %v5740, %v5984
        %v6061 = vadd.f32 %v5741, %v5986
        %v6062 = vadd.f32 %v5742, %v5988
        %v6063 = vadd.f32 %v5743, %v5990
        %v6064 = vadd.f32 %v5744, %v5992
        %v6065 = vadd.f32 %v5745, %v5994
        %v6066 = vadd.f32 %v5746, %v5996
        %v6067 = vadd.f32 %v5747, %v5998
        %v6068 = vadd.f32 %v5748, %v6000
        %v6069 = vadd.f32 %v5749, %v6002
        %v6070 = vadd.f32 %v5750, %v6004
        %v6071 = vadd.f32 %v5751, %v6006
        %v6072 = vadd.f32 %v5752, %v6008
        %v6073 = vtanh.pop %v6041
        %v6074 = vtanh.pop %v6042
        %v6075 = vtanh.pop %v6043
        %v6076 = vtanh.pop %v6044
        %v6077 = vtanh.pop %v6045
        %v6078 = vtanh.pop %v6046
        %v6079 = vtanh.pop %v6047
        %v6080 = vtanh.pop %v6048
        %v6081 = vtanh.pop %v6049
        %v6082 = vtanh.pop %v6050
        %v6083 = vtanh.pop %v6051
        %v6084 = vtanh.pop %v6052
        %v6085 = vtanh.pop %v6053
        %v6086 = vtanh.pop %v6054
        %v6087 = vtanh.pop %v6055
        %v6088 = vtanh.pop %v6056
        %v6089 = vtanh.pop %v6057
        %v6090 = vtanh.pop %v6058
        %v6091 = vtanh.pop %v6059
        %v6092 = vtanh.pop %v6060
        %v6093 = vtanh.pop %v6061
        %v6094 = vtanh.pop %v6062
        %v6095 = vtanh.pop %v6063
        %v6096 = vtanh.pop %v6064
        %v6097 = vtanh.pop %v6065
        %v6098 = vtanh.pop %v6066
        %v6099 = vtanh.pop %v6067
        %v6100 = vtanh.pop %v6068
        %v6101 = vtanh.pop %v6069
        %v6102 = vtanh.pop %v6070
        %v6103 = vtanh.pop %v6071
        %v6104 = vtanh.pop %v6072
        %6137 = vrot.lane.b32.xlu0 %v6073, 64
        %v6138 = vpop.permute.xlu0 %6137
        %6139 = vrot.lane.b32.xlu0 %v6074, 64
        %v6140 = vpop.permute.xlu0 %6139
        %6141 = vrot.lane.b32.xlu0 %v6075, 64
        %v6142 = vpop.permute.xlu0 %6141
        %6143 = vrot.lane.b32.xlu0 %v6076, 64
        %v6144 = vpop.permute.xlu0 %6143
        %6145 = vrot.lane.b32.xlu0 %v6077, 64
        %v6146 = vpop.permute.xlu0 %6145
        %6147 = vrot.lane.b32.xlu0 %v6078, 64
        %v6148 = vpop.permute.xlu0 %6147
        %6149 = vrot.lane.b32.xlu0 %v6079, 64
        %v6150 = vpop.permute.xlu0 %6149
        %6151 = vrot.lane.b32.xlu0 %v6080, 64
        %v6152 = vpop.permute.xlu0 %6151
        %6153 = vrot.lane.b32.xlu0 %v6081, 64
        %v6154 = vpop.permute.xlu0 %6153
        %6155 = vrot.lane.b32.xlu0 %v6082, 64
        %v6156 = vpop.permute.xlu0 %6155
        %6157 = vrot.lane.b32.xlu0 %v6083, 64
        %v6158 = vpop.permute.xlu0 %6157
        %6159 = vrot.lane.b32.xlu0 %v6084, 64
        %v6160 = vpop.permute.xlu0 %6159
        %6161 = vrot.lane.b32.xlu0 %v6085, 64
        %v6162 = vpop.permute.xlu0 %6161
        %6163 = vrot.lane.b32.xlu0 %v6086, 64
        %v6164 = vpop.permute.xlu0 %6163
        %6165 = vrot.lane.b32.xlu0 %v6087, 64
        %v6166 = vpop.permute.xlu0 %6165
        %6167 = vrot.lane.b32.xlu0 %v6088, 64
        %v6168 = vpop.permute.xlu0 %6167
        %6169 = vrot.lane.b32.xlu0 %v6089, 64
        %v6170 = vpop.permute.xlu0 %6169
        %6171 = vrot.lane.b32.xlu0 %v6090, 64
        %v6172 = vpop.permute.xlu0 %6171
        %6173 = vrot.lane.b32.xlu0 %v6091, 64
        %v6174 = vpop.permute.xlu0 %6173
        %6175 = vrot.lane.b32.xlu0 %v6092, 64
        %v6176 = vpop.permute.xlu0 %6175
        %6177 = vrot.lane.b32.xlu0 %v6093, 64
        %v6178 = vpop.permute.xlu0 %6177
        %6179 = vrot.lane.b32.xlu0 %v6094, 64
        %v6180 = vpop.permute.xlu0 %6179
        %6181 = vrot.lane.b32.xlu0 %v6095, 64
        %v6182 = vpop.permute.xlu0 %6181
        %6183 = vrot.lane.b32.xlu0 %v6096, 64
        %v6184 = vpop.permute.xlu0 %6183
        %6185 = vrot.lane.b32.xlu0 %v6097, 64
        %v6186 = vpop.permute.xlu0 %6185
        %6187 = vrot.lane.b32.xlu0 %v6098, 64
        %v6188 = vpop.permute.xlu0 %6187
        %6189 = vrot.lane.b32.xlu0 %v6099, 64
        %v6190 = vpop.permute.xlu0 %6189
        %6191 = vrot.lane.b32.xlu0 %v6100, 64
        %v6192 = vpop.permute.xlu0 %6191
        %6193 = vrot.lane.b32.xlu0 %v6101, 64
        %v6194 = vpop.permute.xlu0 %6193
        %6195 = vrot.lane.b32.xlu0 %v6102, 64
        %v6196 = vpop.permute.xlu0 %6195
        %6197 = vrot.lane.b32.xlu0 %v6103, 64
        %v6198 = vpop.permute.xlu0 %6197
        %6199 = vrot.lane.b32.xlu0 %v6104, 64
        %v6200 = vpop.permute.xlu0 %6199
        %v6233 = vmul.f32 %v5191, %v6138
        %v6234 = vmul.f32 %v5206, %v6140
        %v6235 = vmul.f32 %v5221, %v6142
        %v6236 = vmul.f32 %v5236, %v6144
        %v6237 = vmul.f32 %v5251, %v6146
        %v6238 = vmul.f32 %v5266, %v6148
        %v6239 = vmul.f32 %v5281, %v6150
        %v6240 = vmul.f32 %v5296, %v6152
        %v6241 = vmul.f32 %v5311, %v6154
        %v6242 = vmul.f32 %v5326, %v6156
        %v6243 = vmul.f32 %v5341, %v6158
        %v6244 = vmul.f32 %v5356, %v6160
        %v6245 = vmul.f32 %v5371, %v6162
        %v6246 = vmul.f32 %v5386, %v6164
        %v6247 = vmul.f32 %v5401, %v6166
        %v6248 = vmul.f32 %v5416, %v6168
        %v6249 = vmul.f32 %v5431, %v6170
        %v6250 = vmul.f32 %v5446, %v6172
        %v6251 = vmul.f32 %v5461, %v6174
        %v6252 = vmul.f32 %v5476, %v6176
        %v6253 = vmul.f32 %v5491, %v6178
        %v6254 = vmul.f32 %v5506, %v6180
        %v6255 = vmul.f32 %v5521, %v6182
        %v6256 = vmul.f32 %v5536, %v6184
        %v6257 = vmul.f32 %v5551, %v6186
        %v6258 = vmul.f32 %v5566, %v6188
        %v6259 = vmul.f32 %v5581, %v6190
        %v6260 = vmul.f32 %v5596, %v6192
        %v6261 = vmul.f32 %v5611, %v6194
        %v6262 = vmul.f32 %v5626, %v6196
        %v6263 = vmul.f32 %v5641, %v6198
        %v6264 = vmul.f32 %v5656, %v6200
        %vm6265 = vcmask 261120
        %6266 = vst.msk [vmem:[%s332] sm:$0xff] %vm6265, %v6041
        %6267 = vst.msk [vmem:[%s332 + $0x8] sm:$0xff] %vm6265, %v6042
        %6268 = vst.msk [vmem:[%s332 + $0x10] sm:$0xff] %vm6265, %v6043
        %6269 = vst.msk [vmem:[%s332 + $0x18] sm:$0xff] %vm6265, %v6044
        %6270 = vst.msk [vmem:[%s332 + $0x20] sm:$0xff] %vm6265, %v6045
        %6271 = vst.msk [vmem:[%s332 + $0x28] sm:$0xff] %vm6265, %v6046
        %6272 = vst.msk [vmem:[%s332 + $0x30] sm:$0xff] %vm6265, %v6047
        %6273 = vst.msk [vmem:[%s332 + $0x38] sm:$0xff] %vm6265, %v6048
        %6274 = vst.msk [vmem:[%s332 + $0x40] sm:$0xff] %vm6265, %v6049
        %6275 = vst.msk [vmem:[%s332 + $0x48] sm:$0xff] %vm6265, %v6050
        %6276 = vst.msk [vmem:[%s332 + $0x50] sm:$0xff] %vm6265, %v6051
        %6277 = vst.msk [vmem:[%s332 + $0x58] sm:$0xff] %vm6265, %v6052
        %6278 = vst.msk [vmem:[%s332 + $0x60] sm:$0xff] %vm6265, %v6053
        %6279 = vst.msk [vmem:[%s332 + $0x68] sm:$0xff] %vm6265, %v6054
        %6280 = vst.msk [vmem:[%s332 + $0x70] sm:$0xff] %vm6265, %v6055
        %6281 = vst.msk [vmem:[%s332 + $0x78] sm:$0xff] %vm6265, %v6056
        %6282 = vst.msk [vmem:[%s332 + $0x80] sm:$0xff] %vm6265, %v6057
        %6283 = vst.msk [vmem:[%s332 + $0x88] sm:$0xff] %vm6265, %v6058
        %6284 = vst.msk [vmem:[%s332 + $0x90] sm:$0xff] %vm6265, %v6059
        %6285 = vst.msk [vmem:[%s332 + $0x98] sm:$0xff] %vm6265, %v6060
        %6286 = vst.msk [vmem:[%s332 + $0xa0] sm:$0xff] %vm6265, %v6061
        %6287 = vst.msk [vmem:[%s332 + $0xa8] sm:$0xff] %vm6265, %v6062
        %6288 = vst.msk [vmem:[%s332 + $0xb0] sm:$0xff] %vm6265, %v6063
        %6289 = vst.msk [vmem:[%s332 + $0xb8] sm:$0xff] %vm6265, %v6064
        %6290 = vst.msk [vmem:[%s332 + $0xc0] sm:$0xff] %vm6265, %v6065
        %6291 = vst.msk [vmem:[%s332 + $0xc8] sm:$0xff] %vm6265, %v6066
        %6292 = vst.msk [vmem:[%s332 + $0xd0] sm:$0xff] %vm6265, %v6067
        %6293 = vst.msk [vmem:[%s332 + $0xd8] sm:$0xff] %vm6265, %v6068
        %6294 = vst.msk [vmem:[%s332 + $0xe0] sm:$0xff] %vm6265, %v6069
        %6295 = vst.msk [vmem:[%s332 + $0xe8] sm:$0xff] %vm6265, %v6070
        %6296 = vst.msk [vmem:[%s332 + $0xf0] sm:$0xff] %vm6265, %v6071
        %6297 = vst.msk [vmem:[%s332 + $0xf8] sm:$0xff] %vm6265, %v6072
        %6330 = vrot.lane.b32.xlu0 %v6233, 64
        %v6331 = vpop.permute.xlu0 %6330
        %6332 = vrot.lane.b32.xlu0 %v6234, 64
        %v6333 = vpop.permute.xlu0 %6332
        %6334 = vrot.lane.b32.xlu0 %v6235, 64
        %v6335 = vpop.permute.xlu0 %6334
        %6336 = vrot.lane.b32.xlu0 %v6236, 64
        %v6337 = vpop.permute.xlu0 %6336
        %6338 = vrot.lane.b32.xlu0 %v6237, 64
        %v6339 = vpop.permute.xlu0 %6338
        %6340 = vrot.lane.b32.xlu0 %v6238, 64
        %v6341 = vpop.permute.xlu0 %6340
        %6342 = vrot.lane.b32.xlu0 %v6239, 64
        %v6343 = vpop.permute.xlu0 %6342
        %6344 = vrot.lane.b32.xlu0 %v6240, 64
        %v6345 = vpop.permute.xlu0 %6344
        %6346 = vrot.lane.b32.xlu0 %v6241, 64
        %v6347 = vpop.permute.xlu0 %6346
        %6348 = vrot.lane.b32.xlu0 %v6242, 64
        %v6349 = vpop.permute.xlu0 %6348
        %6350 = vrot.lane.b32.xlu0 %v6243, 64
        %v6351 = vpop.permute.xlu0 %6350
        %6352 = vrot.lane.b32.xlu0 %v6244, 64
        %v6353 = vpop.permute.xlu0 %6352
        %6354 = vrot.lane.b32.xlu0 %v6245, 64
        %v6355 = vpop.permute.xlu0 %6354
        %6356 = vrot.lane.b32.xlu0 %v6246, 64
        %v6357 = vpop.permute.xlu0 %6356
        %6358 = vrot.lane.b32.xlu0 %v6247, 64
        %v6359 = vpop.permute.xlu0 %6358
        %6360 = vrot.lane.b32.xlu0 %v6248, 64
        %v6361 = vpop.permute.xlu0 %6360
        %6362 = vrot.lane.b32.xlu0 %v6249, 64
        %v6363 = vpop.permute.xlu0 %6362
        %6364 = vrot.lane.b32.xlu0 %v6250, 64
        %v6365 = vpop.permute.xlu0 %6364
        %6366 = vrot.lane.b32.xlu0 %v6251, 64
        %v6367 = vpop.permute.xlu0 %6366
        %6368 = vrot.lane.b32.xlu0 %v6252, 64
        %v6369 = vpop.permute.xlu0 %6368
        %6370 = vrot.lane.b32.xlu0 %v6253, 64
        %v6371 = vpop.permute.xlu0 %6370
        %6372 = vrot.lane.b32.xlu0 %v6254, 64
        %v6373 = vpop.permute.xlu0 %6372
        %6374 = vrot.lane.b32.xlu0 %v6255, 64
        %v6375 = vpop.permute.xlu0 %6374
        %6376 = vrot.lane.b32.xlu0 %v6256, 64
        %v6377 = vpop.permute.xlu0 %6376
        %6378 = vrot.lane.b32.xlu0 %v6257, 64
        %v6379 = vpop.permute.xlu0 %6378
        %6380 = vrot.lane.b32.xlu0 %v6258, 64
        %v6381 = vpop.permute.xlu0 %6380
        %6382 = vrot.lane.b32.xlu0 %v6259, 64
        %v6383 = vpop.permute.xlu0 %6382
        %6384 = vrot.lane.b32.xlu0 %v6260, 64
        %v6385 = vpop.permute.xlu0 %6384
        %6386 = vrot.lane.b32.xlu0 %v6261, 64
        %v6387 = vpop.permute.xlu0 %6386
        %6388 = vrot.lane.b32.xlu0 %v6262, 64
        %v6389 = vpop.permute.xlu0 %6388
        %6390 = vrot.lane.b32.xlu0 %v6263, 64
        %v6391 = vpop.permute.xlu0 %6390
        %6392 = vrot.lane.b32.xlu0 %v6264, 64
        %v6393 = vpop.permute.xlu0 %6392
        %6426 = vst.msk [vmem:[%s339] sm:$0xff] %vm6265, %v6331
        %6427 = vst.msk [vmem:[%s339 + $0x8] sm:$0xff] %vm6265, %v6333
        %6428 = vst.msk [vmem:[%s339 + $0x10] sm:$0xff] %vm6265, %v6335
        %6429 = vst.msk [vmem:[%s339 + $0x18] sm:$0xff] %vm6265, %v6337
        %6430 = vst.msk [vmem:[%s339 + $0x20] sm:$0xff] %vm6265, %v6339
        %6431 = vst.msk [vmem:[%s339 + $0x28] sm:$0xff] %vm6265, %v6341
        %6432 = vst.msk [vmem:[%s339 + $0x30] sm:$0xff] %vm6265, %v6343
        %6433 = vst.msk [vmem:[%s339 + $0x38] sm:$0xff] %vm6265, %v6345
        %6434 = vst.msk [vmem:[%s339 + $0x40] sm:$0xff] %vm6265, %v6347
        %6435 = vst.msk [vmem:[%s339 + $0x48] sm:$0xff] %vm6265, %v6349
        %6436 = vst.msk [vmem:[%s339 + $0x50] sm:$0xff] %vm6265, %v6351
        %6437 = vst.msk [vmem:[%s339 + $0x58] sm:$0xff] %vm6265, %v6353
        %6438 = vst.msk [vmem:[%s339 + $0x60] sm:$0xff] %vm6265, %v6355
        %6439 = vst.msk [vmem:[%s339 + $0x68] sm:$0xff] %vm6265, %v6357
        %6440 = vst.msk [vmem:[%s339 + $0x70] sm:$0xff] %vm6265, %v6359
        %6441 = vst.msk [vmem:[%s339 + $0x78] sm:$0xff] %vm6265, %v6361
        %6442 = vst.msk [vmem:[%s339 + $0x80] sm:$0xff] %vm6265, %v6363
        %6443 = vst.msk [vmem:[%s339 + $0x88] sm:$0xff] %vm6265, %v6365
        %6444 = vst.msk [vmem:[%s339 + $0x90] sm:$0xff] %vm6265, %v6367
        %6445 = vst.msk [vmem:[%s339 + $0x98] sm:$0xff] %vm6265, %v6369
        %6446 = vst.msk [vmem:[%s339 + $0xa0] sm:$0xff] %vm6265, %v6371
        %6447 = vst.msk [vmem:[%s339 + $0xa8] sm:$0xff] %vm6265, %v6373
        %6448 = vst.msk [vmem:[%s339 + $0xb0] sm:$0xff] %vm6265, %v6375
        %6449 = vst.msk [vmem:[%s339 + $0xb8] sm:$0xff] %vm6265, %v6377
        %6450 = vst.msk [vmem:[%s339 + $0xc0] sm:$0xff] %vm6265, %v6379
        %6451 = vst.msk [vmem:[%s339 + $0xc8] sm:$0xff] %vm6265, %v6381
        %6452 = vst.msk [vmem:[%s339 + $0xd0] sm:$0xff] %vm6265, %v6383
        %6453 = vst.msk [vmem:[%s339 + $0xd8] sm:$0xff] %vm6265, %v6385
        %6454 = vst.msk [vmem:[%s339 + $0xe0] sm:$0xff] %vm6265, %v6387
        %6455 = vst.msk [vmem:[%s339 + $0xe8] sm:$0xff] %vm6265, %v6389
        %6456 = vst.msk [vmem:[%s339 + $0xf0] sm:$0xff] %vm6265, %v6391
        %6457 = vst.msk [vmem:[%s339 + $0xf8] sm:$0xff] %vm6265, %v6393
        %v6458 = vpack.c.bf16 %v6234, %v6233
        %v6459 = vpack.c.bf16 %v6236, %v6235
        %v6460 = vpack.c.bf16 %v6238, %v6237
        %v6461 = vpack.c.bf16 %v6240, %v6239
        %v6462 = vpack.c.bf16 %v6242, %v6241
        %v6463 = vpack.c.bf16 %v6244, %v6243
        %v6464 = vpack.c.bf16 %v6246, %v6245
        %v6465 = vpack.c.bf16 %v6248, %v6247
        %v6466 = vpack.c.bf16 %v6250, %v6249
        %v6467 = vpack.c.bf16 %v6252, %v6251
        %v6468 = vpack.c.bf16 %v6254, %v6253
        %v6469 = vpack.c.bf16 %v6256, %v6255
        %v6470 = vpack.c.bf16 %v6258, %v6257
        %v6471 = vpack.c.bf16 %v6260, %v6259
        %v6472 = vpack.c.bf16 %v6262, %v6261
        %v6473 = vpack.c.bf16 %v6264, %v6263
        %v6474 = vld [vmem:[%s5] sm:$0xff]
        %v6475 = vld [vmem:[%s5 + $0x8] sm:$0xff]
        %v6476 = vld [vmem:[%s5 + $0x10] sm:$0xff]
        %v6477 = vld [vmem:[%s5 + $0x18] sm:$0xff]
        %v6478 = vld [vmem:[%s5 + $0x20] sm:$0xff]
        %v6479 = vld [vmem:[%s5 + $0x28] sm:$0xff]
        %v6480 = vld [vmem:[%s5 + $0x30] sm:$0xff]
        %v6481 = vld [vmem:[%s5 + $0x38] sm:$0xff]
        %v6482 = vld [vmem:[%s361] sm:$0xff]
        %v6483 = vld [vmem:[%s361 + $0x8] sm:$0xff]
        %v6484 = vld [vmem:[%s361 + $0x10] sm:$0xff]
        %v6485 = vld [vmem:[%s361 + $0x18] sm:$0xff]
        %v6486 = vld [vmem:[%s361 + $0x20] sm:$0xff]
        %v6487 = vld [vmem:[%s361 + $0x28] sm:$0xff]
        %v6488 = vld [vmem:[%s361 + $0x30] sm:$0xff]
        %v6489 = vld [vmem:[%s361 + $0x38] sm:$0xff]
        %v6490 = vld [vmem:[%s361 + $0x40] sm:$0xff]
        %v6491 = vld [vmem:[%s361 + $0x48] sm:$0xff]
        %v6492 = vld [vmem:[%s361 + $0x50] sm:$0xff]
        %v6493 = vld [vmem:[%s361 + $0x58] sm:$0xff]
        %v6494 = vld [vmem:[%s361 + $0x60] sm:$0xff]
        %v6495 = vld [vmem:[%s361 + $0x68] sm:$0xff]
        %v6496 = vld [vmem:[%s361 + $0x70] sm:$0xff]
        %v6497 = vld [vmem:[%s361 + $0x78] sm:$0xff]
        %v6498 = vld [vmem:[%s361 + $0x80] sm:$0xff]
        %v6499 = vld [vmem:[%s361 + $0x88] sm:$0xff]
        %v6500 = vld [vmem:[%s361 + $0x90] sm:$0xff]
        %v6501 = vld [vmem:[%s361 + $0x98] sm:$0xff]
        %v6502 = vld [vmem:[%s361 + $0xa0] sm:$0xff]
        %v6503 = vld [vmem:[%s361 + $0xa8] sm:$0xff]
        %v6504 = vld [vmem:[%s361 + $0xb0] sm:$0xff]
        %v6505 = vld [vmem:[%s361 + $0xb8] sm:$0xff]
        %v6506 = vld [vmem:[%s361 + $0xc0] sm:$0xff]
        %v6507 = vld [vmem:[%s361 + $0xc8] sm:$0xff]
        %v6508 = vld [vmem:[%s361 + $0xd0] sm:$0xff]
        %v6509 = vld [vmem:[%s361 + $0xd8] sm:$0xff]
        %v6510 = vld [vmem:[%s361 + $0xe0] sm:$0xff]
        %v6511 = vld [vmem:[%s361 + $0xe8] sm:$0xff]
        %v6512 = vld [vmem:[%s361 + $0xf0] sm:$0xff]
        %v6513 = vld [vmem:[%s361 + $0xf8] sm:$0xff]
        %v6514 = vld [vmem:[%s361 + $0x100] sm:$0xff]
        %v6515 = vld [vmem:[%s361 + $0x108] sm:$0xff]
        %v6516 = vld [vmem:[%s361 + $0x110] sm:$0xff]
        %v6517 = vld [vmem:[%s361 + $0x118] sm:$0xff]
        %v6518 = vld [vmem:[%s361 + $0x120] sm:$0xff]
        %v6519 = vld [vmem:[%s361 + $0x128] sm:$0xff]
        %v6520 = vld [vmem:[%s361 + $0x130] sm:$0xff]
        %v6521 = vld [vmem:[%s361 + $0x138] sm:$0xff]
        %v6522 = vld [vmem:[%s361 + $0x140] sm:$0xff]
        %v6523 = vld [vmem:[%s361 + $0x148] sm:$0xff]
        %v6524 = vld [vmem:[%s361 + $0x150] sm:$0xff]
        %v6525 = vld [vmem:[%s361 + $0x158] sm:$0xff]
        %v6526 = vld [vmem:[%s361 + $0x160] sm:$0xff]
        %v6527 = vld [vmem:[%s361 + $0x168] sm:$0xff]
        %v6528 = vld [vmem:[%s361 + $0x170] sm:$0xff]
        %v6529 = vld [vmem:[%s361 + $0x178] sm:$0xff]
        %v6530 = vld [vmem:[%s361 + $0x180] sm:$0xff]
        %v6531 = vld [vmem:[%s361 + $0x188] sm:$0xff]
        %v6532 = vld [vmem:[%s361 + $0x190] sm:$0xff]
        %v6533 = vld [vmem:[%s361 + $0x198] sm:$0xff]
        %v6534 = vld [vmem:[%s361 + $0x1a0] sm:$0xff]
        %v6535 = vld [vmem:[%s361 + $0x1a8] sm:$0xff]
        %v6536 = vld [vmem:[%s361 + $0x1b0] sm:$0xff]
        %v6537 = vld [vmem:[%s361 + $0x1b8] sm:$0xff]
        %v6538 = vld [vmem:[%s361 + $0x1c0] sm:$0xff]
        %v6539 = vld [vmem:[%s361 + $0x1c8] sm:$0xff]
        %v6540 = vld [vmem:[%s361 + $0x1d0] sm:$0xff]
        %v6541 = vld [vmem:[%s361 + $0x1d8] sm:$0xff]
        %v6542 = vld [vmem:[%s361 + $0x1e0] sm:$0xff]
        %v6543 = vld [vmem:[%s361 + $0x1e8] sm:$0xff]
        %v6544 = vld [vmem:[%s361 + $0x1f0] sm:$0xff]
        %v6545 = vld [vmem:[%s361 + $0x1f8] sm:$0xff]
        %v6546 = vld [vmem:[%s361 + $0x200] sm:$0xff]
        %v6547 = vld [vmem:[%s361 + $0x208] sm:$0xff]
        %v6548 = vld [vmem:[%s361 + $0x210] sm:$0xff]
        %v6549 = vld [vmem:[%s361 + $0x218] sm:$0xff]
        %v6550 = vld [vmem:[%s361 + $0x220] sm:$0xff]
        %v6551 = vld [vmem:[%s361 + $0x228] sm:$0xff]
        %v6552 = vld [vmem:[%s361 + $0x230] sm:$0xff]
        %v6553 = vld [vmem:[%s361 + $0x238] sm:$0xff]
        %v6554 = vld [vmem:[%s361 + $0x240] sm:$0xff]
        %v6555 = vld [vmem:[%s361 + $0x248] sm:$0xff]
        %v6556 = vld [vmem:[%s361 + $0x250] sm:$0xff]
        %v6557 = vld [vmem:[%s361 + $0x258] sm:$0xff]
        %v6558 = vld [vmem:[%s361 + $0x260] sm:$0xff]
        %v6559 = vld [vmem:[%s361 + $0x268] sm:$0xff]
        %v6560 = vld [vmem:[%s361 + $0x270] sm:$0xff]
        %v6561 = vld [vmem:[%s361 + $0x278] sm:$0xff]
        %v6562 = vld [vmem:[%s361 + $0x280] sm:$0xff]
        %v6563 = vld [vmem:[%s361 + $0x288] sm:$0xff]
        %v6564 = vld [vmem:[%s361 + $0x290] sm:$0xff]
        %v6565 = vld [vmem:[%s361 + $0x298] sm:$0xff]
        %v6566 = vld [vmem:[%s361 + $0x2a0] sm:$0xff]
        %v6567 = vld [vmem:[%s361 + $0x2a8] sm:$0xff]
        %v6568 = vld [vmem:[%s361 + $0x2b0] sm:$0xff]
        %v6569 = vld [vmem:[%s361 + $0x2b8] sm:$0xff]
        %v6570 = vld [vmem:[%s361 + $0x2c0] sm:$0xff]
        %v6571 = vld [vmem:[%s361 + $0x2c8] sm:$0xff]
        %v6572 = vld [vmem:[%s361 + $0x2d0] sm:$0xff]
        %v6573 = vld [vmem:[%s361 + $0x2d8] sm:$0xff]
        %v6574 = vld [vmem:[%s361 + $0x2e0] sm:$0xff]
        %v6575 = vld [vmem:[%s361 + $0x2e8] sm:$0xff]
        %v6576 = vld [vmem:[%s361 + $0x2f0] sm:$0xff]
        %v6577 = vld [vmem:[%s361 + $0x2f8] sm:$0xff]
        %v6578 = vld [vmem:[%s361 + $0x300] sm:$0xff]
        %v6579 = vld [vmem:[%s361 + $0x308] sm:$0xff]
        %v6580 = vld [vmem:[%s361 + $0x310] sm:$0xff]
        %v6581 = vld [vmem:[%s361 + $0x318] sm:$0xff]
        %v6582 = vld [vmem:[%s361 + $0x320] sm:$0xff]
        %v6583 = vld [vmem:[%s361 + $0x328] sm:$0xff]
        %v6584 = vld [vmem:[%s361 + $0x330] sm:$0xff]
        %v6585 = vld [vmem:[%s361 + $0x338] sm:$0xff]
        %v6586 = vld [vmem:[%s361 + $0x340] sm:$0xff]
        %v6587 = vld [vmem:[%s361 + $0x348] sm:$0xff]
        %v6588 = vld [vmem:[%s361 + $0x350] sm:$0xff]
        %v6589 = vld [vmem:[%s361 + $0x358] sm:$0xff]
        %v6590 = vld [vmem:[%s361 + $0x360] sm:$0xff]
        %v6591 = vld [vmem:[%s361 + $0x368] sm:$0xff]
        %v6592 = vld [vmem:[%s361 + $0x370] sm:$0xff]
        %v6593 = vld [vmem:[%s361 + $0x378] sm:$0xff]
        %v6594 = vld [vmem:[%s361 + $0x380] sm:$0xff]
        %v6595 = vld [vmem:[%s361 + $0x388] sm:$0xff]
        %v6596 = vld [vmem:[%s361 + $0x390] sm:$0xff]
        %v6597 = vld [vmem:[%s361 + $0x398] sm:$0xff]
        %v6598 = vld [vmem:[%s361 + $0x3a0] sm:$0xff]
        %v6599 = vld [vmem:[%s361 + $0x3a8] sm:$0xff]
        %v6600 = vld [vmem:[%s361 + $0x3b0] sm:$0xff]
        %v6601 = vld [vmem:[%s361 + $0x3b8] sm:$0xff]
        %v6602 = vld [vmem:[%s361 + $0x3c0] sm:$0xff]
        %v6603 = vld [vmem:[%s361 + $0x3c8] sm:$0xff]
        %v6604 = vld [vmem:[%s361 + $0x3d0] sm:$0xff]
        %v6605 = vld [vmem:[%s361 + $0x3d8] sm:$0xff]
        %v6606 = vld [vmem:[%s361 + $0x3e0] sm:$0xff]
        %v6607 = vld [vmem:[%s361 + $0x3e8] sm:$0xff]
        %v6608 = vld [vmem:[%s361 + $0x3f0] sm:$0xff]
        %v6609 = vld [vmem:[%s361 + $0x3f8] sm:$0xff]
        %6626 = vrot.lane.b32.xlu0 %v6458, 64
        %v6627 = vpop.permute.xlu0 %6626
        %6628 = vrot.lane.b32.xlu0 %v6459, 64
        %v6629 = vpop.permute.xlu0 %6628
        %6630 = vrot.lane.b32.xlu0 %v6460, 64
        %v6631 = vpop.permute.xlu0 %6630
        %6632 = vrot.lane.b32.xlu0 %v6461, 64
        %v6633 = vpop.permute.xlu0 %6632
        %6634 = vrot.lane.b32.xlu0 %v6462, 64
        %v6635 = vpop.permute.xlu0 %6634
        %6636 = vrot.lane.b32.xlu0 %v6463, 64
        %v6637 = vpop.permute.xlu0 %6636
        %6638 = vrot.lane.b32.xlu0 %v6464, 64
        %v6639 = vpop.permute.xlu0 %6638
        %6640 = vrot.lane.b32.xlu0 %v6465, 64
        %v6641 = vpop.permute.xlu0 %6640
        %6642 = vrot.lane.b32.xlu0 %v6466, 64
        %v6643 = vpop.permute.xlu0 %6642
        %6644 = vrot.lane.b32.xlu0 %v6467, 64
        %v6645 = vpop.permute.xlu0 %6644
        %6646 = vrot.lane.b32.xlu0 %v6468, 64
        %v6647 = vpop.permute.xlu0 %6646
        %6648 = vrot.lane.b32.xlu0 %v6469, 64
        %v6649 = vpop.permute.xlu0 %6648
        %6650 = vrot.lane.b32.xlu0 %v6470, 64
        %v6651 = vpop.permute.xlu0 %6650
        %6652 = vrot.lane.b32.xlu0 %v6471, 64
        %v6653 = vpop.permute.xlu0 %6652
        %6654 = vrot.lane.b32.xlu0 %v6472, 64
        %v6655 = vpop.permute.xlu0 %6654
        %6656 = vrot.lane.b32.xlu0 %v6473, 64
        %v6657 = vpop.permute.xlu0 %6656
        %v6666 = vunpack.c.l.b16 %v6474
        %v6667 = vunpack.c.h.b16 %v6474
        %v6668 = vunpack.c.l.b16 %v6475
        %v6669 = vunpack.c.h.b16 %v6475
        %v6670 = vunpack.c.l.b16 %v6476
        %v6671 = vunpack.c.h.b16 %v6476
        %v6672 = vunpack.c.l.b16 %v6477
        %v6673 = vunpack.c.h.b16 %v6477
        %v6674 = vunpack.c.l.b16 %v6478
        %v6675 = vunpack.c.h.b16 %v6478
        %v6676 = vunpack.c.l.b16 %v6479
        %v6677 = vunpack.c.h.b16 %v6479
        %v6678 = vunpack.c.l.b16 %v6480
        %v6679 = vunpack.c.h.b16 %v6480
        %v6680 = vunpack.c.l.b16 %v6481
        %v6681 = vunpack.c.h.b16 %v6481
        %v6682 = vpack.c.b16 %v6670, %v6666
        %v6683 = vpack.c.b16 %v6671, %v6667
        %v6684 = vpack.c.b16 %v6672, %v6668
        %v6685 = vpack.c.b16 %v6673, %v6669
        %v6686 = vpack.c.b16 %v6678, %v6674
        %v6687 = vpack.c.b16 %v6679, %v6675
        %v6688 = vpack.c.b16 %v6680, %v6676
        %v6689 = vpack.c.b16 %v6681, %v6677
        %v6699 = vsel %vm6265, %v6627, 0
        %v6702 = vsel %vm6265, %v6629, 0
        %v6705 = vsel %vm6265, %v6631, 0
        %v6708 = vsel %vm6265, %v6633, 0
        %v6711 = vsel %vm6265, %v6635, 0
        %v6714 = vsel %vm6265, %v6637, 0
        %v6717 = vsel %vm6265, %v6639, 0
        %v6720 = vsel %vm6265, %v6641, 0
        %v6723 = vsel %vm6265, %v6643, 0
        %v6726 = vsel %vm6265, %v6645, 0
        %v6729 = vsel %vm6265, %v6647, 0
        %v6732 = vsel %vm6265, %v6649, 0
        %v6735 = vsel %vm6265, %v6651, 0
        %v6738 = vsel %vm6265, %v6653, 0
        %v6741 = vsel %vm6265, %v6655, 0
        %v6744 = vsel %vm6265, %v6657, 0
        %6746 = vmatpush.bf16.msra.mxu0 0
        %6747 = vmatpush.bf16.msra.mxu0 0
        %6748 = vmatpush.bf16.msra.mxu0 0
        %6749 = vmatpush.bf16.msra.mxu0 0
        %6750 = vmatpush.bf16.msra.mxu0 0
        %6751 = vmatpush.bf16.msra.mxu0 0
        %6752 = vmatpush.bf16.msra.mxu0 %v6686
        %6753 = vmatpush.bf16.msra.mxu0 %v6682
        %6754 = vmatmul.bf16.gmra.mxu0 %v6699
        %v6755 = vpop.f32.mrf.mxu0
        %v6756 = vadd.f32 %v6482, %v6755
        %v6757 = vpop.f32.mrf.mxu0
        %v6758 = vadd.f32 %v6486, %v6757
        %6759 = vmatmul.bf16.gmra.mxu0 %v6702
        %v6760 = vpop.f32.mrf.mxu0
        %v6761 = vadd.f32 %v6490, %v6760
        %v6762 = vpop.f32.mrf.mxu0
        %v6763 = vadd.f32 %v6494, %v6762
        %6764 = vmatmul.bf16.gmra.mxu0 %v6705
        %v6765 = vpop.f32.mrf.mxu0
        %v6766 = vadd.f32 %v6498, %v6765
        %v6767 = vpop.f32.mrf.mxu0
        %v6768 = vadd.f32 %v6502, %v6767
        %6769 = vmatmul.bf16.gmra.mxu0 %v6708
        %v6770 = vpop.f32.mrf.mxu0
        %v6771 = vadd.f32 %v6506, %v6770
        %v6772 = vpop.f32.mrf.mxu0
        %v6773 = vadd.f32 %v6510, %v6772
        %6774 = vmatmul.bf16.gmra.mxu0 %v6711
        %v6775 = vpop.f32.mrf.mxu0
        %v6776 = vadd.f32 %v6514, %v6775
        %v6777 = vpop.f32.mrf.mxu0
        %v6778 = vadd.f32 %v6518, %v6777
        %6779 = vmatmul.bf16.gmra.mxu0 %v6714
        %v6780 = vpop.f32.mrf.mxu0
        %v6781 = vadd.f32 %v6522, %v6780
        %v6782 = vpop.f32.mrf.mxu0
        %v6783 = vadd.f32 %v6526, %v6782
        %6784 = vmatmul.bf16.gmra.mxu0 %v6717
        %v6785 = vpop.f32.mrf.mxu0
        %v6786 = vadd.f32 %v6530, %v6785
        %v6787 = vpop.f32.mrf.mxu0
        %v6788 = vadd.f32 %v6534, %v6787
        %6789 = vmatmul.bf16.gmra.mxu0 %v6720
        %v6790 = vpop.f32.mrf.mxu0
        %v6791 = vadd.f32 %v6538, %v6790
        %v6792 = vpop.f32.mrf.mxu0
        %v6793 = vadd.f32 %v6542, %v6792
        %6794 = vmatmul.bf16.gmra.mxu0 %v6723
        %v6795 = vpop.f32.mrf.mxu0
        %v6796 = vadd.f32 %v6546, %v6795
        %v6797 = vpop.f32.mrf.mxu0
        %v6798 = vadd.f32 %v6550, %v6797
        %6799 = vmatmul.bf16.gmra.mxu0 %v6726
        %v6800 = vpop.f32.mrf.mxu0
        %v6801 = vadd.f32 %v6554, %v6800
        %v6802 = vpop.f32.mrf.mxu0
        %v6803 = vadd.f32 %v6558, %v6802
        %6804 = vmatmul.bf16.gmra.mxu0 %v6729
        %v6805 = vpop.f32.mrf.mxu0
        %v6806 = vadd.f32 %v6562, %v6805
        %v6807 = vpop.f32.mrf.mxu0
        %v6808 = vadd.f32 %v6566, %v6807
        %6809 = vmatmul.bf16.gmra.mxu0 %v6732
        %v6810 = vpop.f32.mrf.mxu0
        %v6811 = vadd.f32 %v6570, %v6810
        %v6812 = vpop.f32.mrf.mxu0
        %v6813 = vadd.f32 %v6574, %v6812
        %6814 = vmatmul.bf16.gmra.mxu0 %v6735
        %v6815 = vpop.f32.mrf.mxu0
        %v6816 = vadd.f32 %v6578, %v6815
        %v6817 = vpop.f32.mrf.mxu0
        %v6818 = vadd.f32 %v6582, %v6817
        %6819 = vmatmul.bf16.gmra.mxu0 %v6738
        %v6820 = vpop.f32.mrf.mxu0
        %v6821 = vadd.f32 %v6586, %v6820
        %v6822 = vpop.f32.mrf.mxu0
        %v6823 = vadd.f32 %v6590, %v6822
        %6824 = vmatmul.bf16.gmra.mxu0 %v6741
        %v6825 = vpop.f32.mrf.mxu0
        %v6826 = vadd.f32 %v6594, %v6825
        %v6827 = vpop.f32.mrf.mxu0
        %v6828 = vadd.f32 %v6598, %v6827
        %6829 = vmatmul.bf16.gmra.mxu0 %v6744
        %v6830 = vpop.f32.mrf.mxu0
        %v6831 = vadd.f32 %v6602, %v6830
        %v6832 = vpop.f32.mrf.mxu0
        %v6833 = vadd.f32 %v6606, %v6832
        %6834 = vdwg.mxu0
        %6835 = vmatpush.bf16.msra.mxu0 0
        %6836 = vmatpush.bf16.msra.mxu0 0
        %6837 = vmatpush.bf16.msra.mxu0 0
        %6838 = vmatpush.bf16.msra.mxu0 0
        %6839 = vmatpush.bf16.msra.mxu0 0
        %6840 = vmatpush.bf16.msra.mxu0 0
        %6841 = vmatpush.bf16.msra.mxu0 %v6687
        %6842 = vmatpush.bf16.msra.mxu0 %v6683
        %6843 = vmatmul.bf16.gmra.mxu0 %v6699
        %v6844 = vpop.f32.mrf.mxu0
        %v6845 = vadd.f32 %v6483, %v6844
        %v6846 = vpop.f32.mrf.mxu0
        %v6847 = vadd.f32 %v6487, %v6846
        %6848 = vmatmul.bf16.gmra.mxu0 %v6702
        %v6849 = vpop.f32.mrf.mxu0
        %v6850 = vadd.f32 %v6491, %v6849
        %v6851 = vpop.f32.mrf.mxu0
        %v6852 = vadd.f32 %v6495, %v6851
        %6853 = vmatmul.bf16.gmra.mxu0 %v6705
        %v6854 = vpop.f32.mrf.mxu0
        %v6855 = vadd.f32 %v6499, %v6854
        %v6856 = vpop.f32.mrf.mxu0
        %v6857 = vadd.f32 %v6503, %v6856
        %6858 = vmatmul.bf16.gmra.mxu0 %v6708
        %v6859 = vpop.f32.mrf.mxu0
        %v6860 = vadd.f32 %v6507, %v6859
        %v6861 = vpop.f32.mrf.mxu0
        %v6862 = vadd.f32 %v6511, %v6861
        %6863 = vmatmul.bf16.gmra.mxu0 %v6711
        %v6864 = vpop.f32.mrf.mxu0
        %v6865 = vadd.f32 %v6515, %v6864
        %v6866 = vpop.f32.mrf.mxu0
        %v6867 = vadd.f32 %v6519, %v6866
        %6868 = vmatmul.bf16.gmra.mxu0 %v6714
        %v6869 = vpop.f32.mrf.mxu0
        %v6870 = vadd.f32 %v6523, %v6869
        %v6871 = vpop.f32.mrf.mxu0
        %v6872 = vadd.f32 %v6527, %v6871
        %6873 = vmatmul.bf16.gmra.mxu0 %v6717
        %v6874 = vpop.f32.mrf.mxu0
        %v6875 = vadd.f32 %v6531, %v6874
        %v6876 = vpop.f32.mrf.mxu0
        %v6877 = vadd.f32 %v6535, %v6876
        %6878 = vmatmul.bf16.gmra.mxu0 %v6720
        %v6879 = vpop.f32.mrf.mxu0
        %v6880 = vadd.f32 %v6539, %v6879
        %v6881 = vpop.f32.mrf.mxu0
        %v6882 = vadd.f32 %v6543, %v6881
        %6883 = vmatmul.bf16.gmra.mxu0 %v6723
        %v6884 = vpop.f32.mrf.mxu0
        %v6885 = vadd.f32 %v6547, %v6884
        %v6886 = vpop.f32.mrf.mxu0
        %v6887 = vadd.f32 %v6551, %v6886
        %6888 = vmatmul.bf16.gmra.mxu0 %v6726
        %v6889 = vpop.f32.mrf.mxu0
        %v6890 = vadd.f32 %v6555, %v6889
        %v6891 = vpop.f32.mrf.mxu0
        %v6892 = vadd.f32 %v6559, %v6891
        %6893 = vmatmul.bf16.gmra.mxu0 %v6729
        %v6894 = vpop.f32.mrf.mxu0
        %v6895 = vadd.f32 %v6563, %v6894
        %v6896 = vpop.f32.mrf.mxu0
        %v6897 = vadd.f32 %v6567, %v6896
        %6898 = vmatmul.bf16.gmra.mxu0 %v6732
        %v6899 = vpop.f32.mrf.mxu0
        %v6900 = vadd.f32 %v6571, %v6899
        %v6901 = vpop.f32.mrf.mxu0
        %v6902 = vadd.f32 %v6575, %v6901
        %6903 = vmatmul.bf16.gmra.mxu0 %v6735
        %v6904 = vpop.f32.mrf.mxu0
        %v6905 = vadd.f32 %v6579, %v6904
        %v6906 = vpop.f32.mrf.mxu0
        %v6907 = vadd.f32 %v6583, %v6906
        %6908 = vmatmul.bf16.gmra.mxu0 %v6738
        %v6909 = vpop.f32.mrf.mxu0
        %v6910 = vadd.f32 %v6587, %v6909
        %v6911 = vpop.f32.mrf.mxu0
        %v6912 = vadd.f32 %v6591, %v6911
        %6913 = vmatmul.bf16.gmra.mxu0 %v6741
        %v6914 = vpop.f32.mrf.mxu0
        %v6915 = vadd.f32 %v6595, %v6914
        %v6916 = vpop.f32.mrf.mxu0
        %v6917 = vadd.f32 %v6599, %v6916
        %6918 = vmatmul.bf16.gmra.mxu0 %v6744
        %v6919 = vpop.f32.mrf.mxu0
        %v6920 = vadd.f32 %v6603, %v6919
        %v6921 = vpop.f32.mrf.mxu0
        %v6922 = vadd.f32 %v6607, %v6921
        %6923 = vdwg.mxu0
        %6924 = vmatpush.bf16.msra.mxu0 0
        %6925 = vmatpush.bf16.msra.mxu0 0
        %6926 = vmatpush.bf16.msra.mxu0 0
        %6927 = vmatpush.bf16.msra.mxu0 0
        %6928 = vmatpush.bf16.msra.mxu0 0
        %6929 = vmatpush.bf16.msra.mxu0 0
        %6930 = vmatpush.bf16.msra.mxu0 %v6688
        %6931 = vmatpush.bf16.msra.mxu0 %v6684
        %6932 = vmatmul.bf16.gmra.mxu0 %v6699
        %v6933 = vpop.f32.mrf.mxu0
        %v6934 = vadd.f32 %v6484, %v6933
        %v6935 = vpop.f32.mrf.mxu0
        %v6936 = vadd.f32 %v6488, %v6935
        %6937 = vmatmul.bf16.gmra.mxu0 %v6702
        %v6938 = vpop.f32.mrf.mxu0
        %v6939 = vadd.f32 %v6492, %v6938
        %v6940 = vpop.f32.mrf.mxu0
        %v6941 = vadd.f32 %v6496, %v6940
        %6942 = vmatmul.bf16.gmra.mxu0 %v6705
        %v6943 = vpop.f32.mrf.mxu0
        %v6944 = vadd.f32 %v6500, %v6943
        %v6945 = vpop.f32.mrf.mxu0
        %v6946 = vadd.f32 %v6504, %v6945
        %6947 = vmatmul.bf16.gmra.mxu0 %v6708
        %v6948 = vpop.f32.mrf.mxu0
        %v6949 = vadd.f32 %v6508, %v6948
        %v6950 = vpop.f32.mrf.mxu0
        %v6951 = vadd.f32 %v6512, %v6950
        %6952 = vmatmul.bf16.gmra.mxu0 %v6711
        %v6953 = vpop.f32.mrf.mxu0
        %v6954 = vadd.f32 %v6516, %v6953
        %v6955 = vpop.f32.mrf.mxu0
        %v6956 = vadd.f32 %v6520, %v6955
        %6957 = vmatmul.bf16.gmra.mxu0 %v6714
        %v6958 = vpop.f32.mrf.mxu0
        %v6959 = vadd.f32 %v6524, %v6958
        %v6960 = vpop.f32.mrf.mxu0
        %v6961 = vadd.f32 %v6528, %v6960
        %6962 = vmatmul.bf16.gmra.mxu0 %v6717
        %v6963 = vpop.f32.mrf.mxu0
        %v6964 = vadd.f32 %v6532, %v6963
        %v6965 = vpop.f32.mrf.mxu0
        %v6966 = vadd.f32 %v6536, %v6965
        %6967 = vmatmul.bf16.gmra.mxu0 %v6720
        %v6968 = vpop.f32.mrf.mxu0
        %v6969 = vadd.f32 %v6540, %v6968
        %v6970 = vpop.f32.mrf.mxu0
        %v6971 = vadd.f32 %v6544, %v6970
        %6972 = vmatmul.bf16.gmra.mxu0 %v6723
        %v6973 = vpop.f32.mrf.mxu0
        %v6974 = vadd.f32 %v6548, %v6973
        %v6975 = vpop.f32.mrf.mxu0
        %v6976 = vadd.f32 %v6552, %v6975
        %6977 = vmatmul.bf16.gmra.mxu0 %v6726
        %v6978 = vpop.f32.mrf.mxu0
        %v6979 = vadd.f32 %v6556, %v6978
        %v6980 = vpop.f32.mrf.mxu0
        %v6981 = vadd.f32 %v6560, %v6980
        %6982 = vmatmul.bf16.gmra.mxu0 %v6729
        %v6983 = vpop.f32.mrf.mxu0
        %v6984 = vadd.f32 %v6564, %v6983
        %v6985 = vpop.f32.mrf.mxu0
        %v6986 = vadd.f32 %v6568, %v6985
        %6987 = vmatmul.bf16.gmra.mxu0 %v6732
        %v6988 = vpop.f32.mrf.mxu0
        %v6989 = vadd.f32 %v6572, %v6988
        %v6990 = vpop.f32.mrf.mxu0
        %v6991 = vadd.f32 %v6576, %v6990
        %6992 = vmatmul.bf16.gmra.mxu0 %v6735
        %v6993 = vpop.f32.mrf.mxu0
        %v6994 = vadd.f32 %v6580, %v6993
        %v6995 = vpop.f32.mrf.mxu0
        %v6996 = vadd.f32 %v6584, %v6995
        %6997 = vmatmul.bf16.gmra.mxu0 %v6738
        %v6998 = vpop.f32.mrf.mxu0
        %v6999 = vadd.f32 %v6588, %v6998
        %v7000 = vpop.f32.mrf.mxu0
        %v7001 = vadd.f32 %v6592, %v7000
        %7002 = vmatmul.bf16.gmra.mxu0 %v6741
        %v7003 = vpop.f32.mrf.mxu0
        %v7004 = vadd.f32 %v6596, %v7003
        %v7005 = vpop.f32.mrf.mxu0
        %v7006 = vadd.f32 %v6600, %v7005
        %7007 = vmatmul.bf16.gmra.mxu0 %v6744
        %v7008 = vpop.f32.mrf.mxu0
        %v7009 = vadd.f32 %v6604, %v7008
        %v7010 = vpop.f32.mrf.mxu0
        %v7011 = vadd.f32 %v6608, %v7010
        %7012 = vdwg.mxu0
        %7013 = vmatpush.bf16.msra.mxu0 0
        %7014 = vmatpush.bf16.msra.mxu0 0
        %7015 = vmatpush.bf16.msra.mxu0 0
        %7016 = vmatpush.bf16.msra.mxu0 0
        %7017 = vmatpush.bf16.msra.mxu0 0
        %7018 = vmatpush.bf16.msra.mxu0 0
        %7019 = vmatpush.bf16.msra.mxu0 %v6689
        %7020 = vmatpush.bf16.msra.mxu0 %v6685
        %7021 = vmatmul.bf16.gmra.mxu0 %v6699
        %v7022 = vpop.f32.mrf.mxu0
        %v7023 = vadd.f32 %v6485, %v7022
        %v7024 = vpop.f32.mrf.mxu0
        %v7025 = vadd.f32 %v6489, %v7024
        %7026 = vmatmul.bf16.gmra.mxu0 %v6702
        %v7027 = vpop.f32.mrf.mxu0
        %v7028 = vadd.f32 %v6493, %v7027
        %v7029 = vpop.f32.mrf.mxu0
        %v7030 = vadd.f32 %v6497, %v7029
        %7031 = vmatmul.bf16.gmra.mxu0 %v6705
        %v7032 = vpop.f32.mrf.mxu0
        %v7033 = vadd.f32 %v6501, %v7032
        %v7034 = vpop.f32.mrf.mxu0
        %v7035 = vadd.f32 %v6505, %v7034
        %7036 = vmatmul.bf16.gmra.mxu0 %v6708
        %v7037 = vpop.f32.mrf.mxu0
        %v7038 = vadd.f32 %v6509, %v7037
        %v7039 = vpop.f32.mrf.mxu0
        %v7040 = vadd.f32 %v6513, %v7039
        %7041 = vmatmul.bf16.gmra.mxu0 %v6711
        %v7042 = vpop.f32.mrf.mxu0
        %v7043 = vadd.f32 %v6517, %v7042
        %v7044 = vpop.f32.mrf.mxu0
        %v7045 = vadd.f32 %v6521, %v7044
        %7046 = vmatmul.bf16.gmra.mxu0 %v6714
        %v7047 = vpop.f32.mrf.mxu0
        %v7048 = vadd.f32 %v6525, %v7047
        %v7049 = vpop.f32.mrf.mxu0
        %v7050 = vadd.f32 %v6529, %v7049
        %7051 = vmatmul.bf16.gmra.mxu0 %v6717
        %v7052 = vpop.f32.mrf.mxu0
        %v7053 = vadd.f32 %v6533, %v7052
        %v7054 = vpop.f32.mrf.mxu0
        %v7055 = vadd.f32 %v6537, %v7054
        %7056 = vmatmul.bf16.gmra.mxu0 %v6720
        %v7057 = vpop.f32.mrf.mxu0
        %v7058 = vadd.f32 %v6541, %v7057
        %v7059 = vpop.f32.mrf.mxu0
        %v7060 = vadd.f32 %v6545, %v7059
        %7061 = vmatmul.bf16.gmra.mxu0 %v6723
        %v7062 = vpop.f32.mrf.mxu0
        %v7063 = vadd.f32 %v6549, %v7062
        %v7064 = vpop.f32.mrf.mxu0
        %v7065 = vadd.f32 %v6553, %v7064
        %7066 = vmatmul.bf16.gmra.mxu0 %v6726
        %v7067 = vpop.f32.mrf.mxu0
        %v7068 = vadd.f32 %v6557, %v7067
        %v7069 = vpop.f32.mrf.mxu0
        %v7070 = vadd.f32 %v6561, %v7069
        %7071 = vmatmul.bf16.gmra.mxu0 %v6729
        %v7072 = vpop.f32.mrf.mxu0
        %v7073 = vadd.f32 %v6565, %v7072
        %v7074 = vpop.f32.mrf.mxu0
        %v7075 = vadd.f32 %v6569, %v7074
        %7076 = vmatmul.bf16.gmra.mxu0 %v6732
        %v7077 = vpop.f32.mrf.mxu0
        %v7078 = vadd.f32 %v6573, %v7077
        %v7079 = vpop.f32.mrf.mxu0
        %v7080 = vadd.f32 %v6577, %v7079
        %7081 = vmatmul.bf16.gmra.mxu0 %v6735
        %v7082 = vpop.f32.mrf.mxu0
        %v7083 = vadd.f32 %v6581, %v7082
        %v7084 = vpop.f32.mrf.mxu0
        %v7085 = vadd.f32 %v6585, %v7084
        %7086 = vmatmul.bf16.gmra.mxu0 %v6738
        %v7087 = vpop.f32.mrf.mxu0
        %v7088 = vadd.f32 %v6589, %v7087
        %v7089 = vpop.f32.mrf.mxu0
        %v7090 = vadd.f32 %v6593, %v7089
        %7091 = vmatmul.bf16.gmra.mxu0 %v6741
        %v7092 = vpop.f32.mrf.mxu0
        %v7093 = vadd.f32 %v6597, %v7092
        %v7094 = vpop.f32.mrf.mxu0
        %v7095 = vadd.f32 %v6601, %v7094
        %7096 = vmatmul.bf16.gmra.mxu0 %v6744
        %v7097 = vpop.f32.mrf.mxu0
        %v7098 = vadd.f32 %v6605, %v7097
        %v7099 = vpop.f32.mrf.mxu0
        %v7100 = vadd.f32 %v6609, %v7099
        %7101 = vdwg.mxu0
        %7102 = vst [vmem:[%s366] sm:$0xff] %v6756
        %7103 = vst [vmem:[%s366 + $0x8] sm:$0xff] %v6845
        %7104 = vst [vmem:[%s366 + $0x10] sm:$0xff] %v6934
        %7105 = vst [vmem:[%s366 + $0x18] sm:$0xff] %v7023
        %7106 = vst [vmem:[%s366 + $0x20] sm:$0xff] %v6758
        %7107 = vst [vmem:[%s366 + $0x28] sm:$0xff] %v6847
        %7108 = vst [vmem:[%s366 + $0x30] sm:$0xff] %v6936
        %7109 = vst [vmem:[%s366 + $0x38] sm:$0xff] %v7025
        %7110 = vst [vmem:[%s366 + $0x40] sm:$0xff] %v6761
        %7111 = vst [vmem:[%s366 + $0x48] sm:$0xff] %v6850
        %7112 = vst [vmem:[%s366 + $0x50] sm:$0xff] %v6939
        %7113 = vst [vmem:[%s366 + $0x58] sm:$0xff] %v7028
        %7114 = vst [vmem:[%s366 + $0x60] sm:$0xff] %v6763
        %7115 = vst [vmem:[%s366 + $0x68] sm:$0xff] %v6852
        %7116 = vst [vmem:[%s366 + $0x70] sm:$0xff] %v6941
        %7117 = vst [vmem:[%s366 + $0x78] sm:$0xff] %v7030
        %7118 = vst [vmem:[%s366 + $0x80] sm:$0xff] %v6766
        %7119 = vst [vmem:[%s366 + $0x88] sm:$0xff] %v6855
        %7120 = vst [vmem:[%s366 + $0x90] sm:$0xff] %v6944
        %7121 = vst [vmem:[%s366 + $0x98] sm:$0xff] %v7033
        %7122 = vst [vmem:[%s366 + $0xa0] sm:$0xff] %v6768
        %7123 = vst [vmem:[%s366 + $0xa8] sm:$0xff] %v6857
        %7124 = vst [vmem:[%s366 + $0xb0] sm:$0xff] %v6946
        %7125 = vst [vmem:[%s366 + $0xb8] sm:$0xff] %v7035
        %7126 = vst [vmem:[%s366 + $0xc0] sm:$0xff] %v6771
        %7127 = vst [vmem:[%s366 + $0xc8] sm:$0xff] %v6860
        %7128 = vst [vmem:[%s366 + $0xd0] sm:$0xff] %v6949
        %7129 = vst [vmem:[%s366 + $0xd8] sm:$0xff] %v7038
        %7130 = vst [vmem:[%s366 + $0xe0] sm:$0xff] %v6773
        %7131 = vst [vmem:[%s366 + $0xe8] sm:$0xff] %v6862
        %7132 = vst [vmem:[%s366 + $0xf0] sm:$0xff] %v6951
        %7133 = vst [vmem:[%s366 + $0xf8] sm:$0xff] %v7040
        %7134 = vst [vmem:[%s366 + $0x100] sm:$0xff] %v6776
        %7135 = vst [vmem:[%s366 + $0x108] sm:$0xff] %v6865
        %7136 = vst [vmem:[%s366 + $0x110] sm:$0xff] %v6954
        %7137 = vst [vmem:[%s366 + $0x118] sm:$0xff] %v7043
        %7138 = vst [vmem:[%s366 + $0x120] sm:$0xff] %v6778
        %7139 = vst [vmem:[%s366 + $0x128] sm:$0xff] %v6867
        %7140 = vst [vmem:[%s366 + $0x130] sm:$0xff] %v6956
        %7141 = vst [vmem:[%s366 + $0x138] sm:$0xff] %v7045
        %7142 = vst [vmem:[%s366 + $0x140] sm:$0xff] %v6781
        %7143 = vst [vmem:[%s366 + $0x148] sm:$0xff] %v6870
        %7144 = vst [vmem:[%s366 + $0x150] sm:$0xff] %v6959
        %7145 = vst [vmem:[%s366 + $0x158] sm:$0xff] %v7048
        %7146 = vst [vmem:[%s366 + $0x160] sm:$0xff] %v6783
        %7147 = vst [vmem:[%s366 + $0x168] sm:$0xff] %v6872
        %7148 = vst [vmem:[%s366 + $0x170] sm:$0xff] %v6961
        %7149 = vst [vmem:[%s366 + $0x178] sm:$0xff] %v7050
        %7150 = vst [vmem:[%s366 + $0x180] sm:$0xff] %v6786
        %7151 = vst [vmem:[%s366 + $0x188] sm:$0xff] %v6875
        %7152 = vst [vmem:[%s366 + $0x190] sm:$0xff] %v6964
        %7153 = vst [vmem:[%s366 + $0x198] sm:$0xff] %v7053
        %7154 = vst [vmem:[%s366 + $0x1a0] sm:$0xff] %v6788
        %7155 = vst [vmem:[%s366 + $0x1a8] sm:$0xff] %v6877
        %7156 = vst [vmem:[%s366 + $0x1b0] sm:$0xff] %v6966
        %7157 = vst [vmem:[%s366 + $0x1b8] sm:$0xff] %v7055
        %7158 = vst [vmem:[%s366 + $0x1c0] sm:$0xff] %v6791
        %7159 = vst [vmem:[%s366 + $0x1c8] sm:$0xff] %v6880
        %7160 = vst [vmem:[%s366 + $0x1d0] sm:$0xff] %v6969
        %7161 = vst [vmem:[%s366 + $0x1d8] sm:$0xff] %v7058
        %7162 = vst [vmem:[%s366 + $0x1e0] sm:$0xff] %v6793
        %7163 = vst [vmem:[%s366 + $0x1e8] sm:$0xff] %v6882
        %7164 = vst [vmem:[%s366 + $0x1f0] sm:$0xff] %v6971
        %7165 = vst [vmem:[%s366 + $0x1f8] sm:$0xff] %v7060
        %7166 = vst [vmem:[%s366 + $0x200] sm:$0xff] %v6796
        %7167 = vst [vmem:[%s366 + $0x208] sm:$0xff] %v6885
        %7168 = vst [vmem:[%s366 + $0x210] sm:$0xff] %v6974
        %7169 = vst [vmem:[%s366 + $0x218] sm:$0xff] %v7063
        %7170 = vst [vmem:[%s366 + $0x220] sm:$0xff] %v6798
        %7171 = vst [vmem:[%s366 + $0x228] sm:$0xff] %v6887
        %7172 = vst [vmem:[%s366 + $0x230] sm:$0xff] %v6976
        %7173 = vst [vmem:[%s366 + $0x238] sm:$0xff] %v7065
        %7174 = vst [vmem:[%s366 + $0x240] sm:$0xff] %v6801
        %7175 = vst [vmem:[%s366 + $0x248] sm:$0xff] %v6890
        %7176 = vst [vmem:[%s366 + $0x250] sm:$0xff] %v6979
        %7177 = vst [vmem:[%s366 + $0x258] sm:$0xff] %v7068
        %7178 = vst [vmem:[%s366 + $0x260] sm:$0xff] %v6803
        %7179 = vst [vmem:[%s366 + $0x268] sm:$0xff] %v6892
        %7180 = vst [vmem:[%s366 + $0x270] sm:$0xff] %v6981
        %7181 = vst [vmem:[%s366 + $0x278] sm:$0xff] %v7070
        %7182 = vst [vmem:[%s366 + $0x280] sm:$0xff] %v6806
        %7183 = vst [vmem:[%s366 + $0x288] sm:$0xff] %v6895
        %7184 = vst [vmem:[%s366 + $0x290] sm:$0xff] %v6984
        %7185 = vst [vmem:[%s366 + $0x298] sm:$0xff] %v7073
        %7186 = vst [vmem:[%s366 + $0x2a0] sm:$0xff] %v6808
        %7187 = vst [vmem:[%s366 + $0x2a8] sm:$0xff] %v6897
        %7188 = vst [vmem:[%s366 + $0x2b0] sm:$0xff] %v6986
        %7189 = vst [vmem:[%s366 + $0x2b8] sm:$0xff] %v7075
        %7190 = vst [vmem:[%s366 + $0x2c0] sm:$0xff] %v6811
        %7191 = vst [vmem:[%s366 + $0x2c8] sm:$0xff] %v6900
        %7192 = vst [vmem:[%s366 + $0x2d0] sm:$0xff] %v6989
        %7193 = vst [vmem:[%s366 + $0x2d8] sm:$0xff] %v7078
        %7194 = vst [vmem:[%s366 + $0x2e0] sm:$0xff] %v6813
        %7195 = vst [vmem:[%s366 + $0x2e8] sm:$0xff] %v6902
        %7196 = vst [vmem:[%s366 + $0x2f0] sm:$0xff] %v6991
        %7197 = vst [vmem:[%s366 + $0x2f8] sm:$0xff] %v7080
        %7198 = vst [vmem:[%s366 + $0x300] sm:$0xff] %v6816
        %7199 = vst [vmem:[%s366 + $0x308] sm:$0xff] %v6905
        %7200 = vst [vmem:[%s366 + $0x310] sm:$0xff] %v6994
        %7201 = vst [vmem:[%s366 + $0x318] sm:$0xff] %v7083
        %7202 = vst [vmem:[%s366 + $0x320] sm:$0xff] %v6818
        %7203 = vst [vmem:[%s366 + $0x328] sm:$0xff] %v6907
        %7204 = vst [vmem:[%s366 + $0x330] sm:$0xff] %v6996
        %7205 = vst [vmem:[%s366 + $0x338] sm:$0xff] %v7085
        %7206 = vst [vmem:[%s366 + $0x340] sm:$0xff] %v6821
        %7207 = vst [vmem:[%s366 + $0x348] sm:$0xff] %v6910
        %7208 = vst [vmem:[%s366 + $0x350] sm:$0xff] %v6999
        %7209 = vst [vmem:[%s366 + $0x358] sm:$0xff] %v7088
        %7210 = vst [vmem:[%s366 + $0x360] sm:$0xff] %v6823
        %7211 = vst [vmem:[%s366 + $0x368] sm:$0xff] %v6912
        %7212 = vst [vmem:[%s366 + $0x370] sm:$0xff] %v7001
        %7213 = vst [vmem:[%s366 + $0x378] sm:$0xff] %v7090
        %7214 = vst [vmem:[%s366 + $0x380] sm:$0xff] %v6826
        %7215 = vst [vmem:[%s366 + $0x388] sm:$0xff] %v6915
        %7216 = vst [vmem:[%s366 + $0x390] sm:$0xff] %v7004
        %7217 = vst [vmem:[%s366 + $0x398] sm:$0xff] %v7093
        %7218 = vst [vmem:[%s366 + $0x3a0] sm:$0xff] %v6828
        %7219 = vst [vmem:[%s366 + $0x3a8] sm:$0xff] %v6917
        %7220 = vst [vmem:[%s366 + $0x3b0] sm:$0xff] %v7006
        %7221 = vst [vmem:[%s366 + $0x3b8] sm:$0xff] %v7095
        %7222 = vst [vmem:[%s366 + $0x3c0] sm:$0xff] %v6831
        %7223 = vst [vmem:[%s366 + $0x3c8] sm:$0xff] %v6920
        %7224 = vst [vmem:[%s366 + $0x3d0] sm:$0xff] %v7009
        %7225 = vst [vmem:[%s366 + $0x3d8] sm:$0xff] %v7098
        %7226 = vst [vmem:[%s366 + $0x3e0] sm:$0xff] %v6833
        %7227 = vst [vmem:[%s366 + $0x3e8] sm:$0xff] %v6922
        %7228 = vst [vmem:[%s366 + $0x3f0] sm:$0xff] %v7011
        %7229 = vst [vmem:[%s366 + $0x3f8] sm:$0xff] %v7100
        %s7230 = sand.u32 %s175, 1
        %s7231 = scalar_lea.sflag [#allocation3], %s7230
        %s7232 = sand.u32 %s175, 1
        %s7233 = smul.addr %s7232, 256
        %s7234 = scalar_lea.vmem [#allocation2], %s7233
        %s7235 = sand.u32 %s201, 1
        %s7236 = scalar_lea.sflag [#allocation5], %s7235
        %s7237 = sand.u32 %s201, 1
        %s7238 = smul.addr %s7237, 256
        %s7239 = scalar_lea.vmem [#allocation4], %s7238
        %p7240 = scmp.lt.s32.totalorder %s26, 1
        %s7241 = scalar_select %p7240, %s26, 1
        %s7242 = smul.addr %s7241, 128
        %s7243 = smul.addr %s7242, 8
        %s7244 = scalar_lea.vmem %s8, %s7243
        // Predicated region
        $region45: #{generation_core_forward.1} parent=43 // pred_check
          %p7245 = pneg %p185
        $region46: #{generation_core_forward.1} parent=43 // pred_check_branch
          %7247 = sbr.rel (%p7245) target = $region48
        $region47: #{generation_core_forward.1} parent=43 // pred_region
          %7249 = vsyncadd %s7231, 0
          %s7250 = smul.addr %s26, 32
          %s7251 = smul.addr %s7250, 8
          %s7252 = scalar_lea.hbm %s6, %s7251
          %s7253 = sshll.u32 %s7234, 4
          %s7254 = int_to_ptr.vmem [resolvable:$true] %s7253
          %s7255 = sshll.u32 %s7252, 4
          %s7256 = int_to_ptr.hbm [resolvable:$true] %s7255
          %7261 = dma.vmem_to_hbm [thread:$0]  %s7254, 4096, %s7256, %s7231, 128, 128, 8
        $region48: #{generation_core_forward.1} parent=43 // pred_fallthru
          _
        // Predicated region
        $region49: #{generation_core_forward.1} parent=43 // pred_check
          %p7262 = pneg %p211
        $region50: #{generation_core_forward.1} parent=43 // pred_check_branch
          %7264 = sbr.rel (%p7262) target = $region52
        $region51: #{generation_core_forward.1} parent=43 // pred_region
          %7266 = vsyncadd %s7236, 0
          %s7267 = smul.addr %s26, 32
          %s7268 = smul.addr %s7267, 8
          %s7269 = scalar_lea.hbm %s7, %s7268
          %s7270 = sshll.u32 %s7239, 4
          %s7271 = int_to_ptr.vmem [resolvable:$true] %s7270
          %s7272 = sshll.u32 %s7269, 4
          %s7273 = int_to_ptr.hbm [resolvable:$true] %s7272
          %7278 = dma.vmem_to_hbm [thread:$0]  %s7271, 4096, %s7273, %s7236, 128, 128, 8
        $region52: #{generation_core_forward.1} parent=43 // pred_fallthru
          _
        // Predicated region
        $region53: #{generation_core_forward.1} parent=43 // pred_check
          %p7279 = pneg %p237
        $region54: #{generation_core_forward.1} parent=43 // pred_check_branch
          %7281 = sbr.rel (%p7279) target = $region56
        $region55: #{generation_core_forward.1} parent=43 // pred_region
          _
        $region56: #{generation_core_forward.1} parent=43 // pred_fallthru
          _
      $region44: #{generation_core_forward.1} parent=5 // pred_fallthru
        _
      %p7282 = scmp.le.s32.totalorder 2, %s21
      // Predicated region
      $region57: #{generation_core_forward.1} parent=5 // pred_check
        %p7283 = pneg %p7282
      $region58: #{generation_core_forward.1} parent=5 // pred_check_branch
        %7285 = sbr.rel (%p7283) target = $region60
      $region59: #{generation_core_forward.1} parent=5 // pred_region
        %s7286 = ssub.s32 %s21, 2
        // Predicated region
        $region61: #{generation_core_forward.1} parent=59 // pred_check
          %p7287 = pneg %p191
        $region62: #{generation_core_forward.1} parent=59 // pred_check_branch
          %7289 = sbr.rel (%p7287) target = $region64
        $region63: #{generation_core_forward.1} parent=59 // pred_region
          %s7290 = sand.u32 %s176, 1
          %s7291 = scalar_lea.sflag [#allocation3], %s7290
          %s7292 = sand.u32 %s176, 1
          %s7293 = smul.addr %s7292, 256
          %s7294 = scalar_lea.vmem [#allocation2], %s7293
          %7296 = dma.done %s7291, 4096
        $region64: #{generation_core_forward.1} parent=59 // pred_fallthru
          _
        // Predicated region
        $region65: #{generation_core_forward.1} parent=59 // pred_check
          %p7297 = pneg %p217
        $region66: #{generation_core_forward.1} parent=59 // pred_check_branch
          %7299 = sbr.rel (%p7297) target = $region68
        $region67: #{generation_core_forward.1} parent=59 // pred_region
          %s7300 = sand.u32 %s202, 1
          %s7301 = scalar_lea.sflag [#allocation5], %s7300
          %s7302 = sand.u32 %s202, 1
          %s7303 = smul.addr %s7302, 256
          %s7304 = scalar_lea.vmem [#allocation4], %s7303
          %7306 = dma.done %s7301, 4096
        $region68: #{generation_core_forward.1} parent=59 // pred_fallthru
          _
        // Predicated region
        $region69: #{generation_core_forward.1} parent=59 // pred_check
          %p7307 = pneg %p243
        $region70: #{generation_core_forward.1} parent=59 // pred_check_branch
          %7309 = sbr.rel (%p7307) target = $region72
        $region71: #{generation_core_forward.1} parent=59 // pred_region
          %p7310 = scmp.lt.s32.totalorder %s27, 1
          %s7311 = scalar_select %p7310, %s27, 1
          %s7312 = smul.addr %s7311, 128
          %s7313 = smul.addr %s7312, 8
          %s7314 = scalar_lea.vmem %s8, %s7313
        $region72: #{generation_core_forward.1} parent=59 // pred_fallthru
          _
      $region60: #{generation_core_forward.1} parent=5 // pred_fallthru
        _
    $region6: #{generation_core_forward.1} parent=1 // loop_footer
      %s25 = sadd.s32 1, %s21
    $region7: #{generation_core_forward.1} parent=1 // loop_footer_branch
      %20 = sbr.rel target = $region3
    $region8: #{generation_core_forward.1} parent=1 // loop_exit
      _
    %7315 = vsyncpa [#allocation3], 1
    %s7316 = scalar_lea.sflag [#allocation3], 1
    %7317 = vsyncpa %s7316, 1
    %7318 = vsyncpa [#allocation5], 1
    %s7319 = scalar_lea.sflag [#allocation5], 1
    %7320 = vsyncpa %s7319, 1

</llo_original>
